<compile_context>
chip_gen: v5e
topology: v5e:2x2
jax: 0.10.0
libtpu: 0.0.40
codegen_flags: <defaults>
</compile_context>

<pallas_src>
import numpy as np
import jax
import jax.numpy as jnp
from jax.experimental import pallas as pl
from jax.experimental.pallas import tpu as pltpu

# ----------------------------- model dimensions -----------------------------
B = 2                 # num_graphs
N = 16                # max_num_nodes
INFEAT = 32           # infeat_dim
FEAT = 128            # feat_dim
HIDDEN = 256          # hidden_dim (transformer FFN)
MLP_HID = FEAT // 2   # hidden of the 2-layer MLPs
HEADS = 4             # num_heads
HEAD_DIM = FEAT // HEADS
NUM_LAYERS = 6
MAX_DEGREE = 8
EPS = 1e-5            # torch LayerNorm default
NEG_SLOPE = 0.1       # LeakyReLU slope in MLP
MASK_NEG = -1e30      # large finite negative for masked logits


# ------------------------------ kernel helpers -------------------------------
def _layer_norm(x, g, b):
    mu = jnp.mean(x, axis=-1, keepdims=True)
    var = jnp.mean((x - mu) ** 2, axis=-1, keepdims=True)
    return (x - mu) * jax.lax.rsqrt(var + EPS) * g + b


def _bf16(x):
    return x.astype(jnp.bfloat16)


# ------------------------------- fused kernel --------------------------------
def _fused_forward_kernel(
    # per-graph inputs
    nf_ref, deg_ref, bias_ref,
    # input MLP (mlp_n)
    w1n_ref, b1n_ref, w2n_ref, b2n_ref,
    # stacked transformer-layer weights (leading dim = NUM_LAYERS)
    wqkv_ref, bqkv_ref, wo_ref, bo_ref,
    ln1g_ref, ln1b_ref,
    wf1_ref, bf1_ref, wf2_ref, bf2_ref,
    ln2g_ref, ln2b_ref,
    # output MLP (mlp_out)
    w1o_ref, b1o_ref, w2o_ref, b2o_ref,
    # output
    o_ref,
):
    """Entire Graphormer forward for one graph per grid step."""
    # ---- mlp_n (Linear -> LeakyReLU -> Linear) + degree-embedding add ----
    nf = nf_ref[0]                                                    # (N, INFEAT)
    h = jnp.dot(nf, w1n_ref[...], preferred_element_type=jnp.float32) + b1n_ref[...]
    h = jnp.where(h >= 0, h, NEG_SLOPE * h)
    x = jnp.dot(h, w2n_ref[...], preferred_element_type=jnp.float32) + b2n_ref[...]
    x = x + deg_ref[0]                                                # (N, FEAT)

    bias = bias_ref[0]                      # (HEADS, N, N), mask already folded in

    def layer_body(l, x):
        # --- biased multi-head attention ---
        # fused QKV projection (scale already folded into Wq / bq)
        qkv = jnp.dot(_bf16(x), wqkv_ref[l],
                      preferred_element_type=jnp.float32) + bqkv_ref[l]   # (N, 3F)

        def heads_of(base):                                 # -> (HEADS, N, HEAD_DIM)
            return jnp.stack(
                [qkv[:, base + hh * HEAD_DIM: base + (hh + 1) * HEAD_DIM]
                 for hh in range(HEADS)], axis=0)

        qh = heads_of(0)
        kh = heads_of(FEAT)
        vh = heads_of(2 * FEAT)

        logits = jax.lax.dot_general(                       # (HEADS, N, N)
            qh, kh, (((2,), (2,)), ((0,), (0,))),
            preferred_element_type=jnp.float32)
        logits = logits + bias

        m = jnp.max(logits, axis=-1, keepdims=True)
        e = jnp.exp(logits - m)
        p = e * pl.reciprocal(jnp.sum(e, axis=-1, keepdims=True), approx=True)

        oh = jax.lax.dot_general(                           # (HEADS, N, HEAD_DIM)
            _bf16(p), _bf16(vh), (((2,), (1,)), ((0,), (0,))),
            preferred_element_type=jnp.float32)
        attn = jnp.concatenate([oh[hh] for hh in range(HEADS)], axis=-1)  # (N, F)
        attn = jnp.dot(_bf16(attn), wo_ref[l],
                       preferred_element_type=jnp.float32) + bo_ref[l]

        # residual + LayerNorm (attention)
        x1 = _layer_norm(x + attn, ln1g_ref[l], ln1b_ref[l])

        # FFN: Linear -> ReLU -> Linear
        ff = jnp.dot(_bf16(x1), wf1_ref[l],
                     preferred_element_type=jnp.float32) + bf1_ref[l]
        ff = jnp.maximum(ff, 0.0)
        ff = jnp.dot(_bf16(ff), wf2_ref[l],
                     preferred_element_type=jnp.float32) + bf2_ref[l]

        # residual + LayerNorm (ffn)
        return _layer_norm(x1 + ff, ln2g_ref[l], ln2b_ref[l])

    x = jax.lax.fori_loop(0, NUM_LAYERS, layer_body, x, unroll=True)

    # ---- mlp_out (Linear -> LeakyReLU -> Linear-to-scalar) on every node ----
    # (POs_mask row gather happens on host; mlp_out is row-wise so order commutes)
    h = jnp.dot(x, w1o_ref[...], preferred_element_type=jnp.float32) + b1o_ref[...]
    h = jnp.where(h >= 0, h, NEG_SLOPE * h)
    out = jnp.sum(h * w2o_ref[...], axis=-1, keepdims=True) + b2o_ref[...]   # (N, 1)
    o_ref[0] = out


# ----------------------------- pallas_call glue ------------------------------
def _rep_spec(shape):
    """Same full block for every grid step (weights resident in VMEM)."""
    nd = len(shape)
    return pl.BlockSpec(shape, lambda *args, _nd=nd: (0,) * _nd)


def graphormer_fused(node_feat, deg_emb, bias_masked, params):
    weight_args = params["mlp_n"] + params["stacked"] + params["mlp_out"]
    in_specs = [
        pl.BlockSpec((1, N, INFEAT), lambda b: (b, 0, 0)),
        pl.BlockSpec((1, N, FEAT), lambda b: (b, 0, 0)),
        pl.BlockSpec((1, HEADS, N, N), lambda b: (b, 0, 0, 0)),
    ] + [_rep_spec(w.shape) for w in weight_args]
    return pl.pallas_call(
        _fused_forward_kernel,
        out_shape=jax.ShapeDtypeStruct((B, N, 1), jnp.float32),
        grid=(B,),
        in_specs=in_specs,
        out_specs=pl.BlockSpec((1, N, 1), lambda b: (b, 0, 0)),
        compiler_params=pltpu.CompilerParams(dimension_semantics=("parallel",)),
    )(node_feat, deg_emb, bias_masked, *weight_args)


# ------------------------------- parameters ---------------------------------
def _linear(key, fan_in, fan_out):
    kw, kb = jax.random.split(key)
    bound = 1.0 / np.sqrt(fan_in)
    w = jax.random.uniform(kw, (fan_in, fan_out), jnp.float32, -bound, bound)
    b = jax.random.uniform(kb, (1, fan_out), jnp.float32, -bound, bound)
    return w, b


def init_params(key):
    keys = jax.random.split(key, 8)
    p = {}
    # DegreeEncoder: two embeddings (max_degree+1, FEAT), padding_idx=0 -> row 0 zeroed
    e_in = 0.02 * jax.random.normal(keys[0], (MAX_DEGREE + 1, FEAT), jnp.float32)
    e_out = 0.02 * jax.random.normal(keys[1], (MAX_DEGREE + 1, FEAT), jnp.float32)
    p["deg_in"] = e_in.at[0].set(0.0)
    p["deg_out"] = e_out.at[0].set(0.0)

    # mlp_n: Linear(INFEAT, FEAT/2) -> LeakyReLU -> Linear(FEAT/2, FEAT)  (kept f32, tiny)
    w1, b1 = _linear(keys[2], INFEAT, MLP_HID)
    w2, b2 = _linear(keys[3], MLP_HID, FEAT)
    p["mlp_n"] = (w1, b1, w2, b2)

    # mlp_out: Linear(FEAT, FEAT/2) -> LeakyReLU -> Linear(FEAT/2, 1)
    w1o, b1o = _linear(keys[4], FEAT, MLP_HID)
    w2o, b2o = _linear(keys[5], MLP_HID, 1)
    # final Linear-to-scalar stored as a (1, MLP_HID) row -> lane reduction in-kernel
    p["mlp_out"] = (w1o, b1o, w2o.T, b2o)

    # 6 GraphormerLayers, weights stacked along a leading layer axis.
    scale = jnp.float32(HEAD_DIM ** -0.5)
    wqkv_l, bqkv_l, wo_l, bo_l = [], [], [], []
    wf1_l, bf1_l, wf2_l, bf2_l = [], [], [], []
    ln1g_l, ln1b_l, ln2g_l, ln2b_l = [], [], [], []
    lkeys = jax.random.split(keys[6], NUM_LAYERS)
    for lk in lkeys:
        ks = jax.random.split(lk, 6)
        wq, bq = _linear(ks[0], FEAT, FEAT)
        wk, bk = _linear(ks[1], FEAT, FEAT)
        wv, bv = _linear(ks[2], FEAT, FEAT)
        wo, bo = _linear(ks[3], FEAT, FEAT)
        wf1, bf1 = _linear(ks[4], FEAT, HIDDEN)
        wf2, bf2 = _linear(ks[5], HIDDEN, FEAT)
        # fold the 1/sqrt(head_dim) query scale into Wq / bq; fuse QKV
        wqkv_l.append(jnp.concatenate([wq * scale, wk, wv], axis=1))  # (F, 3F)
        bqkv_l.append(jnp.concatenate([bq * scale, bk, bv], axis=1))  # (1, 3F)
        wo_l.append(wo); bo_l.append(bo)
        wf1_l.append(wf1); bf1_l.append(bf1)
        wf2_l.append(wf2); bf2_l.append(bf2)
        ln1g_l.append(jnp.ones((1, FEAT), jnp.float32))
        ln1b_l.append(jnp.zeros((1, FEAT), jnp.float32))
        ln2g_l.append(jnp.ones((1, FEAT), jnp.float32))
        ln2b_l.append(jnp.zeros((1, FEAT), jnp.float32))

    stack = lambda xs: jnp.stack(xs, axis=0)
    p["stacked"] = (
        stack(wqkv_l).astype(jnp.bfloat16),   # (L, F, 3F)   bf16 MXU input
        stack(bqkv_l),                        # (L, 1, 3F)   f32
        stack(wo_l).astype(jnp.bfloat16),     # (L, F, F)
        stack(bo_l),                          # (L, 1, F)
        stack(ln1g_l), stack(ln1b_l),         # (L, 1, F) each
        stack(wf1_l).astype(jnp.bfloat16),    # (L, F, HIDDEN)
        stack(bf1_l),                         # (L, 1, HIDDEN)
        stack(wf2_l).astype(jnp.bfloat16),    # (L, HIDDEN, F)
        stack(bf2_l),                         # (L, 1, F)
        stack(ln2g_l), stack(ln2b_l),         # (L, 1, F) each
    )
    return p


# --------------------------------- forward ----------------------------------
@jax.jit
def graphormer_forward(params, in_degree, out_degree, node_feat, attn_mask_i32,
                       attn_bias):
    # DegreeEncoder (embedding gather is host/XLA glue; clamp matches DGL)
    deg_emb = (params["deg_in"][jnp.clip(in_degree, 0, MAX_DEGREE)]
               + params["deg_out"][jnp.clip(out_degree, 0, MAX_DEGREE)])   # (B,N,F)
    # pre-fold the attention mask into the additive bias once per forward
    bias_masked = (jnp.transpose(attn_bias, (0, 3, 1, 2))                  # (B,H,N,N)
                   + jnp.where(attn_mask_i32[:, None, :, :] != 0,
                               MASK_NEG, 0.0).astype(jnp.float32))
    return graphormer_fused(node_feat, deg_emb, bias_masked, params)       # (B,N,1)


# ----------------------------------- main ------------------------------------
if __name__ == "__main__":
    key = jax.random.PRNGKey(0)
    k_par, k_deg1, k_deg2, k_feat, k_mask, k_bias, k_pos = jax.random.split(key, 7)

    params = init_params(k_par)

    in_degree = jax.random.randint(k_deg1, (B, N), 0, 11, dtype=jnp.int32)
    out_degree = jax.random.randint(k_deg2, (B, N), 0, 11, dtype=jnp.int32)
    node_feat = jax.random.normal(k_feat, (B, N, INFEAT), jnp.float32)

    # attention mask: True/1 = masked out; keep the diagonal unmasked
    rand_mask = jax.random.uniform(k_mask, (B, N, N)) < 0.15
    eye = jnp.eye(N, dtype=bool)[None]
    attn_mask_i32 = jnp.where(eye, False, rand_mask).astype(jnp.int32)

    # matches `attn_bias = th.rand(B, N, N, num_heads)` (deterministic here)
    attn_bias = jax.random.uniform(k_bias, (B, N, N, HEADS), jnp.float32)

    # POs_mask: which node rows are gathered into the final output
    pos_mask = jax.random.uniform(k_pos, (B, N)) < 0.3
    pos_mask = pos_mask.at[:, 0].set(True)   # at least one output node per graph

    out_all = graphormer_forward(params, in_degree, out_degree, node_feat,
                                 attn_mask_i32, attn_bias)
    out_all = jax.block_until_ready(out_all)

    # res = cat_i( x[i][POs_mask[i]] ) -> mlp_out  ==  mlp_out(x)[i][POs_mask[i]]
    out_np = np.asarray(out_all)
    pos_np = np.asarray(pos_mask)
    res = np.concatenate([out_np[i][pos_np[i]] for i in range(B)], axis=0)

    assert res.ndim == 2 and res.shape[1] == 1 and np.all(np.isfinite(res))
    print("KERNEL_OK")
</pallas_src>

<mosaic_0001>
module attributes {stable_mosaic.version = 11 : i64} {
  func.func @_fused_forward_kernel(%arg0: i32, %arg1: memref<1x16x32xf32, #tpu.memory_space<vmem>>, %arg2: memref<1x16x128xf32, #tpu.memory_space<vmem>>, %arg3: memref<1x4x16x16xf32, #tpu.memory_space<vmem>>, %arg4: memref<32x64xf32, #tpu.memory_space<vmem>>, %arg5: memref<1x64xf32, #tpu.memory_space<vmem>>, %arg6: memref<64x128xf32, #tpu.memory_space<vmem>>, %arg7: memref<1x128xf32, #tpu.memory_space<vmem>>, %arg8: memref<6x128x384xbf16, #tpu.memory_space<vmem>>, %arg9: memref<6x1x384xf32, #tpu.memory_space<vmem>>, %arg10: memref<6x128x128xbf16, #tpu.memory_space<vmem>>, %arg11: memref<6x1x128xf32, #tpu.memory_space<vmem>>, %arg12: memref<6x1x128xf32, #tpu.memory_space<vmem>>, %arg13: memref<6x1x128xf32, #tpu.memory_space<vmem>>, %arg14: memref<6x128x256xbf16, #tpu.memory_space<vmem>>, %arg15: memref<6x1x256xf32, #tpu.memory_space<vmem>>, %arg16: memref<6x256x128xbf16, #tpu.memory_space<vmem>>, %arg17: memref<6x1x128xf32, #tpu.memory_space<vmem>>, %arg18: memref<6x1x128xf32, #tpu.memory_space<vmem>>, %arg19: memref<6x1x128xf32, #tpu.memory_space<vmem>>, %arg20: memref<128x64xf32, #tpu.memory_space<vmem>>, %arg21: memref<1x64xf32, #tpu.memory_space<vmem>>, %arg22: memref<1x64xf32, #tpu.memory_space<vmem>>, %arg23: memref<1x1xf32, #tpu.memory_space<vmem>>, %arg24: memref<1x16x1xf32, #tpu.memory_space<vmem>>) attributes {dimension_semantics = [#tpu.dimension_semantics<parallel>], iteration_bounds = array<i64: 2>, scalar_prefetch = 0 : i64, scratch_operands = 0 : i64, tpu.core_type = #tpu.core_type<tc>, window_params = [{transform_indices = @transform_0, window_bounds = array<i64: 1, 16, 32>}, {transform_indices = @transform_1, window_bounds = array<i64: 1, 16, 128>}, {transform_indices = @transform_2, window_bounds = array<i64: 1, 4, 16, 16>}, {pipeline_mode = #tpu.pipeline_mode<synchronous>, transform_indices = @transform_3, window_bounds = array<i64: 32, 64>}, {pipeline_mode = #tpu.pipeline_mode<synchronous>, transform_indices = @transform_4, window_bounds = array<i64: 1, 64>}, {pipeline_mode = #tpu.pipeline_mode<synchronous>, transform_indices = @transform_5, window_bounds = array<i64: 64, 128>}, {pipeline_mode = #tpu.pipeline_mode<synchronous>, transform_indices = @transform_6, window_bounds = array<i64: 1, 128>}, {pipeline_mode = #tpu.pipeline_mode<synchronous>, transform_indices = @transform_7, window_bounds = array<i64: 6, 128, 384>}, {pipeline_mode = #tpu.pipeline_mode<synchronous>, transform_indices = @transform_8, window_bounds = array<i64: 6, 1, 384>}, {pipeline_mode = #tpu.pipeline_mode<synchronous>, transform_indices = @transform_9, window_bounds = array<i64: 6, 128, 128>}, {pipeline_mode = #tpu.pipeline_mode<synchronous>, transform_indices = @transform_10, window_bounds = array<i64: 6, 1, 128>}, {pipeline_mode = #tpu.pipeline_mode<synchronous>, transform_indices = @transform_11, window_bounds = array<i64: 6, 1, 128>}, {pipeline_mode = #tpu.pipeline_mode<synchronous>, transform_indices = @transform_12, window_bounds = array<i64: 6, 1, 128>}, {pipeline_mode = #tpu.pipeline_mode<synchronous>, transform_indices = @transform_13, window_bounds = array<i64: 6, 128, 256>}, {pipeline_mode = #tpu.pipeline_mode<synchronous>, transform_indices = @transform_14, window_bounds = array<i64: 6, 1, 256>}, {pipeline_mode = #tpu.pipeline_mode<synchronous>, transform_indices = @transform_15, window_bounds = array<i64: 6, 256, 128>}, {pipeline_mode = #tpu.pipeline_mode<synchronous>, transform_indices = @transform_16, window_bounds = array<i64: 6, 1, 128>}, {pipeline_mode = #tpu.pipeline_mode<synchronous>, transform_indices = @transform_17, window_bounds = array<i64: 6, 1, 128>}, {pipeline_mode = #tpu.pipeline_mode<synchronous>, transform_indices = @transform_18, window_bounds = array<i64: 6, 1, 128>}, {pipeline_mode = #tpu.pipeline_mode<synchronous>, transform_indices = @transform_19, window_bounds = array<i64: 128, 64>}, {pipeline_mode = #tpu.pipeline_mode<synchronous>, transform_indices = @transform_20, window_bounds = array<i64: 1, 64>}, {pipeline_mode = #tpu.pipeline_mode<synchronous>, transform_indices = @transform_21, window_bounds = array<i64: 1, 64>}, {pipeline_mode = #tpu.pipeline_mode<synchronous>, transform_indices = @transform_22, window_bounds = array<i64: 1, 1>}, {transform_indices = @transform_23, window_bounds = array<i64: 1, 16, 1>}]} {
    %c0 = arith.constant 0 : index
    %c0_0 = arith.constant 0 : index
    %c0_1 = arith.constant 0 : index
    %0 = vector.load %arg1[%c0, %c0_0, %c0_1] : memref<1x16x32xf32, #tpu.memory_space<vmem>>, vector<1x16x32xf32>
    %1 = vector.shape_cast %0 : vector<1x16x32xf32> to vector<16x32xf32>
    %c0_2 = arith.constant 0 : index
    %c0_3 = arith.constant 0 : index
    %2 = vector.load %arg4[%c0_2, %c0_3] : memref<32x64xf32, #tpu.memory_space<vmem>>, vector<32x64xf32>
    %cst = arith.constant dense<0.000000e+00> : vector<16x64xf32>
    %3 = tpu.matmul %1, %2, %cst {dimension_numbers = #tpu.dot_dimension_numbers<[1], [0], [0], [1], [0, 0, 1, 1], [], []>} : vector<16x32xf32>, vector<32x64xf32>, vector<16x64xf32> -> vector<16x64xf32>
    %c0_4 = arith.constant 0 : index
    %c0_5 = arith.constant 0 : index
    %4 = vector.load %arg5[%c0_4, %c0_5] : memref<1x64xf32, #tpu.memory_space<vmem>>, vector<1x64xf32>
    %5 = vector.broadcast %4 : vector<1x64xf32> to vector<16x64xf32>
    %6 = arith.addf %3, %5 : vector<16x64xf32>
    %cst_6 = arith.constant 0.000000e+00 : f32
    %7 = vector.broadcast %cst_6 : f32 to vector<16x64xf32>
    %8 = arith.cmpf oge, %6, %7 : vector<16x64xf32>
    %cst_7 = arith.constant 1.000000e-01 : f32
    %9 = vector.broadcast %cst_7 : f32 to vector<16x64xf32>
    %10 = arith.mulf %9, %6 : vector<16x64xf32>
    %11 = arith.select %8, %6, %10 : vector<16x64xi1>, vector<16x64xf32>
    %c0_8 = arith.constant 0 : index
    %c0_9 = arith.constant 0 : index
    %12 = vector.load %arg6[%c0_8, %c0_9] : memref<64x128xf32, #tpu.memory_space<vmem>>, vector<64x128xf32>
    %cst_10 = arith.constant dense<0.000000e+00> : vector<16x128xf32>
    %13 = tpu.matmul %11, %12, %cst_10 {dimension_numbers = #tpu.dot_dimension_numbers<[1], [0], [0], [1], [0, 0, 1, 1], [], []>} : vector<16x64xf32>, vector<64x128xf32>, vector<16x128xf32> -> vector<16x128xf32>
    %c0_11 = arith.constant 0 : index
    %c0_12 = arith.constant 0 : index
    %14 = vector.load %arg7[%c0_11, %c0_12] : memref<1x128xf32, #tpu.memory_space<vmem>>, vector<1x128xf32>
    %15 = vector.broadcast %14 : vector<1x128xf32> to vector<16x128xf32>
    %16 = arith.addf %13, %15 : vector<16x128xf32>
    %c0_13 = arith.constant 0 : index
    %c0_14 = arith.constant 0 : index
    %c0_15 = arith.constant 0 : index
    %17 = vector.load %arg2[%c0_13, %c0_14, %c0_15] : memref<1x16x128xf32, #tpu.memory_space<vmem>>, vector<1x16x128xf32>
    %18 = vector.shape_cast %17 : vector<1x16x128xf32> to vector<16x128xf32>
    %19 = arith.addf %16, %18 : vector<16x128xf32>
    %c0_16 = arith.constant 0 : index
    %c0_17 = arith.constant 0 : index
    %c0_18 = arith.constant 0 : index
    %c0_19 = arith.constant 0 : index
    %20 = vector.load %arg3[%c0_16, %c0_17, %c0_18, %c0_19] : memref<1x4x16x16xf32, #tpu.memory_space<vmem>>, vector<1x4x16x16xf32>
    %21 = vector.shape_cast %20 : vector<1x4x16x16xf32> to vector<4x16x16xf32>
    %c0_i32 = arith.constant 0 : i32
    %22 = arith.truncf %19 : vector<16x128xf32> to vector<16x128xbf16>
    %23 = arith.index_cast %c0_i32 : i32 to index
    %c0_20 = arith.constant 0 : index
    %c0_21 = arith.constant 0 : index
    %24 = vector.load %arg8[%23, %c0_20, %c0_21] : memref<6x128x384xbf16, #tpu.memory_space<vmem>>, vector<1x128x384xbf16>
    %25 = vector.shape_cast %24 : vector<1x128x384xbf16> to vector<128x384xbf16>
    %cst_22 = arith.constant dense<0.000000e+00> : vector<16x384xf32>
    %26 = tpu.matmul %22, %25, %cst_22 {dimension_numbers = #tpu.dot_dimension_numbers<[1], [0], [0], [1], [0, 0, 1, 1], [], []>} : vector<16x128xbf16>, vector<128x384xbf16>, vector<16x384xf32> -> vector<16x384xf32>
    %27 = arith.index_cast %c0_i32 : i32 to index
    %c0_23 = arith.constant 0 : index
    %c0_24 = arith.constant 0 : index
    %28 = vector.load %arg9[%27, %c0_23, %c0_24] : memref<6x1x384xf32, #tpu.memory_space<vmem>>, vector<1x1x384xf32>
    %29 = vector.shape_cast %28 : vector<1x1x384xf32> to vector<1x384xf32>
    %30 = vector.broadcast %29 : vector<1x384xf32> to vector<16x384xf32>
    %31 = arith.addf %26, %30 : vector<16x384xf32>
    %32 = vector.extract_strided_slice %31 {offsets = [0, 0], sizes = [16, 32], strides = [1, 1]} : vector<16x384xf32> to vector<16x32xf32>
    %33 = vector.extract_strided_slice %31 {offsets = [0, 32], sizes = [16, 32], strides = [1, 1]} : vector<16x384xf32> to vector<16x32xf32>
    %34 = vector.extract_strided_slice %31 {offsets = [0, 64], sizes = [16, 32], strides = [1, 1]} : vector<16x384xf32> to vector<16x32xf32>
    %35 = vector.extract_strided_slice %31 {offsets = [0, 96], sizes = [16, 32], strides = [1, 1]} : vector<16x384xf32> to vector<16x32xf32>
    %36 = vector.shape_cast %32 : vector<16x32xf32> to vector<1x16x32xf32>
    %37 = vector.shape_cast %33 : vector<16x32xf32> to vector<1x16x32xf32>
    %38 = vector.shape_cast %34 : vector<16x32xf32> to vector<1x16x32xf32>
    %39 = vector.shape_cast %35 : vector<16x32xf32> to vector<1x16x32xf32>
    %40 = tpu.concatenate %36, %37, %38, %39 in 0 : vector<1x16x32xf32>, vector<1x16x32xf32>, vector<1x16x32xf32>, vector<1x16x32xf32> -> vector<4x16x32xf32>
    %41 = vector.extract_strided_slice %31 {offsets = [0, 128], sizes = [16, 32], strides = [1, 1]} : vector<16x384xf32> to vector<16x32xf32>
    %42 = vector.extract_strided_slice %31 {offsets = [0, 160], sizes = [16, 32], strides = [1, 1]} : vector<16x384xf32> to vector<16x32xf32>
    %43 = vector.extract_strided_slice %31 {offsets = [0, 192], sizes = [16, 32], strides = [1, 1]} : vector<16x384xf32> to vector<16x32xf32>
    %44 = vector.extract_strided_slice %31 {offsets = [0, 224], sizes = [16, 32], strides = [1, 1]} : vector<16x384xf32> to vector<16x32xf32>
    %45 = vector.shape_cast %41 : vector<16x32xf32> to vector<1x16x32xf32>
    %46 = vector.shape_cast %42 : vector<16x32xf32> to vector<1x16x32xf32>
    %47 = vector.shape_cast %43 : vector<16x32xf32> to vector<1x16x32xf32>
    %48 = vector.shape_cast %44 : vector<16x32xf32> to vector<1x16x32xf32>
    %49 = tpu.concatenate %45, %46, %47, %48 in 0 : vector<1x16x32xf32>, vector<1x16x32xf32>, vector<1x16x32xf32>, vector<1x16x32xf32> -> vector<4x16x32xf32>
    %50 = vector.extract_strided_slice %31 {offsets = [0, 256], sizes = [16, 32], strides = [1, 1]} : vector<16x384xf32> to vector<16x32xf32>
    %51 = vector.extract_strided_slice %31 {offsets = [0, 288], sizes = [16, 32], strides = [1, 1]} : vector<16x384xf32> to vector<16x32xf32>
    %52 = vector.extract_strided_slice %31 {offsets = [0, 320], sizes = [16, 32], strides = [1, 1]} : vector<16x384xf32> to vector<16x32xf32>
    %53 = vector.extract_strided_slice %31 {offsets = [0, 352], sizes = [16, 32], strides = [1, 1]} : vector<16x384xf32> to vector<16x32xf32>
    %54 = vector.shape_cast %50 : vector<16x32xf32> to vector<1x16x32xf32>
    %55 = vector.shape_cast %51 : vector<16x32xf32> to vector<1x16x32xf32>
    %56 = vector.shape_cast %52 : vector<16x32xf32> to vector<1x16x32xf32>
    %57 = vector.shape_cast %53 : vector<16x32xf32> to vector<1x16x32xf32>
    %58 = tpu.concatenate %54, %55, %56, %57 in 0 : vector<1x16x32xf32>, vector<1x16x32xf32>, vector<1x16x32xf32>, vector<1x16x32xf32> -> vector<4x16x32xf32>
    %cst_25 = arith.constant dense<0.000000e+00> : vector<4x16x16xf32>
    %59 = tpu.matmul %40, %49, %cst_25 {dimension_numbers = #tpu.dot_dimension_numbers<[2], [2], [1], [1], [0, 0, 0, 1, 1, 1], [0], [0]>} : vector<4x16x32xf32>, vector<4x16x32xf32>, vector<4x16x16xf32> -> vector<4x16x16xf32>
    %60 = arith.addf %59, %21 : vector<4x16x16xf32>
    %cst_26 = arith.constant dense<0xFF800000> : vector<4x16xf32>
    %61 = vector.multi_reduction <maximumf>, %60, %cst_26 [2] : vector<4x16x16xf32> to vector<4x16xf32>
    %62 = vector.shape_cast %61 : vector<4x16xf32> to vector<4x16x1xf32>
    %63 = vector.broadcast %62 : vector<4x16x1xf32> to vector<4x16x16xf32>
    %64 = arith.subf %60, %63 : vector<4x16x16xf32>
    %65 = math.exp %64 : vector<4x16x16xf32>
    %cst_27 = arith.constant dense<0.000000e+00> : vector<4x16xf32>
    %66 = vector.multi_reduction <add>, %65, %cst_27 [2] : vector<4x16x16xf32> to vector<4x16xf32>
    %67 = vector.shape_cast %66 : vector<4x16xf32> to vector<4x16x1xf32>
    %68 = tpu.reciprocal %67 {approx = true} : vector<4x16x1xf32> -> vector<4x16x1xf32>
    %69 = vector.broadcast %68 : vector<4x16x1xf32> to vector<4x16x16xf32>
    %70 = arith.mulf %65, %69 : vector<4x16x16xf32>
    %71 = arith.truncf %70 : vector<4x16x16xf32> to vector<4x16x16xbf16>
    %72 = arith.truncf %58 : vector<4x16x32xf32> to vector<4x16x32xbf16>
    %cst_28 = arith.constant dense<0.000000e+00> : vector<4x16x32xf32>
    %73 = tpu.matmul %71, %72, %cst_28 {dimension_numbers = #tpu.dot_dimension_numbers<[2], [1], [1], [2], [0, 0, 0, 1, 1, 2], [0], [0]>} : vector<4x16x16xbf16>, vector<4x16x32xbf16>, vector<4x16x32xf32> -> vector<4x16x32xf32>
    %74 = vector.extract_strided_slice %73 {offsets = [0, 0, 0], sizes = [1, 16, 32], strides = [1, 1, 1]} : vector<4x16x32xf32> to vector<1x16x32xf32>
    %75 = vector.shape_cast %74 : vector<1x16x32xf32> to vector<16x32xf32>
    %76 = vector.extract_strided_slice %73 {offsets = [1, 0, 0], sizes = [1, 16, 32], strides = [1, 1, 1]} : vector<4x16x32xf32> to vector<1x16x32xf32>
    %77 = vector.shape_cast %76 : vector<1x16x32xf32> to vector<16x32xf32>
    %78 = vector.extract_strided_slice %73 {offsets = [2, 0, 0], sizes = [1, 16, 32], strides = [1, 1, 1]} : vector<4x16x32xf32> to vector<1x16x32xf32>
    %79 = vector.shape_cast %78 : vector<1x16x32xf32> to vector<16x32xf32>
    %80 = vector.extract_strided_slice %73 {offsets = [3, 0, 0], sizes = [1, 16, 32], strides = [1, 1, 1]} : vector<4x16x32xf32> to vector<1x16x32xf32>
    %81 = vector.shape_cast %80 : vector<1x16x32xf32> to vector<16x32xf32>
    %82 = tpu.concatenate %75, %77, %79, %81 in 1 : vector<16x32xf32>, vector<16x32xf32>, vector<16x32xf32>, vector<16x32xf32> -> vector<16x128xf32>
    %83 = arith.truncf %82 : vector<16x128xf32> to vector<16x128xbf16>
    %84 = arith.index_cast %c0_i32 : i32 to index
    %c0_29 = arith.constant 0 : index
    %c0_30 = arith.constant 0 : index
    %85 = vector.load %arg10[%84, %c0_29, %c0_30] : memref<6x128x128xbf16, #tpu.memory_space<vmem>>, vector<1x128x128xbf16>
    %86 = vector.shape_cast %85 : vector<1x128x128xbf16> to vector<128x128xbf16>
    %cst_31 = arith.constant dense<0.000000e+00> : vector<16x128xf32>
    %87 = tpu.matmul %83, %86, %cst_31 {dimension_numbers = #tpu.dot_dimension_numbers<[1], [0], [0], [1], [0, 0, 1, 1], [], []>} : vector<16x128xbf16>, vector<128x128xbf16>, vector<16x128xf32> -> vector<16x128xf32>
    %88 = arith.index_cast %c0_i32 : i32 to index
    %c0_32 = arith.constant 0 : index
    %c0_33 = arith.constant 0 : index
    %89 = vector.load %arg11[%88, %c0_32, %c0_33] : memref<6x1x128xf32, #tpu.memory_space<vmem>>, vector<1x1x128xf32>
    %90 = vector.shape_cast %89 : vector<1x1x128xf32> to vector<1x128xf32>
    %91 = vector.broadcast %90 : vector<1x128xf32> to vector<16x128xf32>
    %92 = arith.addf %87, %91 : vector<16x128xf32>
    %93 = arith.addf %19, %92 : vector<16x128xf32>
    %94 = arith.index_cast %c0_i32 : i32 to index
    %c0_34 = arith.constant 0 : index
    %c0_35 = arith.constant 0 : index
    %95 = vector.load %arg12[%94, %c0_34, %c0_35] : memref<6x1x128xf32, #tpu.memory_space<vmem>>, vector<1x1x128xf32>
    %96 = vector.shape_cast %95 : vector<1x1x128xf32> to vector<1x128xf32>
    %97 = arith.index_cast %c0_i32 : i32 to index
    %c0_36 = arith.constant 0 : index
    %c0_37 = arith.constant 0 : index
    %98 = vector.load %arg13[%97, %c0_36, %c0_37] : memref<6x1x128xf32, #tpu.memory_space<vmem>>, vector<1x1x128xf32>
    %99 = vector.shape_cast %98 : vector<1x1x128xf32> to vector<1x128xf32>
    %cst_38 = arith.constant dense<0.000000e+00> : vector<16xf32>
    %100 = vector.multi_reduction <add>, %93, %cst_38 [1] : vector<16x128xf32> to vector<16xf32>
    %101 = vector.shape_cast %100 : vector<16xf32> to vector<16x1xf32>
    %cst_39 = arith.constant 1.280000e+02 : f32
    %102 = vector.broadcast %cst_39 : f32 to vector<16x1xf32>
    %103 = arith.divf %101, %102 : vector<16x1xf32>
    %104 = vector.broadcast %103 : vector<16x1xf32> to vector<16x128xf32>
    %105 = arith.subf %93, %104 : vector<16x128xf32>
    %106 = arith.mulf %105, %105 : vector<16x128xf32>
    %cst_40 = arith.constant dense<0.000000e+00> : vector<16xf32>
    %107 = vector.multi_reduction <add>, %106, %cst_40 [1] : vector<16x128xf32> to vector<16xf32>
    %108 = vector.shape_cast %107 : vector<16xf32> to vector<16x1xf32>
    %cst_41 = arith.constant 1.280000e+02 : f32
    %109 = vector.broadcast %cst_41 : f32 to vector<16x1xf32>
    %110 = arith.divf %108, %109 : vector<16x1xf32>
    %111 = vector.broadcast %103 : vector<16x1xf32> to vector<16x128xf32>
    %112 = arith.subf %93, %111 : vector<16x128xf32>
    %cst_42 = arith.constant 9.99999974E-6 : f32
    %113 = vector.broadcast %cst_42 : f32 to vector<16x1xf32>
    %114 = arith.addf %110, %113 : vector<16x1xf32>
    %115 = math.rsqrt %114 : vector<16x1xf32>
    %116 = vector.broadcast %115 : vector<16x1xf32> to vector<16x128xf32>
    %117 = arith.mulf %112, %116 : vector<16x128xf32>
    %118 = vector.broadcast %96 : vector<1x128xf32> to vector<16x128xf32>
    %119 = arith.mulf %117, %118 : vector<16x128xf32>
    %120 = vector.broadcast %99 : vector<1x128xf32> to vector<16x128xf32>
    %121 = arith.addf %119, %120 : vector<16x128xf32>
    %122 = arith.truncf %121 : vector<16x128xf32> to vector<16x128xbf16>
    %123 = arith.index_cast %c0_i32 : i32 to index
    %c0_43 = arith.constant 0 : index
    %c0_44 = arith.constant 0 : index
    %124 = vector.load %arg14[%123, %c0_43, %c0_44] : memref<6x128x256xbf16, #tpu.memory_space<vmem>>, vector<1x128x256xbf16>
    %125 = vector.shape_cast %124 : vector<1x128x256xbf16> to vector<128x256xbf16>
    %cst_45 = arith.constant dense<0.000000e+00> : vector<16x256xf32>
    %126 = tpu.matmul %122, %125, %cst_45 {dimension_numbers = #tpu.dot_dimension_numbers<[1], [0], [0], [1], [0, 0, 1, 1], [], []>} : vector<16x128xbf16>, vector<128x256xbf16>, vector<16x256xf32> -> vector<16x256xf32>
    %127 = arith.index_cast %c0_i32 : i32 to index
    %c0_46 = arith.constant 0 : index
    %c0_47 = arith.constant 0 : index
    %128 = vector.load %arg15[%127, %c0_46, %c0_47] : memref<6x1x256xf32, #tpu.memory_space<vmem>>, vector<1x1x256xf32>
    %129 = vector.shape_cast %128 : vector<1x1x256xf32> to vector<1x256xf32>
    %130 = vector.broadcast %129 : vector<1x256xf32> to vector<16x256xf32>
    %131 = arith.addf %126, %130 : vector<16x256xf32>
    %cst_48 = arith.constant 0.000000e+00 : f32
    %132 = vector.broadcast %cst_48 : f32 to vector<16x256xf32>
    %133 = arith.maximumf %131, %132 : vector<16x256xf32>
    %134 = arith.truncf %133 : vector<16x256xf32> to vector<16x256xbf16>
    %135 = arith.index_cast %c0_i32 : i32 to index
    %c0_49 = arith.constant 0 : index
    %c0_50 = arith.constant 0 : index
    %136 = vector.load %arg16[%135, %c0_49, %c0_50] : memref<6x256x128xbf16, #tpu.memory_space<vmem>>, vector<1x256x128xbf16>
    %137 = vector.shape_cast %136 : vector<1x256x128xbf16> to vector<256x128xbf16>
    %cst_51 = arith.constant dense<0.000000e+00> : vector<16x128xf32>
    %138 = tpu.matmul %134, %137, %cst_51 {dimension_numbers = #tpu.dot_dimension_numbers<[1], [0], [0], [1], [0, 0, 1, 1], [], []>} : vector<16x256xbf16>, vector<256x128xbf16>, vector<16x128xf32> -> vector<16x128xf32>
    %139 = arith.index_cast %c0_i32 : i32 to index
    %c0_52 = arith.constant 0 : index
    %c0_53 = arith.constant 0 : index
    %140 = vector.load %arg17[%139, %c0_52, %c0_53] : memref<6x1x128xf32, #tpu.memory_space<vmem>>, vector<1x1x128xf32>
    %141 = vector.shape_cast %140 : vector<1x1x128xf32> to vector<1x128xf32>
    %142 = vector.broadcast %141 : vector<1x128xf32> to vector<16x128xf32>
    %143 = arith.addf %138, %142 : vector<16x128xf32>
    %144 = arith.addf %121, %143 : vector<16x128xf32>
    %145 = arith.index_cast %c0_i32 : i32 to index
    %c0_54 = arith.constant 0 : index
    %c0_55 = arith.constant 0 : index
    %146 = vector.load %arg18[%145, %c0_54, %c0_55] : memref<6x1x128xf32, #tpu.memory_space<vmem>>, vector<1x1x128xf32>
    %147 = vector.shape_cast %146 : vector<1x1x128xf32> to vector<1x128xf32>
    %148 = arith.index_cast %c0_i32 : i32 to index
    %c0_56 = arith.constant 0 : index
    %c0_57 = arith.constant 0 : index
    %149 = vector.load %arg19[%148, %c0_56, %c0_57] : memref<6x1x128xf32, #tpu.memory_space<vmem>>, vector<1x1x128xf32>
    %150 = vector.shape_cast %149 : vector<1x1x128xf32> to vector<1x128xf32>
    %cst_58 = arith.constant dense<0.000000e+00> : vector<16xf32>
    %151 = vector.multi_reduction <add>, %144, %cst_58 [1] : vector<16x128xf32> to vector<16xf32>
    %152 = vector.shape_cast %151 : vector<16xf32> to vector<16x1xf32>
    %cst_59 = arith.constant 1.280000e+02 : f32
    %153 = vector.broadcast %cst_59 : f32 to vector<16x1xf32>
    %154 = arith.divf %152, %153 : vector<16x1xf32>
    %155 = vector.broadcast %154 : vector<16x1xf32> to vector<16x128xf32>
    %156 = arith.subf %144, %155 : vector<16x128xf32>
    %157 = arith.mulf %156, %156 : vector<16x128xf32>
    %cst_60 = arith.constant dense<0.000000e+00> : vector<16xf32>
    %158 = vector.multi_reduction <add>, %157, %cst_60 [1] : vector<16x128xf32> to vector<16xf32>
    %159 = vector.shape_cast %158 : vector<16xf32> to vector<16x1xf32>
    %cst_61 = arith.constant 1.280000e+02 : f32
    %160 = vector.broadcast %cst_61 : f32 to vector<16x1xf32>
    %161 = arith.divf %159, %160 : vector<16x1xf32>
    %162 = vector.broadcast %154 : vector<16x1xf32> to vector<16x128xf32>
    %163 = arith.subf %144, %162 : vector<16x128xf32>
    %cst_62 = arith.constant 9.99999974E-6 : f32
    %164 = vector.broadcast %cst_62 : f32 to vector<16x1xf32>
    %165 = arith.addf %161, %164 : vector<16x1xf32>
    %166 = math.rsqrt %165 : vector<16x1xf32>
    %167 = vector.broadcast %166 : vector<16x1xf32> to vector<16x128xf32>
    %168 = arith.mulf %163, %167 : vector<16x128xf32>
    %169 = vector.broadcast %147 : vector<1x128xf32> to vector<16x128xf32>
    %170 = arith.mulf %168, %169 : vector<16x128xf32>
    %171 = vector.broadcast %150 : vector<1x128xf32> to vector<16x128xf32>
    %172 = arith.addf %170, %171 : vector<16x128xf32>
    %c1_i32 = arith.constant 1 : i32
    %173 = arith.truncf %172 : vector<16x128xf32> to vector<16x128xbf16>
    %174 = arith.index_cast %c1_i32 : i32 to index
    %c0_63 = arith.constant 0 : index
    %c0_64 = arith.constant 0 : index
    %175 = vector.load %arg8[%174, %c0_63, %c0_64] : memref<6x128x384xbf16, #tpu.memory_space<vmem>>, vector<1x128x384xbf16>
    %176 = vector.shape_cast %175 : vector<1x128x384xbf16> to vector<128x384xbf16>
    %cst_65 = arith.constant dense<0.000000e+00> : vector<16x384xf32>
    %177 = tpu.matmul %173, %176, %cst_65 {dimension_numbers = #tpu.dot_dimension_numbers<[1], [0], [0], [1], [0, 0, 1, 1], [], []>} : vector<16x128xbf16>, vector<128x384xbf16>, vector<16x384xf32> -> vector<16x384xf32>
    %178 = arith.index_cast %c1_i32 : i32 to index
    %c0_66 = arith.constant 0 : index
    %c0_67 = arith.constant 0 : index
    %179 = vector.load %arg9[%178, %c0_66, %c0_67] : memref<6x1x384xf32, #tpu.memory_space<vmem>>, vector<1x1x384xf32>
    %180 = vector.shape_cast %179 : vector<1x1x384xf32> to vector<1x384xf32>
    %181 = vector.broadcast %180 : vector<1x384xf32> to vector<16x384xf32>
    %182 = arith.addf %177, %181 : vector<16x384xf32>
    %183 = vector.extract_strided_slice %182 {offsets = [0, 0], sizes = [16, 32], strides = [1, 1]} : vector<16x384xf32> to vector<16x32xf32>
    %184 = vector.extract_strided_slice %182 {offsets = [0, 32], sizes = [16, 32], strides = [1, 1]} : vector<16x384xf32> to vector<16x32xf32>
    %185 = vector.extract_strided_slice %182 {offsets = [0, 64], sizes = [16, 32], strides = [1, 1]} : vector<16x384xf32> to vector<16x32xf32>
    %186 = vector.extract_strided_slice %182 {offsets = [0, 96], sizes = [16, 32], strides = [1, 1]} : vector<16x384xf32> to vector<16x32xf32>
    %187 = vector.shape_cast %183 : vector<16x32xf32> to vector<1x16x32xf32>
    %188 = vector.shape_cast %184 : vector<16x32xf32> to vector<1x16x32xf32>
    %189 = vector.shape_cast %185 : vector<16x32xf32> to vector<1x16x32xf32>
    %190 = vector.shape_cast %186 : vector<16x32xf32> to vector<1x16x32xf32>
    %191 = tpu.concatenate %187, %188, %189, %190 in 0 : vector<1x16x32xf32>, vector<1x16x32xf32>, vector<1x16x32xf32>, vector<1x16x32xf32> -> vector<4x16x32xf32>
    %192 = vector.extract_strided_slice %182 {offsets = [0, 128], sizes = [16, 32], strides = [1, 1]} : vector<16x384xf32> to vector<16x32xf32>
    %193 = vector.extract_strided_slice %182 {offsets = [0, 160], sizes = [16, 32], strides = [1, 1]} : vector<16x384xf32> to vector<16x32xf32>
    %194 = vector.extract_strided_slice %182 {offsets = [0, 192], sizes = [16, 32], strides = [1, 1]} : vector<16x384xf32> to vector<16x32xf32>
    %195 = vector.extract_strided_slice %182 {offsets = [0, 224], sizes = [16, 32], strides = [1, 1]} : vector<16x384xf32> to vector<16x32xf32>
    %196 = vector.shape_cast %192 : vector<16x32xf32> to vector<1x16x32xf32>
    %197 = vector.shape_cast %193 : vector<16x32xf32> to vector<1x16x32xf32>
    %198 = vector.shape_cast %194 : vector<16x32xf32> to vector<1x16x32xf32>
    %199 = vector.shape_cast %195 : vector<16x32xf32> to vector<1x16x32xf32>
    %200 = tpu.concatenate %196, %197, %198, %199 in 0 : vector<1x16x32xf32>, vector<1x16x32xf32>, vector<1x16x32xf32>, vector<1x16x32xf32> -> vector<4x16x32xf32>
    %201 = vector.extract_strided_slice %182 {offsets = [0, 256], sizes = [16, 32], strides = [1, 1]} : vector<16x384xf32> to vector<16x32xf32>
    %202 = vector.extract_strided_slice %182 {offsets = [0, 288], sizes = [16, 32], strides = [1, 1]} : vector<16x384xf32> to vector<16x32xf32>
    %203 = vector.extract_strided_slice %182 {offsets = [0, 320], sizes = [16, 32], strides = [1, 1]} : vector<16x384xf32> to vector<16x32xf32>
    %204 = vector.extract_strided_slice %182 {offsets = [0, 352], sizes = [16, 32], strides = [1, 1]} : vector<16x384xf32> to vector<16x32xf32>
    %205 = vector.shape_cast %201 : vector<16x32xf32> to vector<1x16x32xf32>
    %206 = vector.shape_cast %202 : vector<16x32xf32> to vector<1x16x32xf32>
    %207 = vector.shape_cast %203 : vector<16x32xf32> to vector<1x16x32xf32>
    %208 = vector.shape_cast %204 : vector<16x32xf32> to vector<1x16x32xf32>
    %209 = tpu.concatenate %205, %206, %207, %208 in 0 : vector<1x16x32xf32>, vector<1x16x32xf32>, vector<1x16x32xf32>, vector<1x16x32xf32> -> vector<4x16x32xf32>
    %cst_68 = arith.constant dense<0.000000e+00> : vector<4x16x16xf32>
    %210 = tpu.matmul %191, %200, %cst_68 {dimension_numbers = #tpu.dot_dimension_numbers<[2], [2], [1], [1], [0, 0, 0, 1, 1, 1], [0], [0]>} : vector<4x16x32xf32>, vector<4x16x32xf32>, vector<4x16x16xf32> -> vector<4x16x16xf32>
    %211 = arith.addf %210, %21 : vector<4x16x16xf32>
    %cst_69 = arith.constant dense<0xFF800000> : vector<4x16xf32>
    %212 = vector.multi_reduction <maximumf>, %211, %cst_69 [2] : vector<4x16x16xf32> to vector<4x16xf32>
    %213 = vector.shape_cast %212 : vector<4x16xf32> to vector<4x16x1xf32>
    %214 = vector.broadcast %213 : vector<4x16x1xf32> to vector<4x16x16xf32>
    %215 = arith.subf %211, %214 : vector<4x16x16xf32>
    %216 = math.exp %215 : vector<4x16x16xf32>
    %cst_70 = arith.constant dense<0.000000e+00> : vector<4x16xf32>
    %217 = vector.multi_reduction <add>, %216, %cst_70 [2] : vector<4x16x16xf32> to vector<4x16xf32>
    %218 = vector.shape_cast %217 : vector<4x16xf32> to vector<4x16x1xf32>
    %219 = tpu.reciprocal %218 {approx = true} : vector<4x16x1xf32> -> vector<4x16x1xf32>
    %220 = vector.broadcast %219 : vector<4x16x1xf32> to vector<4x16x16xf32>
    %221 = arith.mulf %216, %220 : vector<4x16x16xf32>
    %222 = arith.truncf %221 : vector<4x16x16xf32> to vector<4x16x16xbf16>
    %223 = arith.truncf %209 : vector<4x16x32xf32> to vector<4x16x32xbf16>
    %cst_71 = arith.constant dense<0.000000e+00> : vector<4x16x32xf32>
    %224 = tpu.matmul %222, %223, %cst_71 {dimension_numbers = #tpu.dot_dimension_numbers<[2], [1], [1], [2], [0, 0, 0, 1, 1, 2], [0], [0]>} : vector<4x16x16xbf16>, vector<4x16x32xbf16>, vector<4x16x32xf32> -> vector<4x16x32xf32>
    %225 = vector.extract_strided_slice %224 {offsets = [0, 0, 0], sizes = [1, 16, 32], strides = [1, 1, 1]} : vector<4x16x32xf32> to vector<1x16x32xf32>
    %226 = vector.shape_cast %225 : vector<1x16x32xf32> to vector<16x32xf32>
    %227 = vector.extract_strided_slice %224 {offsets = [1, 0, 0], sizes = [1, 16, 32], strides = [1, 1, 1]} : vector<4x16x32xf32> to vector<1x16x32xf32>
    %228 = vector.shape_cast %227 : vector<1x16x32xf32> to vector<16x32xf32>
    %229 = vector.extract_strided_slice %224 {offsets = [2, 0, 0], sizes = [1, 16, 32], strides = [1, 1, 1]} : vector<4x16x32xf32> to vector<1x16x32xf32>
    %230 = vector.shape_cast %229 : vector<1x16x32xf32> to vector<16x32xf32>
    %231 = vector.extract_strided_slice %224 {offsets = [3, 0, 0], sizes = [1, 16, 32], strides = [1, 1, 1]} : vector<4x16x32xf32> to vector<1x16x32xf32>
    %232 = vector.shape_cast %231 : vector<1x16x32xf32> to vector<16x32xf32>
    %233 = tpu.concatenate %226, %228, %230, %232 in 1 : vector<16x32xf32>, vector<16x32xf32>, vector<16x32xf32>, vector<16x32xf32> -> vector<16x128xf32>
    %234 = arith.truncf %233 : vector<16x128xf32> to vector<16x128xbf16>
    %235 = arith.index_cast %c1_i32 : i32 to index
    %c0_72 = arith.constant 0 : index
    %c0_73 = arith.constant 0 : index
    %236 = vector.load %arg10[%235, %c0_72, %c0_73] : memref<6x128x128xbf16, #tpu.memory_space<vmem>>, vector<1x128x128xbf16>
    %237 = vector.shape_cast %236 : vector<1x128x128xbf16> to vector<128x128xbf16>
    %cst_74 = arith.constant dense<0.000000e+00> : vector<16x128xf32>
    %238 = tpu.matmul %234, %237, %cst_74 {dimension_numbers = #tpu.dot_dimension_numbers<[1], [0], [0], [1], [0, 0, 1, 1], [], []>} : vector<16x128xbf16>, vector<128x128xbf16>, vector<16x128xf32> -> vector<16x128xf32>
    %239 = arith.index_cast %c1_i32 : i32 to index
    %c0_75 = arith.constant 0 : index
    %c0_76 = arith.constant 0 : index
    %240 = vector.load %arg11[%239, %c0_75, %c0_76] : memref<6x1x128xf32, #tpu.memory_space<vmem>>, vector<1x1x128xf32>
    %241 = vector.shape_cast %240 : vector<1x1x128xf32> to vector<1x128xf32>
    %242 = vector.broadcast %241 : vector<1x128xf32> to vector<16x128xf32>
    %243 = arith.addf %238, %242 : vector<16x128xf32>
    %244 = arith.addf %172, %243 : vector<16x128xf32>
    %245 = arith.index_cast %c1_i32 : i32 to index
    %c0_77 = arith.constant 0 : index
    %c0_78 = arith.constant 0 : index
    %246 = vector.load %arg12[%245, %c0_77, %c0_78] : memref<6x1x128xf32, #tpu.memory_space<vmem>>, vector<1x1x128xf32>
    %247 = vector.shape_cast %246 : vector<1x1x128xf32> to vector<1x128xf32>
    %248 = arith.index_cast %c1_i32 : i32 to index
    %c0_79 = arith.constant 0 : index
    %c0_80 = arith.constant 0 : index
    %249 = vector.load %arg13[%248, %c0_79, %c0_80] : memref<6x1x128xf32, #tpu.memory_space<vmem>>, vector<1x1x128xf32>
    %250 = vector.shape_cast %249 : vector<1x1x128xf32> to vector<1x128xf32>
    %cst_81 = arith.constant dense<0.000000e+00> : vector<16xf32>
    %251 = vector.multi_reduction <add>, %244, %cst_81 [1] : vector<16x128xf32> to vector<16xf32>
    %252 = vector.shape_cast %251 : vector<16xf32> to vector<16x1xf32>
    %cst_82 = arith.constant 1.280000e+02 : f32
    %253 = vector.broadcast %cst_82 : f32 to vector<16x1xf32>
    %254 = arith.divf %252, %253 : vector<16x1xf32>
    %255 = vector.broadcast %254 : vector<16x1xf32> to vector<16x128xf32>
    %256 = arith.subf %244, %255 : vector<16x128xf32>
    %257 = arith.mulf %256, %256 : vector<16x128xf32>
    %cst_83 = arith.constant dense<0.000000e+00> : vector<16xf32>
    %258 = vector.multi_reduction <add>, %257, %cst_83 [1] : vector<16x128xf32> to vector<16xf32>
    %259 = vector.shape_cast %258 : vector<16xf32> to vector<16x1xf32>
    %cst_84 = arith.constant 1.280000e+02 : f32
    %260 = vector.broadcast %cst_84 : f32 to vector<16x1xf32>
    %261 = arith.divf %259, %260 : vector<16x1xf32>
    %262 = vector.broadcast %254 : vector<16x1xf32> to vector<16x128xf32>
    %263 = arith.subf %244, %262 : vector<16x128xf32>
    %cst_85 = arith.constant 9.99999974E-6 : f32
    %264 = vector.broadcast %cst_85 : f32 to vector<16x1xf32>
    %265 = arith.addf %261, %264 : vector<16x1xf32>
    %266 = math.rsqrt %265 : vector<16x1xf32>
    %267 = vector.broadcast %266 : vector<16x1xf32> to vector<16x128xf32>
    %268 = arith.mulf %263, %267 : vector<16x128xf32>
    %269 = vector.broadcast %247 : vector<1x128xf32> to vector<16x128xf32>
    %270 = arith.mulf %268, %269 : vector<16x128xf32>
    %271 = vector.broadcast %250 : vector<1x128xf32> to vector<16x128xf32>
    %272 = arith.addf %270, %271 : vector<16x128xf32>
    %273 = arith.truncf %272 : vector<16x128xf32> to vector<16x128xbf16>
    %274 = arith.index_cast %c1_i32 : i32 to index
    %c0_86 = arith.constant 0 : index
    %c0_87 = arith.constant 0 : index
    %275 = vector.load %arg14[%274, %c0_86, %c0_87] : memref<6x128x256xbf16, #tpu.memory_space<vmem>>, vector<1x128x256xbf16>
    %276 = vector.shape_cast %275 : vector<1x128x256xbf16> to vector<128x256xbf16>
    %cst_88 = arith.constant dense<0.000000e+00> : vector<16x256xf32>
    %277 = tpu.matmul %273, %276, %cst_88 {dimension_numbers = #tpu.dot_dimension_numbers<[1], [0], [0], [1], [0, 0, 1, 1], [], []>} : vector<16x128xbf16>, vector<128x256xbf16>, vector<16x256xf32> -> vector<16x256xf32>
    %278 = arith.index_cast %c1_i32 : i32 to index
    %c0_89 = arith.constant 0 : index
    %c0_90 = arith.constant 0 : index
    %279 = vector.load %arg15[%278, %c0_89, %c0_90] : memref<6x1x256xf32, #tpu.memory_space<vmem>>, vector<1x1x256xf32>
    %280 = vector.shape_cast %279 : vector<1x1x256xf32> to vector<1x256xf32>
    %281 = vector.broadcast %280 : vector<1x256xf32> to vector<16x256xf32>
    %282 = arith.addf %277, %281 : vector<16x256xf32>
    %cst_91 = arith.constant 0.000000e+00 : f32
    %283 = vector.broadcast %cst_91 : f32 to vector<16x256xf32>
    %284 = arith.maximumf %282, %283 : vector<16x256xf32>
    %285 = arith.truncf %284 : vector<16x256xf32> to vector<16x256xbf16>
    %286 = arith.index_cast %c1_i32 : i32 to index
    %c0_92 = arith.constant 0 : index
    %c0_93 = arith.constant 0 : index
    %287 = vector.load %arg16[%286, %c0_92, %c0_93] : memref<6x256x128xbf16, #tpu.memory_space<vmem>>, vector<1x256x128xbf16>
    %288 = vector.shape_cast %287 : vector<1x256x128xbf16> to vector<256x128xbf16>
    %cst_94 = arith.constant dense<0.000000e+00> : vector<16x128xf32>
    %289 = tpu.matmul %285, %288, %cst_94 {dimension_numbers = #tpu.dot_dimension_numbers<[1], [0], [0], [1], [0, 0, 1, 1], [], []>} : vector<16x256xbf16>, vector<256x128xbf16>, vector<16x128xf32> -> vector<16x128xf32>
    %290 = arith.index_cast %c1_i32 : i32 to index
    %c0_95 = arith.constant 0 : index
    %c0_96 = arith.constant 0 : index
    %291 = vector.load %arg17[%290, %c0_95, %c0_96] : memref<6x1x128xf32, #tpu.memory_space<vmem>>, vector<1x1x128xf32>
    %292 = vector.shape_cast %291 : vector<1x1x128xf32> to vector<1x128xf32>
    %293 = vector.broadcast %292 : vector<1x128xf32> to vector<16x128xf32>
    %294 = arith.addf %289, %293 : vector<16x128xf32>
    %295 = arith.addf %272, %294 : vector<16x128xf32>
    %296 = arith.index_cast %c1_i32 : i32 to index
    %c0_97 = arith.constant 0 : index
    %c0_98 = arith.constant 0 : index
    %297 = vector.load %arg18[%296, %c0_97, %c0_98] : memref<6x1x128xf32, #tpu.memory_space<vmem>>, vector<1x1x128xf32>
    %298 = vector.shape_cast %297 : vector<1x1x128xf32> to vector<1x128xf32>
    %299 = arith.index_cast %c1_i32 : i32 to index
    %c0_99 = arith.constant 0 : index
    %c0_100 = arith.constant 0 : index
    %300 = vector.load %arg19[%299, %c0_99, %c0_100] : memref<6x1x128xf32, #tpu.memory_space<vmem>>, vector<1x1x128xf32>
    %301 = vector.shape_cast %300 : vector<1x1x128xf32> to vector<1x128xf32>
    %cst_101 = arith.constant dense<0.000000e+00> : vector<16xf32>
    %302 = vector.multi_reduction <add>, %295, %cst_101 [1] : vector<16x128xf32> to vector<16xf32>
    %303 = vector.shape_cast %302 : vector<16xf32> to vector<16x1xf32>
    %cst_102 = arith.constant 1.280000e+02 : f32
    %304 = vector.broadcast %cst_102 : f32 to vector<16x1xf32>
    %305 = arith.divf %303, %304 : vector<16x1xf32>
    %306 = vector.broadcast %305 : vector<16x1xf32> to vector<16x128xf32>
    %307 = arith.subf %295, %306 : vector<16x128xf32>
    %308 = arith.mulf %307, %307 : vector<16x128xf32>
    %cst_103 = arith.constant dense<0.000000e+00> : vector<16xf32>
    %309 = vector.multi_reduction <add>, %308, %cst_103 [1] : vector<16x128xf32> to vector<16xf32>
    %310 = vector.shape_cast %309 : vector<16xf32> to vector<16x1xf32>
    %cst_104 = arith.constant 1.280000e+02 : f32
    %311 = vector.broadcast %cst_104 : f32 to vector<16x1xf32>
    %312 = arith.divf %310, %311 : vector<16x1xf32>
    %313 = vector.broadcast %305 : vector<16x1xf32> to vector<16x128xf32>
    %314 = arith.subf %295, %313 : vector<16x128xf32>
    %cst_105 = arith.constant 9.99999974E-6 : f32
    %315 = vector.broadcast %cst_105 : f32 to vector<16x1xf32>
    %316 = arith.addf %312, %315 : vector<16x1xf32>
    %317 = math.rsqrt %316 : vector<16x1xf32>
    %318 = vector.broadcast %317 : vector<16x1xf32> to vector<16x128xf32>
    %319 = arith.mulf %314, %318 : vector<16x128xf32>
    %320 = vector.broadcast %298 : vector<1x128xf32> to vector<16x128xf32>
    %321 = arith.mulf %319, %320 : vector<16x128xf32>
    %322 = vector.broadcast %301 : vector<1x128xf32> to vector<16x128xf32>
    %323 = arith.addf %321, %322 : vector<16x128xf32>
    %c2_i32 = arith.constant 2 : i32
    %324 = arith.truncf %323 : vector<16x128xf32> to vector<16x128xbf16>
    %325 = arith.index_cast %c2_i32 : i32 to index
    %c0_106 = arith.constant 0 : index
    %c0_107 = arith.constant 0 : index
    %326 = vector.load %arg8[%325, %c0_106, %c0_107] : memref<6x128x384xbf16, #tpu.memory_space<vmem>>, vector<1x128x384xbf16>
    %327 = vector.shape_cast %326 : vector<1x128x384xbf16> to vector<128x384xbf16>
    %cst_108 = arith.constant dense<0.000000e+00> : vector<16x384xf32>
    %328 = tpu.matmul %324, %327, %cst_108 {dimension_numbers = #tpu.dot_dimension_numbers<[1], [0], [0], [1], [0, 0, 1, 1], [], []>} : vector<16x128xbf16>, vector<128x384xbf16>, vector<16x384xf32> -> vector<16x384xf32>
    %329 = arith.index_cast %c2_i32 : i32 to index
    %c0_109 = arith.constant 0 : index
    %c0_110 = arith.constant 0 : index
    %330 = vector.load %arg9[%329, %c0_109, %c0_110] : memref<6x1x384xf32, #tpu.memory_space<vmem>>, vector<1x1x384xf32>
    %331 = vector.shape_cast %330 : vector<1x1x384xf32> to vector<1x384xf32>
    %332 = vector.broadcast %331 : vector<1x384xf32> to vector<16x384xf32>
    %333 = arith.addf %328, %332 : vector<16x384xf32>
    %334 = vector.extract_strided_slice %333 {offsets = [0, 0], sizes = [16, 32], strides = [1, 1]} : vector<16x384xf32> to vector<16x32xf32>
    %335 = vector.extract_strided_slice %333 {offsets = [0, 32], sizes = [16, 32], strides = [1, 1]} : vector<16x384xf32> to vector<16x32xf32>
    %336 = vector.extract_strided_slice %333 {offsets = [0, 64], sizes = [16, 32], strides = [1, 1]} : vector<16x384xf32> to vector<16x32xf32>
    %337 = vector.extract_strided_slice %333 {offsets = [0, 96], sizes = [16, 32], strides = [1, 1]} : vector<16x384xf32> to vector<16x32xf32>
    %338 = vector.shape_cast %334 : vector<16x32xf32> to vector<1x16x32xf32>
    %339 = vector.shape_cast %335 : vector<16x32xf32> to vector<1x16x32xf32>
    %340 = vector.shape_cast %336 : vector<16x32xf32> to vector<1x16x32xf32>
    %341 = vector.shape_cast %337 : vector<16x32xf32> to vector<1x16x32xf32>
    %342 = tpu.concatenate %338, %339, %340, %341 in 0 : vector<1x16x32xf32>, vector<1x16x32xf32>, vector<1x16x32xf32>, vector<1x16x32xf32> -> vector<4x16x32xf32>
    %343 = vector.extract_strided_slice %333 {offsets = [0, 128], sizes = [16, 32], strides = [1, 1]} : vector<16x384xf32> to vector<16x32xf32>
    %344 = vector.extract_strided_slice %333 {offsets = [0, 160], sizes = [16, 32], strides = [1, 1]} : vector<16x384xf32> to vector<16x32xf32>
    %345 = vector.extract_strided_slice %333 {offsets = [0, 192], sizes = [16, 32], strides = [1, 1]} : vector<16x384xf32> to vector<16x32xf32>
    %346 = vector.extract_strided_slice %333 {offsets = [0, 224], sizes = [16, 32], strides = [1, 1]} : vector<16x384xf32> to vector<16x32xf32>
    %347 = vector.shape_cast %343 : vector<16x32xf32> to vector<1x16x32xf32>
    %348 = vector.shape_cast %344 : vector<16x32xf32> to vector<1x16x32xf32>
    %349 = vector.shape_cast %345 : vector<16x32xf32> to vector<1x16x32xf32>
    %350 = vector.shape_cast %346 : vector<16x32xf32> to vector<1x16x32xf32>
    %351 = tpu.concatenate %347, %348, %349, %350 in 0 : vector<1x16x32xf32>, vector<1x16x32xf32>, vector<1x16x32xf32>, vector<1x16x32xf32> -> vector<4x16x32xf32>
    %352 = vector.extract_strided_slice %333 {offsets = [0, 256], sizes = [16, 32], strides = [1, 1]} : vector<16x384xf32> to vector<16x32xf32>
    %353 = vector.extract_strided_slice %333 {offsets = [0, 288], sizes = [16, 32], strides = [1, 1]} : vector<16x384xf32> to vector<16x32xf32>
    %354 = vector.extract_strided_slice %333 {offsets = [0, 320], sizes = [16, 32], strides = [1, 1]} : vector<16x384xf32> to vector<16x32xf32>
    %355 = vector.extract_strided_slice %333 {offsets = [0, 352], sizes = [16, 32], strides = [1, 1]} : vector<16x384xf32> to vector<16x32xf32>
    %356 = vector.shape_cast %352 : vector<16x32xf32> to vector<1x16x32xf32>
    %357 = vector.shape_cast %353 : vector<16x32xf32> to vector<1x16x32xf32>
    %358 = vector.shape_cast %354 : vector<16x32xf32> to vector<1x16x32xf32>
    %359 = vector.shape_cast %355 : vector<16x32xf32> to vector<1x16x32xf32>
    %360 = tpu.concatenate %356, %357, %358, %359 in 0 : vector<1x16x32xf32>, vector<1x16x32xf32>, vector<1x16x32xf32>, vector<1x16x32xf32> -> vector<4x16x32xf32>
    %cst_111 = arith.constant dense<0.000000e+00> : vector<4x16x16xf32>
    %361 = tpu.matmul %342, %351, %cst_111 {dimension_numbers = #tpu.dot_dimension_numbers<[2], [2], [1], [1], [0, 0, 0, 1, 1, 1], [0], [0]>} : vector<4x16x32xf32>, vector<4x16x32xf32>, vector<4x16x16xf32> -> vector<4x16x16xf32>
    %362 = arith.addf %361, %21 : vector<4x16x16xf32>
    %cst_112 = arith.constant dense<0xFF800000> : vector<4x16xf32>
    %363 = vector.multi_reduction <maximumf>, %362, %cst_112 [2] : vector<4x16x16xf32> to vector<4x16xf32>
    %364 = vector.shape_cast %363 : vector<4x16xf32> to vector<4x16x1xf32>
    %365 = vector.broadcast %364 : vector<4x16x1xf32> to vector<4x16x16xf32>
    %366 = arith.subf %362, %365 : vector<4x16x16xf32>
    %367 = math.exp %366 : vector<4x16x16xf32>
    %cst_113 = arith.constant dense<0.000000e+00> : vector<4x16xf32>
    %368 = vector.multi_reduction <add>, %367, %cst_113 [2] : vector<4x16x16xf32> to vector<4x16xf32>
    %369 = vector.shape_cast %368 : vector<4x16xf32> to vector<4x16x1xf32>
    %370 = tpu.reciprocal %369 {approx = true} : vector<4x16x1xf32> -> vector<4x16x1xf32>
    %371 = vector.broadcast %370 : vector<4x16x1xf32> to vector<4x16x16xf32>
    %372 = arith.mulf %367, %371 : vector<4x16x16xf32>
    %373 = arith.truncf %372 : vector<4x16x16xf32> to vector<4x16x16xbf16>
    %374 = arith.truncf %360 : vector<4x16x32xf32> to vector<4x16x32xbf16>
    %cst_114 = arith.constant dense<0.000000e+00> : vector<4x16x32xf32>
    %375 = tpu.matmul %373, %374, %cst_114 {dimension_numbers = #tpu.dot_dimension_numbers<[2], [1], [1], [2], [0, 0, 0, 1, 1, 2], [0], [0]>} : vector<4x16x16xbf16>, vector<4x16x32xbf16>, vector<4x16x32xf32> -> vector<4x16x32xf32>
    %376 = vector.extract_strided_slice %375 {offsets = [0, 0, 0], sizes = [1, 16, 32], strides = [1, 1, 1]} : vector<4x16x32xf32> to vector<1x16x32xf32>
    %377 = vector.shape_cast %376 : vector<1x16x32xf32> to vector<16x32xf32>
    %378 = vector.extract_strided_slice %375 {offsets = [1, 0, 0], sizes = [1, 16, 32], strides = [1, 1, 1]} : vector<4x16x32xf32> to vector<1x16x32xf32>
    %379 = vector.shape_cast %378 : vector<1x16x32xf32> to vector<16x32xf32>
    %380 = vector.extract_strided_slice %375 {offsets = [2, 0, 0], sizes = [1, 16, 32], strides = [1, 1, 1]} : vector<4x16x32xf32> to vector<1x16x32xf32>
    %381 = vector.shape_cast %380 : vector<1x16x32xf32> to vector<16x32xf32>
    %382 = vector.extract_strided_slice %375 {offsets = [3, 0, 0], sizes = [1, 16, 32], strides = [1, 1, 1]} : vector<4x16x32xf32> to vector<1x16x32xf32>
    %383 = vector.shape_cast %382 : vector<1x16x32xf32> to vector<16x32xf32>
    %384 = tpu.concatenate %377, %379, %381, %383 in 1 : vector<16x32xf32>, vector<16x32xf32>, vector<16x32xf32>, vector<16x32xf32> -> vector<16x128xf32>
    %385 = arith.truncf %384 : vector<16x128xf32> to vector<16x128xbf16>
    %386 = arith.index_cast %c2_i32 : i32 to index
    %c0_115 = arith.constant 0 : index
    %c0_116 = arith.constant 0 : index
    %387 = vector.load %arg10[%386, %c0_115, %c0_116] : memref<6x128x128xbf16, #tpu.memory_space<vmem>>, vector<1x128x128xbf16>
    %388 = vector.shape_cast %387 : vector<1x128x128xbf16> to vector<128x128xbf16>
    %cst_117 = arith.constant dense<0.000000e+00> : vector<16x128xf32>
    %389 = tpu.matmul %385, %388, %cst_117 {dimension_numbers = #tpu.dot_dimension_numbers<[1], [0], [0], [1], [0, 0, 1, 1], [], []>} : vector<16x128xbf16>, vector<128x128xbf16>, vector<16x128xf32> -> vector<16x128xf32>
    %390 = arith.index_cast %c2_i32 : i32 to index
    %c0_118 = arith.constant 0 : index
    %c0_119 = arith.constant 0 : index
    %391 = vector.load %arg11[%390, %c0_118, %c0_119] : memref<6x1x128xf32, #tpu.memory_space<vmem>>, vector<1x1x128xf32>
    %392 = vector.shape_cast %391 : vector<1x1x128xf32> to vector<1x128xf32>
    %393 = vector.broadcast %392 : vector<1x128xf32> to vector<16x128xf32>
    %394 = arith.addf %389, %393 : vector<16x128xf32>
    %395 = arith.addf %323, %394 : vector<16x128xf32>
    %396 = arith.index_cast %c2_i32 : i32 to index
    %c0_120 = arith.constant 0 : index
    %c0_121 = arith.constant 0 : index
    %397 = vector.load %arg12[%396, %c0_120, %c0_121] : memref<6x1x128xf32, #tpu.memory_space<vmem>>, vector<1x1x128xf32>
    %398 = vector.shape_cast %397 : vector<1x1x128xf32> to vector<1x128xf32>
    %399 = arith.index_cast %c2_i32 : i32 to index
    %c0_122 = arith.constant 0 : index
    %c0_123 = arith.constant 0 : index
    %400 = vector.load %arg13[%399, %c0_122, %c0_123] : memref<6x1x128xf32, #tpu.memory_space<vmem>>, vector<1x1x128xf32>
    %401 = vector.shape_cast %400 : vector<1x1x128xf32> to vector<1x128xf32>
    %cst_124 = arith.constant dense<0.000000e+00> : vector<16xf32>
    %402 = vector.multi_reduction <add>, %395, %cst_124 [1] : vector<16x128xf32> to vector<16xf32>
    %403 = vector.shape_cast %402 : vector<16xf32> to vector<16x1xf32>
    %cst_125 = arith.constant 1.280000e+02 : f32
    %404 = vector.broadcast %cst_125 : f32 to vector<16x1xf32>
    %405 = arith.divf %403, %404 : vector<16x1xf32>
    %406 = vector.broadcast %405 : vector<16x1xf32> to vector<16x128xf32>
    %407 = arith.subf %395, %406 : vector<16x128xf32>
    %408 = arith.mulf %407, %407 : vector<16x128xf32>
    %cst_126 = arith.constant dense<0.000000e+00> : vector<16xf32>
    %409 = vector.multi_reduction <add>, %408, %cst_126 [1] : vector<16x128xf32> to vector<16xf32>
    %410 = vector.shape_cast %409 : vector<16xf32> to vector<16x1xf32>
    %cst_127 = arith.constant 1.280000e+02 : f32
    %411 = vector.broadcast %cst_127 : f32 to vector<16x1xf32>
    %412 = arith.divf %410, %411 : vector<16x1xf32>
    %413 = vector.broadcast %405 : vector<16x1xf32> to vector<16x128xf32>
    %414 = arith.subf %395, %413 : vector<16x128xf32>
    %cst_128 = arith.constant 9.99999974E-6 : f32
    %415 = vector.broadcast %cst_128 : f32 to vector<16x1xf32>
    %416 = arith.addf %412, %415 : vector<16x1xf32>
    %417 = math.rsqrt %416 : vector<16x1xf32>
    %418 = vector.broadcast %417 : vector<16x1xf32> to vector<16x128xf32>
    %419 = arith.mulf %414, %418 : vector<16x128xf32>
    %420 = vector.broadcast %398 : vector<1x128xf32> to vector<16x128xf32>
    %421 = arith.mulf %419, %420 : vector<16x128xf32>
    %422 = vector.broadcast %401 : vector<1x128xf32> to vector<16x128xf32>
    %423 = arith.addf %421, %422 : vector<16x128xf32>
    %424 = arith.truncf %423 : vector<16x128xf32> to vector<16x128xbf16>
    %425 = arith.index_cast %c2_i32 : i32 to index
    %c0_129 = arith.constant 0 : index
    %c0_130 = arith.constant 0 : index
    %426 = vector.load %arg14[%425, %c0_129, %c0_130] : memref<6x128x256xbf16, #tpu.memory_space<vmem>>, vector<1x128x256xbf16>
    %427 = vector.shape_cast %426 : vector<1x128x256xbf16> to vector<128x256xbf16>
    %cst_131 = arith.constant dense<0.000000e+00> : vector<16x256xf32>
    %428 = tpu.matmul %424, %427, %cst_131 {dimension_numbers = #tpu.dot_dimension_numbers<[1], [0], [0], [1], [0, 0, 1, 1], [], []>} : vector<16x128xbf16>, vector<128x256xbf16>, vector<16x256xf32> -> vector<16x256xf32>
    %429 = arith.index_cast %c2_i32 : i32 to index
    %c0_132 = arith.constant 0 : index
    %c0_133 = arith.constant 0 : index
    %430 = vector.load %arg15[%429, %c0_132, %c0_133] : memref<6x1x256xf32, #tpu.memory_space<vmem>>, vector<1x1x256xf32>
    %431 = vector.shape_cast %430 : vector<1x1x256xf32> to vector<1x256xf32>
    %432 = vector.broadcast %431 : vector<1x256xf32> to vector<16x256xf32>
    %433 = arith.addf %428, %432 : vector<16x256xf32>
    %cst_134 = arith.constant 0.000000e+00 : f32
    %434 = vector.broadcast %cst_134 : f32 to vector<16x256xf32>
    %435 = arith.maximumf %433, %434 : vector<16x256xf32>
    %436 = arith.truncf %435 : vector<16x256xf32> to vector<16x256xbf16>
    %437 = arith.index_cast %c2_i32 : i32 to index
    %c0_135 = arith.constant 0 : index
    %c0_136 = arith.constant 0 : index
    %438 = vector.load %arg16[%437, %c0_135, %c0_136] : memref<6x256x128xbf16, #tpu.memory_space<vmem>>, vector<1x256x128xbf16>
    %439 = vector.shape_cast %438 : vector<1x256x128xbf16> to vector<256x128xbf16>
    %cst_137 = arith.constant dense<0.000000e+00> : vector<16x128xf32>
    %440 = tpu.matmul %436, %439, %cst_137 {dimension_numbers = #tpu.dot_dimension_numbers<[1], [0], [0], [1], [0, 0, 1, 1], [], []>} : vector<16x256xbf16>, vector<256x128xbf16>, vector<16x128xf32> -> vector<16x128xf32>
    %441 = arith.index_cast %c2_i32 : i32 to index
    %c0_138 = arith.constant 0 : index
    %c0_139 = arith.constant 0 : index
    %442 = vector.load %arg17[%441, %c0_138, %c0_139] : memref<6x1x128xf32, #tpu.memory_space<vmem>>, vector<1x1x128xf32>
    %443 = vector.shape_cast %442 : vector<1x1x128xf32> to vector<1x128xf32>
    %444 = vector.broadcast %443 : vector<1x128xf32> to vector<16x128xf32>
    %445 = arith.addf %440, %444 : vector<16x128xf32>
    %446 = arith.addf %423, %445 : vector<16x128xf32>
    %447 = arith.index_cast %c2_i32 : i32 to index
    %c0_140 = arith.constant 0 : index
    %c0_141 = arith.constant 0 : index
    %448 = vector.load %arg18[%447, %c0_140, %c0_141] : memref<6x1x128xf32, #tpu.memory_space<vmem>>, vector<1x1x128xf32>
    %449 = vector.shape_cast %448 : vector<1x1x128xf32> to vector<1x128xf32>
    %450 = arith.index_cast %c2_i32 : i32 to index
    %c0_142 = arith.constant 0 : index
    %c0_143 = arith.constant 0 : index
    %451 = vector.load %arg19[%450, %c0_142, %c0_143] : memref<6x1x128xf32, #tpu.memory_space<vmem>>, vector<1x1x128xf32>
    %452 = vector.shape_cast %451 : vector<1x1x128xf32> to vector<1x128xf32>
    %cst_144 = arith.constant dense<0.000000e+00> : vector<16xf32>
    %453 = vector.multi_reduction <add>, %446, %cst_144 [1] : vector<16x128xf32> to vector<16xf32>
    %454 = vector.shape_cast %453 : vector<16xf32> to vector<16x1xf32>
    %cst_145 = arith.constant 1.280000e+02 : f32
    %455 = vector.broadcast %cst_145 : f32 to vector<16x1xf32>
    %456 = arith.divf %454, %455 : vector<16x1xf32>
    %457 = vector.broadcast %456 : vector<16x1xf32> to vector<16x128xf32>
    %458 = arith.subf %446, %457 : vector<16x128xf32>
    %459 = arith.mulf %458, %458 : vector<16x128xf32>
    %cst_146 = arith.constant dense<0.000000e+00> : vector<16xf32>
    %460 = vector.multi_reduction <add>, %459, %cst_146 [1] : vector<16x128xf32> to vector<16xf32>
    %461 = vector.shape_cast %460 : vector<16xf32> to vector<16x1xf32>
    %cst_147 = arith.constant 1.280000e+02 : f32
    %462 = vector.broadcast %cst_147 : f32 to vector<16x1xf32>
    %463 = arith.divf %461, %462 : vector<16x1xf32>
    %464 = vector.broadcast %456 : vector<16x1xf32> to vector<16x128xf32>
    %465 = arith.subf %446, %464 : vector<16x128xf32>
    %cst_148 = arith.constant 9.99999974E-6 : f32
    %466 = vector.broadcast %cst_148 : f32 to vector<16x1xf32>
    %467 = arith.addf %463, %466 : vector<16x1xf32>
    %468 = math.rsqrt %467 : vector<16x1xf32>
    %469 = vector.broadcast %468 : vector<16x1xf32> to vector<16x128xf32>
    %470 = arith.mulf %465, %469 : vector<16x128xf32>
    %471 = vector.broadcast %449 : vector<1x128xf32> to vector<16x128xf32>
    %472 = arith.mulf %470, %471 : vector<16x128xf32>
    %473 = vector.broadcast %452 : vector<1x128xf32> to vector<16x128xf32>
    %474 = arith.addf %472, %473 : vector<16x128xf32>
    %c3_i32 = arith.constant 3 : i32
    %475 = arith.truncf %474 : vector<16x128xf32> to vector<16x128xbf16>
    %476 = arith.index_cast %c3_i32 : i32 to index
    %c0_149 = arith.constant 0 : index
    %c0_150 = arith.constant 0 : index
    %477 = vector.load %arg8[%476, %c0_149, %c0_150] : memref<6x128x384xbf16, #tpu.memory_space<vmem>>, vector<1x128x384xbf16>
    %478 = vector.shape_cast %477 : vector<1x128x384xbf16> to vector<128x384xbf16>
    %cst_151 = arith.constant dense<0.000000e+00> : vector<16x384xf32>
    %479 = tpu.matmul %475, %478, %cst_151 {dimension_numbers = #tpu.dot_dimension_numbers<[1], [0], [0], [1], [0, 0, 1, 1], [], []>} : vector<16x128xbf16>, vector<128x384xbf16>, vector<16x384xf32> -> vector<16x384xf32>
    %480 = arith.index_cast %c3_i32 : i32 to index
    %c0_152 = arith.constant 0 : index
    %c0_153 = arith.constant 0 : index
    %481 = vector.load %arg9[%480, %c0_152, %c0_153] : memref<6x1x384xf32, #tpu.memory_space<vmem>>, vector<1x1x384xf32>
    %482 = vector.shape_cast %481 : vector<1x1x384xf32> to vector<1x384xf32>
    %483 = vector.broadcast %482 : vector<1x384xf32> to vector<16x384xf32>
    %484 = arith.addf %479, %483 : vector<16x384xf32>
    %485 = vector.extract_strided_slice %484 {offsets = [0, 0], sizes = [16, 32], strides = [1, 1]} : vector<16x384xf32> to vector<16x32xf32>
    %486 = vector.extract_strided_slice %484 {offsets = [0, 32], sizes = [16, 32], strides = [1, 1]} : vector<16x384xf32> to vector<16x32xf32>
    %487 = vector.extract_strided_slice %484 {offsets = [0, 64], sizes = [16, 32], strides = [1, 1]} : vector<16x384xf32> to vector<16x32xf32>
    %488 = vector.extract_strided_slice %484 {offsets = [0, 96], sizes = [16, 32], strides = [1, 1]} : vector<16x384xf32> to vector<16x32xf32>
    %489 = vector.shape_cast %485 : vector<16x32xf32> to vector<1x16x32xf32>
    %490 = vector.shape_cast %486 : vector<16x32xf32> to vector<1x16x32xf32>
    %491 = vector.shape_cast %487 : vector<16x32xf32> to vector<1x16x32xf32>
    %492 = vector.shape_cast %488 : vector<16x32xf32> to vector<1x16x32xf32>
    %493 = tpu.concatenate %489, %490, %491, %492 in 0 : vector<1x16x32xf32>, vector<1x16x32xf32>, vector<1x16x32xf32>, vector<1x16x32xf32> -> vector<4x16x32xf32>
    %494 = vector.extract_strided_slice %484 {offsets = [0, 128], sizes = [16, 32], strides = [1, 1]} : vector<16x384xf32> to vector<16x32xf32>
    %495 = vector.extract_strided_slice %484 {offsets = [0, 160], sizes = [16, 32], strides = [1, 1]} : vector<16x384xf32> to vector<16x32xf32>
    %496 = vector.extract_strided_slice %484 {offsets = [0, 192], sizes = [16, 32], strides = [1, 1]} : vector<16x384xf32> to vector<16x32xf32>
    %497 = vector.extract_strided_slice %484 {offsets = [0, 224], sizes = [16, 32], strides = [1, 1]} : vector<16x384xf32> to vector<16x32xf32>
    %498 = vector.shape_cast %494 : vector<16x32xf32> to vector<1x16x32xf32>
    %499 = vector.shape_cast %495 : vector<16x32xf32> to vector<1x16x32xf32>
    %500 = vector.shape_cast %496 : vector<16x32xf32> to vector<1x16x32xf32>
    %501 = vector.shape_cast %497 : vector<16x32xf32> to vector<1x16x32xf32>
    %502 = tpu.concatenate %498, %499, %500, %501 in 0 : vector<1x16x32xf32>, vector<1x16x32xf32>, vector<1x16x32xf32>, vector<1x16x32xf32> -> vector<4x16x32xf32>
    %503 = vector.extract_strided_slice %484 {offsets = [0, 256], sizes = [16, 32], strides = [1, 1]} : vector<16x384xf32> to vector<16x32xf32>
    %504 = vector.extract_strided_slice %484 {offsets = [0, 288], sizes = [16, 32], strides = [1, 1]} : vector<16x384xf32> to vector<16x32xf32>
    %505 = vector.extract_strided_slice %484 {offsets = [0, 320], sizes = [16, 32], strides = [1, 1]} : vector<16x384xf32> to vector<16x32xf32>
    %506 = vector.extract_strided_slice %484 {offsets = [0, 352], sizes = [16, 32], strides = [1, 1]} : vector<16x384xf32> to vector<16x32xf32>
    %507 = vector.shape_cast %503 : vector<16x32xf32> to vector<1x16x32xf32>
    %508 = vector.shape_cast %504 : vector<16x32xf32> to vector<1x16x32xf32>
    %509 = vector.shape_cast %505 : vector<16x32xf32> to vector<1x16x32xf32>
    %510 = vector.shape_cast %506 : vector<16x32xf32> to vector<1x16x32xf32>
    %511 = tpu.concatenate %507, %508, %509, %510 in 0 : vector<1x16x32xf32>, vector<1x16x32xf32>, vector<1x16x32xf32>, vector<1x16x32xf32> -> vector<4x16x32xf32>
    %cst_154 = arith.constant dense<0.000000e+00> : vector<4x16x16xf32>
    %512 = tpu.matmul %493, %502, %cst_154 {dimension_numbers = #tpu.dot_dimension_numbers<[2], [2], [1], [1], [0, 0, 0, 1, 1, 1], [0], [0]>} : vector<4x16x32xf32>, vector<4x16x32xf32>, vector<4x16x16xf32> -> vector<4x16x16xf32>
    %513 = arith.addf %512, %21 : vector<4x16x16xf32>
    %cst_155 = arith.constant dense<0xFF800000> : vector<4x16xf32>
    %514 = vector.multi_reduction <maximumf>, %513, %cst_155 [2] : vector<4x16x16xf32> to vector<4x16xf32>
    %515 = vector.shape_cast %514 : vector<4x16xf32> to vector<4x16x1xf32>
    %516 = vector.broadcast %515 : vector<4x16x1xf32> to vector<4x16x16xf32>
    %517 = arith.subf %513, %516 : vector<4x16x16xf32>
    %518 = math.exp %517 : vector<4x16x16xf32>
    %cst_156 = arith.constant dense<0.000000e+00> : vector<4x16xf32>
    %519 = vector.multi_reduction <add>, %518, %cst_156 [2] : vector<4x16x16xf32> to vector<4x16xf32>
    %520 = vector.shape_cast %519 : vector<4x16xf32> to vector<4x16x1xf32>
    %521 = tpu.reciprocal %520 {approx = true} : vector<4x16x1xf32> -> vector<4x16x1xf32>
    %522 = vector.broadcast %521 : vector<4x16x1xf32> to vector<4x16x16xf32>
    %523 = arith.mulf %518, %522 : vector<4x16x16xf32>
    %524 = arith.truncf %523 : vector<4x16x16xf32> to vector<4x16x16xbf16>
    %525 = arith.truncf %511 : vector<4x16x32xf32> to vector<4x16x32xbf16>
    %cst_157 = arith.constant dense<0.000000e+00> : vector<4x16x32xf32>
    %526 = tpu.matmul %524, %525, %cst_157 {dimension_numbers = #tpu.dot_dimension_numbers<[2], [1], [1], [2], [0, 0, 0, 1, 1, 2], [0], [0]>} : vector<4x16x16xbf16>, vector<4x16x32xbf16>, vector<4x16x32xf32> -> vector<4x16x32xf32>
    %527 = vector.extract_strided_slice %526 {offsets = [0, 0, 0], sizes = [1, 16, 32], strides = [1, 1, 1]} : vector<4x16x32xf32> to vector<1x16x32xf32>
    %528 = vector.shape_cast %527 : vector<1x16x32xf32> to vector<16x32xf32>
    %529 = vector.extract_strided_slice %526 {offsets = [1, 0, 0], sizes = [1, 16, 32], strides = [1, 1, 1]} : vector<4x16x32xf32> to vector<1x16x32xf32>
    %530 = vector.shape_cast %529 : vector<1x16x32xf32> to vector<16x32xf32>
    %531 = vector.extract_strided_slice %526 {offsets = [2, 0, 0], sizes = [1, 16, 32], strides = [1, 1, 1]} : vector<4x16x32xf32> to vector<1x16x32xf32>
    %532 = vector.shape_cast %531 : vector<1x16x32xf32> to vector<16x32xf32>
    %533 = vector.extract_strided_slice %526 {offsets = [3, 0, 0], sizes = [1, 16, 32], strides = [1, 1, 1]} : vector<4x16x32xf32> to vector<1x16x32xf32>
    %534 = vector.shape_cast %533 : vector<1x16x32xf32> to vector<16x32xf32>
    %535 = tpu.concatenate %528, %530, %532, %534 in 1 : vector<16x32xf32>, vector<16x32xf32>, vector<16x32xf32>, vector<16x32xf32> -> vector<16x128xf32>
    %536 = arith.truncf %535 : vector<16x128xf32> to vector<16x128xbf16>
    %537 = arith.index_cast %c3_i32 : i32 to index
    %c0_158 = arith.constant 0 : index
    %c0_159 = arith.constant 0 : index
    %538 = vector.load %arg10[%537, %c0_158, %c0_159] : memref<6x128x128xbf16, #tpu.memory_space<vmem>>, vector<1x128x128xbf16>
    %539 = vector.shape_cast %538 : vector<1x128x128xbf16> to vector<128x128xbf16>
    %cst_160 = arith.constant dense<0.000000e+00> : vector<16x128xf32>
    %540 = tpu.matmul %536, %539, %cst_160 {dimension_numbers = #tpu.dot_dimension_numbers<[1], [0], [0], [1], [0, 0, 1, 1], [], []>} : vector<16x128xbf16>, vector<128x128xbf16>, vector<16x128xf32> -> vector<16x128xf32>
    %541 = arith.index_cast %c3_i32 : i32 to index
    %c0_161 = arith.constant 0 : index
    %c0_162 = arith.constant 0 : index
    %542 = vector.load %arg11[%541, %c0_161, %c0_162] : memref<6x1x128xf32, #tpu.memory_space<vmem>>, vector<1x1x128xf32>
    %543 = vector.shape_cast %542 : vector<1x1x128xf32> to vector<1x128xf32>
    %544 = vector.broadcast %543 : vector<1x128xf32> to vector<16x128xf32>
    %545 = arith.addf %540, %544 : vector<16x128xf32>
    %546 = arith.addf %474, %545 : vector<16x128xf32>
    %547 = arith.index_cast %c3_i32 : i32 to index
    %c0_163 = arith.constant 0 : index
    %c0_164 = arith.constant 0 : index
    %548 = vector.load %arg12[%547, %c0_163, %c0_164] : memref<6x1x128xf32, #tpu.memory_space<vmem>>, vector<1x1x128xf32>
    %549 = vector.shape_cast %548 : vector<1x1x128xf32> to vector<1x128xf32>
    %550 = arith.index_cast %c3_i32 : i32 to index
    %c0_165 = arith.constant 0 : index
    %c0_166 = arith.constant 0 : index
    %551 = vector.load %arg13[%550, %c0_165, %c0_166] : memref<6x1x128xf32, #tpu.memory_space<vmem>>, vector<1x1x128xf32>
    %552 = vector.shape_cast %551 : vector<1x1x128xf32> to vector<1x128xf32>
    %cst_167 = arith.constant dense<0.000000e+00> : vector<16xf32>
    %553 = vector.multi_reduction <add>, %546, %cst_167 [1] : vector<16x128xf32> to vector<16xf32>
    %554 = vector.shape_cast %553 : vector<16xf32> to vector<16x1xf32>
    %cst_168 = arith.constant 1.280000e+02 : f32
    %555 = vector.broadcast %cst_168 : f32 to vector<16x1xf32>
    %556 = arith.divf %554, %555 : vector<16x1xf32>
    %557 = vector.broadcast %556 : vector<16x1xf32> to vector<16x128xf32>
    %558 = arith.subf %546, %557 : vector<16x128xf32>
    %559 = arith.mulf %558, %558 : vector<16x128xf32>
    %cst_169 = arith.constant dense<0.000000e+00> : vector<16xf32>
    %560 = vector.multi_reduction <add>, %559, %cst_169 [1] : vector<16x128xf32> to vector<16xf32>
    %561 = vector.shape_cast %560 : vector<16xf32> to vector<16x1xf32>
    %cst_170 = arith.constant 1.280000e+02 : f32
    %562 = vector.broadcast %cst_170 : f32 to vector<16x1xf32>
    %563 = arith.divf %561, %562 : vector<16x1xf32>
    %564 = vector.broadcast %556 : vector<16x1xf32> to vector<16x128xf32>
    %565 = arith.subf %546, %564 : vector<16x128xf32>
    %cst_171 = arith.constant 9.99999974E-6 : f32
    %566 = vector.broadcast %cst_171 : f32 to vector<16x1xf32>
    %567 = arith.addf %563, %566 : vector<16x1xf32>
    %568 = math.rsqrt %567 : vector<16x1xf32>
    %569 = vector.broadcast %568 : vector<16x1xf32> to vector<16x128xf32>
    %570 = arith.mulf %565, %569 : vector<16x128xf32>
    %571 = vector.broadcast %549 : vector<1x128xf32> to vector<16x128xf32>
    %572 = arith.mulf %570, %571 : vector<16x128xf32>
    %573 = vector.broadcast %552 : vector<1x128xf32> to vector<16x128xf32>
    %574 = arith.addf %572, %573 : vector<16x128xf32>
    %575 = arith.truncf %574 : vector<16x128xf32> to vector<16x128xbf16>
    %576 = arith.index_cast %c3_i32 : i32 to index
    %c0_172 = arith.constant 0 : index
    %c0_173 = arith.constant 0 : index
    %577 = vector.load %arg14[%576, %c0_172, %c0_173] : memref<6x128x256xbf16, #tpu.memory_space<vmem>>, vector<1x128x256xbf16>
    %578 = vector.shape_cast %577 : vector<1x128x256xbf16> to vector<128x256xbf16>
    %cst_174 = arith.constant dense<0.000000e+00> : vector<16x256xf32>
    %579 = tpu.matmul %575, %578, %cst_174 {dimension_numbers = #tpu.dot_dimension_numbers<[1], [0], [0], [1], [0, 0, 1, 1], [], []>} : vector<16x128xbf16>, vector<128x256xbf16>, vector<16x256xf32> -> vector<16x256xf32>
    %580 = arith.index_cast %c3_i32 : i32 to index
    %c0_175 = arith.constant 0 : index
    %c0_176 = arith.constant 0 : index
    %581 = vector.load %arg15[%580, %c0_175, %c0_176] : memref<6x1x256xf32, #tpu.memory_space<vmem>>, vector<1x1x256xf32>
    %582 = vector.shape_cast %581 : vector<1x1x256xf32> to vector<1x256xf32>
    %583 = vector.broadcast %582 : vector<1x256xf32> to vector<16x256xf32>
    %584 = arith.addf %579, %583 : vector<16x256xf32>
    %cst_177 = arith.constant 0.000000e+00 : f32
    %585 = vector.broadcast %cst_177 : f32 to vector<16x256xf32>
    %586 = arith.maximumf %584, %585 : vector<16x256xf32>
    %587 = arith.truncf %586 : vector<16x256xf32> to vector<16x256xbf16>
    %588 = arith.index_cast %c3_i32 : i32 to index
    %c0_178 = arith.constant 0 : index
    %c0_179 = arith.constant 0 : index
    %589 = vector.load %arg16[%588, %c0_178, %c0_179] : memref<6x256x128xbf16, #tpu.memory_space<vmem>>, vector<1x256x128xbf16>
    %590 = vector.shape_cast %589 : vector<1x256x128xbf16> to vector<256x128xbf16>
    %cst_180 = arith.constant dense<0.000000e+00> : vector<16x128xf32>
    %591 = tpu.matmul %587, %590, %cst_180 {dimension_numbers = #tpu.dot_dimension_numbers<[1], [0], [0], [1], [0, 0, 1, 1], [], []>} : vector<16x256xbf16>, vector<256x128xbf16>, vector<16x128xf32> -> vector<16x128xf32>
    %592 = arith.index_cast %c3_i32 : i32 to index
    %c0_181 = arith.constant 0 : index
    %c0_182 = arith.constant 0 : index
    %593 = vector.load %arg17[%592, %c0_181, %c0_182] : memref<6x1x128xf32, #tpu.memory_space<vmem>>, vector<1x1x128xf32>
    %594 = vector.shape_cast %593 : vector<1x1x128xf32> to vector<1x128xf32>
    %595 = vector.broadcast %594 : vector<1x128xf32> to vector<16x128xf32>
    %596 = arith.addf %591, %595 : vector<16x128xf32>
    %597 = arith.addf %574, %596 : vector<16x128xf32>
    %598 = arith.index_cast %c3_i32 : i32 to index
    %c0_183 = arith.constant 0 : index
    %c0_184 = arith.constant 0 : index
    %599 = vector.load %arg18[%598, %c0_183, %c0_184] : memref<6x1x128xf32, #tpu.memory_space<vmem>>, vector<1x1x128xf32>
    %600 = vector.shape_cast %599 : vector<1x1x128xf32> to vector<1x128xf32>
    %601 = arith.index_cast %c3_i32 : i32 to index
    %c0_185 = arith.constant 0 : index
    %c0_186 = arith.constant 0 : index
    %602 = vector.load %arg19[%601, %c0_185, %c0_186] : memref<6x1x128xf32, #tpu.memory_space<vmem>>, vector<1x1x128xf32>
    %603 = vector.shape_cast %602 : vector<1x1x128xf32> to vector<1x128xf32>
    %cst_187 = arith.constant dense<0.000000e+00> : vector<16xf32>
    %604 = vector.multi_reduction <add>, %597, %cst_187 [1] : vector<16x128xf32> to vector<16xf32>
    %605 = vector.shape_cast %604 : vector<16xf32> to vector<16x1xf32>
    %cst_188 = arith.constant 1.280000e+02 : f32
    %606 = vector.broadcast %cst_188 : f32 to vector<16x1xf32>
    %607 = arith.divf %605, %606 : vector<16x1xf32>
    %608 = vector.broadcast %607 : vector<16x1xf32> to vector<16x128xf32>
    %609 = arith.subf %597, %608 : vector<16x128xf32>
    %610 = arith.mulf %609, %609 : vector<16x128xf32>
    %cst_189 = arith.constant dense<0.000000e+00> : vector<16xf32>
    %611 = vector.multi_reduction <add>, %610, %cst_189 [1] : vector<16x128xf32> to vector<16xf32>
    %612 = vector.shape_cast %611 : vector<16xf32> to vector<16x1xf32>
    %cst_190 = arith.constant 1.280000e+02 : f32
    %613 = vector.broadcast %cst_190 : f32 to vector<16x1xf32>
    %614 = arith.divf %612, %613 : vector<16x1xf32>
    %615 = vector.broadcast %607 : vector<16x1xf32> to vector<16x128xf32>
    %616 = arith.subf %597, %615 : vector<16x128xf32>
    %cst_191 = arith.constant 9.99999974E-6 : f32
    %617 = vector.broadcast %cst_191 : f32 to vector<16x1xf32>
    %618 = arith.addf %614, %617 : vector<16x1xf32>
    %619 = math.rsqrt %618 : vector<16x1xf32>
    %620 = vector.broadcast %619 : vector<16x1xf32> to vector<16x128xf32>
    %621 = arith.mulf %616, %620 : vector<16x128xf32>
    %622 = vector.broadcast %600 : vector<1x128xf32> to vector<16x128xf32>
    %623 = arith.mulf %621, %622 : vector<16x128xf32>
    %624 = vector.broadcast %603 : vector<1x128xf32> to vector<16x128xf32>
    %625 = arith.addf %623, %624 : vector<16x128xf32>
    %c4_i32 = arith.constant 4 : i32
    %626 = arith.truncf %625 : vector<16x128xf32> to vector<16x128xbf16>
    %627 = arith.index_cast %c4_i32 : i32 to index
    %c0_192 = arith.constant 0 : index
    %c0_193 = arith.constant 0 : index
    %628 = vector.load %arg8[%627, %c0_192, %c0_193] : memref<6x128x384xbf16, #tpu.memory_space<vmem>>, vector<1x128x384xbf16>
    %629 = vector.shape_cast %628 : vector<1x128x384xbf16> to vector<128x384xbf16>
    %cst_194 = arith.constant dense<0.000000e+00> : vector<16x384xf32>
    %630 = tpu.matmul %626, %629, %cst_194 {dimension_numbers = #tpu.dot_dimension_numbers<[1], [0], [0], [1], [0, 0, 1, 1], [], []>} : vector<16x128xbf16>, vector<128x384xbf16>, vector<16x384xf32> -> vector<16x384xf32>
    %631 = arith.index_cast %c4_i32 : i32 to index
    %c0_195 = arith.constant 0 : index
    %c0_196 = arith.constant 0 : index
    %632 = vector.load %arg9[%631, %c0_195, %c0_196] : memref<6x1x384xf32, #tpu.memory_space<vmem>>, vector<1x1x384xf32>
    %633 = vector.shape_cast %632 : vector<1x1x384xf32> to vector<1x384xf32>
    %634 = vector.broadcast %633 : vector<1x384xf32> to vector<16x384xf32>
    %635 = arith.addf %630, %634 : vector<16x384xf32>
    %636 = vector.extract_strided_slice %635 {offsets = [0, 0], sizes = [16, 32], strides = [1, 1]} : vector<16x384xf32> to vector<16x32xf32>
    %637 = vector.extract_strided_slice %635 {offsets = [0, 32], sizes = [16, 32], strides = [1, 1]} : vector<16x384xf32> to vector<16x32xf32>
    %638 = vector.extract_strided_slice %635 {offsets = [0, 64], sizes = [16, 32], strides = [1, 1]} : vector<16x384xf32> to vector<16x32xf32>
    %639 = vector.extract_strided_slice %635 {offsets = [0, 96], sizes = [16, 32], strides = [1, 1]} : vector<16x384xf32> to vector<16x32xf32>
    %640 = vector.shape_cast %636 : vector<16x32xf32> to vector<1x16x32xf32>
    %641 = vector.shape_cast %637 : vector<16x32xf32> to vector<1x16x32xf32>
    %642 = vector.shape_cast %638 : vector<16x32xf32> to vector<1x16x32xf32>
    %643 = vector.shape_cast %639 : vector<16x32xf32> to vector<1x16x32xf32>
    %644 = tpu.concatenate %640, %641, %642, %643 in 0 : vector<1x16x32xf32>, vector<1x16x32xf32>, vector<1x16x32xf32>, vector<1x16x32xf32> -> vector<4x16x32xf32>
    %645 = vector.extract_strided_slice %635 {offsets = [0, 128], sizes = [16, 32], strides = [1, 1]} : vector<16x384xf32> to vector<16x32xf32>
    %646 = vector.extract_strided_slice %635 {offsets = [0, 160], sizes = [16, 32], strides = [1, 1]} : vector<16x384xf32> to vector<16x32xf32>
    %647 = vector.extract_strided_slice %635 {offsets = [0, 192], sizes = [16, 32], strides = [1, 1]} : vector<16x384xf32> to vector<16x32xf32>
    %648 = vector.extract_strided_slice %635 {offsets = [0, 224], sizes = [16, 32], strides = [1, 1]} : vector<16x384xf32> to vector<16x32xf32>
    %649 = vector.shape_cast %645 : vector<16x32xf32> to vector<1x16x32xf32>
    %650 = vector.shape_cast %646 : vector<16x32xf32> to vector<1x16x32xf32>
    %651 = vector.shape_cast %647 : vector<16x32xf32> to vector<1x16x32xf32>
    %652 = vector.shape_cast %648 : vector<16x32xf32> to vector<1x16x32xf32>
    %653 = tpu.concatenate %649, %650, %651, %652 in 0 : vector<1x16x32xf32>, vector<1x16x32xf32>, vector<1x16x32xf32>, vector<1x16x32xf32> -> vector<4x16x32xf32>
    %654 = vector.extract_strided_slice %635 {offsets = [0, 256], sizes = [16, 32], strides = [1, 1]} : vector<16x384xf32> to vector<16x32xf32>
    %655 = vector.extract_strided_slice %635 {offsets = [0, 288], sizes = [16, 32], strides = [1, 1]} : vector<16x384xf32> to vector<16x32xf32>
    %656 = vector.extract_strided_slice %635 {offsets = [0, 320], sizes = [16, 32], strides = [1, 1]} : vector<16x384xf32> to vector<16x32xf32>
    %657 = vector.extract_strided_slice %635 {offsets = [0, 352], sizes = [16, 32], strides = [1, 1]} : vector<16x384xf32> to vector<16x32xf32>
    %658 = vector.shape_cast %654 : vector<16x32xf32> to vector<1x16x32xf32>
    %659 = vector.shape_cast %655 : vector<16x32xf32> to vector<1x16x32xf32>
    %660 = vector.shape_cast %656 : vector<16x32xf32> to vector<1x16x32xf32>
    %661 = vector.shape_cast %657 : vector<16x32xf32> to vector<1x16x32xf32>
    %662 = tpu.concatenate %658, %659, %660, %661 in 0 : vector<1x16x32xf32>, vector<1x16x32xf32>, vector<1x16x32xf32>, vector<1x16x32xf32> -> vector<4x16x32xf32>
    %cst_197 = arith.constant dense<0.000000e+00> : vector<4x16x16xf32>
    %663 = tpu.matmul %644, %653, %cst_197 {dimension_numbers = #tpu.dot_dimension_numbers<[2], [2], [1], [1], [0, 0, 0, 1, 1, 1], [0], [0]>} : vector<4x16x32xf32>, vector<4x16x32xf32>, vector<4x16x16xf32> -> vector<4x16x16xf32>
    %664 = arith.addf %663, %21 : vector<4x16x16xf32>
    %cst_198 = arith.constant dense<0xFF800000> : vector<4x16xf32>
    %665 = vector.multi_reduction <maximumf>, %664, %cst_198 [2] : vector<4x16x16xf32> to vector<4x16xf32>
    %666 = vector.shape_cast %665 : vector<4x16xf32> to vector<4x16x1xf32>
    %667 = vector.broadcast %666 : vector<4x16x1xf32> to vector<4x16x16xf32>
    %668 = arith.subf %664, %667 : vector<4x16x16xf32>
    %669 = math.exp %668 : vector<4x16x16xf32>
    %cst_199 = arith.constant dense<0.000000e+00> : vector<4x16xf32>
    %670 = vector.multi_reduction <add>, %669, %cst_199 [2] : vector<4x16x16xf32> to vector<4x16xf32>
    %671 = vector.shape_cast %670 : vector<4x16xf32> to vector<4x16x1xf32>
    %672 = tpu.reciprocal %671 {approx = true} : vector<4x16x1xf32> -> vector<4x16x1xf32>
    %673 = vector.broadcast %672 : vector<4x16x1xf32> to vector<4x16x16xf32>
    %674 = arith.mulf %669, %673 : vector<4x16x16xf32>
    %675 = arith.truncf %674 : vector<4x16x16xf32> to vector<4x16x16xbf16>
    %676 = arith.truncf %662 : vector<4x16x32xf32> to vector<4x16x32xbf16>
    %cst_200 = arith.constant dense<0.000000e+00> : vector<4x16x32xf32>
    %677 = tpu.matmul %675, %676, %cst_200 {dimension_numbers = #tpu.dot_dimension_numbers<[2], [1], [1], [2], [0, 0, 0, 1, 1, 2], [0], [0]>} : vector<4x16x16xbf16>, vector<4x16x32xbf16>, vector<4x16x32xf32> -> vector<4x16x32xf32>
    %678 = vector.extract_strided_slice %677 {offsets = [0, 0, 0], sizes = [1, 16, 32], strides = [1, 1, 1]} : vector<4x16x32xf32> to vector<1x16x32xf32>
    %679 = vector.shape_cast %678 : vector<1x16x32xf32> to vector<16x32xf32>
    %680 = vector.extract_strided_slice %677 {offsets = [1, 0, 0], sizes = [1, 16, 32], strides = [1, 1, 1]} : vector<4x16x32xf32> to vector<1x16x32xf32>
    %681 = vector.shape_cast %680 : vector<1x16x32xf32> to vector<16x32xf32>
    %682 = vector.extract_strided_slice %677 {offsets = [2, 0, 0], sizes = [1, 16, 32], strides = [1, 1, 1]} : vector<4x16x32xf32> to vector<1x16x32xf32>
    %683 = vector.shape_cast %682 : vector<1x16x32xf32> to vector<16x32xf32>
    %684 = vector.extract_strided_slice %677 {offsets = [3, 0, 0], sizes = [1, 16, 32], strides = [1, 1, 1]} : vector<4x16x32xf32> to vector<1x16x32xf32>
    %685 = vector.shape_cast %684 : vector<1x16x32xf32> to vector<16x32xf32>
    %686 = tpu.concatenate %679, %681, %683, %685 in 1 : vector<16x32xf32>, vector<16x32xf32>, vector<16x32xf32>, vector<16x32xf32> -> vector<16x128xf32>
    %687 = arith.truncf %686 : vector<16x128xf32> to vector<16x128xbf16>
    %688 = arith.index_cast %c4_i32 : i32 to index
    %c0_201 = arith.constant 0 : index
    %c0_202 = arith.constant 0 : index
    %689 = vector.load %arg10[%688, %c0_201, %c0_202] : memref<6x128x128xbf16, #tpu.memory_space<vmem>>, vector<1x128x128xbf16>
    %690 = vector.shape_cast %689 : vector<1x128x128xbf16> to vector<128x128xbf16>
    %cst_203 = arith.constant dense<0.000000e+00> : vector<16x128xf32>
    %691 = tpu.matmul %687, %690, %cst_203 {dimension_numbers = #tpu.dot_dimension_numbers<[1], [0], [0], [1], [0, 0, 1, 1], [], []>} : vector<16x128xbf16>, vector<128x128xbf16>, vector<16x128xf32> -> vector<16x128xf32>
    %692 = arith.index_cast %c4_i32 : i32 to index
    %c0_204 = arith.constant 0 : index
    %c0_205 = arith.constant 0 : index
    %693 = vector.load %arg11[%692, %c0_204, %c0_205] : memref<6x1x128xf32, #tpu.memory_space<vmem>>, vector<1x1x128xf32>
    %694 = vector.shape_cast %693 : vector<1x1x128xf32> to vector<1x128xf32>
    %695 = vector.broadcast %694 : vector<1x128xf32> to vector<16x128xf32>
    %696 = arith.addf %691, %695 : vector<16x128xf32>
    %697 = arith.addf %625, %696 : vector<16x128xf32>
    %698 = arith.index_cast %c4_i32 : i32 to index
    %c0_206 = arith.constant 0 : index
    %c0_207 = arith.constant 0 : index
    %699 = vector.load %arg12[%698, %c0_206, %c0_207] : memref<6x1x128xf32, #tpu.memory_space<vmem>>, vector<1x1x128xf32>
    %700 = vector.shape_cast %699 : vector<1x1x128xf32> to vector<1x128xf32>
    %701 = arith.index_cast %c4_i32 : i32 to index
    %c0_208 = arith.constant 0 : index
    %c0_209 = arith.constant 0 : index
    %702 = vector.load %arg13[%701, %c0_208, %c0_209] : memref<6x1x128xf32, #tpu.memory_space<vmem>>, vector<1x1x128xf32>
    %703 = vector.shape_cast %702 : vector<1x1x128xf32> to vector<1x128xf32>
    %cst_210 = arith.constant dense<0.000000e+00> : vector<16xf32>
    %704 = vector.multi_reduction <add>, %697, %cst_210 [1] : vector<16x128xf32> to vector<16xf32>
    %705 = vector.shape_cast %704 : vector<16xf32> to vector<16x1xf32>
    %cst_211 = arith.constant 1.280000e+02 : f32
    %706 = vector.broadcast %cst_211 : f32 to vector<16x1xf32>
    %707 = arith.divf %705, %706 : vector<16x1xf32>
    %708 = vector.broadcast %707 : vector<16x1xf32> to vector<16x128xf32>
    %709 = arith.subf %697, %708 : vector<16x128xf32>
    %710 = arith.mulf %709, %709 : vector<16x128xf32>
    %cst_212 = arith.constant dense<0.000000e+00> : vector<16xf32>
    %711 = vector.multi_reduction <add>, %710, %cst_212 [1] : vector<16x128xf32> to vector<16xf32>
    %712 = vector.shape_cast %711 : vector<16xf32> to vector<16x1xf32>
    %cst_213 = arith.constant 1.280000e+02 : f32
    %713 = vector.broadcast %cst_213 : f32 to vector<16x1xf32>
    %714 = arith.divf %712, %713 : vector<16x1xf32>
    %715 = vector.broadcast %707 : vector<16x1xf32> to vector<16x128xf32>
    %716 = arith.subf %697, %715 : vector<16x128xf32>
    %cst_214 = arith.constant 9.99999974E-6 : f32
    %717 = vector.broadcast %cst_214 : f32 to vector<16x1xf32>
    %718 = arith.addf %714, %717 : vector<16x1xf32>
    %719 = math.rsqrt %718 : vector<16x1xf32>
    %720 = vector.broadcast %719 : vector<16x1xf32> to vector<16x128xf32>
    %721 = arith.mulf %716, %720 : vector<16x128xf32>
    %722 = vector.broadcast %700 : vector<1x128xf32> to vector<16x128xf32>
    %723 = arith.mulf %721, %722 : vector<16x128xf32>
    %724 = vector.broadcast %703 : vector<1x128xf32> to vector<16x128xf32>
    %725 = arith.addf %723, %724 : vector<16x128xf32>
    %726 = arith.truncf %725 : vector<16x128xf32> to vector<16x128xbf16>
    %727 = arith.index_cast %c4_i32 : i32 to index
    %c0_215 = arith.constant 0 : index
    %c0_216 = arith.constant 0 : index
    %728 = vector.load %arg14[%727, %c0_215, %c0_216] : memref<6x128x256xbf16, #tpu.memory_space<vmem>>, vector<1x128x256xbf16>
    %729 = vector.shape_cast %728 : vector<1x128x256xbf16> to vector<128x256xbf16>
    %cst_217 = arith.constant dense<0.000000e+00> : vector<16x256xf32>
    %730 = tpu.matmul %726, %729, %cst_217 {dimension_numbers = #tpu.dot_dimension_numbers<[1], [0], [0], [1], [0, 0, 1, 1], [], []>} : vector<16x128xbf16>, vector<128x256xbf16>, vector<16x256xf32> -> vector<16x256xf32>
    %731 = arith.index_cast %c4_i32 : i32 to index
    %c0_218 = arith.constant 0 : index
    %c0_219 = arith.constant 0 : index
    %732 = vector.load %arg15[%731, %c0_218, %c0_219] : memref<6x1x256xf32, #tpu.memory_space<vmem>>, vector<1x1x256xf32>
    %733 = vector.shape_cast %732 : vector<1x1x256xf32> to vector<1x256xf32>
    %734 = vector.broadcast %733 : vector<1x256xf32> to vector<16x256xf32>
    %735 = arith.addf %730, %734 : vector<16x256xf32>
    %cst_220 = arith.constant 0.000000e+00 : f32
    %736 = vector.broadcast %cst_220 : f32 to vector<16x256xf32>
    %737 = arith.maximumf %735, %736 : vector<16x256xf32>
    %738 = arith.truncf %737 : vector<16x256xf32> to vector<16x256xbf16>
    %739 = arith.index_cast %c4_i32 : i32 to index
    %c0_221 = arith.constant 0 : index
    %c0_222 = arith.constant 0 : index
    %740 = vector.load %arg16[%739, %c0_221, %c0_222] : memref<6x256x128xbf16, #tpu.memory_space<vmem>>, vector<1x256x128xbf16>
    %741 = vector.shape_cast %740 : vector<1x256x128xbf16> to vector<256x128xbf16>
    %cst_223 = arith.constant dense<0.000000e+00> : vector<16x128xf32>
    %742 = tpu.matmul %738, %741, %cst_223 {dimension_numbers = #tpu.dot_dimension_numbers<[1], [0], [0], [1], [0, 0, 1, 1], [], []>} : vector<16x256xbf16>, vector<256x128xbf16>, vector<16x128xf32> -> vector<16x128xf32>
    %743 = arith.index_cast %c4_i32 : i32 to index
    %c0_224 = arith.constant 0 : index
    %c0_225 = arith.constant 0 : index
    %744 = vector.load %arg17[%743, %c0_224, %c0_225] : memref<6x1x128xf32, #tpu.memory_space<vmem>>, vector<1x1x128xf32>
    %745 = vector.shape_cast %744 : vector<1x1x128xf32> to vector<1x128xf32>
    %746 = vector.broadcast %745 : vector<1x128xf32> to vector<16x128xf32>
    %747 = arith.addf %742, %746 : vector<16x128xf32>
    %748 = arith.addf %725, %747 : vector<16x128xf32>
    %749 = arith.index_cast %c4_i32 : i32 to index
    %c0_226 = arith.constant 0 : index
    %c0_227 = arith.constant 0 : index
    %750 = vector.load %arg18[%749, %c0_226, %c0_227] : memref<6x1x128xf32, #tpu.memory_space<vmem>>, vector<1x1x128xf32>
    %751 = vector.shape_cast %750 : vector<1x1x128xf32> to vector<1x128xf32>
    %752 = arith.index_cast %c4_i32 : i32 to index
    %c0_228 = arith.constant 0 : index
    %c0_229 = arith.constant 0 : index
    %753 = vector.load %arg19[%752, %c0_228, %c0_229] : memref<6x1x128xf32, #tpu.memory_space<vmem>>, vector<1x1x128xf32>
    %754 = vector.shape_cast %753 : vector<1x1x128xf32> to vector<1x128xf32>
    %cst_230 = arith.constant dense<0.000000e+00> : vector<16xf32>
    %755 = vector.multi_reduction <add>, %748, %cst_230 [1] : vector<16x128xf32> to vector<16xf32>
    %756 = vector.shape_cast %755 : vector<16xf32> to vector<16x1xf32>
    %cst_231 = arith.constant 1.280000e+02 : f32
    %757 = vector.broadcast %cst_231 : f32 to vector<16x1xf32>
    %758 = arith.divf %756, %757 : vector<16x1xf32>
    %759 = vector.broadcast %758 : vector<16x1xf32> to vector<16x128xf32>
    %760 = arith.subf %748, %759 : vector<16x128xf32>
    %761 = arith.mulf %760, %760 : vector<16x128xf32>
    %cst_232 = arith.constant dense<0.000000e+00> : vector<16xf32>
    %762 = vector.multi_reduction <add>, %761, %cst_232 [1] : vector<16x128xf32> to vector<16xf32>
    %763 = vector.shape_cast %762 : vector<16xf32> to vector<16x1xf32>
    %cst_233 = arith.constant 1.280000e+02 : f32
    %764 = vector.broadcast %cst_233 : f32 to vector<16x1xf32>
    %765 = arith.divf %763, %764 : vector<16x1xf32>
    %766 = vector.broadcast %758 : vector<16x1xf32> to vector<16x128xf32>
    %767 = arith.subf %748, %766 : vector<16x128xf32>
    %cst_234 = arith.constant 9.99999974E-6 : f32
    %768 = vector.broadcast %cst_234 : f32 to vector<16x1xf32>
    %769 = arith.addf %765, %768 : vector<16x1xf32>
    %770 = math.rsqrt %769 : vector<16x1xf32>
    %771 = vector.broadcast %770 : vector<16x1xf32> to vector<16x128xf32>
    %772 = arith.mulf %767, %771 : vector<16x128xf32>
    %773 = vector.broadcast %751 : vector<1x128xf32> to vector<16x128xf32>
    %774 = arith.mulf %772, %773 : vector<16x128xf32>
    %775 = vector.broadcast %754 : vector<1x128xf32> to vector<16x128xf32>
    %776 = arith.addf %774, %775 : vector<16x128xf32>
    %c5_i32 = arith.constant 5 : i32
    %777 = arith.truncf %776 : vector<16x128xf32> to vector<16x128xbf16>
    %778 = arith.index_cast %c5_i32 : i32 to index
    %c0_235 = arith.constant 0 : index
    %c0_236 = arith.constant 0 : index
    %779 = vector.load %arg8[%778, %c0_235, %c0_236] : memref<6x128x384xbf16, #tpu.memory_space<vmem>>, vector<1x128x384xbf16>
    %780 = vector.shape_cast %779 : vector<1x128x384xbf16> to vector<128x384xbf16>
    %cst_237 = arith.constant dense<0.000000e+00> : vector<16x384xf32>
    %781 = tpu.matmul %777, %780, %cst_237 {dimension_numbers = #tpu.dot_dimension_numbers<[1], [0], [0], [1], [0, 0, 1, 1], [], []>} : vector<16x128xbf16>, vector<128x384xbf16>, vector<16x384xf32> -> vector<16x384xf32>
    %782 = arith.index_cast %c5_i32 : i32 to index
    %c0_238 = arith.constant 0 : index
    %c0_239 = arith.constant 0 : index
    %783 = vector.load %arg9[%782, %c0_238, %c0_239] : memref<6x1x384xf32, #tpu.memory_space<vmem>>, vector<1x1x384xf32>
    %784 = vector.shape_cast %783 : vector<1x1x384xf32> to vector<1x384xf32>
    %785 = vector.broadcast %784 : vector<1x384xf32> to vector<16x384xf32>
    %786 = arith.addf %781, %785 : vector<16x384xf32>
    %787 = vector.extract_strided_slice %786 {offsets = [0, 0], sizes = [16, 32], strides = [1, 1]} : vector<16x384xf32> to vector<16x32xf32>
    %788 = vector.extract_strided_slice %786 {offsets = [0, 32], sizes = [16, 32], strides = [1, 1]} : vector<16x384xf32> to vector<16x32xf32>
    %789 = vector.extract_strided_slice %786 {offsets = [0, 64], sizes = [16, 32], strides = [1, 1]} : vector<16x384xf32> to vector<16x32xf32>
    %790 = vector.extract_strided_slice %786 {offsets = [0, 96], sizes = [16, 32], strides = [1, 1]} : vector<16x384xf32> to vector<16x32xf32>
    %791 = vector.shape_cast %787 : vector<16x32xf32> to vector<1x16x32xf32>
    %792 = vector.shape_cast %788 : vector<16x32xf32> to vector<1x16x32xf32>
    %793 = vector.shape_cast %789 : vector<16x32xf32> to vector<1x16x32xf32>
    %794 = vector.shape_cast %790 : vector<16x32xf32> to vector<1x16x32xf32>
    %795 = tpu.concatenate %791, %792, %793, %794 in 0 : vector<1x16x32xf32>, vector<1x16x32xf32>, vector<1x16x32xf32>, vector<1x16x32xf32> -> vector<4x16x32xf32>
    %796 = vector.extract_strided_slice %786 {offsets = [0, 128], sizes = [16, 32], strides = [1, 1]} : vector<16x384xf32> to vector<16x32xf32>
    %797 = vector.extract_strided_slice %786 {offsets = [0, 160], sizes = [16, 32], strides = [1, 1]} : vector<16x384xf32> to vector<16x32xf32>
    %798 = vector.extract_strided_slice %786 {offsets = [0, 192], sizes = [16, 32], strides = [1, 1]} : vector<16x384xf32> to vector<16x32xf32>
    %799 = vector.extract_strided_slice %786 {offsets = [0, 224], sizes = [16, 32], strides = [1, 1]} : vector<16x384xf32> to vector<16x32xf32>
    %800 = vector.shape_cast %796 : vector<16x32xf32> to vector<1x16x32xf32>
    %801 = vector.shape_cast %797 : vector<16x32xf32> to vector<1x16x32xf32>
    %802 = vector.shape_cast %798 : vector<16x32xf32> to vector<1x16x32xf32>
    %803 = vector.shape_cast %799 : vector<16x32xf32> to vector<1x16x32xf32>
    %804 = tpu.concatenate %800, %801, %802, %803 in 0 : vector<1x16x32xf32>, vector<1x16x32xf32>, vector<1x16x32xf32>, vector<1x16x32xf32> -> vector<4x16x32xf32>
    %805 = vector.extract_strided_slice %786 {offsets = [0, 256], sizes = [16, 32], strides = [1, 1]} : vector<16x384xf32> to vector<16x32xf32>
    %806 = vector.extract_strided_slice %786 {offsets = [0, 288], sizes = [16, 32], strides = [1, 1]} : vector<16x384xf32> to vector<16x32xf32>
    %807 = vector.extract_strided_slice %786 {offsets = [0, 320], sizes = [16, 32], strides = [1, 1]} : vector<16x384xf32> to vector<16x32xf32>
    %808 = vector.extract_strided_slice %786 {offsets = [0, 352], sizes = [16, 32], strides = [1, 1]} : vector<16x384xf32> to vector<16x32xf32>
    %809 = vector.shape_cast %805 : vector<16x32xf32> to vector<1x16x32xf32>
    %810 = vector.shape_cast %806 : vector<16x32xf32> to vector<1x16x32xf32>
    %811 = vector.shape_cast %807 : vector<16x32xf32> to vector<1x16x32xf32>
    %812 = vector.shape_cast %808 : vector<16x32xf32> to vector<1x16x32xf32>
    %813 = tpu.concatenate %809, %810, %811, %812 in 0 : vector<1x16x32xf32>, vector<1x16x32xf32>, vector<1x16x32xf32>, vector<1x16x32xf32> -> vector<4x16x32xf32>
    %cst_240 = arith.constant dense<0.000000e+00> : vector<4x16x16xf32>
    %814 = tpu.matmul %795, %804, %cst_240 {dimension_numbers = #tpu.dot_dimension_numbers<[2], [2], [1], [1], [0, 0, 0, 1, 1, 1], [0], [0]>} : vector<4x16x32xf32>, vector<4x16x32xf32>, vector<4x16x16xf32> -> vector<4x16x16xf32>
    %815 = arith.addf %814, %21 : vector<4x16x16xf32>
    %cst_241 = arith.constant dense<0xFF800000> : vector<4x16xf32>
    %816 = vector.multi_reduction <maximumf>, %815, %cst_241 [2] : vector<4x16x16xf32> to vector<4x16xf32>
    %817 = vector.shape_cast %816 : vector<4x16xf32> to vector<4x16x1xf32>
    %818 = vector.broadcast %817 : vector<4x16x1xf32> to vector<4x16x16xf32>
    %819 = arith.subf %815, %818 : vector<4x16x16xf32>
    %820 = math.exp %819 : vector<4x16x16xf32>
    %cst_242 = arith.constant dense<0.000000e+00> : vector<4x16xf32>
    %821 = vector.multi_reduction <add>, %820, %cst_242 [2] : vector<4x16x16xf32> to vector<4x16xf32>
    %822 = vector.shape_cast %821 : vector<4x16xf32> to vector<4x16x1xf32>
    %823 = tpu.reciprocal %822 {approx = true} : vector<4x16x1xf32> -> vector<4x16x1xf32>
    %824 = vector.broadcast %823 : vector<4x16x1xf32> to vector<4x16x16xf32>
    %825 = arith.mulf %820, %824 : vector<4x16x16xf32>
    %826 = arith.truncf %825 : vector<4x16x16xf32> to vector<4x16x16xbf16>
    %827 = arith.truncf %813 : vector<4x16x32xf32> to vector<4x16x32xbf16>
    %cst_243 = arith.constant dense<0.000000e+00> : vector<4x16x32xf32>
    %828 = tpu.matmul %826, %827, %cst_243 {dimension_numbers = #tpu.dot_dimension_numbers<[2], [1], [1], [2], [0, 0, 0, 1, 1, 2], [0], [0]>} : vector<4x16x16xbf16>, vector<4x16x32xbf16>, vector<4x16x32xf32> -> vector<4x16x32xf32>
    %829 = vector.extract_strided_slice %828 {offsets = [0, 0, 0], sizes = [1, 16, 32], strides = [1, 1, 1]} : vector<4x16x32xf32> to vector<1x16x32xf32>
    %830 = vector.shape_cast %829 : vector<1x16x32xf32> to vector<16x32xf32>
    %831 = vector.extract_strided_slice %828 {offsets = [1, 0, 0], sizes = [1, 16, 32], strides = [1, 1, 1]} : vector<4x16x32xf32> to vector<1x16x32xf32>
    %832 = vector.shape_cast %831 : vector<1x16x32xf32> to vector<16x32xf32>
    %833 = vector.extract_strided_slice %828 {offsets = [2, 0, 0], sizes = [1, 16, 32], strides = [1, 1, 1]} : vector<4x16x32xf32> to vector<1x16x32xf32>
    %834 = vector.shape_cast %833 : vector<1x16x32xf32> to vector<16x32xf32>
    %835 = vector.extract_strided_slice %828 {offsets = [3, 0, 0], sizes = [1, 16, 32], strides = [1, 1, 1]} : vector<4x16x32xf32> to vector<1x16x32xf32>
    %836 = vector.shape_cast %835 : vector<1x16x32xf32> to vector<16x32xf32>
    %837 = tpu.concatenate %830, %832, %834, %836 in 1 : vector<16x32xf32>, vector<16x32xf32>, vector<16x32xf32>, vector<16x32xf32> -> vector<16x128xf32>
    %838 = arith.truncf %837 : vector<16x128xf32> to vector<16x128xbf16>
    %839 = arith.index_cast %c5_i32 : i32 to index
    %c0_244 = arith.constant 0 : index
    %c0_245 = arith.constant 0 : index
    %840 = vector.load %arg10[%839, %c0_244, %c0_245] : memref<6x128x128xbf16, #tpu.memory_space<vmem>>, vector<1x128x128xbf16>
    %841 = vector.shape_cast %840 : vector<1x128x128xbf16> to vector<128x128xbf16>
    %cst_246 = arith.constant dense<0.000000e+00> : vector<16x128xf32>
    %842 = tpu.matmul %838, %841, %cst_246 {dimension_numbers = #tpu.dot_dimension_numbers<[1], [0], [0], [1], [0, 0, 1, 1], [], []>} : vector<16x128xbf16>, vector<128x128xbf16>, vector<16x128xf32> -> vector<16x128xf32>
    %843 = arith.index_cast %c5_i32 : i32 to index
    %c0_247 = arith.constant 0 : index
    %c0_248 = arith.constant 0 : index
    %844 = vector.load %arg11[%843, %c0_247, %c0_248] : memref<6x1x128xf32, #tpu.memory_space<vmem>>, vector<1x1x128xf32>
    %845 = vector.shape_cast %844 : vector<1x1x128xf32> to vector<1x128xf32>
    %846 = vector.broadcast %845 : vector<1x128xf32> to vector<16x128xf32>
    %847 = arith.addf %842, %846 : vector<16x128xf32>
    %848 = arith.addf %776, %847 : vector<16x128xf32>
    %849 = arith.index_cast %c5_i32 : i32 to index
    %c0_249 = arith.constant 0 : index
    %c0_250 = arith.constant 0 : index
    %850 = vector.load %arg12[%849, %c0_249, %c0_250] : memref<6x1x128xf32, #tpu.memory_space<vmem>>, vector<1x1x128xf32>
    %851 = vector.shape_cast %850 : vector<1x1x128xf32> to vector<1x128xf32>
    %852 = arith.index_cast %c5_i32 : i32 to index
    %c0_251 = arith.constant 0 : index
    %c0_252 = arith.constant 0 : index
    %853 = vector.load %arg13[%852, %c0_251, %c0_252] : memref<6x1x128xf32, #tpu.memory_space<vmem>>, vector<1x1x128xf32>
    %854 = vector.shape_cast %853 : vector<1x1x128xf32> to vector<1x128xf32>
    %cst_253 = arith.constant dense<0.000000e+00> : vector<16xf32>
    %855 = vector.multi_reduction <add>, %848, %cst_253 [1] : vector<16x128xf32> to vector<16xf32>
    %856 = vector.shape_cast %855 : vector<16xf32> to vector<16x1xf32>
    %cst_254 = arith.constant 1.280000e+02 : f32
    %857 = vector.broadcast %cst_254 : f32 to vector<16x1xf32>
    %858 = arith.divf %856, %857 : vector<16x1xf32>
    %859 = vector.broadcast %858 : vector<16x1xf32> to vector<16x128xf32>
    %860 = arith.subf %848, %859 : vector<16x128xf32>
    %861 = arith.mulf %860, %860 : vector<16x128xf32>
    %cst_255 = arith.constant dense<0.000000e+00> : vector<16xf32>
    %862 = vector.multi_reduction <add>, %861, %cst_255 [1] : vector<16x128xf32> to vector<16xf32>
    %863 = vector.shape_cast %862 : vector<16xf32> to vector<16x1xf32>
    %cst_256 = arith.constant 1.280000e+02 : f32
    %864 = vector.broadcast %cst_256 : f32 to vector<16x1xf32>
    %865 = arith.divf %863, %864 : vector<16x1xf32>
    %866 = vector.broadcast %858 : vector<16x1xf32> to vector<16x128xf32>
    %867 = arith.subf %848, %866 : vector<16x128xf32>
    %cst_257 = arith.constant 9.99999974E-6 : f32
    %868 = vector.broadcast %cst_257 : f32 to vector<16x1xf32>
    %869 = arith.addf %865, %868 : vector<16x1xf32>
    %870 = math.rsqrt %869 : vector<16x1xf32>
    %871 = vector.broadcast %870 : vector<16x1xf32> to vector<16x128xf32>
    %872 = arith.mulf %867, %871 : vector<16x128xf32>
    %873 = vector.broadcast %851 : vector<1x128xf32> to vector<16x128xf32>
    %874 = arith.mulf %872, %873 : vector<16x128xf32>
    %875 = vector.broadcast %854 : vector<1x128xf32> to vector<16x128xf32>
    %876 = arith.addf %874, %875 : vector<16x128xf32>
    %877 = arith.truncf %876 : vector<16x128xf32> to vector<16x128xbf16>
    %878 = arith.index_cast %c5_i32 : i32 to index
    %c0_258 = arith.constant 0 : index
    %c0_259 = arith.constant 0 : index
    %879 = vector.load %arg14[%878, %c0_258, %c0_259] : memref<6x128x256xbf16, #tpu.memory_space<vmem>>, vector<1x128x256xbf16>
    %880 = vector.shape_cast %879 : vector<1x128x256xbf16> to vector<128x256xbf16>
    %cst_260 = arith.constant dense<0.000000e+00> : vector<16x256xf32>
    %881 = tpu.matmul %877, %880, %cst_260 {dimension_numbers = #tpu.dot_dimension_numbers<[1], [0], [0], [1], [0, 0, 1, 1], [], []>} : vector<16x128xbf16>, vector<128x256xbf16>, vector<16x256xf32> -> vector<16x256xf32>
    %882 = arith.index_cast %c5_i32 : i32 to index
    %c0_261 = arith.constant 0 : index
    %c0_262 = arith.constant 0 : index
    %883 = vector.load %arg15[%882, %c0_261, %c0_262] : memref<6x1x256xf32, #tpu.memory_space<vmem>>, vector<1x1x256xf32>
    %884 = vector.shape_cast %883 : vector<1x1x256xf32> to vector<1x256xf32>
    %885 = vector.broadcast %884 : vector<1x256xf32> to vector<16x256xf32>
    %886 = arith.addf %881, %885 : vector<16x256xf32>
    %cst_263 = arith.constant 0.000000e+00 : f32
    %887 = vector.broadcast %cst_263 : f32 to vector<16x256xf32>
    %888 = arith.maximumf %886, %887 : vector<16x256xf32>
    %889 = arith.truncf %888 : vector<16x256xf32> to vector<16x256xbf16>
    %890 = arith.index_cast %c5_i32 : i32 to index
    %c0_264 = arith.constant 0 : index
    %c0_265 = arith.constant 0 : index
    %891 = vector.load %arg16[%890, %c0_264, %c0_265] : memref<6x256x128xbf16, #tpu.memory_space<vmem>>, vector<1x256x128xbf16>
    %892 = vector.shape_cast %891 : vector<1x256x128xbf16> to vector<256x128xbf16>
    %cst_266 = arith.constant dense<0.000000e+00> : vector<16x128xf32>
    %893 = tpu.matmul %889, %892, %cst_266 {dimension_numbers = #tpu.dot_dimension_numbers<[1], [0], [0], [1], [0, 0, 1, 1], [], []>} : vector<16x256xbf16>, vector<256x128xbf16>, vector<16x128xf32> -> vector<16x128xf32>
    %894 = arith.index_cast %c5_i32 : i32 to index
    %c0_267 = arith.constant 0 : index
    %c0_268 = arith.constant 0 : index
    %895 = vector.load %arg17[%894, %c0_267, %c0_268] : memref<6x1x128xf32, #tpu.memory_space<vmem>>, vector<1x1x128xf32>
    %896 = vector.shape_cast %895 : vector<1x1x128xf32> to vector<1x128xf32>
    %897 = vector.broadcast %896 : vector<1x128xf32> to vector<16x128xf32>
    %898 = arith.addf %893, %897 : vector<16x128xf32>
    %899 = arith.addf %876, %898 : vector<16x128xf32>
    %900 = arith.index_cast %c5_i32 : i32 to index
    %c0_269 = arith.constant 0 : index
    %c0_270 = arith.constant 0 : index
    %901 = vector.load %arg18[%900, %c0_269, %c0_270] : memref<6x1x128xf32, #tpu.memory_space<vmem>>, vector<1x1x128xf32>
    %902 = vector.shape_cast %901 : vector<1x1x128xf32> to vector<1x128xf32>
    %903 = arith.index_cast %c5_i32 : i32 to index
    %c0_271 = arith.constant 0 : index
    %c0_272 = arith.constant 0 : index
    %904 = vector.load %arg19[%903, %c0_271, %c0_272] : memref<6x1x128xf32, #tpu.memory_space<vmem>>, vector<1x1x128xf32>
    %905 = vector.shape_cast %904 : vector<1x1x128xf32> to vector<1x128xf32>
    %cst_273 = arith.constant dense<0.000000e+00> : vector<16xf32>
    %906 = vector.multi_reduction <add>, %899, %cst_273 [1] : vector<16x128xf32> to vector<16xf32>
    %907 = vector.shape_cast %906 : vector<16xf32> to vector<16x1xf32>
    %cst_274 = arith.constant 1.280000e+02 : f32
    %908 = vector.broadcast %cst_274 : f32 to vector<16x1xf32>
    %909 = arith.divf %907, %908 : vector<16x1xf32>
    %910 = vector.broadcast %909 : vector<16x1xf32> to vector<16x128xf32>
    %911 = arith.subf %899, %910 : vector<16x128xf32>
    %912 = arith.mulf %911, %911 : vector<16x128xf32>
    %cst_275 = arith.constant dense<0.000000e+00> : vector<16xf32>
    %913 = vector.multi_reduction <add>, %912, %cst_275 [1] : vector<16x128xf32> to vector<16xf32>
    %914 = vector.shape_cast %913 : vector<16xf32> to vector<16x1xf32>
    %cst_276 = arith.constant 1.280000e+02 : f32
    %915 = vector.broadcast %cst_276 : f32 to vector<16x1xf32>
    %916 = arith.divf %914, %915 : vector<16x1xf32>
    %917 = vector.broadcast %909 : vector<16x1xf32> to vector<16x128xf32>
    %918 = arith.subf %899, %917 : vector<16x128xf32>
    %cst_277 = arith.constant 9.99999974E-6 : f32
    %919 = vector.broadcast %cst_277 : f32 to vector<16x1xf32>
    %920 = arith.addf %916, %919 : vector<16x1xf32>
    %921 = math.rsqrt %920 : vector<16x1xf32>
    %922 = vector.broadcast %921 : vector<16x1xf32> to vector<16x128xf32>
    %923 = arith.mulf %918, %922 : vector<16x128xf32>
    %924 = vector.broadcast %902 : vector<1x128xf32> to vector<16x128xf32>
    %925 = arith.mulf %923, %924 : vector<16x128xf32>
    %926 = vector.broadcast %905 : vector<1x128xf32> to vector<16x128xf32>
    %927 = arith.addf %925, %926 : vector<16x128xf32>
    %c6_i32 = arith.constant 6 : i32
    %c0_278 = arith.constant 0 : index
    %c0_279 = arith.constant 0 : index
    %928 = vector.load %arg20[%c0_278, %c0_279] : memref<128x64xf32, #tpu.memory_space<vmem>>, vector<128x64xf32>
    %cst_280 = arith.constant dense<0.000000e+00> : vector<16x64xf32>
    %929 = tpu.matmul %927, %928, %cst_280 {dimension_numbers = #tpu.dot_dimension_numbers<[1], [0], [0], [1], [0, 0, 1, 1], [], []>} : vector<16x128xf32>, vector<128x64xf32>, vector<16x64xf32> -> vector<16x64xf32>
    %c0_281 = arith.constant 0 : index
    %c0_282 = arith.constant 0 : index
    %930 = vector.load %arg21[%c0_281, %c0_282] : memref<1x64xf32, #tpu.memory_space<vmem>>, vector<1x64xf32>
    %931 = vector.broadcast %930 : vector<1x64xf32> to vector<16x64xf32>
    %932 = arith.addf %929, %931 : vector<16x64xf32>
    %cst_283 = arith.constant 0.000000e+00 : f32
    %933 = vector.broadcast %cst_283 : f32 to vector<16x64xf32>
    %934 = arith.cmpf oge, %932, %933 : vector<16x64xf32>
    %cst_284 = arith.constant 1.000000e-01 : f32
    %935 = vector.broadcast %cst_284 : f32 to vector<16x64xf32>
    %936 = arith.mulf %935, %932 : vector<16x64xf32>
    %937 = arith.select %934, %932, %936 : vector<16x64xi1>, vector<16x64xf32>
    %c0_285 = arith.constant 0 : index
    %c0_286 = arith.constant 0 : index
    %938 = vector.load %arg22[%c0_285, %c0_286] : memref<1x64xf32, #tpu.memory_space<vmem>>, vector<1x64xf32>
    %939 = vector.broadcast %938 : vector<1x64xf32> to vector<16x64xf32>
    %940 = arith.mulf %937, %939 : vector<16x64xf32>
    %cst_287 = arith.constant dense<0.000000e+00> : vector<16xf32>
    %941 = vector.multi_reduction <add>, %940, %cst_287 [1] : vector<16x64xf32> to vector<16xf32>
    %942 = vector.shape_cast %941 : vector<16xf32> to vector<16x1xf32>
    %c0_288 = arith.constant 0 : index
    %c0_289 = arith.constant 0 : index
    %943 = vector.load %arg23[%c0_288, %c0_289] : memref<1x1xf32, #tpu.memory_space<vmem>>, vector<1x1xf32>
    %944 = vector.broadcast %943 : vector<1x1xf32> to vector<16x1xf32>
    %945 = arith.addf %942, %944 : vector<16x1xf32>
    %c0_290 = arith.constant 0 : index
    %c0_291 = arith.constant 0 : index
    %c0_292 = arith.constant 0 : index
    %946 = vector.load %arg24[%c0_290, %c0_291, %c0_292] : memref<1x16x1xf32, #tpu.memory_space<vmem>>, vector<1x16x1xf32>
    %947 = vector.shape_cast %946 : vector<1x16x1xf32> to vector<16x1xf32>
    %948 = vector.shape_cast %945 : vector<16x1xf32> to vector<1x16x1xf32>
    tpu.vector_store %arg24[%c0_290, %c0_291, %c0_292], %948 {strides = array<i32>} : memref<1x16x1xf32, #tpu.memory_space<vmem>>, vector<1x16x1xf32>,
    return
  }
  func.func @transform_0(%arg0: i32) -> (i32, i32, i32) {
    %c0_i32 = arith.constant 0 : i32
    %c0_i32_0 = arith.constant 0 : i32
    %c0_i32_1 = arith.constant 0 : i32
    return %arg0, %c0_i32, %c0_i32_0 : i32, i32, i32
  }
  func.func @transform_1(%arg0: i32) -> (i32, i32, i32) {
    %c0_i32 = arith.constant 0 : i32
    %c0_i32_0 = arith.constant 0 : i32
    %c0_i32_1 = arith.constant 0 : i32
    return %arg0, %c0_i32, %c0_i32_0 : i32, i32, i32
  }
  func.func @transform_2(%arg0: i32) -> (i32, i32, i32, i32) {
    %c0_i32 = arith.constant 0 : i32
    %c0_i32_0 = arith.constant 0 : i32
    %c0_i32_1 = arith.constant 0 : i32
    %c0_i32_2 = arith.constant 0 : i32
    return %arg0, %c0_i32, %c0_i32_0, %c0_i32_1 : i32, i32, i32, i32
  }
  func.func @transform_3(%arg0: i32) -> (i32, i32) {
    %c0_i32 = arith.constant 0 : i32
    %c0_i32_0 = arith.constant 0 : i32
    %c0_i32_1 = arith.constant 0 : i32
    return %c0_i32, %c0_i32_0 : i32, i32
  }
  func.func @transform_4(%arg0: i32) -> (i32, i32) {
    %c0_i32 = arith.constant 0 : i32
    %c0_i32_0 = arith.constant 0 : i32
    %c0_i32_1 = arith.constant 0 : i32
    return %c0_i32, %c0_i32_0 : i32, i32
  }
  func.func @transform_5(%arg0: i32) -> (i32, i32) {
    %c0_i32 = arith.constant 0 : i32
    %c0_i32_0 = arith.constant 0 : i32
    %c0_i32_1 = arith.constant 0 : i32
    return %c0_i32, %c0_i32_0 : i32, i32
  }
  func.func @transform_6(%arg0: i32) -> (i32, i32) {
    %c0_i32 = arith.constant 0 : i32
    %c0_i32_0 = arith.constant 0 : i32
    %c0_i32_1 = arith.constant 0 : i32
    return %c0_i32, %c0_i32_0 : i32, i32
  }
  func.func @transform_7(%arg0: i32) -> (i32, i32, i32) {
    %c0_i32 = arith.constant 0 : i32
    %c0_i32_0 = arith.constant 0 : i32
    %c0_i32_1 = arith.constant 0 : i32
    %c0_i32_2 = arith.constant 0 : i32
    return %c0_i32, %c0_i32_0, %c0_i32_1 : i32, i32, i32
  }
  func.func @transform_8(%arg0: i32) -> (i32, i32, i32) {
    %c0_i32 = arith.constant 0 : i32
    %c0_i32_0 = arith.constant 0 : i32
    %c0_i32_1 = arith.constant 0 : i32
    %c0_i32_2 = arith.constant 0 : i32
    return %c0_i32, %c0_i32_0, %c0_i32_1 : i32, i32, i32
  }
  func.func @transform_9(%arg0: i32) -> (i32, i32, i32) {
    %c0_i32 = arith.constant 0 : i32
    %c0_i32_0 = arith.constant 0 : i32
    %c0_i32_1 = arith.constant 0 : i32
    %c0_i32_2 = arith.constant 0 : i32
    return %c0_i32, %c0_i32_0, %c0_i32_1 : i32, i32, i32
  }
  func.func @transform_10(%arg0: i32) -> (i32, i32, i32) {
    %c0_i32 = arith.constant 0 : i32
    %c0_i32_0 = arith.constant 0 : i32
    %c0_i32_1 = arith.constant 0 : i32
    %c0_i32_2 = arith.constant 0 : i32
    return %c0_i32, %c0_i32_0, %c0_i32_1 : i32, i32, i32
  }
  func.func @transform_11(%arg0: i32) -> (i32, i32, i32) {
    %c0_i32 = arith.constant 0 : i32
    %c0_i32_0 = arith.constant 0 : i32
    %c0_i32_1 = arith.constant 0 : i32
    %c0_i32_2 = arith.constant 0 : i32
    return %c0_i32, %c0_i32_0, %c0_i32_1 : i32, i32, i32
  }
  func.func @transform_12(%arg0: i32) -> (i32, i32, i32) {
    %c0_i32 = arith.constant 0 : i32
    %c0_i32_0 = arith.constant 0 : i32
    %c0_i32_1 = arith.constant 0 : i32
    %c0_i32_2 = arith.constant 0 : i32
    return %c0_i32, %c0_i32_0, %c0_i32_1 : i32, i32, i32
  }
  func.func @transform_13(%arg0: i32) -> (i32, i32, i32) {
    %c0_i32 = arith.constant 0 : i32
    %c0_i32_0 = arith.constant 0 : i32
    %c0_i32_1 = arith.constant 0 : i32
    %c0_i32_2 = arith.constant 0 : i32
    return %c0_i32, %c0_i32_0, %c0_i32_1 : i32, i32, i32
  }
  func.func @transform_14(%arg0: i32) -> (i32, i32, i32) {
    %c0_i32 = arith.constant 0 : i32
    %c0_i32_0 = arith.constant 0 : i32
    %c0_i32_1 = arith.constant 0 : i32
    %c0_i32_2 = arith.constant 0 : i32
    return %c0_i32, %c0_i32_0, %c0_i32_1 : i32, i32, i32
  }
  func.func @transform_15(%arg0: i32) -> (i32, i32, i32) {
    %c0_i32 = arith.constant 0 : i32
    %c0_i32_0 = arith.constant 0 : i32
    %c0_i32_1 = arith.constant 0 : i32
    %c0_i32_2 = arith.constant 0 : i32
    return %c0_i32, %c0_i32_0, %c0_i32_1 : i32, i32, i32
  }
  func.func @transform_16(%arg0: i32) -> (i32, i32, i32) {
    %c0_i32 = arith.constant 0 : i32
    %c0_i32_0 = arith.constant 0 : i32
    %c0_i32_1 = arith.constant 0 : i32
    %c0_i32_2 = arith.constant 0 : i32
    return %c0_i32, %c0_i32_0, %c0_i32_1 : i32, i32, i32
  }
  func.func @transform_17(%arg0: i32) -> (i32, i32, i32) {
    %c0_i32 = arith.constant 0 : i32
    %c0_i32_0 = arith.constant 0 : i32
    %c0_i32_1 = arith.constant 0 : i32
    %c0_i32_2 = arith.constant 0 : i32
    return %c0_i32, %c0_i32_0, %c0_i32_1 : i32, i32, i32
  }
  func.func @transform_18(%arg0: i32) -> (i32, i32, i32) {
    %c0_i32 = arith.constant 0 : i32
    %c0_i32_0 = arith.constant 0 : i32
    %c0_i32_1 = arith.constant 0 : i32
    %c0_i32_2 = arith.constant 0 : i32
    return %c0_i32, %c0_i32_0, %c0_i32_1 : i32, i32, i32
  }
  func.func @transform_19(%arg0: i32) -> (i32, i32) {
    %c0_i32 = arith.constant 0 : i32
    %c0_i32_0 = arith.constant 0 : i32
    %c0_i32_1 = arith.constant 0 : i32
    return %c0_i32, %c0_i32_0 : i32, i32
  }
  func.func @transform_20(%arg0: i32) -> (i32, i32) {
    %c0_i32 = arith.constant 0 : i32
    %c0_i32_0 = arith.constant 0 : i32
    %c0_i32_1 = arith.constant 0 : i32
    return %c0_i32, %c0_i32_0 : i32, i32
  }
  func.func @transform_21(%arg0: i32) -> (i32, i32) {
    %c0_i32 = arith.constant 0 : i32
    %c0_i32_0 = arith.constant 0 : i32
    %c0_i32_1 = arith.constant 0 : i32
    return %c0_i32, %c0_i32_0 : i32, i32
  }
  func.func @transform_22(%arg0: i32) -> (i32, i32) {
    %c0_i32 = arith.constant 0 : i32
    %c0_i32_0 = arith.constant 0 : i32
    %c0_i32_1 = arith.constant 0 : i32
    return %c0_i32, %c0_i32_0 : i32, i32
  }
  func.func @transform_23(%arg0: i32) -> (i32, i32, i32) {
    %c0_i32 = arith.constant 0 : i32
    %c0_i32_0 = arith.constant 0 : i32
    %c0_i32_1 = arith.constant 0 : i32
    return %arg0, %c0_i32, %c0_i32_0 : i32, i32, i32
  }
}

</mosaic_0001>

<llo_original>
// kernel: graphormer_forward.1
$region0: #{graphormer_forward.1}
  #allocation0 [shape = 'u32[]', space=smem, size = 0x4, offset = 0x4, fixed_abs, tag = 'smem constant byte address 0x4 - core index']
  #allocation1 [shape = 'u32[72,128]{1,0:T(1,128)}', space=vmem, size = 0x9000, scoped, tag = 'internal scratch']
  #allocation2 [shape = 'f32[1,1]{1,0:T(1,128)S(1)}', space=vmem, size = 0x200, scoped, tag = 'scoped memory for graphormer_forward.1']
  %s0 = inlined_call_operand.vmem [shape: f32[2,16,32], index: 0, kind: input, shape index: {}]
  %s1 = inlined_call_operand.vmem [shape: f32[2,16,128], index: 1, kind: input, shape index: {}]
  %s2 = inlined_call_operand.vmem [shape: f32[2,4,16,16], index: 2, kind: input, shape index: {}]
  %s3 = inlined_call_operand.vmem [shape: f32[32,64], index: 3, kind: input, shape index: {}]
  %s4 = inlined_call_operand.vmem [shape: f32[1,64], index: 4, kind: input, shape index: {}]
  %s5 = inlined_call_operand.vmem [shape: f32[64,128], index: 5, kind: input, shape index: {}]
  %s6 = inlined_call_operand.vmem [shape: f32[1,128], index: 6, kind: input, shape index: {}]
  %s7 = inlined_call_operand.hbm [shape: bf16[6,128,384], index: 7, kind: input, shape index: {}]
  %s8 = inlined_call_operand.vmem [shape: f32[6,1,384], index: 8, kind: input, shape index: {}]
  %s9 = inlined_call_operand.vmem [shape: bf16[6,128,128], index: 9, kind: input, shape index: {}]
  %s10 = inlined_call_operand.vmem [shape: f32[6,1,128], index: 10, kind: input, shape index: {}]
  %s11 = inlined_call_operand.vmem [shape: f32[6,1,128], index: 11, kind: input, shape index: {}]
  %s12 = inlined_call_operand.vmem [shape: f32[6,1,128], index: 12, kind: input, shape index: {}]
  %s13 = inlined_call_operand.hbm [shape: bf16[6,128,256], index: 13, kind: input, shape index: {}]
  %s14 = inlined_call_operand.vmem [shape: f32[6,1,256], index: 14, kind: input, shape index: {}]
  %s15 = inlined_call_operand.hbm [shape: bf16[6,256,128], index: 15, kind: input, shape index: {}]
  %s16 = inlined_call_operand.vmem [shape: f32[6,1,128], index: 16, kind: input, shape index: {}]
  %s17 = inlined_call_operand.vmem [shape: f32[6,1,128], index: 17, kind: input, shape index: {}]
  %s18 = inlined_call_operand.vmem [shape: f32[6,1,128], index: 18, kind: input, shape index: {}]
  %s19 = inlined_call_operand.vmem [shape: f32[128,64], index: 19, kind: input, shape index: {}]
  %s20 = inlined_call_operand.vmem [shape: f32[1,64], index: 20, kind: input, shape index: {}]
  %s21 = inlined_call_operand.vmem [shape: f32[1,64], index: 21, kind: input, shape index: {}]
  %s22 = inlined_call_operand.<no memory space> [shape: f32[1,1], index: 22, kind: input, shape index: {}]
  %s23 = inlined_call_operand.vmem [shape: f32[2,16,1], index: 23, kind: output, shape index: {}]
  %s24 = sld [smem:[#allocation0]]
  $region137: #{graphormer_forward.1} parent=0
    _
  %s26 = ssub.s32 1, %s24
  %s27 = scalar_select 0, %s26, %s24
  %v28 = vstv %s22
  %29 = vst [vmem:[#allocation2] sm:$0x1] %v28
  $region1: #{graphormer_forward.1} parent=0
    #allocation3 [shape = 'u8[589824]{0}', space=vmem, size = 0x90000, scoped, tag = 'input window, operand 7, single buffered']
    #allocation4 [shape = 's32[2]{0}', space=sflag, size = 0x8, scoped, tag = 'scoped memory for graphormer_forward.1']
    #allocation5 [shape = 'u8[393216]{0}', space=vmem, size = 0x60000, scoped, tag = 'input window, operand 13, single buffered']
    #allocation6 [shape = 's32[1]{0}', space=sflag, size = 0x4, scoped, tag = 'scoped memory for graphormer_forward.1']
    #allocation7 [shape = 'u8[393216]{0}', space=vmem, size = 0x60000, scoped, tag = 'input window, operand 15, single buffered']
    %30 = vsyncpa [#allocation4], 0
    %31 = vsyncpa [#allocation6], 0
    loop: start=0, step=1, limit=4
    $region2: #{graphormer_forward.1} parent=1 // loop_pre_header
      _
    $region3: #{graphormer_forward.1} parent=1 // loop_header
      %s33 = sphi 0, %s37
      %p34 = scmp.ge.s32.totalorder %s33, 4
      %s43 = sphi 0, %s45
      %s46 = sphi 0, %s43
      %s47 = sphi 0, %s46
      %s63 = sphi 0, %s47
      %s69 = sphi 0, %s71
      %s72 = sphi 0, %s69
      %s73 = sphi 0, %s72
      %s89 = sphi 0, %s73
      %s95 = sphi 0, %s97
      %s98 = sphi 0, %s95
      %s99 = sphi 0, %s98
      %s115 = sphi 0, %s99
      %s119 = sphi 0, %s119
      %s121 = sphi 0, %s119
      %s122 = sphi 0, %s121
      %s136 = sphi 0, %s122
      %s140 = sphi 0, %s140
      %s142 = sphi 0, %s140
      %s143 = sphi 0, %s142
      %s157 = sphi 0, %s143
      %s161 = sphi 0, %s161
      %s163 = sphi 0, %s161
      %s164 = sphi 0, %s163
      %s178 = sphi 0, %s164
      %s182 = sphi 0, %s182
      %s184 = sphi 0, %s182
      %s185 = sphi 0, %s184
      %s199 = sphi 0, %s185
      %s203 = sphi 0, %s203
      %s205 = sphi 0, %s203
      %s206 = sphi 0, %s205
      %s220 = sphi 0, %s206
      %s224 = sphi 0, %s224
      %s226 = sphi 0, %s224
      %s227 = sphi 0, %s226
      %s241 = sphi 0, %s227
      %s245 = sphi 0, %s245
      %s247 = sphi 0, %s245
      %s248 = sphi 0, %s247
      %s262 = sphi 0, %s248
      %s266 = sphi 0, %s266
      %s268 = sphi 0, %s266
      %s269 = sphi 0, %s268
      %s283 = sphi 0, %s269
      %s287 = sphi 0, %s287
      %s289 = sphi 0, %s287
      %s290 = sphi 0, %s289
      %s304 = sphi 0, %s290
      %s308 = sphi 0, %s308
      %s310 = sphi 0, %s308
      %s311 = sphi 0, %s310
      %s325 = sphi 0, %s311
      %s329 = sphi 0, %s329
      %s331 = sphi 0, %s329
      %s332 = sphi 0, %s331
      %s346 = sphi 0, %s332
      %s350 = sphi 0, %s350
      %s352 = sphi 0, %s350
      %s353 = sphi 0, %s352
      %s367 = sphi 0, %s353
      %s371 = sphi 0, %s371
      %s373 = sphi 0, %s371
      %s374 = sphi 0, %s373
      %s388 = sphi 0, %s374
      %s392 = sphi 0, %s392
      %s394 = sphi 0, %s392
      %s395 = sphi 0, %s394
      %s409 = sphi 0, %s395
      %s413 = sphi 0, %s413
      %s415 = sphi 0, %s413
      %s416 = sphi 0, %s415
      %s430 = sphi 0, %s416
      %s434 = sphi 0, %s434
      %s436 = sphi 0, %s434
      %s437 = sphi 0, %s436
      %s451 = sphi 0, %s437
      %s455 = sphi 0, %s455
      %s457 = sphi 0, %s455
      %s458 = sphi 0, %s457
      %s472 = sphi 0, %s458
      %s476 = sphi 0, %s476
      %s478 = sphi 0, %s476
      %s479 = sphi 0, %s478
      %s493 = sphi 0, %s479
      %s497 = sphi 0, %s497
      %s499 = sphi 0, %s497
      %s500 = sphi 0, %s499
      %s514 = sphi 0, %s500
      %s518 = sphi 0, %s518
      %s520 = sphi 0, %s518
      %s521 = sphi 0, %s520
      %s535 = sphi 0, %s521
      %s541 = sphi 0, %s543
      %s544 = sphi 0, %s541
      %s545 = sphi 0, %s544
      %s561 = sphi 0, %s545
    $region4: #{graphormer_forward.1} parent=1 // loop_header_branch
      %36 = sbr.rel (%p34) target = $region8
    $region5: #{graphormer_forward.1} parent=1 // loop_body
      %s38 = ssub.s32 %s33, 1
      %s39 = ssub.s32 %s33, 2
      %s40 = sadd.s32 %s33, 1
      %s41 = ssub.s32 %s33, %s40
      %p42 = scmp.eq.s32.totalorder %s41, 0
      %s44 = sadd.s32 %s43, 1
      %s45 = scalar_select %p42, %s43, %s44
      %p48 = pneg %p42
      %p49 = scmp.eq.s32.totalorder %s33, 1
      %p50 = por %p48, %p49
      %p51 = scmp.ne.s32.totalorder %s43, %s46
      %p52 = scmp.eq.s32.totalorder %s33, 0
      %p53 = por %p51, %p52
      %p54 = scmp.ne.s32.totalorder %s43, %s46
      %p55 = scmp.eq.s32.totalorder %s38, 1
      %p56 = por %p54, %p55
      %p57 = scmp.ne.s32.totalorder %s46, %s47
      %p58 = scmp.eq.s32.totalorder %s38, 0
      %p59 = por %p57, %p58
      %p60 = scmp.ne.s32.totalorder %s46, %s47
      %p61 = scmp.eq.s32.totalorder %s39, 1
      %p62 = por %p60, %p61
      %p64 = scmp.ne.s32.totalorder %s47, %s63
      %p65 = scmp.eq.s32.totalorder %s39, 0
      %p66 = por %p64, %p65
      %s67 = ssub.s32 %s33, %s40
      %p68 = scmp.eq.s32.totalorder %s67, 0
      %s70 = sadd.s32 %s69, 1
      %s71 = scalar_select %p68, %s69, %s70
      %p74 = pneg %p68
      %p75 = scmp.eq.s32.totalorder %s33, 1
      %p76 = por %p74, %p75
      %p77 = scmp.ne.s32.totalorder %s69, %s72
      %p78 = scmp.eq.s32.totalorder %s33, 0
      %p79 = por %p77, %p78
      %p80 = scmp.ne.s32.totalorder %s69, %s72
      %p81 = scmp.eq.s32.totalorder %s38, 1
      %p82 = por %p80, %p81
      %p83 = scmp.ne.s32.totalorder %s72, %s73
      %p84 = scmp.eq.s32.totalorder %s38, 0
      %p85 = por %p83, %p84
      %p86 = scmp.ne.s32.totalorder %s72, %s73
      %p87 = scmp.eq.s32.totalorder %s39, 1
      %p88 = por %p86, %p87
      %p90 = scmp.ne.s32.totalorder %s73, %s89
      %p91 = scmp.eq.s32.totalorder %s39, 0
      %p92 = por %p90, %p91
      %s93 = ssub.s32 %s33, %s40
      %p94 = scmp.eq.s32.totalorder %s93, 0
      %s96 = sadd.s32 %s95, 1
      %s97 = scalar_select %p94, %s95, %s96
      %p100 = pneg %p94
      %p101 = scmp.eq.s32.totalorder %s33, 1
      %p102 = por %p100, %p101
      %p103 = scmp.ne.s32.totalorder %s95, %s98
      %p104 = scmp.eq.s32.totalorder %s33, 0
      %p105 = por %p103, %p104
      %p106 = scmp.ne.s32.totalorder %s95, %s98
      %p107 = scmp.eq.s32.totalorder %s38, 1
      %p108 = por %p106, %p107
      %p109 = scmp.ne.s32.totalorder %s98, %s99
      %p110 = scmp.eq.s32.totalorder %s38, 0
      %p111 = por %p109, %p110
      %p112 = scmp.ne.s32.totalorder %s98, %s99
      %p113 = scmp.eq.s32.totalorder %s39, 1
      %p114 = por %p112, %p113
      %p116 = scmp.ne.s32.totalorder %s99, %s115
      %p117 = scmp.eq.s32.totalorder %s39, 0
      %p118 = por %p116, %p117
      %s120 = sadd.s32 %s119, 1
      %p123 = scmp.eq.s32.totalorder %s33, 1
      %p124 = scmp.ne.s32.totalorder %s119, %s121
      %p125 = scmp.eq.s32.totalorder %s33, 0
      %p126 = por %p124, %p125
      %p127 = scmp.ne.s32.totalorder %s119, %s121
      %p128 = scmp.eq.s32.totalorder %s38, 1
      %p129 = por %p127, %p128
      %p130 = scmp.ne.s32.totalorder %s121, %s122
      %p131 = scmp.eq.s32.totalorder %s38, 0
      %p132 = por %p130, %p131
      %p133 = scmp.ne.s32.totalorder %s121, %s122
      %p134 = scmp.eq.s32.totalorder %s39, 1
      %p135 = por %p133, %p134
      %p137 = scmp.ne.s32.totalorder %s122, %s136
      %p138 = scmp.eq.s32.totalorder %s39, 0
      %p139 = por %p137, %p138
      %s141 = sadd.s32 %s140, 1
      %p144 = scmp.eq.s32.totalorder %s33, 1
      %p145 = scmp.ne.s32.totalorder %s140, %s142
      %p146 = scmp.eq.s32.totalorder %s33, 0
      %p147 = por %p145, %p146
      %p148 = scmp.ne.s32.totalorder %s140, %s142
      %p149 = scmp.eq.s32.totalorder %s38, 1
      %p150 = por %p148, %p149
      %p151 = scmp.ne.s32.totalorder %s142, %s143
      %p152 = scmp.eq.s32.totalorder %s38, 0
      %p153 = por %p151, %p152
      %p154 = scmp.ne.s32.totalorder %s142, %s143
      %p155 = scmp.eq.s32.totalorder %s39, 1
      %p156 = por %p154, %p155
      %p158 = scmp.ne.s32.totalorder %s143, %s157
      %p159 = scmp.eq.s32.totalorder %s39, 0
      %p160 = por %p158, %p159
      %s162 = sadd.s32 %s161, 1
      %p165 = scmp.eq.s32.totalorder %s33, 1
      %p166 = scmp.ne.s32.totalorder %s161, %s163
      %p167 = scmp.eq.s32.totalorder %s33, 0
      %p168 = por %p166, %p167
      %p169 = scmp.ne.s32.totalorder %s161, %s163
      %p170 = scmp.eq.s32.totalorder %s38, 1
      %p171 = por %p169, %p170
      %p172 = scmp.ne.s32.totalorder %s163, %s164
      %p173 = scmp.eq.s32.totalorder %s38, 0
      %p174 = por %p172, %p173
      %p175 = scmp.ne.s32.totalorder %s163, %s164
      %p176 = scmp.eq.s32.totalorder %s39, 1
      %p177 = por %p175, %p176
      %p179 = scmp.ne.s32.totalorder %s164, %s178
      %p180 = scmp.eq.s32.totalorder %s39, 0
      %p181 = por %p179, %p180
      %s183 = sadd.s32 %s182, 1
      %p186 = scmp.eq.s32.totalorder %s33, 1
      %p187 = scmp.ne.s32.totalorder %s182, %s184
      %p188 = scmp.eq.s32.totalorder %s33, 0
      %p189 = por %p187, %p188
      %p190 = scmp.ne.s32.totalorder %s182, %s184
      %p191 = scmp.eq.s32.totalorder %s38, 1
      %p192 = por %p190, %p191
      %p193 = scmp.ne.s32.totalorder %s184, %s185
      %p194 = scmp.eq.s32.totalorder %s38, 0
      %p195 = por %p193, %p194
      %p196 = scmp.ne.s32.totalorder %s184, %s185
      %p197 = scmp.eq.s32.totalorder %s39, 1
      %p198 = por %p196, %p197
      %p200 = scmp.ne.s32.totalorder %s185, %s199
      %p201 = scmp.eq.s32.totalorder %s39, 0
      %p202 = por %p200, %p201
      %s204 = sadd.s32 %s203, 1
      %p207 = scmp.eq.s32.totalorder %s33, 1
      %p208 = scmp.ne.s32.totalorder %s203, %s205
      %p209 = scmp.eq.s32.totalorder %s33, 0
      %p210 = por %p208, %p209
      %p211 = scmp.ne.s32.totalorder %s203, %s205
      %p212 = scmp.eq.s32.totalorder %s38, 1
      %p213 = por %p211, %p212
      %p214 = scmp.ne.s32.totalorder %s205, %s206
      %p215 = scmp.eq.s32.totalorder %s38, 0
      %p216 = por %p214, %p215
      %p217 = scmp.ne.s32.totalorder %s205, %s206
      %p218 = scmp.eq.s32.totalorder %s39, 1
      %p219 = por %p217, %p218
      %p221 = scmp.ne.s32.totalorder %s206, %s220
      %p222 = scmp.eq.s32.totalorder %s39, 0
      %p223 = por %p221, %p222
      %s225 = sadd.s32 %s224, 1
      %p228 = scmp.eq.s32.totalorder %s33, 1
      %p229 = scmp.ne.s32.totalorder %s224, %s226
      %p230 = scmp.eq.s32.totalorder %s33, 0
      %p231 = por %p229, %p230
      %p232 = scmp.ne.s32.totalorder %s224, %s226
      %p233 = scmp.eq.s32.totalorder %s38, 1
      %p234 = por %p232, %p233
      %p235 = scmp.ne.s32.totalorder %s226, %s227
      %p236 = scmp.eq.s32.totalorder %s38, 0
      %p237 = por %p235, %p236
      %p238 = scmp.ne.s32.totalorder %s226, %s227
      %p239 = scmp.eq.s32.totalorder %s39, 1
      %p240 = por %p238, %p239
      %p242 = scmp.ne.s32.totalorder %s227, %s241
      %p243 = scmp.eq.s32.totalorder %s39, 0
      %p244 = por %p242, %p243
      %s246 = sadd.s32 %s245, 1
      %p249 = scmp.eq.s32.totalorder %s33, 1
      %p250 = scmp.ne.s32.totalorder %s245, %s247
      %p251 = scmp.eq.s32.totalorder %s33, 0
      %p252 = por %p250, %p251
      %p253 = scmp.ne.s32.totalorder %s245, %s247
      %p254 = scmp.eq.s32.totalorder %s38, 1
      %p255 = por %p253, %p254
      %p256 = scmp.ne.s32.totalorder %s247, %s248
      %p257 = scmp.eq.s32.totalorder %s38, 0
      %p258 = por %p256, %p257
      %p259 = scmp.ne.s32.totalorder %s247, %s248
      %p260 = scmp.eq.s32.totalorder %s39, 1
      %p261 = por %p259, %p260
      %p263 = scmp.ne.s32.totalorder %s248, %s262
      %p264 = scmp.eq.s32.totalorder %s39, 0
      %p265 = por %p263, %p264
      %s267 = sadd.s32 %s266, 1
      %p270 = scmp.eq.s32.totalorder %s33, 1
      %p271 = scmp.ne.s32.totalorder %s266, %s268
      %p272 = scmp.eq.s32.totalorder %s33, 0
      %p273 = por %p271, %p272
      %p274 = scmp.ne.s32.totalorder %s266, %s268
      %p275 = scmp.eq.s32.totalorder %s38, 1
      %p276 = por %p274, %p275
      %p277 = scmp.ne.s32.totalorder %s268, %s269
      %p278 = scmp.eq.s32.totalorder %s38, 0
      %p279 = por %p277, %p278
      %p280 = scmp.ne.s32.totalorder %s268, %s269
      %p281 = scmp.eq.s32.totalorder %s39, 1
      %p282 = por %p280, %p281
      %p284 = scmp.ne.s32.totalorder %s269, %s283
      %p285 = scmp.eq.s32.totalorder %s39, 0
      %p286 = por %p284, %p285
      %s288 = sadd.s32 %s287, 1
      %p291 = scmp.eq.s32.totalorder %s33, 1
      %p292 = scmp.ne.s32.totalorder %s287, %s289
      %p293 = scmp.eq.s32.totalorder %s33, 0
      %p294 = por %p292, %p293
      %p295 = scmp.ne.s32.totalorder %s287, %s289
      %p296 = scmp.eq.s32.totalorder %s38, 1
      %p297 = por %p295, %p296
      %p298 = scmp.ne.s32.totalorder %s289, %s290
      %p299 = scmp.eq.s32.totalorder %s38, 0
      %p300 = por %p298, %p299
      %p301 = scmp.ne.s32.totalorder %s289, %s290
      %p302 = scmp.eq.s32.totalorder %s39, 1
      %p303 = por %p301, %p302
      %p305 = scmp.ne.s32.totalorder %s290, %s304
      %p306 = scmp.eq.s32.totalorder %s39, 0
      %p307 = por %p305, %p306
      %s309 = sadd.s32 %s308, 1
      %p312 = scmp.eq.s32.totalorder %s33, 1
      %p313 = scmp.ne.s32.totalorder %s308, %s310
      %p314 = scmp.eq.s32.totalorder %s33, 0
      %p315 = por %p313, %p314
      %p316 = scmp.ne.s32.totalorder %s308, %s310
      %p317 = scmp.eq.s32.totalorder %s38, 1
      %p318 = por %p316, %p317
      %p319 = scmp.ne.s32.totalorder %s310, %s311
      %p320 = scmp.eq.s32.totalorder %s38, 0
      %p321 = por %p319, %p320
      %p322 = scmp.ne.s32.totalorder %s310, %s311
      %p323 = scmp.eq.s32.totalorder %s39, 1
      %p324 = por %p322, %p323
      %p326 = scmp.ne.s32.totalorder %s311, %s325
      %p327 = scmp.eq.s32.totalorder %s39, 0
      %p328 = por %p326, %p327
      %s330 = sadd.s32 %s329, 1
      %p333 = scmp.eq.s32.totalorder %s33, 1
      %p334 = scmp.ne.s32.totalorder %s329, %s331
      %p335 = scmp.eq.s32.totalorder %s33, 0
      %p336 = por %p334, %p335
      %p337 = scmp.ne.s32.totalorder %s329, %s331
      %p338 = scmp.eq.s32.totalorder %s38, 1
      %p339 = por %p337, %p338
      %p340 = scmp.ne.s32.totalorder %s331, %s332
      %p341 = scmp.eq.s32.totalorder %s38, 0
      %p342 = por %p340, %p341
      %p343 = scmp.ne.s32.totalorder %s331, %s332
      %p344 = scmp.eq.s32.totalorder %s39, 1
      %p345 = por %p343, %p344
      %p347 = scmp.ne.s32.totalorder %s332, %s346
      %p348 = scmp.eq.s32.totalorder %s39, 0
      %p349 = por %p347, %p348
      %s351 = sadd.s32 %s350, 1
      %p354 = scmp.eq.s32.totalorder %s33, 1
      %p355 = scmp.ne.s32.totalorder %s350, %s352
      %p356 = scmp.eq.s32.totalorder %s33, 0
      %p357 = por %p355, %p356
      %p358 = scmp.ne.s32.totalorder %s350, %s352
      %p359 = scmp.eq.s32.totalorder %s38, 1
      %p360 = por %p358, %p359
      %p361 = scmp.ne.s32.totalorder %s352, %s353
      %p362 = scmp.eq.s32.totalorder %s38, 0
      %p363 = por %p361, %p362
      %p364 = scmp.ne.s32.totalorder %s352, %s353
      %p365 = scmp.eq.s32.totalorder %s39, 1
      %p366 = por %p364, %p365
      %p368 = scmp.ne.s32.totalorder %s353, %s367
      %p369 = scmp.eq.s32.totalorder %s39, 0
      %p370 = por %p368, %p369
      %s372 = sadd.s32 %s371, 1
      %p375 = scmp.eq.s32.totalorder %s33, 1
      %p376 = scmp.ne.s32.totalorder %s371, %s373
      %p377 = scmp.eq.s32.totalorder %s33, 0
      %p378 = por %p376, %p377
      %p379 = scmp.ne.s32.totalorder %s371, %s373
      %p380 = scmp.eq.s32.totalorder %s38, 1
      %p381 = por %p379, %p380
      %p382 = scmp.ne.s32.totalorder %s373, %s374
      %p383 = scmp.eq.s32.totalorder %s38, 0
      %p384 = por %p382, %p383
      %p385 = scmp.ne.s32.totalorder %s373, %s374
      %p386 = scmp.eq.s32.totalorder %s39, 1
      %p387 = por %p385, %p386
      %p389 = scmp.ne.s32.totalorder %s374, %s388
      %p390 = scmp.eq.s32.totalorder %s39, 0
      %p391 = por %p389, %p390
      %s393 = sadd.s32 %s392, 1
      %p396 = scmp.eq.s32.totalorder %s33, 1
      %p397 = scmp.ne.s32.totalorder %s392, %s394
      %p398 = scmp.eq.s32.totalorder %s33, 0
      %p399 = por %p397, %p398
      %p400 = scmp.ne.s32.totalorder %s392, %s394
      %p401 = scmp.eq.s32.totalorder %s38, 1
      %p402 = por %p400, %p401
      %p403 = scmp.ne.s32.totalorder %s394, %s395
      %p404 = scmp.eq.s32.totalorder %s38, 0
      %p405 = por %p403, %p404
      %p406 = scmp.ne.s32.totalorder %s394, %s395
      %p407 = scmp.eq.s32.totalorder %s39, 1
      %p408 = por %p406, %p407
      %p410 = scmp.ne.s32.totalorder %s395, %s409
      %p411 = scmp.eq.s32.totalorder %s39, 0
      %p412 = por %p410, %p411
      %s414 = sadd.s32 %s413, 1
      %p417 = scmp.eq.s32.totalorder %s33, 1
      %p418 = scmp.ne.s32.totalorder %s413, %s415
      %p419 = scmp.eq.s32.totalorder %s33, 0
      %p420 = por %p418, %p419
      %p421 = scmp.ne.s32.totalorder %s413, %s415
      %p422 = scmp.eq.s32.totalorder %s38, 1
      %p423 = por %p421, %p422
      %p424 = scmp.ne.s32.totalorder %s415, %s416
      %p425 = scmp.eq.s32.totalorder %s38, 0
      %p426 = por %p424, %p425
      %p427 = scmp.ne.s32.totalorder %s415, %s416
      %p428 = scmp.eq.s32.totalorder %s39, 1
      %p429 = por %p427, %p428
      %p431 = scmp.ne.s32.totalorder %s416, %s430
      %p432 = scmp.eq.s32.totalorder %s39, 0
      %p433 = por %p431, %p432
      %s435 = sadd.s32 %s434, 1
      %p438 = scmp.eq.s32.totalorder %s33, 1
      %p439 = scmp.ne.s32.totalorder %s434, %s436
      %p440 = scmp.eq.s32.totalorder %s33, 0
      %p441 = por %p439, %p440
      %p442 = scmp.ne.s32.totalorder %s434, %s436
      %p443 = scmp.eq.s32.totalorder %s38, 1
      %p444 = por %p442, %p443
      %p445 = scmp.ne.s32.totalorder %s436, %s437
      %p446 = scmp.eq.s32.totalorder %s38, 0
      %p447 = por %p445, %p446
      %p448 = scmp.ne.s32.totalorder %s436, %s437
      %p449 = scmp.eq.s32.totalorder %s39, 1
      %p450 = por %p448, %p449
      %p452 = scmp.ne.s32.totalorder %s437, %s451
      %p453 = scmp.eq.s32.totalorder %s39, 0
      %p454 = por %p452, %p453
      %s456 = sadd.s32 %s455, 1
      %p459 = scmp.eq.s32.totalorder %s33, 1
      %p460 = scmp.ne.s32.totalorder %s455, %s457
      %p461 = scmp.eq.s32.totalorder %s33, 0
      %p462 = por %p460, %p461
      %p463 = scmp.ne.s32.totalorder %s455, %s457
      %p464 = scmp.eq.s32.totalorder %s38, 1
      %p465 = por %p463, %p464
      %p466 = scmp.ne.s32.totalorder %s457, %s458
      %p467 = scmp.eq.s32.totalorder %s38, 0
      %p468 = por %p466, %p467
      %p469 = scmp.ne.s32.totalorder %s457, %s458
      %p470 = scmp.eq.s32.totalorder %s39, 1
      %p471 = por %p469, %p470
      %p473 = scmp.ne.s32.totalorder %s458, %s472
      %p474 = scmp.eq.s32.totalorder %s39, 0
      %p475 = por %p473, %p474
      %s477 = sadd.s32 %s476, 1
      %p480 = scmp.eq.s32.totalorder %s33, 1
      %p481 = scmp.ne.s32.totalorder %s476, %s478
      %p482 = scmp.eq.s32.totalorder %s33, 0
      %p483 = por %p481, %p482
      %p484 = scmp.ne.s32.totalorder %s476, %s478
      %p485 = scmp.eq.s32.totalorder %s38, 1
      %p486 = por %p484, %p485
      %p487 = scmp.ne.s32.totalorder %s478, %s479
      %p488 = scmp.eq.s32.totalorder %s38, 0
      %p489 = por %p487, %p488
      %p490 = scmp.ne.s32.totalorder %s478, %s479
      %p491 = scmp.eq.s32.totalorder %s39, 1
      %p492 = por %p490, %p491
      %p494 = scmp.ne.s32.totalorder %s479, %s493
      %p495 = scmp.eq.s32.totalorder %s39, 0
      %p496 = por %p494, %p495
      %s498 = sadd.s32 %s497, 1
      %p501 = scmp.eq.s32.totalorder %s33, 1
      %p502 = scmp.ne.s32.totalorder %s497, %s499
      %p503 = scmp.eq.s32.totalorder %s33, 0
      %p504 = por %p502, %p503
      %p505 = scmp.ne.s32.totalorder %s497, %s499
      %p506 = scmp.eq.s32.totalorder %s38, 1
      %p507 = por %p505, %p506
      %p508 = scmp.ne.s32.totalorder %s499, %s500
      %p509 = scmp.eq.s32.totalorder %s38, 0
      %p510 = por %p508, %p509
      %p511 = scmp.ne.s32.totalorder %s499, %s500
      %p512 = scmp.eq.s32.totalorder %s39, 1
      %p513 = por %p511, %p512
      %p515 = scmp.ne.s32.totalorder %s500, %s514
      %p516 = scmp.eq.s32.totalorder %s39, 0
      %p517 = por %p515, %p516
      %s519 = sadd.s32 %s518, 1
      %p522 = scmp.eq.s32.totalorder %s33, 1
      %p523 = scmp.ne.s32.totalorder %s518, %s520
      %p524 = scmp.eq.s32.totalorder %s33, 0
      %p525 = por %p523, %p524
      %p526 = scmp.ne.s32.totalorder %s518, %s520
      %p527 = scmp.eq.s32.totalorder %s38, 1
      %p528 = por %p526, %p527
      %p529 = scmp.ne.s32.totalorder %s520, %s521
      %p530 = scmp.eq.s32.totalorder %s38, 0
      %p531 = por %p529, %p530
      %p532 = scmp.ne.s32.totalorder %s520, %s521
      %p533 = scmp.eq.s32.totalorder %s39, 1
      %p534 = por %p532, %p533
      %p536 = scmp.ne.s32.totalorder %s521, %s535
      %p537 = scmp.eq.s32.totalorder %s39, 0
      %p538 = por %p536, %p537
      %s539 = ssub.s32 %s33, %s40
      %p540 = scmp.eq.s32.totalorder %s539, 0
      %s542 = sadd.s32 %s541, 1
      %s543 = scalar_select %p540, %s541, %s542
      %p546 = pneg %p540
      %p547 = scmp.eq.s32.totalorder %s33, 1
      %p548 = por %p546, %p547
      %p549 = scmp.ne.s32.totalorder %s541, %s544
      %p550 = scmp.eq.s32.totalorder %s33, 0
      %p551 = por %p549, %p550
      %p552 = scmp.ne.s32.totalorder %s541, %s544
      %p553 = scmp.eq.s32.totalorder %s38, 1
      %p554 = por %p552, %p553
      %p555 = scmp.ne.s32.totalorder %s544, %s545
      %p556 = scmp.eq.s32.totalorder %s38, 0
      %p557 = por %p555, %p556
      %p558 = scmp.ne.s32.totalorder %s544, %s545
      %p559 = scmp.eq.s32.totalorder %s39, 1
      %p560 = por %p558, %p559
      %p562 = scmp.ne.s32.totalorder %s545, %s561
      %p563 = scmp.eq.s32.totalorder %s39, 0
      %p564 = por %p562, %p563
      %p565 = scmp.le.s32.totalorder 1, %s33
      %p566 = scmp.lt.s32.totalorder %s33, 3
      %p567 = pnand %p565, %p566
      %p568 = pneg %p567
      // Predicated region
      $region9: #{graphormer_forward.1} parent=5 // pred_check
        _
      $region10: #{graphormer_forward.1} parent=5 // pred_check_branch
        %570 = sbr.rel (%p567) target = $region12
      $region11: #{graphormer_forward.1} parent=5 // pred_region
        %s571 = ssub.s32 %s33, 1
        // Predicated region
        $region13: #{graphormer_forward.1} parent=11 // pred_check
          %p572 = pneg %p132
        $region14: #{graphormer_forward.1} parent=11 // pred_check_branch
          %574 = sbr.rel (%p572) target = $region16
        $region15: #{graphormer_forward.1} parent=11 // pred_region
          _
        $region16: #{graphormer_forward.1} parent=11 // pred_fallthru
          _
        // Predicated region
        $region17: #{graphormer_forward.1} parent=11 // pred_check
          %p575 = pneg %p153
        $region18: #{graphormer_forward.1} parent=11 // pred_check_branch
          %577 = sbr.rel (%p575) target = $region20
        $region19: #{graphormer_forward.1} parent=11 // pred_region
          _
        $region20: #{graphormer_forward.1} parent=11 // pred_fallthru
          _
        // Predicated region
        $region21: #{graphormer_forward.1} parent=11 // pred_check
          %p578 = pneg %p174
        $region22: #{graphormer_forward.1} parent=11 // pred_check_branch
          %580 = sbr.rel (%p578) target = $region24
        $region23: #{graphormer_forward.1} parent=11 // pred_region
          _
        $region24: #{graphormer_forward.1} parent=11 // pred_fallthru
          _
        // Predicated region
        $region25: #{graphormer_forward.1} parent=11 // pred_check
          %p581 = pneg %p195
        $region26: #{graphormer_forward.1} parent=11 // pred_check_branch
          %583 = sbr.rel (%p581) target = $region28
        $region27: #{graphormer_forward.1} parent=11 // pred_region
          _
        $region28: #{graphormer_forward.1} parent=11 // pred_fallthru
          _
        // Predicated region
        $region29: #{graphormer_forward.1} parent=11 // pred_check
          %p584 = pneg %p216
        $region30: #{graphormer_forward.1} parent=11 // pred_check_branch
          %586 = sbr.rel (%p584) target = $region32
        $region31: #{graphormer_forward.1} parent=11 // pred_region
          %588 = vsyncadd [#allocation4], 0
          %s589 = sshll.u32 %s7, 4
          %s590 = int_to_ptr.hbm [resolvable:$true] %s589
          %s591 = sshll.u32 [#allocation3], 4
          %s592 = int_to_ptr.vmem [resolvable:$true] %s591
          %597 = dma.hbm_to_vmem [thread:$0]  %s590, 18432, %s592, [#allocation4], 192, 192, 12
        $region32: #{graphormer_forward.1} parent=11 // pred_fallthru
          _
        // Predicated region
        $region33: #{graphormer_forward.1} parent=11 // pred_check
          %p598 = pneg %p237
        $region34: #{graphormer_forward.1} parent=11 // pred_check_branch
          %600 = sbr.rel (%p598) target = $region36
        $region35: #{graphormer_forward.1} parent=11 // pred_region
          _
        $region36: #{graphormer_forward.1} parent=11 // pred_fallthru
          _
        // Predicated region
        $region37: #{graphormer_forward.1} parent=11 // pred_check
          %p601 = pneg %p258
        $region38: #{graphormer_forward.1} parent=11 // pred_check_branch
          %603 = sbr.rel (%p601) target = $region40
        $region39: #{graphormer_forward.1} parent=11 // pred_region
          _
        $region40: #{graphormer_forward.1} parent=11 // pred_fallthru
          _
        // Predicated region
        $region41: #{graphormer_forward.1} parent=11 // pred_check
          %p604 = pneg %p279
        $region42: #{graphormer_forward.1} parent=11 // pred_check_branch
          %606 = sbr.rel (%p604) target = $region44
        $region43: #{graphormer_forward.1} parent=11 // pred_region
          _
        $region44: #{graphormer_forward.1} parent=11 // pred_fallthru
          _
        // Predicated region
        $region45: #{graphormer_forward.1} parent=11 // pred_check
          %p607 = pneg %p300
        $region46: #{graphormer_forward.1} parent=11 // pred_check_branch
          %609 = sbr.rel (%p607) target = $region48
        $region47: #{graphormer_forward.1} parent=11 // pred_region
          _
        $region48: #{graphormer_forward.1} parent=11 // pred_fallthru
          _
        // Predicated region
        $region49: #{graphormer_forward.1} parent=11 // pred_check
          %p610 = pneg %p321
        $region50: #{graphormer_forward.1} parent=11 // pred_check_branch
          %612 = sbr.rel (%p610) target = $region52
        $region51: #{graphormer_forward.1} parent=11 // pred_region
          _
        $region52: #{graphormer_forward.1} parent=11 // pred_fallthru
          _
        // Predicated region
        $region53: #{graphormer_forward.1} parent=11 // pred_check
          %p613 = pneg %p342
        $region54: #{graphormer_forward.1} parent=11 // pred_check_branch
          %615 = sbr.rel (%p613) target = $region56
        $region55: #{graphormer_forward.1} parent=11 // pred_region
          %617 = vsyncadd [#allocation6], 0
          %s618 = sshll.u32 %s13, 4
          %s619 = int_to_ptr.hbm [resolvable:$true] %s618
          %s620 = sshll.u32 [#allocation5], 4
          %s621 = int_to_ptr.vmem [resolvable:$true] %s620
          %626 = dma.hbm_to_vmem [thread:$0]  %s619, 12288, %s621, [#allocation6], 128, 128, 8
        $region56: #{graphormer_forward.1} parent=11 // pred_fallthru
          _
        // Predicated region
        $region57: #{graphormer_forward.1} parent=11 // pred_check
          %p627 = pneg %p363
        $region58: #{graphormer_forward.1} parent=11 // pred_check_branch
          %629 = sbr.rel (%p627) target = $region60
        $region59: #{graphormer_forward.1} parent=11 // pred_region
          _
        $region60: #{graphormer_forward.1} parent=11 // pred_fallthru
          _
        // Predicated region
        $region61: #{graphormer_forward.1} parent=11 // pred_check
          %p630 = pneg %p384
        $region62: #{graphormer_forward.1} parent=11 // pred_check_branch
          %632 = sbr.rel (%p630) target = $region64
        $region63: #{graphormer_forward.1} parent=11 // pred_region
          %634 = vsyncadd [#allocation6], 0
          %s635 = sshll.u32 %s15, 4
          %s636 = int_to_ptr.hbm [resolvable:$true] %s635
          %s637 = sshll.u32 [#allocation7], 4
          %s638 = int_to_ptr.vmem [resolvable:$true] %s637
          %643 = dma.hbm_to_vmem [thread:$0]  %s636, 12288, %s638, [#allocation6], 64, 64, 4
        $region64: #{graphormer_forward.1} parent=11 // pred_fallthru
          _
        // Predicated region
        $region65: #{graphormer_forward.1} parent=11 // pred_check
          %p644 = pneg %p405
        $region66: #{graphormer_forward.1} parent=11 // pred_check_branch
          %646 = sbr.rel (%p644) target = $region68
        $region67: #{graphormer_forward.1} parent=11 // pred_region
          _
        $region68: #{graphormer_forward.1} parent=11 // pred_fallthru
          _
        // Predicated region
        $region69: #{graphormer_forward.1} parent=11 // pred_check
          %p647 = pneg %p426
        $region70: #{graphormer_forward.1} parent=11 // pred_check_branch
          %649 = sbr.rel (%p647) target = $region72
        $region71: #{graphormer_forward.1} parent=11 // pred_region
          _
        $region72: #{graphormer_forward.1} parent=11 // pred_fallthru
          _
        // Predicated region
        $region73: #{graphormer_forward.1} parent=11 // pred_check
          %p650 = pneg %p447
        $region74: #{graphormer_forward.1} parent=11 // pred_check_branch
          %652 = sbr.rel (%p650) target = $region76
        $region75: #{graphormer_forward.1} parent=11 // pred_region
          _
        $region76: #{graphormer_forward.1} parent=11 // pred_fallthru
          _
        // Predicated region
        $region77: #{graphormer_forward.1} parent=11 // pred_check
          %p653 = pneg %p468
        $region78: #{graphormer_forward.1} parent=11 // pred_check_branch
          %655 = sbr.rel (%p653) target = $region80
        $region79: #{graphormer_forward.1} parent=11 // pred_region
          _
        $region80: #{graphormer_forward.1} parent=11 // pred_fallthru
          _
        // Predicated region
        $region81: #{graphormer_forward.1} parent=11 // pred_check
          %p656 = pneg %p489
        $region82: #{graphormer_forward.1} parent=11 // pred_check_branch
          %658 = sbr.rel (%p656) target = $region84
        $region83: #{graphormer_forward.1} parent=11 // pred_region
          _
        $region84: #{graphormer_forward.1} parent=11 // pred_fallthru
          _
        // Predicated region
        $region85: #{graphormer_forward.1} parent=11 // pred_check
          %p659 = pneg %p510
        $region86: #{graphormer_forward.1} parent=11 // pred_check_branch
          %661 = sbr.rel (%p659) target = $region88
        $region87: #{graphormer_forward.1} parent=11 // pred_region
          _
        $region88: #{graphormer_forward.1} parent=11 // pred_fallthru
          _
        // Predicated region
        $region89: #{graphormer_forward.1} parent=11 // pred_check
          %p662 = pneg %p531
        $region90: #{graphormer_forward.1} parent=11 // pred_check_branch
          %664 = sbr.rel (%p662) target = $region92
        $region91: #{graphormer_forward.1} parent=11 // pred_region
          _
        $region92: #{graphormer_forward.1} parent=11 // pred_fallthru
          _
      $region12: #{graphormer_forward.1} parent=5 // pred_fallthru
        _
      %p665 = scmp.lt.s32.totalorder %s33, 2
      // Predicated region
      $region93: #{graphormer_forward.1} parent=5 // pred_check
        %p666 = pneg %p665
      $region94: #{graphormer_forward.1} parent=5 // pred_check_branch
        %668 = sbr.rel (%p666) target = $region96
      $region95: #{graphormer_forward.1} parent=5 // pred_region
        // Predicated region
        $region97: #{graphormer_forward.1} parent=95 // pred_check
          %p669 = pneg %p53
        $region98: #{graphormer_forward.1} parent=95 // pred_check_branch
          %671 = sbr.rel (%p669) target = $region100
        $region99: #{graphormer_forward.1} parent=95 // pred_region
          %p672 = scmp.lt.s32.totalorder %s33, 1
          %s673 = scalar_select %p672, %s33, 1
          %s674 = smul.addr %s673, 2
          %s675 = smul.addr %s674, 8
          %s676 = scalar_lea.vmem %s0, %s675
        $region100: #{graphormer_forward.1} parent=95 // pred_fallthru
          _
        // Predicated region
        $region101: #{graphormer_forward.1} parent=95 // pred_check
          %p677 = pneg %p79
        $region102: #{graphormer_forward.1} parent=95 // pred_check_branch
          %679 = sbr.rel (%p677) target = $region104
        $region103: #{graphormer_forward.1} parent=95 // pred_region
          %p680 = scmp.lt.s32.totalorder %s33, 1
          %s681 = scalar_select %p680, %s33, 1
          %s682 = smul.addr %s681, 2
          %s683 = smul.addr %s682, 8
          %s684 = scalar_lea.vmem %s1, %s683
        $region104: #{graphormer_forward.1} parent=95 // pred_fallthru
          _
        // Predicated region
        $region105: #{graphormer_forward.1} parent=95 // pred_check
          %p685 = pneg %p105
        $region106: #{graphormer_forward.1} parent=95 // pred_check_branch
          %687 = sbr.rel (%p685) target = $region108
        $region107: #{graphormer_forward.1} parent=95 // pred_region
          %p688 = scmp.lt.s32.totalorder %s33, 1
          %s689 = scalar_select %p688, %s33, 1
          %s690 = smul.addr %s689, 8
          %s691 = smul.addr %s690, 8
          %s692 = scalar_lea.vmem %s2, %s691
        $region108: #{graphormer_forward.1} parent=95 // pred_fallthru
          _
      $region96: #{graphormer_forward.1} parent=5 // pred_fallthru
        _
      %p693 = scmp.le.s32.totalorder 1, %s33
      %p694 = scmp.lt.s32.totalorder %s33, 3
      %p695 = pnand %p693, %p694
      %p696 = pneg %p695
      // Predicated region
      $region109: #{graphormer_forward.1} parent=5 // pred_check
        _
      $region110: #{graphormer_forward.1} parent=5 // pred_check_branch
        %698 = sbr.rel (%p695) target = $region112
      $region111: #{graphormer_forward.1} parent=5 // pred_region
        %s699 = ssub.s32 %s33, 1
        // Predicated region
        $region113: #{graphormer_forward.1} parent=111 // pred_check
          %p700 = pneg %p216
        $region114: #{graphormer_forward.1} parent=111 // pred_check_branch
          %702 = sbr.rel (%p700) target = $region116
        $region115: #{graphormer_forward.1} parent=111 // pred_region
          %704 = dma.done [#allocation4], 18432
        $region116: #{graphormer_forward.1} parent=111 // pred_fallthru
          _
        // Predicated region
        $region117: #{graphormer_forward.1} parent=111 // pred_check
          %p705 = pneg %p342
        $region118: #{graphormer_forward.1} parent=111 // pred_check_branch
          %707 = sbr.rel (%p705) target = $region120
        $region119: #{graphormer_forward.1} parent=111 // pred_region
          %709 = dma.done [#allocation6], 12288
        $region120: #{graphormer_forward.1} parent=111 // pred_fallthru
          _
        // Predicated region
        $region121: #{graphormer_forward.1} parent=111 // pred_check
          %p710 = pneg %p384
        $region122: #{graphormer_forward.1} parent=111 // pred_check_branch
          %712 = sbr.rel (%p710) target = $region124
        $region123: #{graphormer_forward.1} parent=111 // pred_region
          %714 = dma.done [#allocation6], 12288
        $region124: #{graphormer_forward.1} parent=111 // pred_fallthru
          _
        %p715 = scmp.lt.s32.totalorder %s38, 1
        %s716 = scalar_select %p715, %s38, 1
        %s717 = smul.addr %s716, 2
        %s718 = smul.addr %s717, 8
        %s719 = scalar_lea.vmem %s0, %s718
        %p720 = pneg %p59
        %p721 = pneg %p56
        %p722 = scmp.lt.s32.totalorder %s38, 1
        %s723 = scalar_select %p722, %s38, 1
        %s724 = smul.addr %s723, 2
        %s725 = smul.addr %s724, 8
        %s726 = scalar_lea.vmem %s1, %s725
        %p727 = pneg %p85
        %p728 = pneg %p82
        %p729 = scmp.lt.s32.totalorder %s38, 1
        %s730 = scalar_select %p729, %s38, 1
        %s731 = smul.addr %s730, 8
        %s732 = smul.addr %s731, 8
        %s733 = scalar_lea.vmem %s2, %s732
        %p734 = pneg %p111
        %p735 = pneg %p108
        %p736 = pneg %p132
        %p737 = pneg %p129
        %p738 = pneg %p153
        %p739 = pneg %p150
        %p740 = pneg %p174
        %p741 = pneg %p171
        %p742 = pneg %p195
        %p743 = pneg %p192
        %p744 = pneg %p216
        %p745 = pneg %p213
        %p746 = pneg %p237
        %p747 = pneg %p234
        %p748 = pneg %p258
        %p749 = pneg %p255
        %p750 = pneg %p279
        %p751 = pneg %p276
        %p752 = pneg %p300
        %p753 = pneg %p297
        %p754 = pneg %p321
        %p755 = pneg %p318
        %p756 = pneg %p342
        %p757 = pneg %p339
        %p758 = pneg %p363
        %p759 = pneg %p360
        %p760 = pneg %p384
        %p761 = pneg %p381
        %p762 = pneg %p405
        %p763 = pneg %p402
        %p764 = pneg %p426
        %p765 = pneg %p423
        %p766 = pneg %p447
        %p767 = pneg %p444
        %p768 = pneg %p468
        %p769 = pneg %p465
        %p770 = pneg %p489
        %p771 = pneg %p486
        %p772 = pneg %p510
        %p773 = pneg %p507
        %p774 = pneg %p531
        %p775 = pneg %p528
        %p776 = pneg %p557
        %p777 = pneg %p554
        %p778 = scmp.lt.s32.totalorder %s38, 1
        %s779 = scalar_select %p778, %s38, 1
        %s780 = smul.addr %s779, 2
        %s781 = smul.addr %s780, 8
        %s782 = scalar_lea.vmem %s23, %s781
        %p783 = scmp.lt.s32.totalorder %s38, 1
        %s784 = scalar_select %p783, %s38, 1
        %s785 = smul.addr %s784, 2
        %s786 = smul.addr %s785, 8
        %s787 = scalar_lea.vmem %s0, %s786
        %p788 = scmp.lt.s32.totalorder %s38, 1
        %s789 = scalar_select %p788, %s38, 1
        %s790 = smul.addr %s789, 2
        %s791 = smul.addr %s790, 8
        %s792 = scalar_lea.vmem %s1, %s791
        %p793 = scmp.lt.s32.totalorder %s38, 1
        %s794 = scalar_select %p793, %s38, 1
        %s795 = smul.addr %s794, 8
        %s796 = smul.addr %s795, 8
        %s797 = scalar_lea.vmem %s2, %s796
        %p798 = scmp.lt.s32.totalorder %s38, 1
        %s799 = scalar_select %p798, %s38, 1
        %s800 = smul.addr %s799, 2
        %s801 = smul.addr %s800, 8
        %s802 = scalar_lea.vmem %s23, %s801
        %v804 = vld [vmem:[%s787] sm:$0xff]
        %v805 = vld [vmem:[%s787 + $0x8] sm:$0xff]
        %v806 = vld [vmem:[%s3] sm:$0xff]
        %v807 = vld [vmem:[%s3 + $0x8] sm:$0xff]
        %v808 = vld [vmem:[%s3 + $0x10] sm:$0xff]
        %v809 = vld [vmem:[%s3 + $0x18] sm:$0xff]
        %v810 = vld [vmem:[%s4] sm:$0x1]
        %v812 = vperm.slane %v810, 0
        %vm814 = vcmask 261120
        %v816 = vsel %vm814, %v804, 0
        %v819 = vsel %vm814, %v805, 0
        %821 = vmatpush.msra.mxu0 0.0
        %822 = vmatpush.msra.mxu0 0.0
        %823 = vmatpush.msra.mxu0 0.0
        %824 = vmatpush.msra.mxu0 0.0
        %825 = vmatpush.msra.mxu0 0.0
        %826 = vmatpush.msra.mxu0 0.0
        %827 = vmatpush.msra.mxu0 0.0
        %828 = vmatpush.msra.mxu0 0.0
        %829 = vmatpush.msra.mxu0 0.0
        %830 = vmatpush.msra.mxu0 0.0
        %831 = vmatpush.msra.mxu0 0.0
        %832 = vmatpush.msra.mxu0 0.0
        %833 = vmatpush.msra.mxu0 %v809
        %834 = vmatpush.msra.mxu0 %v808
        %835 = vmatpush.msra.mxu0 %v807
        %836 = vmatpush.msra.mxu0 %v806
        %837 = vmatmul.f32.gmra.mxu0 %v816
        %v838 = vpop.f32.mrf.mxu0
        %v839 = vadd.f32 %v812, %v838
        %840 = vmatmul.f32.gmra.mxu0 %v819
        %v841 = vpop.f32.mrf.mxu0
        %v842 = vadd.f32 %v812, %v841
        %843 = vdwg.mxu0
        %vm844 = vcmp.ge.f32.partialorder %v839, 0.0
        %vm845 = vcmp.ge.f32.partialorder %v842, 0.0
        %v846 = vmul.f32 %v839, 0.1
        %v847 = vmul.f32 %v842, 0.1
        %v848 = vsel %vm844, %v839, %v846
        %v849 = vsel %vm845, %v842, %v847
        %v850 = vld [vmem:[%s5] sm:$0xff]
        %v851 = vld [vmem:[%s5 + $0x8] sm:$0xff]
        %v852 = vld [vmem:[%s5 + $0x10] sm:$0xff]
        %v853 = vld [vmem:[%s5 + $0x18] sm:$0xff]
        %v854 = vld [vmem:[%s5 + $0x20] sm:$0xff]
        %v855 = vld [vmem:[%s5 + $0x28] sm:$0xff]
        %v856 = vld [vmem:[%s5 + $0x30] sm:$0xff]
        %v857 = vld [vmem:[%s5 + $0x38] sm:$0xff]
        %v858 = vld [vmem:[%s6] sm:$0x1]
        %v860 = vperm.slane %v858, 0
        %vm862 = vcmask 523264
        %v864 = vsel %vm862, %v848, 0
        %v867 = vsel %vm862, %v849, 0
        %869 = vmatpush.msra.mxu0 0.0
        %870 = vmatpush.msra.mxu0 0.0
        %871 = vmatpush.msra.mxu0 0.0
        %872 = vmatpush.msra.mxu0 0.0
        %873 = vmatpush.msra.mxu0 0.0
        %874 = vmatpush.msra.mxu0 0.0
        %875 = vmatpush.msra.mxu0 0.0
        %876 = vmatpush.msra.mxu0 0.0
        %877 = vmatpush.msra.mxu0 %v857
        %878 = vmatpush.msra.mxu0 %v856
        %879 = vmatpush.msra.mxu0 %v855
        %880 = vmatpush.msra.mxu0 %v854
        %881 = vmatpush.msra.mxu0 %v853
        %882 = vmatpush.msra.mxu0 %v852
        %883 = vmatpush.msra.mxu0 %v851
        %884 = vmatpush.msra.mxu0 %v850
        %885 = vmatmul.f32.gmra.mxu0 %v864
        %v886 = vpop.f32.mrf.mxu0
        %v887 = vadd.f32 %v860, %v886
        %888 = vmatmul.f32.gmra.mxu0 %v867
        %v889 = vpop.f32.mrf.mxu0
        %v890 = vadd.f32 %v860, %v889
        %891 = vdwg.mxu0
        %v892 = vld [vmem:[%s792] sm:$0xff]
        %v893 = vld [vmem:[%s792 + $0x8] sm:$0xff]
        %v894 = vadd.f32 %v887, %v892
        %v895 = vadd.f32 %v890, %v893
        %v896 = vld [vmem:[%s797] sm:$0xff]
        %v897 = vld [vmem:[%s797 + $0x8] sm:$0xff]
        %v898 = vld [vmem:[%s797 + $0x10] sm:$0xff]
        %v899 = vld [vmem:[%s797 + $0x18] sm:$0xff]
        %v900 = vld [vmem:[%s797 + $0x20] sm:$0xff]
        %v901 = vld [vmem:[%s797 + $0x28] sm:$0xff]
        %v902 = vld [vmem:[%s797 + $0x30] sm:$0xff]
        %v903 = vld [vmem:[%s797 + $0x38] sm:$0xff]
        %v904 = vpack.c.bf16 %v895, %v894
        %v905 = vld [vmem:[#allocation3] sm:$0xff]
        %v906 = vld [vmem:[#allocation3 + $0x8] sm:$0xf]
        %v907 = vld [vmem:[#allocation3 + $0xc] sm:$0xff]
        %v908 = vld [vmem:[#allocation3 + $0x14] sm:$0xf]
        %v909 = vld [vmem:[#allocation3 + $0x18] sm:$0xff]
        %v910 = vld [vmem:[#allocation3 + $0x20] sm:$0xf]
        %v911 = vld [vmem:[#allocation3 + $0x24] sm:$0xff]
        %v912 = vld [vmem:[#allocation3 + $0x2c] sm:$0xf]
        %v913 = vld [vmem:[#allocation3 + $0x30] sm:$0xff]
        %v914 = vld [vmem:[#allocation3 + $0x38] sm:$0xf]
        %v915 = vld [vmem:[#allocation3 + $0x3c] sm:$0xff]
        %v916 = vld [vmem:[#allocation3 + $0x44] sm:$0xf]
        %v917 = vld [vmem:[#allocation3 + $0x48] sm:$0xff]
        %v918 = vld [vmem:[#allocation3 + $0x50] sm:$0xf]
        %v919 = vld [vmem:[#allocation3 + $0x54] sm:$0xff]
        %v920 = vld [vmem:[#allocation3 + $0x5c] sm:$0xf]
        %v921 = vld [vmem:[#allocation3 + $0x60] sm:$0xff]
        %v922 = vld [vmem:[#allocation3 + $0x68] sm:$0xf]
        %v923 = vld [vmem:[#allocation3 + $0x6c] sm:$0xff]
        %v924 = vld [vmem:[#allocation3 + $0x74] sm:$0xf]
        %v925 = vld [vmem:[#allocation3 + $0x78] sm:$0xff]
        %v926 = vld [vmem:[#allocation3 + $0x80] sm:$0xf]
        %v927 = vld [vmem:[#allocation3 + $0x84] sm:$0xff]
        %v928 = vld [vmem:[#allocation3 + $0x8c] sm:$0xf]
        %v929 = vld [vmem:[#allocation3 + $0x90] sm:$0xff]
        %v930 = vld [vmem:[#allocation3 + $0x98] sm:$0xf]
        %v931 = vld [vmem:[#allocation3 + $0x9c] sm:$0xff]
        %v932 = vld [vmem:[#allocation3 + $0xa4] sm:$0xf]
        %v933 = vld [vmem:[#allocation3 + $0xa8] sm:$0xff]
        %v934 = vld [vmem:[#allocation3 + $0xb0] sm:$0xf]
        %v935 = vld [vmem:[#allocation3 + $0xb4] sm:$0xff]
        %v936 = vld [vmem:[#allocation3 + $0xbc] sm:$0xf]
        %v937 = vld [vmem:[%s8] sm:$0x7]
        %v939 = vperm.slane %v937, 0
        %v940 = vperm.slane %v937, 1
        %v941 = vperm.slane %v937, 2
        %v977 = vunpack.c.l.b16 %v905
        %v978 = vunpack.c.h.b16 %v905
        %v979 = vunpack.c.l.b16 %v906
        %v980 = vunpack.c.l.b16 %v907
        %v981 = vunpack.c.h.b16 %v907
        %v982 = vunpack.c.l.b16 %v908
        %v983 = vunpack.c.l.b16 %v909
        %v984 = vunpack.c.h.b16 %v909
        %v985 = vunpack.c.l.b16 %v910
        %v986 = vunpack.c.l.b16 %v911
        %v987 = vunpack.c.h.b16 %v911
        %v988 = vunpack.c.l.b16 %v912
        %v989 = vunpack.c.l.b16 %v913
        %v990 = vunpack.c.h.b16 %v913
        %v991 = vunpack.c.l.b16 %v914
        %v992 = vunpack.c.l.b16 %v915
        %v993 = vunpack.c.h.b16 %v915
        %v994 = vunpack.c.l.b16 %v916
        %v995 = vunpack.c.l.b16 %v917
        %v996 = vunpack.c.h.b16 %v917
        %v997 = vunpack.c.l.b16 %v918
        %v998 = vunpack.c.l.b16 %v919
        %v999 = vunpack.c.h.b16 %v919
        %v1000 = vunpack.c.l.b16 %v920
        %v1001 = vunpack.c.l.b16 %v921
        %v1002 = vunpack.c.h.b16 %v921
        %v1003 = vunpack.c.l.b16 %v922
        %v1004 = vunpack.c.l.b16 %v923
        %v1005 = vunpack.c.h.b16 %v923
        %v1006 = vunpack.c.l.b16 %v924
        %v1007 = vunpack.c.l.b16 %v925
        %v1008 = vunpack.c.h.b16 %v925
        %v1009 = vunpack.c.l.b16 %v926
        %v1010 = vunpack.c.l.b16 %v927
        %v1011 = vunpack.c.h.b16 %v927
        %v1012 = vunpack.c.l.b16 %v928
        %v1013 = vunpack.c.l.b16 %v929
        %v1014 = vunpack.c.h.b16 %v929
        %v1015 = vunpack.c.l.b16 %v930
        %v1016 = vunpack.c.l.b16 %v931
        %v1017 = vunpack.c.h.b16 %v931
        %v1018 = vunpack.c.l.b16 %v932
        %v1019 = vunpack.c.l.b16 %v933
        %v1020 = vunpack.c.h.b16 %v933
        %v1021 = vunpack.c.l.b16 %v934
        %v1022 = vunpack.c.l.b16 %v935
        %v1023 = vunpack.c.h.b16 %v935
        %v1024 = vunpack.c.l.b16 %v936
        %v1025 = vpack.c.b16 %v980, %v977
        %v1026 = vpack.c.b16 %v981, %v978
        %v1027 = vpack.c.b16 %v982, %v979
        %v1028 = vpack.c.b16 %v986, %v983
        %v1029 = vpack.c.b16 %v987, %v984
        %v1030 = vpack.c.b16 %v988, %v985
        %v1031 = vpack.c.b16 %v992, %v989
        %v1032 = vpack.c.b16 %v993, %v990
        %v1033 = vpack.c.b16 %v994, %v991
        %v1034 = vpack.c.b16 %v998, %v995
        %v1035 = vpack.c.b16 %v999, %v996
        %v1036 = vpack.c.b16 %v1000, %v997
        %v1037 = vpack.c.b16 %v1004, %v1001
        %v1038 = vpack.c.b16 %v1005, %v1002
        %v1039 = vpack.c.b16 %v1006, %v1003
        %v1040 = vpack.c.b16 %v1010, %v1007
        %v1041 = vpack.c.b16 %v1011, %v1008
        %v1042 = vpack.c.b16 %v1012, %v1009
        %v1043 = vpack.c.b16 %v1016, %v1013
        %v1044 = vpack.c.b16 %v1017, %v1014
        %v1045 = vpack.c.b16 %v1018, %v1015
        %v1046 = vpack.c.b16 %v1022, %v1019
        %v1047 = vpack.c.b16 %v1023, %v1020
        %v1048 = vpack.c.b16 %v1024, %v1021
        %1073 = vmatpush.bf16.msra.mxu0 %v1046
        %1074 = vmatpush.bf16.msra.mxu0 %v1043
        %1075 = vmatpush.bf16.msra.mxu0 %v1040
        %1076 = vmatpush.bf16.msra.mxu0 %v1037
        %1077 = vmatpush.bf16.msra.mxu0 %v1034
        %1078 = vmatpush.bf16.msra.mxu0 %v1031
        %1079 = vmatpush.bf16.msra.mxu0 %v1028
        %1080 = vmatpush.bf16.msra.mxu0 %v1025
        %1081 = vmatmul.bf16.gmra.mxu0 %v904
        %v1082 = vpop.f32.mrf.mxu0
        %v1083 = vadd.f32 %v939, %v1082
        %v1084 = vpop.f32.mrf.mxu0
        %v1085 = vadd.f32 %v939, %v1084
        %1086 = vdwg.mxu0
        %1087 = vmatpush.bf16.msra.mxu0 %v1047
        %1088 = vmatpush.bf16.msra.mxu0 %v1044
        %1089 = vmatpush.bf16.msra.mxu0 %v1041
        %1090 = vmatpush.bf16.msra.mxu0 %v1038
        %1091 = vmatpush.bf16.msra.mxu0 %v1035
        %1092 = vmatpush.bf16.msra.mxu0 %v1032
        %1093 = vmatpush.bf16.msra.mxu0 %v1029
        %1094 = vmatpush.bf16.msra.mxu0 %v1026
        %1095 = vmatmul.bf16.gmra.mxu0 %v904
        %v1096 = vpop.f32.mrf.mxu0
        %v1097 = vadd.f32 %v940, %v1096
        %v1098 = vpop.f32.mrf.mxu0
        %v1099 = vadd.f32 %v940, %v1098
        %1100 = vdwg.mxu0
        %1101 = vmatpush.bf16.msra.mxu0 %v1048
        %1102 = vmatpush.bf16.msra.mxu0 %v1045
        %1103 = vmatpush.bf16.msra.mxu0 %v1042
        %1104 = vmatpush.bf16.msra.mxu0 %v1039
        %1105 = vmatpush.bf16.msra.mxu0 %v1036
        %1106 = vmatpush.bf16.msra.mxu0 %v1033
        %1107 = vmatpush.bf16.msra.mxu0 %v1030
        %1108 = vmatpush.bf16.msra.mxu0 %v1027
        %1109 = vmatmul.bf16.gmra.mxu0 %v904
        %v1110 = vpop.f32.mrf.mxu0
        %v1111 = vadd.f32 %v941, %v1110
        %v1112 = vpop.f32.mrf.mxu0
        %v1113 = vadd.f32 %v941, %v1112
        %1114 = vdwg.mxu0
        %1117 = vrot.lane.b32.xlu0 %v1083, 96
        %v1118 = vpop.permute.xlu0 %1117
        %1119 = vrot.lane.b32.xlu0 %v1085, 96
        %v1120 = vpop.permute.xlu0 %1119
        %1121 = vrot.lane.b32.xlu0 %v1083, 64
        %v1122 = vpop.permute.xlu0 %1121
        %1123 = vrot.lane.b32.xlu0 %v1085, 64
        %v1124 = vpop.permute.xlu0 %1123
        %1125 = vrot.lane.b32.xlu0 %v1083, 32
        %v1126 = vpop.permute.xlu0 %1125
        %1127 = vrot.lane.b32.xlu0 %v1085, 32
        %v1128 = vpop.permute.xlu0 %1127
        %1131 = vrot.lane.b32.xlu0 %v1097, 96
        %v1132 = vpop.permute.xlu0 %1131
        %1133 = vrot.lane.b32.xlu0 %v1099, 96
        %v1134 = vpop.permute.xlu0 %1133
        %1135 = vrot.lane.b32.xlu0 %v1097, 64
        %v1136 = vpop.permute.xlu0 %1135
        %1137 = vrot.lane.b32.xlu0 %v1099, 64
        %v1138 = vpop.permute.xlu0 %1137
        %1139 = vrot.lane.b32.xlu0 %v1097, 32
        %v1140 = vpop.permute.xlu0 %1139
        %1141 = vrot.lane.b32.xlu0 %v1099, 32
        %v1142 = vpop.permute.xlu0 %1141
        %1145 = vrot.lane.b32.xlu0 %v1111, 96
        %v1146 = vpop.permute.xlu0 %1145
        %1147 = vrot.lane.b32.xlu0 %v1113, 96
        %v1148 = vpop.permute.xlu0 %1147
        %1151 = vrot.lane.b32.xlu0 %v1111, 64
        %v1152 = vpop.permute.xlu0 %1151
        %1153 = vrot.lane.b32.xlu0 %v1113, 64
        %v1154 = vpop.permute.xlu0 %1153
        %1157 = vrot.lane.b32.xlu0 %v1111, 32
        %v1158 = vpop.permute.xlu0 %1157
        %1159 = vrot.lane.b32.xlu0 %v1113, 32
        %v1160 = vpop.permute.xlu0 %1159
        %v1163 = vsel %vm814, %v1083, 0
        %v1165 = vsel %vm814, %v1085, 0
        %v1167 = vsel %vm814, %v1097, 0
        %v1169 = vsel %vm814, %v1099, 0
        %1171 = vmatpush.xpose.msra.mxu0 0.0
        %1172 = vmatpush.xpose.msra.mxu0 0.0
        %1173 = vmatpush.xpose.msra.mxu0 0.0
        %1174 = vmatpush.xpose.msra.mxu0 0.0
        %1175 = vmatpush.xpose.msra.mxu0 0.0
        %1176 = vmatpush.xpose.msra.mxu0 0.0
        %1177 = vmatpush.xpose.msra.mxu0 0.0
        %1178 = vmatpush.xpose.msra.mxu0 0.0
        %1179 = vmatpush.xpose.msra.mxu0 0.0
        %1180 = vmatpush.xpose.msra.mxu0 0.0
        %1181 = vmatpush.xpose.msra.mxu0 0.0
        %1182 = vmatpush.xpose.msra.mxu0 0.0
        %1183 = vmatpush.xpose.msra.mxu0 0.0
        %1184 = vmatpush.xpose.msra.mxu0 0.0
        %1185 = vmatpush.xpose.msra.mxu0 %v1169
        %1186 = vmatpush.xpose.msra.mxu0 %v1167
        %1187 = vmatmul.f32.gmra.mxu0 %v1163
        %v1188 = vpop.f32.mrf.mxu0
        %v1189 = vadd.f32 %v896, %v1188
        %1190 = vmatmul.f32.gmra.mxu0 %v1165
        %v1191 = vpop.f32.mrf.mxu0
        %v1192 = vadd.f32 %v897, %v1191
        %1193 = vdwg.mxu0
        %v1194 = vsel %vm814, %v1118, 0
        %v1196 = vsel %vm814, %v1120, 0
        %v1198 = vsel %vm814, %v1132, 0
        %v1200 = vsel %vm814, %v1134, 0
        %1202 = vmatpush.xpose.msra.mxu0 0.0
        %1203 = vmatpush.xpose.msra.mxu0 0.0
        %1204 = vmatpush.xpose.msra.mxu0 0.0
        %1205 = vmatpush.xpose.msra.mxu0 0.0
        %1206 = vmatpush.xpose.msra.mxu0 0.0
        %1207 = vmatpush.xpose.msra.mxu0 0.0
        %1208 = vmatpush.xpose.msra.mxu0 0.0
        %1209 = vmatpush.xpose.msra.mxu0 0.0
        %1210 = vmatpush.xpose.msra.mxu0 0.0
        %1211 = vmatpush.xpose.msra.mxu0 0.0
        %1212 = vmatpush.xpose.msra.mxu0 0.0
        %1213 = vmatpush.xpose.msra.mxu0 0.0
        %1214 = vmatpush.xpose.msra.mxu0 0.0
        %1215 = vmatpush.xpose.msra.mxu0 0.0
        %1216 = vmatpush.xpose.msra.mxu0 %v1200
        %1217 = vmatpush.xpose.msra.mxu0 %v1198
        %1218 = vmatmul.f32.gmra.mxu0 %v1194
        %v1219 = vpop.f32.mrf.mxu0
        %v1220 = vadd.f32 %v898, %v1219
        %1221 = vmatmul.f32.gmra.mxu0 %v1196
        %v1222 = vpop.f32.mrf.mxu0
        %v1223 = vadd.f32 %v899, %v1222
        %1224 = vdwg.mxu0
        %v1225 = vsel %vm814, %v1122, 0
        %v1227 = vsel %vm814, %v1124, 0
        %v1229 = vsel %vm814, %v1136, 0
        %v1231 = vsel %vm814, %v1138, 0
        %1233 = vmatpush.xpose.msra.mxu0 0.0
        %1234 = vmatpush.xpose.msra.mxu0 0.0
        %1235 = vmatpush.xpose.msra.mxu0 0.0
        %1236 = vmatpush.xpose.msra.mxu0 0.0
        %1237 = vmatpush.xpose.msra.mxu0 0.0
        %1238 = vmatpush.xpose.msra.mxu0 0.0
        %1239 = vmatpush.xpose.msra.mxu0 0.0
        %1240 = vmatpush.xpose.msra.mxu0 0.0
        %1241 = vmatpush.xpose.msra.mxu0 0.0
        %1242 = vmatpush.xpose.msra.mxu0 0.0
        %1243 = vmatpush.xpose.msra.mxu0 0.0
        %1244 = vmatpush.xpose.msra.mxu0 0.0
        %1245 = vmatpush.xpose.msra.mxu0 0.0
        %1246 = vmatpush.xpose.msra.mxu0 0.0
        %1247 = vmatpush.xpose.msra.mxu0 %v1231
        %1248 = vmatpush.xpose.msra.mxu0 %v1229
        %1249 = vmatmul.f32.gmra.mxu0 %v1225
        %v1250 = vpop.f32.mrf.mxu0
        %v1251 = vadd.f32 %v900, %v1250
        %1252 = vmatmul.f32.gmra.mxu0 %v1227
        %v1253 = vpop.f32.mrf.mxu0
        %v1254 = vadd.f32 %v901, %v1253
        %1255 = vdwg.mxu0
        %v1256 = vsel %vm814, %v1126, 0
        %v1258 = vsel %vm814, %v1128, 0
        %v1260 = vsel %vm814, %v1140, 0
        %v1262 = vsel %vm814, %v1142, 0
        %1264 = vmatpush.xpose.msra.mxu0 0.0
        %1265 = vmatpush.xpose.msra.mxu0 0.0
        %1266 = vmatpush.xpose.msra.mxu0 0.0
        %1267 = vmatpush.xpose.msra.mxu0 0.0
        %1268 = vmatpush.xpose.msra.mxu0 0.0
        %1269 = vmatpush.xpose.msra.mxu0 0.0
        %1270 = vmatpush.xpose.msra.mxu0 0.0
        %1271 = vmatpush.xpose.msra.mxu0 0.0
        %1272 = vmatpush.xpose.msra.mxu0 0.0
        %1273 = vmatpush.xpose.msra.mxu0 0.0
        %1274 = vmatpush.xpose.msra.mxu0 0.0
        %1275 = vmatpush.xpose.msra.mxu0 0.0
        %1276 = vmatpush.xpose.msra.mxu0 0.0
        %1277 = vmatpush.xpose.msra.mxu0 0.0
        %1278 = vmatpush.xpose.msra.mxu0 %v1262
        %1279 = vmatpush.xpose.msra.mxu0 %v1260
        %1280 = vmatmul.f32.gmra.mxu0 %v1256
        %v1281 = vpop.f32.mrf.mxu0
        %v1282 = vadd.f32 %v902, %v1281
        %1283 = vmatmul.f32.gmra.mxu0 %v1258
        %v1284 = vpop.f32.mrf.mxu0
        %v1285 = vadd.f32 %v903, %v1284
        %1286 = vdwg.mxu0
        %vm1287 = vcmask 130048
        %v1288 = vsel %vm1287, %v1189, -inf
        %1289 = vmax.xlane.f32.xlu0 %v1288
        %v1290 = vpop.xlane.xlu0 %1289
        %v1291 = vsel %vm1287, %v1192, -inf
        %1292 = vmax.xlane.f32.xlu0 %v1291
        %v1293 = vpop.xlane.xlu0 %1292
        %v1294 = vsel %vm1287, %v1220, -inf
        %1295 = vmax.xlane.f32.xlu0 %v1294
        %v1296 = vpop.xlane.xlu0 %1295
        %v1297 = vsel %vm1287, %v1223, -inf
        %1298 = vmax.xlane.f32.xlu0 %v1297
        %v1299 = vpop.xlane.xlu0 %1298
        %v1300 = vsel %vm1287, %v1251, -inf
        %1301 = vmax.xlane.f32.xlu0 %v1300
        %v1302 = vpop.xlane.xlu0 %1301
        %v1303 = vsel %vm1287, %v1254, -inf
        %1304 = vmax.xlane.f32.xlu0 %v1303
        %v1305 = vpop.xlane.xlu0 %1304
        %v1306 = vsel %vm1287, %v1282, -inf
        %1307 = vmax.xlane.f32.xlu0 %v1306
        %v1308 = vpop.xlane.xlu0 %1307
        %v1309 = vsel %vm1287, %v1285, -inf
        %1310 = vmax.xlane.f32.xlu0 %v1309
        %v1311 = vpop.xlane.xlu0 %1310
        %v1312 = vsub.f32 %v1189, %v1290
        %v1313 = vsub.f32 %v1192, %v1293
        %v1314 = vsub.f32 %v1220, %v1296
        %v1315 = vsub.f32 %v1223, %v1299
        %v1316 = vsub.f32 %v1251, %v1302
        %v1317 = vsub.f32 %v1254, %v1305
        %v1318 = vsub.f32 %v1282, %v1308
        %v1319 = vsub.f32 %v1285, %v1311
        %v1320 = vmul.f32 %v1312, 1.442695
        %v1321 = vpow.pop %v1320
        %v1322 = vmul.f32 %v1313, 1.442695
        %v1323 = vpow.pop %v1322
        %v1324 = vmul.f32 %v1314, 1.442695
        %v1325 = vpow.pop %v1324
        %v1326 = vmul.f32 %v1315, 1.442695
        %v1327 = vpow.pop %v1326
        %v1328 = vmul.f32 %v1316, 1.442695
        %v1329 = vpow.pop %v1328
        %v1330 = vmul.f32 %v1317, 1.442695
        %v1331 = vpow.pop %v1330
        %v1332 = vmul.f32 %v1318, 1.442695
        %v1333 = vpow.pop %v1332
        %v1334 = vmul.f32 %v1319, 1.442695
        %v1335 = vpow.pop %v1334
        %v1336 = vsel %vm1287, %v1321, 0.0
        %1337 = vadd.xlane.f32.xlu0 %v1336
        %v1338 = vpop.xlane.xlu0 %1337
        %v1339 = vsel %vm1287, %v1323, 0.0
        %1340 = vadd.xlane.f32.xlu0 %v1339
        %v1341 = vpop.xlane.xlu0 %1340
        %v1342 = vsel %vm1287, %v1325, 0.0
        %1343 = vadd.xlane.f32.xlu0 %v1342
        %v1344 = vpop.xlane.xlu0 %1343
        %v1345 = vsel %vm1287, %v1327, 0.0
        %1346 = vadd.xlane.f32.xlu0 %v1345
        %v1347 = vpop.xlane.xlu0 %1346
        %v1348 = vsel %vm1287, %v1329, 0.0
        %1349 = vadd.xlane.f32.xlu0 %v1348
        %v1350 = vpop.xlane.xlu0 %1349
        %v1351 = vsel %vm1287, %v1331, 0.0
        %1352 = vadd.xlane.f32.xlu0 %v1351
        %v1353 = vpop.xlane.xlu0 %1352
        %v1354 = vsel %vm1287, %v1333, 0.0
        %1355 = vadd.xlane.f32.xlu0 %v1354
        %v1356 = vpop.xlane.xlu0 %1355
        %v1357 = vsel %vm1287, %v1335, 0.0
        %1358 = vadd.xlane.f32.xlu0 %v1357
        %v1359 = vpop.xlane.xlu0 %1358
        %v1360 = vrcp.pop %v1338
        %v1361 = vrcp.pop %v1341
        %v1362 = vrcp.pop %v1344
        %v1363 = vrcp.pop %v1347
        %v1364 = vrcp.pop %v1350
        %v1365 = vrcp.pop %v1353
        %v1366 = vrcp.pop %v1356
        %v1367 = vrcp.pop %v1359
        %v1368 = vmul.f32 %v1321, %v1360
        %v1369 = vmul.f32 %v1323, %v1361
        %v1370 = vmul.f32 %v1325, %v1362
        %v1371 = vmul.f32 %v1327, %v1363
        %v1372 = vmul.f32 %v1329, %v1364
        %v1373 = vmul.f32 %v1331, %v1365
        %v1374 = vmul.f32 %v1333, %v1366
        %v1375 = vmul.f32 %v1335, %v1367
        %v1376 = vpack.c.bf16 %v1368, %v1368
        %v1377 = vpack.c.bf16 %v1369, %v1369
        %v1378 = vpack.c.bf16 %v1370, %v1370
        %v1379 = vpack.c.bf16 %v1371, %v1371
        %v1380 = vpack.c.bf16 %v1372, %v1372
        %v1381 = vpack.c.bf16 %v1373, %v1373
        %v1382 = vpack.c.bf16 %v1374, %v1374
        %v1383 = vpack.c.bf16 %v1375, %v1375
        %v1384 = vpack.c.bf16 %v1111, %v1111
        %v1385 = vpack.c.bf16 %v1113, %v1113
        %v1386 = vpack.c.bf16 %v1146, %v1146
        %v1387 = vpack.c.bf16 %v1148, %v1148
        %v1388 = vpack.c.bf16 %v1152, %v1152
        %v1389 = vpack.c.bf16 %v1154, %v1154
        %v1390 = vpack.c.bf16 %v1158, %v1158
        %v1391 = vpack.c.bf16 %v1160, %v1160
        %v1394 = vunpack.c.l.b16 %v1376
        %v1395 = vunpack.c.l.b16 %v1377
        %v1396 = vpack.c.b16 %v1395, %v1394
        %v1399 = vunpack.c.l.b16 %v1384
        %v1400 = vunpack.c.l.b16 %v1385
        %v1401 = vpack.c.b16 %v1400, %v1399
        %v1404 = vsel %vm1287, %v1396, 0
        %1406 = vmatpush.bf16.msra.mxu0 0
        %1407 = vmatpush.bf16.msra.mxu0 0
        %1408 = vmatpush.bf16.msra.mxu0 0
        %1409 = vmatpush.bf16.msra.mxu0 0
        %1410 = vmatpush.bf16.msra.mxu0 0
        %1411 = vmatpush.bf16.msra.mxu0 0
        %1412 = vmatpush.bf16.msra.mxu0 0
        %1413 = vmatpush.bf16.msra.mxu0 %v1401
        %1414 = vmatmul.bf16.gmra.mxu0 %v1404
        %v1415 = vpop.f32.mrf.mxu0
        %v1416 = vadd.f32 0.0, %v1415
        %v1417 = vpop.f32.mrf.mxu0
        %v1418 = vadd.f32 0.0, %v1417
        %1419 = vdwg.mxu0
        %v1422 = vunpack.c.l.b16 %v1378
        %v1423 = vunpack.c.l.b16 %v1379
        %v1424 = vpack.c.b16 %v1423, %v1422
        %v1427 = vunpack.c.l.b16 %v1386
        %v1428 = vunpack.c.l.b16 %v1387
        %v1429 = vpack.c.b16 %v1428, %v1427
        %v1432 = vsel %vm1287, %v1424, 0
        %1434 = vmatpush.bf16.msra.mxu0 0
        %1435 = vmatpush.bf16.msra.mxu0 0
        %1436 = vmatpush.bf16.msra.mxu0 0
        %1437 = vmatpush.bf16.msra.mxu0 0
        %1438 = vmatpush.bf16.msra.mxu0 0
        %1439 = vmatpush.bf16.msra.mxu0 0
        %1440 = vmatpush.bf16.msra.mxu0 0
        %1441 = vmatpush.bf16.msra.mxu0 %v1429
        %1442 = vmatmul.bf16.gmra.mxu0 %v1432
        %v1443 = vpop.f32.mrf.mxu0
        %v1444 = vadd.f32 0.0, %v1443
        %v1445 = vpop.f32.mrf.mxu0
        %v1446 = vadd.f32 0.0, %v1445
        %1447 = vdwg.mxu0
        %v1450 = vunpack.c.l.b16 %v1380
        %v1451 = vunpack.c.l.b16 %v1381
        %v1452 = vpack.c.b16 %v1451, %v1450
        %v1455 = vunpack.c.l.b16 %v1388
        %v1456 = vunpack.c.l.b16 %v1389
        %v1457 = vpack.c.b16 %v1456, %v1455
        %v1460 = vsel %vm1287, %v1452, 0
        %1462 = vmatpush.bf16.msra.mxu0 0
        %1463 = vmatpush.bf16.msra.mxu0 0
        %1464 = vmatpush.bf16.msra.mxu0 0
        %1465 = vmatpush.bf16.msra.mxu0 0
        %1466 = vmatpush.bf16.msra.mxu0 0
        %1467 = vmatpush.bf16.msra.mxu0 0
        %1468 = vmatpush.bf16.msra.mxu0 0
        %1469 = vmatpush.bf16.msra.mxu0 %v1457
        %1470 = vmatmul.bf16.gmra.mxu0 %v1460
        %v1471 = vpop.f32.mrf.mxu0
        %v1472 = vadd.f32 0.0, %v1471
        %v1473 = vpop.f32.mrf.mxu0
        %v1474 = vadd.f32 0.0, %v1473
        %1475 = vdwg.mxu0
        %v1478 = vunpack.c.l.b16 %v1382
        %v1479 = vunpack.c.l.b16 %v1383
        %v1480 = vpack.c.b16 %v1479, %v1478
        %v1483 = vunpack.c.l.b16 %v1390
        %v1484 = vunpack.c.l.b16 %v1391
        %v1485 = vpack.c.b16 %v1484, %v1483
        %v1488 = vsel %vm1287, %v1480, 0
        %1490 = vmatpush.bf16.msra.mxu0 0
        %1491 = vmatpush.bf16.msra.mxu0 0
        %1492 = vmatpush.bf16.msra.mxu0 0
        %1493 = vmatpush.bf16.msra.mxu0 0
        %1494 = vmatpush.bf16.msra.mxu0 0
        %1495 = vmatpush.bf16.msra.mxu0 0
        %1496 = vmatpush.bf16.msra.mxu0 0
        %1497 = vmatpush.bf16.msra.mxu0 %v1485
        %1498 = vmatmul.bf16.gmra.mxu0 %v1488
        %v1499 = vpop.f32.mrf.mxu0
        %v1500 = vadd.f32 0.0, %v1499
        %v1501 = vpop.f32.mrf.mxu0
        %v1502 = vadd.f32 0.0, %v1501
        %1503 = vdwg.mxu0
        %1506 = vrot.lane.b32.xlu0 %v1444, 32
        %v1507 = vpop.permute.xlu0 %1506
        %1508 = vrot.lane.b32.xlu0 %v1446, 32
        %v1509 = vpop.permute.xlu0 %1508
        %1514 = vrot.lane.b32.xlu0 %v1472, 64
        %v1515 = vpop.permute.xlu0 %1514
        %1516 = vrot.lane.b32.xlu0 %v1474, 64
        %v1517 = vpop.permute.xlu0 %1516
        %1522 = vrot.lane.b32.xlu0 %v1500, 96
        %v1523 = vpop.permute.xlu0 %1522
        %1524 = vrot.lane.b32.xlu0 %v1502, 96
        %v1525 = vpop.permute.xlu0 %1524
        %v1528 = vsel %vm814, %v1416, %v1507
        %v1529 = vsel %vm814, %v1418, %v1509
        %v1530 = vsel %vm862, %v1528, %v1515
        %v1531 = vsel %vm862, %v1529, %v1517
        %vm1532 = vcmask 785408
        %v1533 = vsel %vm1532, %v1530, %v1523
        %v1534 = vsel %vm1532, %v1531, %v1525
        %v1535 = vpack.c.bf16 %v1534, %v1533
        %v1536 = vld [vmem:[%s9] sm:$0xf]
        %v1537 = vld [vmem:[%s9 + $0x4] sm:$0xf]
        %v1538 = vld [vmem:[%s9 + $0x8] sm:$0xf]
        %v1539 = vld [vmem:[%s9 + $0xc] sm:$0xf]
        %v1540 = vld [vmem:[%s9 + $0x10] sm:$0xf]
        %v1541 = vld [vmem:[%s9 + $0x14] sm:$0xf]
        %v1542 = vld [vmem:[%s9 + $0x18] sm:$0xf]
        %v1543 = vld [vmem:[%s9 + $0x1c] sm:$0xf]
        %v1544 = vld [vmem:[%s9 + $0x20] sm:$0xf]
        %v1545 = vld [vmem:[%s9 + $0x24] sm:$0xf]
        %v1546 = vld [vmem:[%s9 + $0x28] sm:$0xf]
        %v1547 = vld [vmem:[%s9 + $0x2c] sm:$0xf]
        %v1548 = vld [vmem:[%s9 + $0x30] sm:$0xf]
        %v1549 = vld [vmem:[%s9 + $0x34] sm:$0xf]
        %v1550 = vld [vmem:[%s9 + $0x38] sm:$0xf]
        %v1551 = vld [vmem:[%s9 + $0x3c] sm:$0xf]
        %v1552 = vld [vmem:[%s10] sm:$0x1]
        %v1554 = vperm.slane %v1552, 0
        %v1572 = vunpack.c.l.b16 %v1536
        %v1573 = vunpack.c.l.b16 %v1537
        %v1574 = vunpack.c.l.b16 %v1538
        %v1575 = vunpack.c.l.b16 %v1539
        %v1576 = vunpack.c.l.b16 %v1540
        %v1577 = vunpack.c.l.b16 %v1541
        %v1578 = vunpack.c.l.b16 %v1542
        %v1579 = vunpack.c.l.b16 %v1543
        %v1580 = vunpack.c.l.b16 %v1544
        %v1581 = vunpack.c.l.b16 %v1545
        %v1582 = vunpack.c.l.b16 %v1546
        %v1583 = vunpack.c.l.b16 %v1547
        %v1584 = vunpack.c.l.b16 %v1548
        %v1585 = vunpack.c.l.b16 %v1549
        %v1586 = vunpack.c.l.b16 %v1550
        %v1587 = vunpack.c.l.b16 %v1551
        %v1588 = vpack.c.b16 %v1573, %v1572
        %v1589 = vpack.c.b16 %v1575, %v1574
        %v1590 = vpack.c.b16 %v1577, %v1576
        %v1591 = vpack.c.b16 %v1579, %v1578
        %v1592 = vpack.c.b16 %v1581, %v1580
        %v1593 = vpack.c.b16 %v1583, %v1582
        %v1594 = vpack.c.b16 %v1585, %v1584
        %v1595 = vpack.c.b16 %v1587, %v1586
        %1604 = vmatpush.bf16.msra.mxu0 %v1595
        %1605 = vmatpush.bf16.msra.mxu0 %v1594
        %1606 = vmatpush.bf16.msra.mxu0 %v1593
        %1607 = vmatpush.bf16.msra.mxu0 %v1592
        %1608 = vmatpush.bf16.msra.mxu0 %v1591
        %1609 = vmatpush.bf16.msra.mxu0 %v1590
        %1610 = vmatpush.bf16.msra.mxu0 %v1589
        %1611 = vmatpush.bf16.msra.mxu0 %v1588
        %1612 = vmatmul.bf16.gmra.mxu0 %v1535
        %v1613 = vpop.f32.mrf.mxu0
        %v1614 = vadd.f32 %v1554, %v1613
        %v1615 = vpop.f32.mrf.mxu0
        %v1616 = vadd.f32 %v1554, %v1615
        %1617 = vdwg.mxu0
        %v1618 = vadd.f32 %v894, %v1614
        %v1619 = vadd.f32 %v895, %v1616
        %v1620 = vld [vmem:[%s11] sm:$0x1]
        %v1621 = vld [vmem:[%s12] sm:$0x1]
        %1622 = vadd.xlane.f32.xlu0 %v1618
        %v1623 = vpop.xlane.xlu0 %1622
        %1624 = vadd.xlane.f32.xlu0 %v1619
        %v1625 = vpop.xlane.xlu0 %1624
        %v1626 = vrcp.pop 128.0
        %v1627 = vmul.f32 128.0, %v1626
        %v1628 = vsub.f32 1.0, %v1627
        %v1629 = vmul.f32 %v1626, %v1628
        %v1630 = vadd.f32 %v1626, %v1629
        %vm1631 = vweird.f32 %v1626
        %v1632 = vsel %vm1631, %v1626, %v1630
        %v1633 = vmul.f32 %v1623, %v1632
        %v1634 = vmul.f32 %v1625, %v1632
        %v1635 = vsub.f32 %v1618, %v1633
        %v1636 = vsub.f32 %v1619, %v1634
        %v1637 = vmul.f32 %v1635, %v1635
        %v1638 = vmul.f32 %v1636, %v1636
        %1639 = vadd.xlane.f32.xlu0 %v1637
        %v1640 = vpop.xlane.xlu0 %1639
        %1641 = vadd.xlane.f32.xlu0 %v1638
        %v1642 = vpop.xlane.xlu0 %1641
        %v1643 = vmul.f32 %v1640, %v1632
        %v1644 = vmul.f32 %v1642, %v1632
        %v1645 = vadd.f32 %v1643, 1e-05
        %v1646 = vadd.f32 %v1644, 1e-05
        %v1647 = vrsqrt.pop %v1645
        %v1648 = vmul.f32 %v1647, %v1645
        %v1649 = vmul.f32 %v1648, %v1647
        %v1650 = vmul.f32 0.5, %v1649
        %v1651 = vsub.f32 1.5, %v1650
        %v1652 = vmul.f32 %v1647, %v1651
        %vm1653 = vweird.f32 %v1645
        %vm1654 = vweird.f32 %v1647
        %vm1655 = vmor %vm1653, %vm1654
        %v1656 = vsel %vm1655, %v1647, %v1652
        %v1657 = vrsqrt.pop %v1646
        %v1658 = vmul.f32 %v1657, %v1646
        %v1659 = vmul.f32 %v1658, %v1657
        %v1660 = vmul.f32 0.5, %v1659
        %v1661 = vsub.f32 1.5, %v1660
        %v1662 = vmul.f32 %v1657, %v1661
        %vm1663 = vweird.f32 %v1646
        %vm1664 = vweird.f32 %v1657
        %vm1665 = vmor %vm1663, %vm1664
        %v1666 = vsel %vm1665, %v1657, %v1662
        %v1667 = vmul.f32 %v1635, %v1656
        %v1668 = vmul.f32 %v1636, %v1666
        %v1670 = vperm.slane %v1620, 0
        %v1672 = vmul.f32 %v1667, %v1670
        %v1673 = vmul.f32 %v1668, %v1670
        %v1675 = vperm.slane %v1621, 0
        %v1677 = vadd.f32 %v1672, %v1675
        %v1678 = vadd.f32 %v1673, %v1675
        %v1679 = vpack.c.bf16 %v1678, %v1677
        %v1680 = vld [vmem:[#allocation5] sm:$0xff]
        %v1681 = vld [vmem:[#allocation5 + $0x8] sm:$0xff]
        %v1682 = vld [vmem:[#allocation5 + $0x10] sm:$0xff]
        %v1683 = vld [vmem:[#allocation5 + $0x18] sm:$0xff]
        %v1684 = vld [vmem:[#allocation5 + $0x20] sm:$0xff]
        %v1685 = vld [vmem:[#allocation5 + $0x28] sm:$0xff]
        %v1686 = vld [vmem:[#allocation5 + $0x30] sm:$0xff]
        %v1687 = vld [vmem:[#allocation5 + $0x38] sm:$0xff]
        %v1688 = vld [vmem:[#allocation5 + $0x40] sm:$0xff]
        %v1689 = vld [vmem:[#allocation5 + $0x48] sm:$0xff]
        %v1690 = vld [vmem:[#allocation5 + $0x50] sm:$0xff]
        %v1691 = vld [vmem:[#allocation5 + $0x58] sm:$0xff]
        %v1692 = vld [vmem:[#allocation5 + $0x60] sm:$0xff]
        %v1693 = vld [vmem:[#allocation5 + $0x68] sm:$0xff]
        %v1694 = vld [vmem:[#allocation5 + $0x70] sm:$0xff]
        %v1695 = vld [vmem:[#allocation5 + $0x78] sm:$0xff]
        %v1696 = vld [vmem:[%s14] sm:$0x3]
        %v1698 = vperm.slane %v1696, 0
        %v1699 = vperm.slane %v1696, 1
        %v1718 = vunpack.c.l.b16 %v1680
        %v1719 = vunpack.c.h.b16 %v1680
        %v1720 = vunpack.c.l.b16 %v1681
        %v1721 = vunpack.c.h.b16 %v1681
        %v1722 = vunpack.c.l.b16 %v1682
        %v1723 = vunpack.c.h.b16 %v1682
        %v1724 = vunpack.c.l.b16 %v1683
        %v1725 = vunpack.c.h.b16 %v1683
        %v1726 = vunpack.c.l.b16 %v1684
        %v1727 = vunpack.c.h.b16 %v1684
        %v1728 = vunpack.c.l.b16 %v1685
        %v1729 = vunpack.c.h.b16 %v1685
        %v1730 = vunpack.c.l.b16 %v1686
        %v1731 = vunpack.c.h.b16 %v1686
        %v1732 = vunpack.c.l.b16 %v1687
        %v1733 = vunpack.c.h.b16 %v1687
        %v1734 = vunpack.c.l.b16 %v1688
        %v1735 = vunpack.c.h.b16 %v1688
        %v1736 = vunpack.c.l.b16 %v1689
        %v1737 = vunpack.c.h.b16 %v1689
        %v1738 = vunpack.c.l.b16 %v1690
        %v1739 = vunpack.c.h.b16 %v1690
        %v1740 = vunpack.c.l.b16 %v1691
        %v1741 = vunpack.c.h.b16 %v1691
        %v1742 = vunpack.c.l.b16 %v1692
        %v1743 = vunpack.c.h.b16 %v1692
        %v1744 = vunpack.c.l.b16 %v1693
        %v1745 = vunpack.c.h.b16 %v1693
        %v1746 = vunpack.c.l.b16 %v1694
        %v1747 = vunpack.c.h.b16 %v1694
        %v1748 = vunpack.c.l.b16 %v1695
        %v1749 = vunpack.c.h.b16 %v1695
        %v1750 = vpack.c.b16 %v1720, %v1718
        %v1751 = vpack.c.b16 %v1721, %v1719
        %v1752 = vpack.c.b16 %v1724, %v1722
        %v1753 = vpack.c.b16 %v1725, %v1723
        %v1754 = vpack.c.b16 %v1728, %v1726
        %v1755 = vpack.c.b16 %v1729, %v1727
        %v1756 = vpack.c.b16 %v1732, %v1730
        %v1757 = vpack.c.b16 %v1733, %v1731
        %v1758 = vpack.c.b16 %v1736, %v1734
        %v1759 = vpack.c.b16 %v1737, %v1735
        %v1760 = vpack.c.b16 %v1740, %v1738
        %v1761 = vpack.c.b16 %v1741, %v1739
        %v1762 = vpack.c.b16 %v1744, %v1742
        %v1763 = vpack.c.b16 %v1745, %v1743
        %v1764 = vpack.c.b16 %v1748, %v1746
        %v1765 = vpack.c.b16 %v1749, %v1747
        %1782 = vmatpush.bf16.msra.mxu0 %v1764
        %1783 = vmatpush.bf16.msra.mxu0 %v1762
        %1784 = vmatpush.bf16.msra.mxu0 %v1760
        %1785 = vmatpush.bf16.msra.mxu0 %v1758
        %1786 = vmatpush.bf16.msra.mxu0 %v1756
        %1787 = vmatpush.bf16.msra.mxu0 %v1754
        %1788 = vmatpush.bf16.msra.mxu0 %v1752
        %1789 = vmatpush.bf16.msra.mxu0 %v1750
        %1790 = vmatmul.bf16.gmra.mxu0 %v1679
        %v1791 = vpop.f32.mrf.mxu0
        %v1792 = vadd.f32 %v1698, %v1791
        %v1793 = vpop.f32.mrf.mxu0
        %v1794 = vadd.f32 %v1698, %v1793
        %1795 = vdwg.mxu0
        %1796 = vmatpush.bf16.msra.mxu0 %v1765
        %1797 = vmatpush.bf16.msra.mxu0 %v1763
        %1798 = vmatpush.bf16.msra.mxu0 %v1761
        %1799 = vmatpush.bf16.msra.mxu0 %v1759
        %1800 = vmatpush.bf16.msra.mxu0 %v1757
        %1801 = vmatpush.bf16.msra.mxu0 %v1755
        %1802 = vmatpush.bf16.msra.mxu0 %v1753
        %1803 = vmatpush.bf16.msra.mxu0 %v1751
        %1804 = vmatmul.bf16.gmra.mxu0 %v1679
        %v1805 = vpop.f32.mrf.mxu0
        %v1806 = vadd.f32 %v1699, %v1805
        %v1807 = vpop.f32.mrf.mxu0
        %v1808 = vadd.f32 %v1699, %v1807
        %1809 = vdwg.mxu0
        %v1810 = vmax.f32 %v1792, 0.0
        %v1811 = vmax.f32 %v1806, 0.0
        %v1812 = vmax.f32 %v1794, 0.0
        %v1813 = vmax.f32 %v1808, 0.0
        %v1814 = vpack.c.bf16 %v1812, %v1810
        %v1815 = vpack.c.bf16 %v1813, %v1811
        %v1816 = vld [vmem:[#allocation7] sm:$0xf]
        %v1817 = vld [vmem:[#allocation7 + $0x4] sm:$0xf]
        %v1818 = vld [vmem:[#allocation7 + $0x8] sm:$0xf]
        %v1819 = vld [vmem:[#allocation7 + $0xc] sm:$0xf]
        %v1820 = vld [vmem:[#allocation7 + $0x10] sm:$0xf]
        %v1821 = vld [vmem:[#allocation7 + $0x14] sm:$0xf]
        %v1822 = vld [vmem:[#allocation7 + $0x18] sm:$0xf]
        %v1823 = vld [vmem:[#allocation7 + $0x1c] sm:$0xf]
        %v1824 = vld [vmem:[#allocation7 + $0x20] sm:$0xf]
        %v1825 = vld [vmem:[#allocation7 + $0x24] sm:$0xf]
        %v1826 = vld [vmem:[#allocation7 + $0x28] sm:$0xf]
        %v1827 = vld [vmem:[#allocation7 + $0x2c] sm:$0xf]
        %v1828 = vld [vmem:[#allocation7 + $0x30] sm:$0xf]
        %v1829 = vld [vmem:[#allocation7 + $0x34] sm:$0xf]
        %v1830 = vld [vmem:[#allocation7 + $0x38] sm:$0xf]
        %v1831 = vld [vmem:[#allocation7 + $0x3c] sm:$0xf]
        %v1832 = vld [vmem:[#allocation7 + $0x40] sm:$0xf]
        %v1833 = vld [vmem:[#allocation7 + $0x44] sm:$0xf]
        %v1834 = vld [vmem:[#allocation7 + $0x48] sm:$0xf]
        %v1835 = vld [vmem:[#allocation7 + $0x4c] sm:$0xf]
        %v1836 = vld [vmem:[#allocation7 + $0x50] sm:$0xf]
        %v1837 = vld [vmem:[#allocation7 + $0x54] sm:$0xf]
        %v1838 = vld [vmem:[#allocation7 + $0x58] sm:$0xf]
        %v1839 = vld [vmem:[#allocation7 + $0x5c] sm:$0xf]
        %v1840 = vld [vmem:[#allocation7 + $0x60] sm:$0xf]
        %v1841 = vld [vmem:[#allocation7 + $0x64] sm:$0xf]
        %v1842 = vld [vmem:[#allocation7 + $0x68] sm:$0xf]
        %v1843 = vld [vmem:[#allocation7 + $0x6c] sm:$0xf]
        %v1844 = vld [vmem:[#allocation7 + $0x70] sm:$0xf]
        %v1845 = vld [vmem:[#allocation7 + $0x74] sm:$0xf]
        %v1846 = vld [vmem:[#allocation7 + $0x78] sm:$0xf]
        %v1847 = vld [vmem:[#allocation7 + $0x7c] sm:$0xf]
        %v1848 = vld [vmem:[%s16] sm:$0x1]
        %v1850 = vperm.slane %v1848, 0
        %v1884 = vunpack.c.l.b16 %v1816
        %v1885 = vunpack.c.l.b16 %v1817
        %v1886 = vunpack.c.l.b16 %v1818
        %v1887 = vunpack.c.l.b16 %v1819
        %v1888 = vunpack.c.l.b16 %v1820
        %v1889 = vunpack.c.l.b16 %v1821
        %v1890 = vunpack.c.l.b16 %v1822
        %v1891 = vunpack.c.l.b16 %v1823
        %v1892 = vunpack.c.l.b16 %v1824
        %v1893 = vunpack.c.l.b16 %v1825
        %v1894 = vunpack.c.l.b16 %v1826
        %v1895 = vunpack.c.l.b16 %v1827
        %v1896 = vunpack.c.l.b16 %v1828
        %v1897 = vunpack.c.l.b16 %v1829
        %v1898 = vunpack.c.l.b16 %v1830
        %v1899 = vunpack.c.l.b16 %v1831
        %v1900 = vunpack.c.l.b16 %v1832
        %v1901 = vunpack.c.l.b16 %v1833
        %v1902 = vunpack.c.l.b16 %v1834
        %v1903 = vunpack.c.l.b16 %v1835
        %v1904 = vunpack.c.l.b16 %v1836
        %v1905 = vunpack.c.l.b16 %v1837
        %v1906 = vunpack.c.l.b16 %v1838
        %v1907 = vunpack.c.l.b16 %v1839
        %v1908 = vunpack.c.l.b16 %v1840
        %v1909 = vunpack.c.l.b16 %v1841
        %v1910 = vunpack.c.l.b16 %v1842
        %v1911 = vunpack.c.l.b16 %v1843
        %v1912 = vunpack.c.l.b16 %v1844
        %v1913 = vunpack.c.l.b16 %v1845
        %v1914 = vunpack.c.l.b16 %v1846
        %v1915 = vunpack.c.l.b16 %v1847
        %v1916 = vpack.c.b16 %v1885, %v1884
        %v1917 = vpack.c.b16 %v1887, %v1886
        %v1918 = vpack.c.b16 %v1889, %v1888
        %v1919 = vpack.c.b16 %v1891, %v1890
        %v1920 = vpack.c.b16 %v1893, %v1892
        %v1921 = vpack.c.b16 %v1895, %v1894
        %v1922 = vpack.c.b16 %v1897, %v1896
        %v1923 = vpack.c.b16 %v1899, %v1898
        %v1924 = vpack.c.b16 %v1901, %v1900
        %v1925 = vpack.c.b16 %v1903, %v1902
        %v1926 = vpack.c.b16 %v1905, %v1904
        %v1927 = vpack.c.b16 %v1907, %v1906
        %v1928 = vpack.c.b16 %v1909, %v1908
        %v1929 = vpack.c.b16 %v1911, %v1910
        %v1930 = vpack.c.b16 %v1913, %v1912
        %v1931 = vpack.c.b16 %v1915, %v1914
        %1948 = vmatpush.bf16.msra.mxu0 %v1923
        %1949 = vmatpush.bf16.msra.mxu0 %v1922
        %1950 = vmatpush.bf16.msra.mxu0 %v1921
        %1951 = vmatpush.bf16.msra.mxu0 %v1920
        %1952 = vmatpush.bf16.msra.mxu0 %v1919
        %1953 = vmatpush.bf16.msra.mxu0 %v1918
        %1954 = vmatpush.bf16.msra.mxu0 %v1917
        %1955 = vmatpush.bf16.msra.mxu0 %v1916
        %1956 = vmatmul.bf16.gmra.mxu0 %v1814
        %v1957 = vpop.f32.mrf.mxu0
        %v1958 = vadd.f32 %v1850, %v1957
        %v1959 = vpop.f32.mrf.mxu0
        %v1960 = vadd.f32 %v1850, %v1959
        %1961 = vdwg.mxu0
        %1962 = vmatpush.bf16.msra.mxu0 %v1931
        %1963 = vmatpush.bf16.msra.mxu0 %v1930
        %1964 = vmatpush.bf16.msra.mxu0 %v1929
        %1965 = vmatpush.bf16.msra.mxu0 %v1928
        %1966 = vmatpush.bf16.msra.mxu0 %v1927
        %1967 = vmatpush.bf16.msra.mxu0 %v1926
        %1968 = vmatpush.bf16.msra.mxu0 %v1925
        %1969 = vmatpush.bf16.msra.mxu0 %v1924
        %1970 = vmatmul.bf16.gmra.mxu0 %v1815
        %v1971 = vpop.f32.mrf.mxu0
        %v1972 = vadd.f32 %v1958, %v1971
        %v1973 = vpop.f32.mrf.mxu0
        %v1974 = vadd.f32 %v1960, %v1973
        %1975 = vdwg.mxu0
        %v1976 = vadd.f32 %v1677, %v1972
        %v1977 = vadd.f32 %v1678, %v1974
        %v1978 = vld [vmem:[%s17] sm:$0x1]
        %v1979 = vld [vmem:[%s18] sm:$0x1]
        %1980 = vadd.xlane.f32.xlu0 %v1976
        %v1981 = vpop.xlane.xlu0 %1980
        %1982 = vadd.xlane.f32.xlu0 %v1977
        %v1983 = vpop.xlane.xlu0 %1982
        %v1984 = vmul.f32 %v1981, %v1632
        %v1985 = vmul.f32 %v1983, %v1632
        %v1986 = vsub.f32 %v1976, %v1984
        %v1987 = vsub.f32 %v1977, %v1985
        %v1988 = vmul.f32 %v1986, %v1986
        %v1989 = vmul.f32 %v1987, %v1987
        %1990 = vadd.xlane.f32.xlu0 %v1988
        %v1991 = vpop.xlane.xlu0 %1990
        %1992 = vadd.xlane.f32.xlu0 %v1989
        %v1993 = vpop.xlane.xlu0 %1992
        %v1994 = vmul.f32 %v1991, %v1632
        %v1995 = vmul.f32 %v1993, %v1632
        %v1996 = vadd.f32 %v1994, 1e-05
        %v1997 = vadd.f32 %v1995, 1e-05
        %v1998 = vrsqrt.pop %v1996
        %v1999 = vmul.f32 %v1998, %v1996
        %v2000 = vmul.f32 %v1999, %v1998
        %v2001 = vmul.f32 0.5, %v2000
        %v2002 = vsub.f32 1.5, %v2001
        %v2003 = vmul.f32 %v1998, %v2002
        %vm2004 = vweird.f32 %v1996
        %vm2005 = vweird.f32 %v1998
        %vm2006 = vmor %vm2004, %vm2005
        %v2007 = vsel %vm2006, %v1998, %v2003
        %v2008 = vrsqrt.pop %v1997
        %v2009 = vmul.f32 %v2008, %v1997
        %v2010 = vmul.f32 %v2009, %v2008
        %v2011 = vmul.f32 0.5, %v2010
        %v2012 = vsub.f32 1.5, %v2011
        %v2013 = vmul.f32 %v2008, %v2012
        %vm2014 = vweird.f32 %v1997
        %vm2015 = vweird.f32 %v2008
        %vm2016 = vmor %vm2014, %vm2015
        %v2017 = vsel %vm2016, %v2008, %v2013
        %v2018 = vmul.f32 %v1986, %v2007
        %v2019 = vmul.f32 %v1987, %v2017
        %v2021 = vperm.slane %v1978, 0
        %v2023 = vmul.f32 %v2018, %v2021
        %v2024 = vmul.f32 %v2019, %v2021
        %v2026 = vperm.slane %v1979, 0
        %v2028 = vadd.f32 %v2023, %v2026
        %v2029 = vadd.f32 %v2024, %v2026
        %v2030 = vpack.c.bf16 %v2029, %v2028
        %s2031 = scalar_lea.vmem [#allocation3], 192
        %v2032 = vld [vmem:[%s2031] sm:$0xff]
        %v2033 = vld [vmem:[%s2031 + $0x8] sm:$0xf]
        %v2034 = vld [vmem:[%s2031 + $0xc] sm:$0xff]
        %v2035 = vld [vmem:[%s2031 + $0x14] sm:$0xf]
        %v2036 = vld [vmem:[%s2031 + $0x18] sm:$0xff]
        %v2037 = vld [vmem:[%s2031 + $0x20] sm:$0xf]
        %v2038 = vld [vmem:[%s2031 + $0x24] sm:$0xff]
        %v2039 = vld [vmem:[%s2031 + $0x2c] sm:$0xf]
        %v2040 = vld [vmem:[%s2031 + $0x30] sm:$0xff]
        %v2041 = vld [vmem:[%s2031 + $0x38] sm:$0xf]
        %v2042 = vld [vmem:[%s2031 + $0x3c] sm:$0xff]
        %v2043 = vld [vmem:[%s2031 + $0x44] sm:$0xf]
        %v2044 = vld [vmem:[%s2031 + $0x48] sm:$0xff]
        %v2045 = vld [vmem:[%s2031 + $0x50] sm:$0xf]
        %v2046 = vld [vmem:[%s2031 + $0x54] sm:$0xff]
        %v2047 = vld [vmem:[%s2031 + $0x5c] sm:$0xf]
        %v2048 = vld [vmem:[%s2031 + $0x60] sm:$0xff]
        %v2049 = vld [vmem:[%s2031 + $0x68] sm:$0xf]
        %v2050 = vld [vmem:[%s2031 + $0x6c] sm:$0xff]
        %v2051 = vld [vmem:[%s2031 + $0x74] sm:$0xf]
        %v2052 = vld [vmem:[%s2031 + $0x78] sm:$0xff]
        %v2053 = vld [vmem:[%s2031 + $0x80] sm:$0xf]
        %v2054 = vld [vmem:[%s2031 + $0x84] sm:$0xff]
        %v2055 = vld [vmem:[%s2031 + $0x8c] sm:$0xf]
        %v2056 = vld [vmem:[%s2031 + $0x90] sm:$0xff]
        %v2057 = vld [vmem:[%s2031 + $0x98] sm:$0xf]
        %v2058 = vld [vmem:[%s2031 + $0x9c] sm:$0xff]
        %v2059 = vld [vmem:[%s2031 + $0xa4] sm:$0xf]
        %v2060 = vld [vmem:[%s2031 + $0xa8] sm:$0xff]
        %v2061 = vld [vmem:[%s2031 + $0xb0] sm:$0xf]
        %v2062 = vld [vmem:[%s2031 + $0xb4] sm:$0xff]
        %v2063 = vld [vmem:[%s2031 + $0xbc] sm:$0xf]
        %s2064 = scalar_lea.vmem %s8, 3
        %v2065 = vld [vmem:[%s2064] sm:$0x7]
        %v2067 = vperm.slane %v2065, 0
        %v2068 = vperm.slane %v2065, 1
        %v2069 = vperm.slane %v2065, 2
        %v2105 = vunpack.c.l.b16 %v2032
        %v2106 = vunpack.c.h.b16 %v2032
        %v2107 = vunpack.c.l.b16 %v2033
        %v2108 = vunpack.c.l.b16 %v2034
        %v2109 = vunpack.c.h.b16 %v2034
        %v2110 = vunpack.c.l.b16 %v2035
        %v2111 = vunpack.c.l.b16 %v2036
        %v2112 = vunpack.c.h.b16 %v2036
        %v2113 = vunpack.c.l.b16 %v2037
        %v2114 = vunpack.c.l.b16 %v2038
        %v2115 = vunpack.c.h.b16 %v2038
        %v2116 = vunpack.c.l.b16 %v2039
        %v2117 = vunpack.c.l.b16 %v2040
        %v2118 = vunpack.c.h.b16 %v2040
        %v2119 = vunpack.c.l.b16 %v2041
        %v2120 = vunpack.c.l.b16 %v2042
        %v2121 = vunpack.c.h.b16 %v2042
        %v2122 = vunpack.c.l.b16 %v2043
        %v2123 = vunpack.c.l.b16 %v2044
        %v2124 = vunpack.c.h.b16 %v2044
        %v2125 = vunpack.c.l.b16 %v2045
        %v2126 = vunpack.c.l.b16 %v2046
        %v2127 = vunpack.c.h.b16 %v2046
        %v2128 = vunpack.c.l.b16 %v2047
        %v2129 = vunpack.c.l.b16 %v2048
        %v2130 = vunpack.c.h.b16 %v2048
        %v2131 = vunpack.c.l.b16 %v2049
        %v2132 = vunpack.c.l.b16 %v2050
        %v2133 = vunpack.c.h.b16 %v2050
        %v2134 = vunpack.c.l.b16 %v2051
        %v2135 = vunpack.c.l.b16 %v2052
        %v2136 = vunpack.c.h.b16 %v2052
        %v2137 = vunpack.c.l.b16 %v2053
        %v2138 = vunpack.c.l.b16 %v2054
        %v2139 = vunpack.c.h.b16 %v2054
        %v2140 = vunpack.c.l.b16 %v2055
        %v2141 = vunpack.c.l.b16 %v2056
        %v2142 = vunpack.c.h.b16 %v2056
        %v2143 = vunpack.c.l.b16 %v2057
        %v2144 = vunpack.c.l.b16 %v2058
        %v2145 = vunpack.c.h.b16 %v2058
        %v2146 = vunpack.c.l.b16 %v2059
        %v2147 = vunpack.c.l.b16 %v2060
        %v2148 = vunpack.c.h.b16 %v2060
        %v2149 = vunpack.c.l.b16 %v2061
        %v2150 = vunpack.c.l.b16 %v2062
        %v2151 = vunpack.c.h.b16 %v2062
        %v2152 = vunpack.c.l.b16 %v2063
        %v2153 = vpack.c.b16 %v2108, %v2105
        %v2154 = vpack.c.b16 %v2109, %v2106
        %v2155 = vpack.c.b16 %v2110, %v2107
        %v2156 = vpack.c.b16 %v2114, %v2111
        %v2157 = vpack.c.b16 %v2115, %v2112
        %v2158 = vpack.c.b16 %v2116, %v2113
        %v2159 = vpack.c.b16 %v2120, %v2117
        %v2160 = vpack.c.b16 %v2121, %v2118
        %v2161 = vpack.c.b16 %v2122, %v2119
        %v2162 = vpack.c.b16 %v2126, %v2123
        %v2163 = vpack.c.b16 %v2127, %v2124
        %v2164 = vpack.c.b16 %v2128, %v2125
        %v2165 = vpack.c.b16 %v2132, %v2129
        %v2166 = vpack.c.b16 %v2133, %v2130
        %v2167 = vpack.c.b16 %v2134, %v2131
        %v2168 = vpack.c.b16 %v2138, %v2135
        %v2169 = vpack.c.b16 %v2139, %v2136
        %v2170 = vpack.c.b16 %v2140, %v2137
        %v2171 = vpack.c.b16 %v2144, %v2141
        %v2172 = vpack.c.b16 %v2145, %v2142
        %v2173 = vpack.c.b16 %v2146, %v2143
        %v2174 = vpack.c.b16 %v2150, %v2147
        %v2175 = vpack.c.b16 %v2151, %v2148
        %v2176 = vpack.c.b16 %v2152, %v2149
        %2201 = vmatpush.bf16.msra.mxu0 %v2174
        %2202 = vmatpush.bf16.msra.mxu0 %v2171
        %2203 = vmatpush.bf16.msra.mxu0 %v2168
        %2204 = vmatpush.bf16.msra.mxu0 %v2165
        %2205 = vmatpush.bf16.msra.mxu0 %v2162
        %2206 = vmatpush.bf16.msra.mxu0 %v2159
        %2207 = vmatpush.bf16.msra.mxu0 %v2156
        %2208 = vmatpush.bf16.msra.mxu0 %v2153
        %2209 = vmatmul.bf16.gmra.mxu0 %v2030
        %v2210 = vpop.f32.mrf.mxu0
        %v2211 = vadd.f32 %v2067, %v2210
        %v2212 = vpop.f32.mrf.mxu0
        %v2213 = vadd.f32 %v2067, %v2212
        %2214 = vdwg.mxu0
        %2215 = vmatpush.bf16.msra.mxu0 %v2175
        %2216 = vmatpush.bf16.msra.mxu0 %v2172
        %2217 = vmatpush.bf16.msra.mxu0 %v2169
        %2218 = vmatpush.bf16.msra.mxu0 %v2166
        %2219 = vmatpush.bf16.msra.mxu0 %v2163
        %2220 = vmatpush.bf16.msra.mxu0 %v2160
        %2221 = vmatpush.bf16.msra.mxu0 %v2157
        %2222 = vmatpush.bf16.msra.mxu0 %v2154
        %2223 = vmatmul.bf16.gmra.mxu0 %v2030
        %v2224 = vpop.f32.mrf.mxu0
        %v2225 = vadd.f32 %v2068, %v2224
        %v2226 = vpop.f32.mrf.mxu0
        %v2227 = vadd.f32 %v2068, %v2226
        %2228 = vdwg.mxu0
        %2229 = vmatpush.bf16.msra.mxu0 %v2176
        %2230 = vmatpush.bf16.msra.mxu0 %v2173
        %2231 = vmatpush.bf16.msra.mxu0 %v2170
        %2232 = vmatpush.bf16.msra.mxu0 %v2167
        %2233 = vmatpush.bf16.msra.mxu0 %v2164
        %2234 = vmatpush.bf16.msra.mxu0 %v2161
        %2235 = vmatpush.bf16.msra.mxu0 %v2158
        %2236 = vmatpush.bf16.msra.mxu0 %v2155
        %2237 = vmatmul.bf16.gmra.mxu0 %v2030
        %v2238 = vpop.f32.mrf.mxu0
        %v2239 = vadd.f32 %v2069, %v2238
        %v2240 = vpop.f32.mrf.mxu0
        %v2241 = vadd.f32 %v2069, %v2240
        %2242 = vdwg.mxu0
        %2245 = vrot.lane.b32.xlu0 %v2211, 96
        %v2246 = vpop.permute.xlu0 %2245
        %2247 = vrot.lane.b32.xlu0 %v2213, 96
        %v2248 = vpop.permute.xlu0 %2247
        %2249 = vrot.lane.b32.xlu0 %v2211, 64
        %v2250 = vpop.permute.xlu0 %2249
        %2251 = vrot.lane.b32.xlu0 %v2213, 64
        %v2252 = vpop.permute.xlu0 %2251
        %2253 = vrot.lane.b32.xlu0 %v2211, 32
        %v2254 = vpop.permute.xlu0 %2253
        %2255 = vrot.lane.b32.xlu0 %v2213, 32
        %v2256 = vpop.permute.xlu0 %2255
        %2259 = vrot.lane.b32.xlu0 %v2225, 96
        %v2260 = vpop.permute.xlu0 %2259
        %2261 = vrot.lane.b32.xlu0 %v2227, 96
        %v2262 = vpop.permute.xlu0 %2261
        %2263 = vrot.lane.b32.xlu0 %v2225, 64
        %v2264 = vpop.permute.xlu0 %2263
        %2265 = vrot.lane.b32.xlu0 %v2227, 64
        %v2266 = vpop.permute.xlu0 %2265
        %2267 = vrot.lane.b32.xlu0 %v2225, 32
        %v2268 = vpop.permute.xlu0 %2267
        %2269 = vrot.lane.b32.xlu0 %v2227, 32
        %v2270 = vpop.permute.xlu0 %2269
        %2273 = vrot.lane.b32.xlu0 %v2239, 96
        %v2274 = vpop.permute.xlu0 %2273
        %2275 = vrot.lane.b32.xlu0 %v2241, 96
        %v2276 = vpop.permute.xlu0 %2275
        %2279 = vrot.lane.b32.xlu0 %v2239, 64
        %v2280 = vpop.permute.xlu0 %2279
        %2281 = vrot.lane.b32.xlu0 %v2241, 64
        %v2282 = vpop.permute.xlu0 %2281
        %2285 = vrot.lane.b32.xlu0 %v2239, 32
        %v2286 = vpop.permute.xlu0 %2285
        %2287 = vrot.lane.b32.xlu0 %v2241, 32
        %v2288 = vpop.permute.xlu0 %2287
        %v2291 = vsel %vm814, %v2211, 0
        %v2293 = vsel %vm814, %v2213, 0
        %v2295 = vsel %vm814, %v2225, 0
        %v2297 = vsel %vm814, %v2227, 0
        %2299 = vmatpush.xpose.msra.mxu0 0.0
        %2300 = vmatpush.xpose.msra.mxu0 0.0
        %2301 = vmatpush.xpose.msra.mxu0 0.0
        %2302 = vmatpush.xpose.msra.mxu0 0.0
        %2303 = vmatpush.xpose.msra.mxu0 0.0
        %2304 = vmatpush.xpose.msra.mxu0 0.0
        %2305 = vmatpush.xpose.msra.mxu0 0.0
        %2306 = vmatpush.xpose.msra.mxu0 0.0
        %2307 = vmatpush.xpose.msra.mxu0 0.0
        %2308 = vmatpush.xpose.msra.mxu0 0.0
        %2309 = vmatpush.xpose.msra.mxu0 0.0
        %2310 = vmatpush.xpose.msra.mxu0 0.0
        %2311 = vmatpush.xpose.msra.mxu0 0.0
        %2312 = vmatpush.xpose.msra.mxu0 0.0
        %2313 = vmatpush.xpose.msra.mxu0 %v2297
        %2314 = vmatpush.xpose.msra.mxu0 %v2295
        %2315 = vmatmul.f32.gmra.mxu0 %v2291
        %v2316 = vpop.f32.mrf.mxu0
        %v2317 = vadd.f32 %v896, %v2316
        %2318 = vmatmul.f32.gmra.mxu0 %v2293
        %v2319 = vpop.f32.mrf.mxu0
        %v2320 = vadd.f32 %v897, %v2319
        %2321 = vdwg.mxu0
        %v2322 = vsel %vm814, %v2246, 0
        %v2324 = vsel %vm814, %v2248, 0
        %v2326 = vsel %vm814, %v2260, 0
        %v2328 = vsel %vm814, %v2262, 0
        %2330 = vmatpush.xpose.msra.mxu0 0.0
        %2331 = vmatpush.xpose.msra.mxu0 0.0
        %2332 = vmatpush.xpose.msra.mxu0 0.0
        %2333 = vmatpush.xpose.msra.mxu0 0.0
        %2334 = vmatpush.xpose.msra.mxu0 0.0
        %2335 = vmatpush.xpose.msra.mxu0 0.0
        %2336 = vmatpush.xpose.msra.mxu0 0.0
        %2337 = vmatpush.xpose.msra.mxu0 0.0
        %2338 = vmatpush.xpose.msra.mxu0 0.0
        %2339 = vmatpush.xpose.msra.mxu0 0.0
        %2340 = vmatpush.xpose.msra.mxu0 0.0
        %2341 = vmatpush.xpose.msra.mxu0 0.0
        %2342 = vmatpush.xpose.msra.mxu0 0.0
        %2343 = vmatpush.xpose.msra.mxu0 0.0
        %2344 = vmatpush.xpose.msra.mxu0 %v2328
        %2345 = vmatpush.xpose.msra.mxu0 %v2326
        %2346 = vmatmul.f32.gmra.mxu0 %v2322
        %v2347 = vpop.f32.mrf.mxu0
        %v2348 = vadd.f32 %v898, %v2347
        %2349 = vmatmul.f32.gmra.mxu0 %v2324
        %v2350 = vpop.f32.mrf.mxu0
        %v2351 = vadd.f32 %v899, %v2350
        %2352 = vdwg.mxu0
        %v2353 = vsel %vm814, %v2250, 0
        %v2355 = vsel %vm814, %v2252, 0
        %v2357 = vsel %vm814, %v2264, 0
        %v2359 = vsel %vm814, %v2266, 0
        %2361 = vmatpush.xpose.msra.mxu0 0.0
        %2362 = vmatpush.xpose.msra.mxu0 0.0
        %2363 = vmatpush.xpose.msra.mxu0 0.0
        %2364 = vmatpush.xpose.msra.mxu0 0.0
        %2365 = vmatpush.xpose.msra.mxu0 0.0
        %2366 = vmatpush.xpose.msra.mxu0 0.0
        %2367 = vmatpush.xpose.msra.mxu0 0.0
        %2368 = vmatpush.xpose.msra.mxu0 0.0
        %2369 = vmatpush.xpose.msra.mxu0 0.0
        %2370 = vmatpush.xpose.msra.mxu0 0.0
        %2371 = vmatpush.xpose.msra.mxu0 0.0
        %2372 = vmatpush.xpose.msra.mxu0 0.0
        %2373 = vmatpush.xpose.msra.mxu0 0.0
        %2374 = vmatpush.xpose.msra.mxu0 0.0
        %2375 = vmatpush.xpose.msra.mxu0 %v2359
        %2376 = vmatpush.xpose.msra.mxu0 %v2357
        %2377 = vmatmul.f32.gmra.mxu0 %v2353
        %v2378 = vpop.f32.mrf.mxu0
        %v2379 = vadd.f32 %v900, %v2378
        %2380 = vmatmul.f32.gmra.mxu0 %v2355
        %v2381 = vpop.f32.mrf.mxu0
        %v2382 = vadd.f32 %v901, %v2381
        %2383 = vdwg.mxu0
        %v2384 = vsel %vm814, %v2254, 0
        %v2386 = vsel %vm814, %v2256, 0
        %v2388 = vsel %vm814, %v2268, 0
        %v2390 = vsel %vm814, %v2270, 0
        %2392 = vmatpush.xpose.msra.mxu0 0.0
        %2393 = vmatpush.xpose.msra.mxu0 0.0
        %2394 = vmatpush.xpose.msra.mxu0 0.0
        %2395 = vmatpush.xpose.msra.mxu0 0.0
        %2396 = vmatpush.xpose.msra.mxu0 0.0
        %2397 = vmatpush.xpose.msra.mxu0 0.0
        %2398 = vmatpush.xpose.msra.mxu0 0.0
        %2399 = vmatpush.xpose.msra.mxu0 0.0
        %2400 = vmatpush.xpose.msra.mxu0 0.0
        %2401 = vmatpush.xpose.msra.mxu0 0.0
        %2402 = vmatpush.xpose.msra.mxu0 0.0
        %2403 = vmatpush.xpose.msra.mxu0 0.0
        %2404 = vmatpush.xpose.msra.mxu0 0.0
        %2405 = vmatpush.xpose.msra.mxu0 0.0
        %2406 = vmatpush.xpose.msra.mxu0 %v2390
        %2407 = vmatpush.xpose.msra.mxu0 %v2388
        %2408 = vmatmul.f32.gmra.mxu0 %v2384
        %v2409 = vpop.f32.mrf.mxu0
        %v2410 = vadd.f32 %v902, %v2409
        %2411 = vmatmul.f32.gmra.mxu0 %v2386
        %v2412 = vpop.f32.mrf.mxu0
        %v2413 = vadd.f32 %v903, %v2412
        %2414 = vdwg.mxu0
        %v2415 = vsel %vm1287, %v2317, -inf
        %2416 = vmax.xlane.f32.xlu0 %v2415
        %v2417 = vpop.xlane.xlu0 %2416
        %v2418 = vsel %vm1287, %v2320, -inf
        %2419 = vmax.xlane.f32.xlu0 %v2418
        %v2420 = vpop.xlane.xlu0 %2419
        %v2421 = vsel %vm1287, %v2348, -inf
        %2422 = vmax.xlane.f32.xlu0 %v2421
        %v2423 = vpop.xlane.xlu0 %2422
        %v2424 = vsel %vm1287, %v2351, -inf
        %2425 = vmax.xlane.f32.xlu0 %v2424
        %v2426 = vpop.xlane.xlu0 %2425
        %v2427 = vsel %vm1287, %v2379, -inf
        %2428 = vmax.xlane.f32.xlu0 %v2427
        %v2429 = vpop.xlane.xlu0 %2428
        %v2430 = vsel %vm1287, %v2382, -inf
        %2431 = vmax.xlane.f32.xlu0 %v2430
        %v2432 = vpop.xlane.xlu0 %2431
        %v2433 = vsel %vm1287, %v2410, -inf
        %2434 = vmax.xlane.f32.xlu0 %v2433
        %v2435 = vpop.xlane.xlu0 %2434
        %v2436 = vsel %vm1287, %v2413, -inf
        %2437 = vmax.xlane.f32.xlu0 %v2436
        %v2438 = vpop.xlane.xlu0 %2437
        %v2439 = vsub.f32 %v2317, %v2417
        %v2440 = vsub.f32 %v2320, %v2420
        %v2441 = vsub.f32 %v2348, %v2423
        %v2442 = vsub.f32 %v2351, %v2426
        %v2443 = vsub.f32 %v2379, %v2429
        %v2444 = vsub.f32 %v2382, %v2432
        %v2445 = vsub.f32 %v2410, %v2435
        %v2446 = vsub.f32 %v2413, %v2438
        %v2447 = vmul.f32 %v2439, 1.442695
        %v2448 = vpow.pop %v2447
        %v2449 = vmul.f32 %v2440, 1.442695
        %v2450 = vpow.pop %v2449
        %v2451 = vmul.f32 %v2441, 1.442695
        %v2452 = vpow.pop %v2451
        %v2453 = vmul.f32 %v2442, 1.442695
        %v2454 = vpow.pop %v2453
        %v2455 = vmul.f32 %v2443, 1.442695
        %v2456 = vpow.pop %v2455
        %v2457 = vmul.f32 %v2444, 1.442695
        %v2458 = vpow.pop %v2457
        %v2459 = vmul.f32 %v2445, 1.442695
        %v2460 = vpow.pop %v2459
        %v2461 = vmul.f32 %v2446, 1.442695
        %v2462 = vpow.pop %v2461
        %v2463 = vsel %vm1287, %v2448, 0.0
        %2464 = vadd.xlane.f32.xlu0 %v2463
        %v2465 = vpop.xlane.xlu0 %2464
        %v2466 = vsel %vm1287, %v2450, 0.0
        %2467 = vadd.xlane.f32.xlu0 %v2466
        %v2468 = vpop.xlane.xlu0 %2467
        %v2469 = vsel %vm1287, %v2452, 0.0
        %2470 = vadd.xlane.f32.xlu0 %v2469
        %v2471 = vpop.xlane.xlu0 %2470
        %v2472 = vsel %vm1287, %v2454, 0.0
        %2473 = vadd.xlane.f32.xlu0 %v2472
        %v2474 = vpop.xlane.xlu0 %2473
        %v2475 = vsel %vm1287, %v2456, 0.0
        %2476 = vadd.xlane.f32.xlu0 %v2475
        %v2477 = vpop.xlane.xlu0 %2476
        %v2478 = vsel %vm1287, %v2458, 0.0
        %2479 = vadd.xlane.f32.xlu0 %v2478
        %v2480 = vpop.xlane.xlu0 %2479
        %v2481 = vsel %vm1287, %v2460, 0.0
        %2482 = vadd.xlane.f32.xlu0 %v2481
        %v2483 = vpop.xlane.xlu0 %2482
        %v2484 = vsel %vm1287, %v2462, 0.0
        %2485 = vadd.xlane.f32.xlu0 %v2484
        %v2486 = vpop.xlane.xlu0 %2485
        %v2487 = vrcp.pop %v2465
        %v2488 = vrcp.pop %v2468
        %v2489 = vrcp.pop %v2471
        %v2490 = vrcp.pop %v2474
        %v2491 = vrcp.pop %v2477
        %v2492 = vrcp.pop %v2480
        %v2493 = vrcp.pop %v2483
        %v2494 = vrcp.pop %v2486
        %v2495 = vmul.f32 %v2448, %v2487
        %v2496 = vmul.f32 %v2450, %v2488
        %v2497 = vmul.f32 %v2452, %v2489
        %v2498 = vmul.f32 %v2454, %v2490
        %v2499 = vmul.f32 %v2456, %v2491
        %v2500 = vmul.f32 %v2458, %v2492
        %v2501 = vmul.f32 %v2460, %v2493
        %v2502 = vmul.f32 %v2462, %v2494
        %v2503 = vpack.c.bf16 %v2495, %v2495
        %v2504 = vpack.c.bf16 %v2496, %v2496
        %v2505 = vpack.c.bf16 %v2497, %v2497
        %v2506 = vpack.c.bf16 %v2498, %v2498
        %v2507 = vpack.c.bf16 %v2499, %v2499
        %v2508 = vpack.c.bf16 %v2500, %v2500
        %v2509 = vpack.c.bf16 %v2501, %v2501
        %v2510 = vpack.c.bf16 %v2502, %v2502
        %v2511 = vpack.c.bf16 %v2239, %v2239
        %v2512 = vpack.c.bf16 %v2241, %v2241
        %v2513 = vpack.c.bf16 %v2274, %v2274
        %v2514 = vpack.c.bf16 %v2276, %v2276
        %v2515 = vpack.c.bf16 %v2280, %v2280
        %v2516 = vpack.c.bf16 %v2282, %v2282
        %v2517 = vpack.c.bf16 %v2286, %v2286
        %v2518 = vpack.c.bf16 %v2288, %v2288
        %v2521 = vunpack.c.l.b16 %v2503
        %v2522 = vunpack.c.l.b16 %v2504
        %v2523 = vpack.c.b16 %v2522, %v2521
        %v2526 = vunpack.c.l.b16 %v2511
        %v2527 = vunpack.c.l.b16 %v2512
        %v2528 = vpack.c.b16 %v2527, %v2526
        %v2531 = vsel %vm1287, %v2523, 0
        %2533 = vmatpush.bf16.msra.mxu0 0
        %2534 = vmatpush.bf16.msra.mxu0 0
        %2535 = vmatpush.bf16.msra.mxu0 0
        %2536 = vmatpush.bf16.msra.mxu0 0
        %2537 = vmatpush.bf16.msra.mxu0 0
        %2538 = vmatpush.bf16.msra.mxu0 0
        %2539 = vmatpush.bf16.msra.mxu0 0
        %2540 = vmatpush.bf16.msra.mxu0 %v2528
        %2541 = vmatmul.bf16.gmra.mxu0 %v2531
        %v2542 = vpop.f32.mrf.mxu0
        %v2543 = vadd.f32 0.0, %v2542
        %v2544 = vpop.f32.mrf.mxu0
        %v2545 = vadd.f32 0.0, %v2544
        %2546 = vdwg.mxu0
        %v2549 = vunpack.c.l.b16 %v2505
        %v2550 = vunpack.c.l.b16 %v2506
        %v2551 = vpack.c.b16 %v2550, %v2549
        %v2554 = vunpack.c.l.b16 %v2513
        %v2555 = vunpack.c.l.b16 %v2514
        %v2556 = vpack.c.b16 %v2555, %v2554
        %v2559 = vsel %vm1287, %v2551, 0
        %2561 = vmatpush.bf16.msra.mxu0 0
        %2562 = vmatpush.bf16.msra.mxu0 0
        %2563 = vmatpush.bf16.msra.mxu0 0
        %2564 = vmatpush.bf16.msra.mxu0 0
        %2565 = vmatpush.bf16.msra.mxu0 0
        %2566 = vmatpush.bf16.msra.mxu0 0
        %2567 = vmatpush.bf16.msra.mxu0 0
        %2568 = vmatpush.bf16.msra.mxu0 %v2556
        %2569 = vmatmul.bf16.gmra.mxu0 %v2559
        %v2570 = vpop.f32.mrf.mxu0
        %v2571 = vadd.f32 0.0, %v2570
        %v2572 = vpop.f32.mrf.mxu0
        %v2573 = vadd.f32 0.0, %v2572
        %2574 = vdwg.mxu0
        %v2577 = vunpack.c.l.b16 %v2507
        %v2578 = vunpack.c.l.b16 %v2508
        %v2579 = vpack.c.b16 %v2578, %v2577
        %v2582 = vunpack.c.l.b16 %v2515
        %v2583 = vunpack.c.l.b16 %v2516
        %v2584 = vpack.c.b16 %v2583, %v2582
        %v2587 = vsel %vm1287, %v2579, 0
        %2589 = vmatpush.bf16.msra.mxu0 0
        %2590 = vmatpush.bf16.msra.mxu0 0
        %2591 = vmatpush.bf16.msra.mxu0 0
        %2592 = vmatpush.bf16.msra.mxu0 0
        %2593 = vmatpush.bf16.msra.mxu0 0
        %2594 = vmatpush.bf16.msra.mxu0 0
        %2595 = vmatpush.bf16.msra.mxu0 0
        %2596 = vmatpush.bf16.msra.mxu0 %v2584
        %2597 = vmatmul.bf16.gmra.mxu0 %v2587
        %v2598 = vpop.f32.mrf.mxu0
        %v2599 = vadd.f32 0.0, %v2598
        %v2600 = vpop.f32.mrf.mxu0
        %v2601 = vadd.f32 0.0, %v2600
        %2602 = vdwg.mxu0
        %v2605 = vunpack.c.l.b16 %v2509
        %v2606 = vunpack.c.l.b16 %v2510
        %v2607 = vpack.c.b16 %v2606, %v2605
        %v2610 = vunpack.c.l.b16 %v2517
        %v2611 = vunpack.c.l.b16 %v2518
        %v2612 = vpack.c.b16 %v2611, %v2610
        %v2615 = vsel %vm1287, %v2607, 0
        %2617 = vmatpush.bf16.msra.mxu0 0
        %2618 = vmatpush.bf16.msra.mxu0 0
        %2619 = vmatpush.bf16.msra.mxu0 0
        %2620 = vmatpush.bf16.msra.mxu0 0
        %2621 = vmatpush.bf16.msra.mxu0 0
        %2622 = vmatpush.bf16.msra.mxu0 0
        %2623 = vmatpush.bf16.msra.mxu0 0
        %2624 = vmatpush.bf16.msra.mxu0 %v2612
        %2625 = vmatmul.bf16.gmra.mxu0 %v2615
        %v2626 = vpop.f32.mrf.mxu0
        %v2627 = vadd.f32 0.0, %v2626
        %v2628 = vpop.f32.mrf.mxu0
        %v2629 = vadd.f32 0.0, %v2628
        %2630 = vdwg.mxu0
        %2633 = vrot.lane.b32.xlu0 %v2571, 32
        %v2634 = vpop.permute.xlu0 %2633
        %2635 = vrot.lane.b32.xlu0 %v2573, 32
        %v2636 = vpop.permute.xlu0 %2635
        %2641 = vrot.lane.b32.xlu0 %v2599, 64
        %v2642 = vpop.permute.xlu0 %2641
        %2643 = vrot.lane.b32.xlu0 %v2601, 64
        %v2644 = vpop.permute.xlu0 %2643
        %2649 = vrot.lane.b32.xlu0 %v2627, 96
        %v2650 = vpop.permute.xlu0 %2649
        %2651 = vrot.lane.b32.xlu0 %v2629, 96
        %v2652 = vpop.permute.xlu0 %2651
        %v2655 = vsel %vm814, %v2543, %v2634
        %v2656 = vsel %vm814, %v2545, %v2636
        %v2657 = vsel %vm862, %v2655, %v2642
        %v2658 = vsel %vm862, %v2656, %v2644
        %v2659 = vsel %vm1532, %v2657, %v2650
        %v2660 = vsel %vm1532, %v2658, %v2652
        %v2661 = vpack.c.bf16 %v2660, %v2659
        %s2662 = scalar_lea.vmem %s9, 64
        %v2663 = vld [vmem:[%s2662] sm:$0xf]
        %v2664 = vld [vmem:[%s2662 + $0x4] sm:$0xf]
        %v2665 = vld [vmem:[%s2662 + $0x8] sm:$0xf]
        %v2666 = vld [vmem:[%s2662 + $0xc] sm:$0xf]
        %v2667 = vld [vmem:[%s2662 + $0x10] sm:$0xf]
        %v2668 = vld [vmem:[%s2662 + $0x14] sm:$0xf]
        %v2669 = vld [vmem:[%s2662 + $0x18] sm:$0xf]
        %v2670 = vld [vmem:[%s2662 + $0x1c] sm:$0xf]
        %v2671 = vld [vmem:[%s2662 + $0x20] sm:$0xf]
        %v2672 = vld [vmem:[%s2662 + $0x24] sm:$0xf]
        %v2673 = vld [vmem:[%s2662 + $0x28] sm:$0xf]
        %v2674 = vld [vmem:[%s2662 + $0x2c] sm:$0xf]
        %v2675 = vld [vmem:[%s2662 + $0x30] sm:$0xf]
        %v2676 = vld [vmem:[%s2662 + $0x34] sm:$0xf]
        %v2677 = vld [vmem:[%s2662 + $0x38] sm:$0xf]
        %v2678 = vld [vmem:[%s2662 + $0x3c] sm:$0xf]
        %s2679 = scalar_lea.vmem %s10, 1
        %v2680 = vld [vmem:[%s2679] sm:$0x1]
        %v2682 = vperm.slane %v2680, 0
        %v2700 = vunpack.c.l.b16 %v2663
        %v2701 = vunpack.c.l.b16 %v2664
        %v2702 = vunpack.c.l.b16 %v2665
        %v2703 = vunpack.c.l.b16 %v2666
        %v2704 = vunpack.c.l.b16 %v2667
        %v2705 = vunpack.c.l.b16 %v2668
        %v2706 = vunpack.c.l.b16 %v2669
        %v2707 = vunpack.c.l.b16 %v2670
        %v2708 = vunpack.c.l.b16 %v2671
        %v2709 = vunpack.c.l.b16 %v2672
        %v2710 = vunpack.c.l.b16 %v2673
        %v2711 = vunpack.c.l.b16 %v2674
        %v2712 = vunpack.c.l.b16 %v2675
        %v2713 = vunpack.c.l.b16 %v2676
        %v2714 = vunpack.c.l.b16 %v2677
        %v2715 = vunpack.c.l.b16 %v2678
        %v2716 = vpack.c.b16 %v2701, %v2700
        %v2717 = vpack.c.b16 %v2703, %v2702
        %v2718 = vpack.c.b16 %v2705, %v2704
        %v2719 = vpack.c.b16 %v2707, %v2706
        %v2720 = vpack.c.b16 %v2709, %v2708
        %v2721 = vpack.c.b16 %v2711, %v2710
        %v2722 = vpack.c.b16 %v2713, %v2712
        %v2723 = vpack.c.b16 %v2715, %v2714
        %2732 = vmatpush.bf16.msra.mxu0 %v2723
        %2733 = vmatpush.bf16.msra.mxu0 %v2722
        %2734 = vmatpush.bf16.msra.mxu0 %v2721
        %2735 = vmatpush.bf16.msra.mxu0 %v2720
        %2736 = vmatpush.bf16.msra.mxu0 %v2719
        %2737 = vmatpush.bf16.msra.mxu0 %v2718
        %2738 = vmatpush.bf16.msra.mxu0 %v2717
        %2739 = vmatpush.bf16.msra.mxu0 %v2716
        %2740 = vmatmul.bf16.gmra.mxu0 %v2661
        %v2741 = vpop.f32.mrf.mxu0
        %v2742 = vadd.f32 %v2682, %v2741
        %v2743 = vpop.f32.mrf.mxu0
        %v2744 = vadd.f32 %v2682, %v2743
        %2745 = vdwg.mxu0
        %v2746 = vadd.f32 %v2028, %v2742
        %v2747 = vadd.f32 %v2029, %v2744
        %s2748 = scalar_lea.vmem %s11, 1
        %v2749 = vld [vmem:[%s2748] sm:$0x1]
        %s2750 = scalar_lea.vmem %s12, 1
        %v2751 = vld [vmem:[%s2750] sm:$0x1]
        %2752 = vadd.xlane.f32.xlu0 %v2746
        %v2753 = vpop.xlane.xlu0 %2752
        %2754 = vadd.xlane.f32.xlu0 %v2747
        %v2755 = vpop.xlane.xlu0 %2754
        %v2756 = vmul.f32 %v2753, %v1632
        %v2757 = vmul.f32 %v2755, %v1632
        %v2758 = vsub.f32 %v2746, %v2756
        %v2759 = vsub.f32 %v2747, %v2757
        %v2760 = vmul.f32 %v2758, %v2758
        %v2761 = vmul.f32 %v2759, %v2759
        %2762 = vadd.xlane.f32.xlu0 %v2760
        %v2763 = vpop.xlane.xlu0 %2762
        %2764 = vadd.xlane.f32.xlu0 %v2761
        %v2765 = vpop.xlane.xlu0 %2764
        %v2766 = vmul.f32 %v2763, %v1632
        %v2767 = vmul.f32 %v2765, %v1632
        %v2768 = vadd.f32 %v2766, 1e-05
        %v2769 = vadd.f32 %v2767, 1e-05
        %v2770 = vrsqrt.pop %v2768
        %v2771 = vmul.f32 %v2770, %v2768
        %v2772 = vmul.f32 %v2771, %v2770
        %v2773 = vmul.f32 0.5, %v2772
        %v2774 = vsub.f32 1.5, %v2773
        %v2775 = vmul.f32 %v2770, %v2774
        %vm2776 = vweird.f32 %v2768
        %vm2777 = vweird.f32 %v2770
        %vm2778 = vmor %vm2776, %vm2777
        %v2779 = vsel %vm2778, %v2770, %v2775
        %v2780 = vrsqrt.pop %v2769
        %v2781 = vmul.f32 %v2780, %v2769
        %v2782 = vmul.f32 %v2781, %v2780
        %v2783 = vmul.f32 0.5, %v2782
        %v2784 = vsub.f32 1.5, %v2783
        %v2785 = vmul.f32 %v2780, %v2784
        %vm2786 = vweird.f32 %v2769
        %vm2787 = vweird.f32 %v2780
        %vm2788 = vmor %vm2786, %vm2787
        %v2789 = vsel %vm2788, %v2780, %v2785
        %v2790 = vmul.f32 %v2758, %v2779
        %v2791 = vmul.f32 %v2759, %v2789
        %v2793 = vperm.slane %v2749, 0
        %v2795 = vmul.f32 %v2790, %v2793
        %v2796 = vmul.f32 %v2791, %v2793
        %v2798 = vperm.slane %v2751, 0
        %v2800 = vadd.f32 %v2795, %v2798
        %v2801 = vadd.f32 %v2796, %v2798
        %v2802 = vpack.c.bf16 %v2801, %v2800
        %s2803 = scalar_lea.vmem [#allocation5], 128
        %v2804 = vld [vmem:[%s2803] sm:$0xff]
        %v2805 = vld [vmem:[%s2803 + $0x8] sm:$0xff]
        %v2806 = vld [vmem:[%s2803 + $0x10] sm:$0xff]
        %v2807 = vld [vmem:[%s2803 + $0x18] sm:$0xff]
        %v2808 = vld [vmem:[%s2803 + $0x20] sm:$0xff]
        %v2809 = vld [vmem:[%s2803 + $0x28] sm:$0xff]
        %v2810 = vld [vmem:[%s2803 + $0x30] sm:$0xff]
        %v2811 = vld [vmem:[%s2803 + $0x38] sm:$0xff]
        %v2812 = vld [vmem:[%s2803 + $0x40] sm:$0xff]
        %v2813 = vld [vmem:[%s2803 + $0x48] sm:$0xff]
        %v2814 = vld [vmem:[%s2803 + $0x50] sm:$0xff]
        %v2815 = vld [vmem:[%s2803 + $0x58] sm:$0xff]
        %v2816 = vld [vmem:[%s2803 + $0x60] sm:$0xff]
        %v2817 = vld [vmem:[%s2803 + $0x68] sm:$0xff]
        %v2818 = vld [vmem:[%s2803 + $0x70] sm:$0xff]
        %v2819 = vld [vmem:[%s2803 + $0x78] sm:$0xff]
        %s2820 = scalar_lea.vmem %s14, 2
        %v2821 = vld [vmem:[%s2820] sm:$0x3]
        %v2823 = vperm.slane %v2821, 0
        %v2824 = vperm.slane %v2821, 1
        %v2843 = vunpack.c.l.b16 %v2804
        %v2844 = vunpack.c.h.b16 %v2804
        %v2845 = vunpack.c.l.b16 %v2805
        %v2846 = vunpack.c.h.b16 %v2805
        %v2847 = vunpack.c.l.b16 %v2806
        %v2848 = vunpack.c.h.b16 %v2806
        %v2849 = vunpack.c.l.b16 %v2807
        %v2850 = vunpack.c.h.b16 %v2807
        %v2851 = vunpack.c.l.b16 %v2808
        %v2852 = vunpack.c.h.b16 %v2808
        %v2853 = vunpack.c.l.b16 %v2809
        %v2854 = vunpack.c.h.b16 %v2809
        %v2855 = vunpack.c.l.b16 %v2810
        %v2856 = vunpack.c.h.b16 %v2810
        %v2857 = vunpack.c.l.b16 %v2811
        %v2858 = vunpack.c.h.b16 %v2811
        %v2859 = vunpack.c.l.b16 %v2812
        %v2860 = vunpack.c.h.b16 %v2812
        %v2861 = vunpack.c.l.b16 %v2813
        %v2862 = vunpack.c.h.b16 %v2813
        %v2863 = vunpack.c.l.b16 %v2814
        %v2864 = vunpack.c.h.b16 %v2814
        %v2865 = vunpack.c.l.b16 %v2815
        %v2866 = vunpack.c.h.b16 %v2815
        %v2867 = vunpack.c.l.b16 %v2816
        %v2868 = vunpack.c.h.b16 %v2816
        %v2869 = vunpack.c.l.b16 %v2817
        %v2870 = vunpack.c.h.b16 %v2817
        %v2871 = vunpack.c.l.b16 %v2818
        %v2872 = vunpack.c.h.b16 %v2818
        %v2873 = vunpack.c.l.b16 %v2819
        %v2874 = vunpack.c.h.b16 %v2819
        %v2875 = vpack.c.b16 %v2845, %v2843
        %v2876 = vpack.c.b16 %v2846, %v2844
        %v2877 = vpack.c.b16 %v2849, %v2847
        %v2878 = vpack.c.b16 %v2850, %v2848
        %v2879 = vpack.c.b16 %v2853, %v2851
        %v2880 = vpack.c.b16 %v2854, %v2852
        %v2881 = vpack.c.b16 %v2857, %v2855
        %v2882 = vpack.c.b16 %v2858, %v2856
        %v2883 = vpack.c.b16 %v2861, %v2859
        %v2884 = vpack.c.b16 %v2862, %v2860
        %v2885 = vpack.c.b16 %v2865, %v2863
        %v2886 = vpack.c.b16 %v2866, %v2864
        %v2887 = vpack.c.b16 %v2869, %v2867
        %v2888 = vpack.c.b16 %v2870, %v2868
        %v2889 = vpack.c.b16 %v2873, %v2871
        %v2890 = vpack.c.b16 %v2874, %v2872
        %2907 = vmatpush.bf16.msra.mxu0 %v2889
        %2908 = vmatpush.bf16.msra.mxu0 %v2887
        %2909 = vmatpush.bf16.msra.mxu0 %v2885
        %2910 = vmatpush.bf16.msra.mxu0 %v2883
        %2911 = vmatpush.bf16.msra.mxu0 %v2881
        %2912 = vmatpush.bf16.msra.mxu0 %v2879
        %2913 = vmatpush.bf16.msra.mxu0 %v2877
        %2914 = vmatpush.bf16.msra.mxu0 %v2875
        %2915 = vmatmul.bf16.gmra.mxu0 %v2802
        %v2916 = vpop.f32.mrf.mxu0
        %v2917 = vadd.f32 %v2823, %v2916
        %v2918 = vpop.f32.mrf.mxu0
        %v2919 = vadd.f32 %v2823, %v2918
        %2920 = vdwg.mxu0
        %2921 = vmatpush.bf16.msra.mxu0 %v2890
        %2922 = vmatpush.bf16.msra.mxu0 %v2888
        %2923 = vmatpush.bf16.msra.mxu0 %v2886
        %2924 = vmatpush.bf16.msra.mxu0 %v2884
        %2925 = vmatpush.bf16.msra.mxu0 %v2882
        %2926 = vmatpush.bf16.msra.mxu0 %v2880
        %2927 = vmatpush.bf16.msra.mxu0 %v2878
        %2928 = vmatpush.bf16.msra.mxu0 %v2876
        %2929 = vmatmul.bf16.gmra.mxu0 %v2802
        %v2930 = vpop.f32.mrf.mxu0
        %v2931 = vadd.f32 %v2824, %v2930
        %v2932 = vpop.f32.mrf.mxu0
        %v2933 = vadd.f32 %v2824, %v2932
        %2934 = vdwg.mxu0
        %v2935 = vmax.f32 %v2917, 0.0
        %v2936 = vmax.f32 %v2931, 0.0
        %v2937 = vmax.f32 %v2919, 0.0
        %v2938 = vmax.f32 %v2933, 0.0
        %v2939 = vpack.c.bf16 %v2937, %v2935
        %v2940 = vpack.c.bf16 %v2938, %v2936
        %s2941 = scalar_lea.vmem [#allocation7], 128
        %v2942 = vld [vmem:[%s2941] sm:$0xf]
        %v2943 = vld [vmem:[%s2941 + $0x4] sm:$0xf]
        %v2944 = vld [vmem:[%s2941 + $0x8] sm:$0xf]
        %v2945 = vld [vmem:[%s2941 + $0xc] sm:$0xf]
        %v2946 = vld [vmem:[%s2941 + $0x10] sm:$0xf]
        %v2947 = vld [vmem:[%s2941 + $0x14] sm:$0xf]
        %v2948 = vld [vmem:[%s2941 + $0x18] sm:$0xf]
        %v2949 = vld [vmem:[%s2941 + $0x1c] sm:$0xf]
        %v2950 = vld [vmem:[%s2941 + $0x20] sm:$0xf]
        %v2951 = vld [vmem:[%s2941 + $0x24] sm:$0xf]
        %v2952 = vld [vmem:[%s2941 + $0x28] sm:$0xf]
        %v2953 = vld [vmem:[%s2941 + $0x2c] sm:$0xf]
        %v2954 = vld [vmem:[%s2941 + $0x30] sm:$0xf]
        %v2955 = vld [vmem:[%s2941 + $0x34] sm:$0xf]
        %v2956 = vld [vmem:[%s2941 + $0x38] sm:$0xf]
        %v2957 = vld [vmem:[%s2941 + $0x3c] sm:$0xf]
        %v2958 = vld [vmem:[%s2941 + $0x40] sm:$0xf]
        %v2959 = vld [vmem:[%s2941 + $0x44] sm:$0xf]
        %v2960 = vld [vmem:[%s2941 + $0x48] sm:$0xf]
        %v2961 = vld [vmem:[%s2941 + $0x4c] sm:$0xf]
        %v2962 = vld [vmem:[%s2941 + $0x50] sm:$0xf]
        %v2963 = vld [vmem:[%s2941 + $0x54] sm:$0xf]
        %v2964 = vld [vmem:[%s2941 + $0x58] sm:$0xf]
        %v2965 = vld [vmem:[%s2941 + $0x5c] sm:$0xf]
        %v2966 = vld [vmem:[%s2941 + $0x60] sm:$0xf]
        %v2967 = vld [vmem:[%s2941 + $0x64] sm:$0xf]
        %v2968 = vld [vmem:[%s2941 + $0x68] sm:$0xf]
        %v2969 = vld [vmem:[%s2941 + $0x6c] sm:$0xf]
        %v2970 = vld [vmem:[%s2941 + $0x70] sm:$0xf]
        %v2971 = vld [vmem:[%s2941 + $0x74] sm:$0xf]
        %v2972 = vld [vmem:[%s2941 + $0x78] sm:$0xf]
        %v2973 = vld [vmem:[%s2941 + $0x7c] sm:$0xf]
        %s2974 = scalar_lea.vmem %s16, 1
        %v2975 = vld [vmem:[%s2974] sm:$0x1]
        %v2977 = vperm.slane %v2975, 0
        %v3011 = vunpack.c.l.b16 %v2942
        %v3012 = vunpack.c.l.b16 %v2943
        %v3013 = vunpack.c.l.b16 %v2944
        %v3014 = vunpack.c.l.b16 %v2945
        %v3015 = vunpack.c.l.b16 %v2946
        %v3016 = vunpack.c.l.b16 %v2947
        %v3017 = vunpack.c.l.b16 %v2948
        %v3018 = vunpack.c.l.b16 %v2949
        %v3019 = vunpack.c.l.b16 %v2950
        %v3020 = vunpack.c.l.b16 %v2951
        %v3021 = vunpack.c.l.b16 %v2952
        %v3022 = vunpack.c.l.b16 %v2953
        %v3023 = vunpack.c.l.b16 %v2954
        %v3024 = vunpack.c.l.b16 %v2955
        %v3025 = vunpack.c.l.b16 %v2956
        %v3026 = vunpack.c.l.b16 %v2957
        %v3027 = vunpack.c.l.b16 %v2958
        %v3028 = vunpack.c.l.b16 %v2959
        %v3029 = vunpack.c.l.b16 %v2960
        %v3030 = vunpack.c.l.b16 %v2961
        %v3031 = vunpack.c.l.b16 %v2962
        %v3032 = vunpack.c.l.b16 %v2963
        %v3033 = vunpack.c.l.b16 %v2964
        %v3034 = vunpack.c.l.b16 %v2965
        %v3035 = vunpack.c.l.b16 %v2966
        %v3036 = vunpack.c.l.b16 %v2967
        %v3037 = vunpack.c.l.b16 %v2968
        %v3038 = vunpack.c.l.b16 %v2969
        %v3039 = vunpack.c.l.b16 %v2970
        %v3040 = vunpack.c.l.b16 %v2971
        %v3041 = vunpack.c.l.b16 %v2972
        %v3042 = vunpack.c.l.b16 %v2973
        %v3043 = vpack.c.b16 %v3012, %v3011
        %v3044 = vpack.c.b16 %v3014, %v3013
        %v3045 = vpack.c.b16 %v3016, %v3015
        %v3046 = vpack.c.b16 %v3018, %v3017
        %v3047 = vpack.c.b16 %v3020, %v3019
        %v3048 = vpack.c.b16 %v3022, %v3021
        %v3049 = vpack.c.b16 %v3024, %v3023
        %v3050 = vpack.c.b16 %v3026, %v3025
        %v3051 = vpack.c.b16 %v3028, %v3027
        %v3052 = vpack.c.b16 %v3030, %v3029
        %v3053 = vpack.c.b16 %v3032, %v3031
        %v3054 = vpack.c.b16 %v3034, %v3033
        %v3055 = vpack.c.b16 %v3036, %v3035
        %v3056 = vpack.c.b16 %v3038, %v3037
        %v3057 = vpack.c.b16 %v3040, %v3039
        %v3058 = vpack.c.b16 %v3042, %v3041
        %3075 = vmatpush.bf16.msra.mxu0 %v3050
        %3076 = vmatpush.bf16.msra.mxu0 %v3049
        %3077 = vmatpush.bf16.msra.mxu0 %v3048
        %3078 = vmatpush.bf16.msra.mxu0 %v3047
        %3079 = vmatpush.bf16.msra.mxu0 %v3046
        %3080 = vmatpush.bf16.msra.mxu0 %v3045
        %3081 = vmatpush.bf16.msra.mxu0 %v3044
        %3082 = vmatpush.bf16.msra.mxu0 %v3043
        %3083 = vmatmul.bf16.gmra.mxu0 %v2939
        %v3084 = vpop.f32.mrf.mxu0
        %v3085 = vadd.f32 %v2977, %v3084
        %v3086 = vpop.f32.mrf.mxu0
        %v3087 = vadd.f32 %v2977, %v3086
        %3088 = vdwg.mxu0
        %3089 = vmatpush.bf16.msra.mxu0 %v3058
        %3090 = vmatpush.bf16.msra.mxu0 %v3057
        %3091 = vmatpush.bf16.msra.mxu0 %v3056
        %3092 = vmatpush.bf16.msra.mxu0 %v3055
        %3093 = vmatpush.bf16.msra.mxu0 %v3054
        %3094 = vmatpush.bf16.msra.mxu0 %v3053
        %3095 = vmatpush.bf16.msra.mxu0 %v3052
        %3096 = vmatpush.bf16.msra.mxu0 %v3051
        %3097 = vmatmul.bf16.gmra.mxu0 %v2940
        %v3098 = vpop.f32.mrf.mxu0
        %v3099 = vadd.f32 %v3085, %v3098
        %v3100 = vpop.f32.mrf.mxu0
        %v3101 = vadd.f32 %v3087, %v3100
        %3102 = vdwg.mxu0
        %v3103 = vadd.f32 %v2800, %v3099
        %v3104 = vadd.f32 %v2801, %v3101
        %s3105 = scalar_lea.vmem %s17, 1
        %v3106 = vld [vmem:[%s3105] sm:$0x1]
        %s3107 = scalar_lea.vmem %s18, 1
        %v3108 = vld [vmem:[%s3107] sm:$0x1]
        %3109 = vadd.xlane.f32.xlu0 %v3103
        %v3110 = vpop.xlane.xlu0 %3109
        %3111 = vadd.xlane.f32.xlu0 %v3104
        %v3112 = vpop.xlane.xlu0 %3111
        %v3113 = vmul.f32 %v3110, %v1632
        %v3114 = vmul.f32 %v3112, %v1632
        %v3115 = vsub.f32 %v3103, %v3113
        %v3116 = vsub.f32 %v3104, %v3114
        %v3117 = vmul.f32 %v3115, %v3115
        %v3118 = vmul.f32 %v3116, %v3116
        %3119 = vadd.xlane.f32.xlu0 %v3117
        %v3120 = vpop.xlane.xlu0 %3119
        %3121 = vadd.xlane.f32.xlu0 %v3118
        %v3122 = vpop.xlane.xlu0 %3121
        %v3123 = vmul.f32 %v3120, %v1632
        %v3124 = vmul.f32 %v3122, %v1632
        %v3125 = vadd.f32 %v3123, 1e-05
        %v3126 = vadd.f32 %v3124, 1e-05
        %v3127 = vrsqrt.pop %v3125
        %v3128 = vmul.f32 %v3127, %v3125
        %v3129 = vmul.f32 %v3128, %v3127
        %v3130 = vmul.f32 0.5, %v3129
        %v3131 = vsub.f32 1.5, %v3130
        %v3132 = vmul.f32 %v3127, %v3131
        %vm3133 = vweird.f32 %v3125
        %vm3134 = vweird.f32 %v3127
        %vm3135 = vmor %vm3133, %vm3134
        %v3136 = vsel %vm3135, %v3127, %v3132
        %v3137 = vrsqrt.pop %v3126
        %v3138 = vmul.f32 %v3137, %v3126
        %v3139 = vmul.f32 %v3138, %v3137
        %v3140 = vmul.f32 0.5, %v3139
        %v3141 = vsub.f32 1.5, %v3140
        %v3142 = vmul.f32 %v3137, %v3141
        %vm3143 = vweird.f32 %v3126
        %vm3144 = vweird.f32 %v3137
        %vm3145 = vmor %vm3143, %vm3144
        %v3146 = vsel %vm3145, %v3137, %v3142
        %v3147 = vmul.f32 %v3115, %v3136
        %v3148 = vmul.f32 %v3116, %v3146
        %v3150 = vperm.slane %v3106, 0
        %v3152 = vmul.f32 %v3147, %v3150
        %v3153 = vmul.f32 %v3148, %v3150
        %v3155 = vperm.slane %v3108, 0
        %v3157 = vadd.f32 %v3152, %v3155
        %v3158 = vadd.f32 %v3153, %v3155
        %v3159 = vpack.c.bf16 %v3158, %v3157
        %s3160 = scalar_lea.vmem [#allocation3], 384
        %v3161 = vld [vmem:[%s3160] sm:$0xff]
        %v3162 = vld [vmem:[%s3160 + $0x8] sm:$0xf]
        %v3163 = vld [vmem:[%s3160 + $0xc] sm:$0xff]
        %v3164 = vld [vmem:[%s3160 + $0x14] sm:$0xf]
        %v3165 = vld [vmem:[%s3160 + $0x18] sm:$0xff]
        %v3166 = vld [vmem:[%s3160 + $0x20] sm:$0xf]
        %v3167 = vld [vmem:[%s3160 + $0x24] sm:$0xff]
        %v3168 = vld [vmem:[%s3160 + $0x2c] sm:$0xf]
        %v3169 = vld [vmem:[%s3160 + $0x30] sm:$0xff]
        %v3170 = vld [vmem:[%s3160 + $0x38] sm:$0xf]
        %v3171 = vld [vmem:[%s3160 + $0x3c] sm:$0xff]
        %v3172 = vld [vmem:[%s3160 + $0x44] sm:$0xf]
        %v3173 = vld [vmem:[%s3160 + $0x48] sm:$0xff]
        %v3174 = vld [vmem:[%s3160 + $0x50] sm:$0xf]
        %v3175 = vld [vmem:[%s3160 + $0x54] sm:$0xff]
        %v3176 = vld [vmem:[%s3160 + $0x5c] sm:$0xf]
        %v3177 = vld [vmem:[%s3160 + $0x60] sm:$0xff]
        %v3178 = vld [vmem:[%s3160 + $0x68] sm:$0xf]
        %v3179 = vld [vmem:[%s3160 + $0x6c] sm:$0xff]
        %v3180 = vld [vmem:[%s3160 + $0x74] sm:$0xf]
        %v3181 = vld [vmem:[%s3160 + $0x78] sm:$0xff]
        %v3182 = vld [vmem:[%s3160 + $0x80] sm:$0xf]
        %v3183 = vld [vmem:[%s3160 + $0x84] sm:$0xff]
        %v3184 = vld [vmem:[%s3160 + $0x8c] sm:$0xf]
        %v3185 = vld [vmem:[%s3160 + $0x90] sm:$0xff]
        %v3186 = vld [vmem:[%s3160 + $0x98] sm:$0xf]
        %v3187 = vld [vmem:[%s3160 + $0x9c] sm:$0xff]
        %v3188 = vld [vmem:[%s3160 + $0xa4] sm:$0xf]
        %v3189 = vld [vmem:[%s3160 + $0xa8] sm:$0xff]
        %v3190 = vld [vmem:[%s3160 + $0xb0] sm:$0xf]
        %v3191 = vld [vmem:[%s3160 + $0xb4] sm:$0xff]
        %v3192 = vld [vmem:[%s3160 + $0xbc] sm:$0xf]
        %s3193 = scalar_lea.vmem %s8, 6
        %v3194 = vld [vmem:[%s3193] sm:$0x7]
        %v3196 = vperm.slane %v3194, 0
        %v3197 = vperm.slane %v3194, 1
        %v3198 = vperm.slane %v3194, 2
        %v3234 = vunpack.c.l.b16 %v3161
        %v3235 = vunpack.c.h.b16 %v3161
        %v3236 = vunpack.c.l.b16 %v3162
        %v3237 = vunpack.c.l.b16 %v3163
        %v3238 = vunpack.c.h.b16 %v3163
        %v3239 = vunpack.c.l.b16 %v3164
        %v3240 = vunpack.c.l.b16 %v3165
        %v3241 = vunpack.c.h.b16 %v3165
        %v3242 = vunpack.c.l.b16 %v3166
        %v3243 = vunpack.c.l.b16 %v3167
        %v3244 = vunpack.c.h.b16 %v3167
        %v3245 = vunpack.c.l.b16 %v3168
        %v3246 = vunpack.c.l.b16 %v3169
        %v3247 = vunpack.c.h.b16 %v3169
        %v3248 = vunpack.c.l.b16 %v3170
        %v3249 = vunpack.c.l.b16 %v3171
        %v3250 = vunpack.c.h.b16 %v3171
        %v3251 = vunpack.c.l.b16 %v3172
        %v3252 = vunpack.c.l.b16 %v3173
        %v3253 = vunpack.c.h.b16 %v3173
        %v3254 = vunpack.c.l.b16 %v3174
        %v3255 = vunpack.c.l.b16 %v3175
        %v3256 = vunpack.c.h.b16 %v3175
        %v3257 = vunpack.c.l.b16 %v3176
        %v3258 = vunpack.c.l.b16 %v3177
        %v3259 = vunpack.c.h.b16 %v3177
        %v3260 = vunpack.c.l.b16 %v3178
        %v3261 = vunpack.c.l.b16 %v3179
        %v3262 = vunpack.c.h.b16 %v3179
        %v3263 = vunpack.c.l.b16 %v3180
        %v3264 = vunpack.c.l.b16 %v3181
        %v3265 = vunpack.c.h.b16 %v3181
        %v3266 = vunpack.c.l.b16 %v3182
        %v3267 = vunpack.c.l.b16 %v3183
        %v3268 = vunpack.c.h.b16 %v3183
        %v3269 = vunpack.c.l.b16 %v3184
        %v3270 = vunpack.c.l.b16 %v3185
        %v3271 = vunpack.c.h.b16 %v3185
        %v3272 = vunpack.c.l.b16 %v3186
        %v3273 = vunpack.c.l.b16 %v3187
        %v3274 = vunpack.c.h.b16 %v3187
        %v3275 = vunpack.c.l.b16 %v3188
        %v3276 = vunpack.c.l.b16 %v3189
        %v3277 = vunpack.c.h.b16 %v3189
        %v3278 = vunpack.c.l.b16 %v3190
        %v3279 = vunpack.c.l.b16 %v3191
        %v3280 = vunpack.c.h.b16 %v3191
        %v3281 = vunpack.c.l.b16 %v3192
        %v3282 = vpack.c.b16 %v3237, %v3234
        %v3283 = vpack.c.b16 %v3238, %v3235
        %v3284 = vpack.c.b16 %v3239, %v3236
        %v3285 = vpack.c.b16 %v3243, %v3240
        %v3286 = vpack.c.b16 %v3244, %v3241
        %v3287 = vpack.c.b16 %v3245, %v3242
        %v3288 = vpack.c.b16 %v3249, %v3246
        %v3289 = vpack.c.b16 %v3250, %v3247
        %v3290 = vpack.c.b16 %v3251, %v3248
        %v3291 = vpack.c.b16 %v3255, %v3252
        %v3292 = vpack.c.b16 %v3256, %v3253
        %v3293 = vpack.c.b16 %v3257, %v3254
        %v3294 = vpack.c.b16 %v3261, %v3258
        %v3295 = vpack.c.b16 %v3262, %v3259
        %v3296 = vpack.c.b16 %v3263, %v3260
        %v3297 = vpack.c.b16 %v3267, %v3264
        %v3298 = vpack.c.b16 %v3268, %v3265
        %v3299 = vpack.c.b16 %v3269, %v3266
        %v3300 = vpack.c.b16 %v3273, %v3270
        %v3301 = vpack.c.b16 %v3274, %v3271
        %v3302 = vpack.c.b16 %v3275, %v3272
        %v3303 = vpack.c.b16 %v3279, %v3276
        %v3304 = vpack.c.b16 %v3280, %v3277
        %v3305 = vpack.c.b16 %v3281, %v3278
        %3330 = vmatpush.bf16.msra.mxu0 %v3303
        %3331 = vmatpush.bf16.msra.mxu0 %v3300
        %3332 = vmatpush.bf16.msra.mxu0 %v3297
        %3333 = vmatpush.bf16.msra.mxu0 %v3294
        %3334 = vmatpush.bf16.msra.mxu0 %v3291
        %3335 = vmatpush.bf16.msra.mxu0 %v3288
        %3336 = vmatpush.bf16.msra.mxu0 %v3285
        %3337 = vmatpush.bf16.msra.mxu0 %v3282
        %3338 = vmatmul.bf16.gmra.mxu0 %v3159
        %v3339 = vpop.f32.mrf.mxu0
        %v3340 = vadd.f32 %v3196, %v3339
        %v3341 = vpop.f32.mrf.mxu0
        %v3342 = vadd.f32 %v3196, %v3341
        %3343 = vdwg.mxu0
        %3344 = vmatpush.bf16.msra.mxu0 %v3304
        %3345 = vmatpush.bf16.msra.mxu0 %v3301
        %3346 = vmatpush.bf16.msra.mxu0 %v3298
        %3347 = vmatpush.bf16.msra.mxu0 %v3295
        %3348 = vmatpush.bf16.msra.mxu0 %v3292
        %3349 = vmatpush.bf16.msra.mxu0 %v3289
        %3350 = vmatpush.bf16.msra.mxu0 %v3286
        %3351 = vmatpush.bf16.msra.mxu0 %v3283
        %3352 = vmatmul.bf16.gmra.mxu0 %v3159
        %v3353 = vpop.f32.mrf.mxu0
        %v3354 = vadd.f32 %v3197, %v3353
        %v3355 = vpop.f32.mrf.mxu0
        %v3356 = vadd.f32 %v3197, %v3355
        %3357 = vdwg.mxu0
        %3358 = vmatpush.bf16.msra.mxu0 %v3305
        %3359 = vmatpush.bf16.msra.mxu0 %v3302
        %3360 = vmatpush.bf16.msra.mxu0 %v3299
        %3361 = vmatpush.bf16.msra.mxu0 %v3296
        %3362 = vmatpush.bf16.msra.mxu0 %v3293
        %3363 = vmatpush.bf16.msra.mxu0 %v3290
        %3364 = vmatpush.bf16.msra.mxu0 %v3287
        %3365 = vmatpush.bf16.msra.mxu0 %v3284
        %3366 = vmatmul.bf16.gmra.mxu0 %v3159
        %v3367 = vpop.f32.mrf.mxu0
        %v3368 = vadd.f32 %v3198, %v3367
        %v3369 = vpop.f32.mrf.mxu0
        %v3370 = vadd.f32 %v3198, %v3369
        %3371 = vdwg.mxu0
        %3374 = vrot.lane.b32.xlu0 %v3340, 96
        %v3375 = vpop.permute.xlu0 %3374
        %3376 = vrot.lane.b32.xlu0 %v3342, 96
        %v3377 = vpop.permute.xlu0 %3376
        %3378 = vrot.lane.b32.xlu0 %v3340, 64
        %v3379 = vpop.permute.xlu0 %3378
        %3380 = vrot.lane.b32.xlu0 %v3342, 64
        %v3381 = vpop.permute.xlu0 %3380
        %3382 = vrot.lane.b32.xlu0 %v3340, 32
        %v3383 = vpop.permute.xlu0 %3382
        %3384 = vrot.lane.b32.xlu0 %v3342, 32
        %v3385 = vpop.permute.xlu0 %3384
        %3388 = vrot.lane.b32.xlu0 %v3354, 96
        %v3389 = vpop.permute.xlu0 %3388
        %3390 = vrot.lane.b32.xlu0 %v3356, 96
        %v3391 = vpop.permute.xlu0 %3390
        %3392 = vrot.lane.b32.xlu0 %v3354, 64
        %v3393 = vpop.permute.xlu0 %3392
        %3394 = vrot.lane.b32.xlu0 %v3356, 64
        %v3395 = vpop.permute.xlu0 %3394
        %3396 = vrot.lane.b32.xlu0 %v3354, 32
        %v3397 = vpop.permute.xlu0 %3396
        %3398 = vrot.lane.b32.xlu0 %v3356, 32
        %v3399 = vpop.permute.xlu0 %3398
        %3402 = vrot.lane.b32.xlu0 %v3368, 96
        %v3403 = vpop.permute.xlu0 %3402
        %3404 = vrot.lane.b32.xlu0 %v3370, 96
        %v3405 = vpop.permute.xlu0 %3404
        %3408 = vrot.lane.b32.xlu0 %v3368, 64
        %v3409 = vpop.permute.xlu0 %3408
        %3410 = vrot.lane.b32.xlu0 %v3370, 64
        %v3411 = vpop.permute.xlu0 %3410
        %3414 = vrot.lane.b32.xlu0 %v3368, 32
        %v3415 = vpop.permute.xlu0 %3414
        %3416 = vrot.lane.b32.xlu0 %v3370, 32
        %v3417 = vpop.permute.xlu0 %3416
        %v3420 = vsel %vm814, %v3340, 0
        %v3422 = vsel %vm814, %v3342, 0
        %v3424 = vsel %vm814, %v3354, 0
        %v3426 = vsel %vm814, %v3356, 0
        %3428 = vmatpush.xpose.msra.mxu0 0.0
        %3429 = vmatpush.xpose.msra.mxu0 0.0
        %3430 = vmatpush.xpose.msra.mxu0 0.0
        %3431 = vmatpush.xpose.msra.mxu0 0.0
        %3432 = vmatpush.xpose.msra.mxu0 0.0
        %3433 = vmatpush.xpose.msra.mxu0 0.0
        %3434 = vmatpush.xpose.msra.mxu0 0.0
        %3435 = vmatpush.xpose.msra.mxu0 0.0
        %3436 = vmatpush.xpose.msra.mxu0 0.0
        %3437 = vmatpush.xpose.msra.mxu0 0.0
        %3438 = vmatpush.xpose.msra.mxu0 0.0
        %3439 = vmatpush.xpose.msra.mxu0 0.0
        %3440 = vmatpush.xpose.msra.mxu0 0.0
        %3441 = vmatpush.xpose.msra.mxu0 0.0
        %3442 = vmatpush.xpose.msra.mxu0 %v3426
        %3443 = vmatpush.xpose.msra.mxu0 %v3424
        %3444 = vmatmul.f32.gmra.mxu0 %v3420
        %v3445 = vpop.f32.mrf.mxu0
        %v3446 = vadd.f32 %v896, %v3445
        %3447 = vmatmul.f32.gmra.mxu0 %v3422
        %v3448 = vpop.f32.mrf.mxu0
        %v3449 = vadd.f32 %v897, %v3448
        %3450 = vdwg.mxu0
        %v3451 = vsel %vm814, %v3375, 0
        %v3453 = vsel %vm814, %v3377, 0
        %v3455 = vsel %vm814, %v3389, 0
        %v3457 = vsel %vm814, %v3391, 0
        %3459 = vmatpush.xpose.msra.mxu0 0.0
        %3460 = vmatpush.xpose.msra.mxu0 0.0
        %3461 = vmatpush.xpose.msra.mxu0 0.0
        %3462 = vmatpush.xpose.msra.mxu0 0.0
        %3463 = vmatpush.xpose.msra.mxu0 0.0
        %3464 = vmatpush.xpose.msra.mxu0 0.0
        %3465 = vmatpush.xpose.msra.mxu0 0.0
        %3466 = vmatpush.xpose.msra.mxu0 0.0
        %3467 = vmatpush.xpose.msra.mxu0 0.0
        %3468 = vmatpush.xpose.msra.mxu0 0.0
        %3469 = vmatpush.xpose.msra.mxu0 0.0
        %3470 = vmatpush.xpose.msra.mxu0 0.0
        %3471 = vmatpush.xpose.msra.mxu0 0.0
        %3472 = vmatpush.xpose.msra.mxu0 0.0
        %3473 = vmatpush.xpose.msra.mxu0 %v3457
        %3474 = vmatpush.xpose.msra.mxu0 %v3455
        %3475 = vmatmul.f32.gmra.mxu0 %v3451
        %v3476 = vpop.f32.mrf.mxu0
        %v3477 = vadd.f32 %v898, %v3476
        %3478 = vmatmul.f32.gmra.mxu0 %v3453
        %v3479 = vpop.f32.mrf.mxu0
        %v3480 = vadd.f32 %v899, %v3479
        %3481 = vdwg.mxu0
        %v3482 = vsel %vm814, %v3379, 0
        %v3484 = vsel %vm814, %v3381, 0
        %v3486 = vsel %vm814, %v3393, 0
        %v3488 = vsel %vm814, %v3395, 0
        %3490 = vmatpush.xpose.msra.mxu0 0.0
        %3491 = vmatpush.xpose.msra.mxu0 0.0
        %3492 = vmatpush.xpose.msra.mxu0 0.0
        %3493 = vmatpush.xpose.msra.mxu0 0.0
        %3494 = vmatpush.xpose.msra.mxu0 0.0
        %3495 = vmatpush.xpose.msra.mxu0 0.0
        %3496 = vmatpush.xpose.msra.mxu0 0.0
        %3497 = vmatpush.xpose.msra.mxu0 0.0
        %3498 = vmatpush.xpose.msra.mxu0 0.0
        %3499 = vmatpush.xpose.msra.mxu0 0.0
        %3500 = vmatpush.xpose.msra.mxu0 0.0
        %3501 = vmatpush.xpose.msra.mxu0 0.0
        %3502 = vmatpush.xpose.msra.mxu0 0.0
        %3503 = vmatpush.xpose.msra.mxu0 0.0
        %3504 = vmatpush.xpose.msra.mxu0 %v3488
        %3505 = vmatpush.xpose.msra.mxu0 %v3486
        %3506 = vmatmul.f32.gmra.mxu0 %v3482
        %v3507 = vpop.f32.mrf.mxu0
        %v3508 = vadd.f32 %v900, %v3507
        %3509 = vmatmul.f32.gmra.mxu0 %v3484
        %v3510 = vpop.f32.mrf.mxu0
        %v3511 = vadd.f32 %v901, %v3510
        %3512 = vdwg.mxu0
        %v3513 = vsel %vm814, %v3383, 0
        %v3515 = vsel %vm814, %v3385, 0
        %v3517 = vsel %vm814, %v3397, 0
        %v3519 = vsel %vm814, %v3399, 0
        %3521 = vmatpush.xpose.msra.mxu0 0.0
        %3522 = vmatpush.xpose.msra.mxu0 0.0
        %3523 = vmatpush.xpose.msra.mxu0 0.0
        %3524 = vmatpush.xpose.msra.mxu0 0.0
        %3525 = vmatpush.xpose.msra.mxu0 0.0
        %3526 = vmatpush.xpose.msra.mxu0 0.0
        %3527 = vmatpush.xpose.msra.mxu0 0.0
        %3528 = vmatpush.xpose.msra.mxu0 0.0
        %3529 = vmatpush.xpose.msra.mxu0 0.0
        %3530 = vmatpush.xpose.msra.mxu0 0.0
        %3531 = vmatpush.xpose.msra.mxu0 0.0
        %3532 = vmatpush.xpose.msra.mxu0 0.0
        %3533 = vmatpush.xpose.msra.mxu0 0.0
        %3534 = vmatpush.xpose.msra.mxu0 0.0
        %3535 = vmatpush.xpose.msra.mxu0 %v3519
        %3536 = vmatpush.xpose.msra.mxu0 %v3517
        %3537 = vmatmul.f32.gmra.mxu0 %v3513
        %v3538 = vpop.f32.mrf.mxu0
        %v3539 = vadd.f32 %v902, %v3538
        %3540 = vmatmul.f32.gmra.mxu0 %v3515
        %v3541 = vpop.f32.mrf.mxu0
        %v3542 = vadd.f32 %v903, %v3541
        %3543 = vdwg.mxu0
        %v3544 = vsel %vm1287, %v3446, -inf
        %3545 = vmax.xlane.f32.xlu0 %v3544
        %v3546 = vpop.xlane.xlu0 %3545
        %v3547 = vsel %vm1287, %v3449, -inf
        %3548 = vmax.xlane.f32.xlu0 %v3547
        %v3549 = vpop.xlane.xlu0 %3548
        %v3550 = vsel %vm1287, %v3477, -inf
        %3551 = vmax.xlane.f32.xlu0 %v3550
        %v3552 = vpop.xlane.xlu0 %3551
        %v3553 = vsel %vm1287, %v3480, -inf
        %3554 = vmax.xlane.f32.xlu0 %v3553
        %v3555 = vpop.xlane.xlu0 %3554
        %v3556 = vsel %vm1287, %v3508, -inf
        %3557 = vmax.xlane.f32.xlu0 %v3556
        %v3558 = vpop.xlane.xlu0 %3557
        %v3559 = vsel %vm1287, %v3511, -inf
        %3560 = vmax.xlane.f32.xlu0 %v3559
        %v3561 = vpop.xlane.xlu0 %3560
        %v3562 = vsel %vm1287, %v3539, -inf
        %3563 = vmax.xlane.f32.xlu0 %v3562
        %v3564 = vpop.xlane.xlu0 %3563
        %v3565 = vsel %vm1287, %v3542, -inf
        %3566 = vmax.xlane.f32.xlu0 %v3565
        %v3567 = vpop.xlane.xlu0 %3566
        %v3568 = vsub.f32 %v3446, %v3546
        %v3569 = vsub.f32 %v3449, %v3549
        %v3570 = vsub.f32 %v3477, %v3552
        %v3571 = vsub.f32 %v3480, %v3555
        %v3572 = vsub.f32 %v3508, %v3558
        %v3573 = vsub.f32 %v3511, %v3561
        %v3574 = vsub.f32 %v3539, %v3564
        %v3575 = vsub.f32 %v3542, %v3567
        %v3576 = vmul.f32 %v3568, 1.442695
        %v3577 = vpow.pop %v3576
        %v3578 = vmul.f32 %v3569, 1.442695
        %v3579 = vpow.pop %v3578
        %v3580 = vmul.f32 %v3570, 1.442695
        %v3581 = vpow.pop %v3580
        %v3582 = vmul.f32 %v3571, 1.442695
        %v3583 = vpow.pop %v3582
        %v3584 = vmul.f32 %v3572, 1.442695
        %v3585 = vpow.pop %v3584
        %v3586 = vmul.f32 %v3573, 1.442695
        %v3587 = vpow.pop %v3586
        %v3588 = vmul.f32 %v3574, 1.442695
        %v3589 = vpow.pop %v3588
        %v3590 = vmul.f32 %v3575, 1.442695
        %v3591 = vpow.pop %v3590
        %v3592 = vsel %vm1287, %v3577, 0.0
        %3593 = vadd.xlane.f32.xlu0 %v3592
        %v3594 = vpop.xlane.xlu0 %3593
        %v3595 = vsel %vm1287, %v3579, 0.0
        %3596 = vadd.xlane.f32.xlu0 %v3595
        %v3597 = vpop.xlane.xlu0 %3596
        %v3598 = vsel %vm1287, %v3581, 0.0
        %3599 = vadd.xlane.f32.xlu0 %v3598
        %v3600 = vpop.xlane.xlu0 %3599
        %v3601 = vsel %vm1287, %v3583, 0.0
        %3602 = vadd.xlane.f32.xlu0 %v3601
        %v3603 = vpop.xlane.xlu0 %3602
        %v3604 = vsel %vm1287, %v3585, 0.0
        %3605 = vadd.xlane.f32.xlu0 %v3604
        %v3606 = vpop.xlane.xlu0 %3605
        %v3607 = vsel %vm1287, %v3587, 0.0
        %3608 = vadd.xlane.f32.xlu0 %v3607
        %v3609 = vpop.xlane.xlu0 %3608
        %v3610 = vsel %vm1287, %v3589, 0.0
        %3611 = vadd.xlane.f32.xlu0 %v3610
        %v3612 = vpop.xlane.xlu0 %3611
        %v3613 = vsel %vm1287, %v3591, 0.0
        %3614 = vadd.xlane.f32.xlu0 %v3613
        %v3615 = vpop.xlane.xlu0 %3614
        %v3616 = vrcp.pop %v3594
        %v3617 = vrcp.pop %v3597
        %v3618 = vrcp.pop %v3600
        %v3619 = vrcp.pop %v3603
        %v3620 = vrcp.pop %v3606
        %v3621 = vrcp.pop %v3609
        %v3622 = vrcp.pop %v3612
        %v3623 = vrcp.pop %v3615
        %v3624 = vmul.f32 %v3577, %v3616
        %v3625 = vmul.f32 %v3579, %v3617
        %v3626 = vmul.f32 %v3581, %v3618
        %v3627 = vmul.f32 %v3583, %v3619
        %v3628 = vmul.f32 %v3585, %v3620
        %v3629 = vmul.f32 %v3587, %v3621
        %v3630 = vmul.f32 %v3589, %v3622
        %v3631 = vmul.f32 %v3591, %v3623
        %v3632 = vpack.c.bf16 %v3624, %v3624
        %v3633 = vpack.c.bf16 %v3625, %v3625
        %v3634 = vpack.c.bf16 %v3626, %v3626
        %v3635 = vpack.c.bf16 %v3627, %v3627
        %v3636 = vpack.c.bf16 %v3628, %v3628
        %v3637 = vpack.c.bf16 %v3629, %v3629
        %v3638 = vpack.c.bf16 %v3630, %v3630
        %v3639 = vpack.c.bf16 %v3631, %v3631
        %v3640 = vpack.c.bf16 %v3368, %v3368
        %v3641 = vpack.c.bf16 %v3370, %v3370
        %v3642 = vpack.c.bf16 %v3403, %v3403
        %v3643 = vpack.c.bf16 %v3405, %v3405
        %v3644 = vpack.c.bf16 %v3409, %v3409
        %v3645 = vpack.c.bf16 %v3411, %v3411
        %v3646 = vpack.c.bf16 %v3415, %v3415
        %v3647 = vpack.c.bf16 %v3417, %v3417
        %v3650 = vunpack.c.l.b16 %v3632
        %v3651 = vunpack.c.l.b16 %v3633
        %v3652 = vpack.c.b16 %v3651, %v3650
        %v3655 = vunpack.c.l.b16 %v3640
        %v3656 = vunpack.c.l.b16 %v3641
        %v3657 = vpack.c.b16 %v3656, %v3655
        %v3660 = vsel %vm1287, %v3652, 0
        %3662 = vmatpush.bf16.msra.mxu0 0
        %3663 = vmatpush.bf16.msra.mxu0 0
        %3664 = vmatpush.bf16.msra.mxu0 0
        %3665 = vmatpush.bf16.msra.mxu0 0
        %3666 = vmatpush.bf16.msra.mxu0 0
        %3667 = vmatpush.bf16.msra.mxu0 0
        %3668 = vmatpush.bf16.msra.mxu0 0
        %3669 = vmatpush.bf16.msra.mxu0 %v3657
        %3670 = vmatmul.bf16.gmra.mxu0 %v3660
        %v3671 = vpop.f32.mrf.mxu0
        %v3672 = vadd.f32 0.0, %v3671
        %v3673 = vpop.f32.mrf.mxu0
        %v3674 = vadd.f32 0.0, %v3673
        %3675 = vdwg.mxu0
        %v3678 = vunpack.c.l.b16 %v3634
        %v3679 = vunpack.c.l.b16 %v3635
        %v3680 = vpack.c.b16 %v3679, %v3678
        %v3683 = vunpack.c.l.b16 %v3642
        %v3684 = vunpack.c.l.b16 %v3643
        %v3685 = vpack.c.b16 %v3684, %v3683
        %v3688 = vsel %vm1287, %v3680, 0
        %3690 = vmatpush.bf16.msra.mxu0 0
        %3691 = vmatpush.bf16.msra.mxu0 0
        %3692 = vmatpush.bf16.msra.mxu0 0
        %3693 = vmatpush.bf16.msra.mxu0 0
        %3694 = vmatpush.bf16.msra.mxu0 0
        %3695 = vmatpush.bf16.msra.mxu0 0
        %3696 = vmatpush.bf16.msra.mxu0 0
        %3697 = vmatpush.bf16.msra.mxu0 %v3685
        %3698 = vmatmul.bf16.gmra.mxu0 %v3688
        %v3699 = vpop.f32.mrf.mxu0
        %v3700 = vadd.f32 0.0, %v3699
        %v3701 = vpop.f32.mrf.mxu0
        %v3702 = vadd.f32 0.0, %v3701
        %3703 = vdwg.mxu0
        %v3706 = vunpack.c.l.b16 %v3636
        %v3707 = vunpack.c.l.b16 %v3637
        %v3708 = vpack.c.b16 %v3707, %v3706
        %v3711 = vunpack.c.l.b16 %v3644
        %v3712 = vunpack.c.l.b16 %v3645
        %v3713 = vpack.c.b16 %v3712, %v3711
        %v3716 = vsel %vm1287, %v3708, 0
        %3718 = vmatpush.bf16.msra.mxu0 0
        %3719 = vmatpush.bf16.msra.mxu0 0
        %3720 = vmatpush.bf16.msra.mxu0 0
        %3721 = vmatpush.bf16.msra.mxu0 0
        %3722 = vmatpush.bf16.msra.mxu0 0
        %3723 = vmatpush.bf16.msra.mxu0 0
        %3724 = vmatpush.bf16.msra.mxu0 0
        %3725 = vmatpush.bf16.msra.mxu0 %v3713
        %3726 = vmatmul.bf16.gmra.mxu0 %v3716
        %v3727 = vpop.f32.mrf.mxu0
        %v3728 = vadd.f32 0.0, %v3727
        %v3729 = vpop.f32.mrf.mxu0
        %v3730 = vadd.f32 0.0, %v3729
        %3731 = vdwg.mxu0
        %v3734 = vunpack.c.l.b16 %v3638
        %v3735 = vunpack.c.l.b16 %v3639
        %v3736 = vpack.c.b16 %v3735, %v3734
        %v3739 = vunpack.c.l.b16 %v3646
        %v3740 = vunpack.c.l.b16 %v3647
        %v3741 = vpack.c.b16 %v3740, %v3739
        %v3744 = vsel %vm1287, %v3736, 0
        %3746 = vmatpush.bf16.msra.mxu0 0
        %3747 = vmatpush.bf16.msra.mxu0 0
        %3748 = vmatpush.bf16.msra.mxu0 0
        %3749 = vmatpush.bf16.msra.mxu0 0
        %3750 = vmatpush.bf16.msra.mxu0 0
        %3751 = vmatpush.bf16.msra.mxu0 0
        %3752 = vmatpush.bf16.msra.mxu0 0
        %3753 = vmatpush.bf16.msra.mxu0 %v3741
        %3754 = vmatmul.bf16.gmra.mxu0 %v3744
        %v3755 = vpop.f32.mrf.mxu0
        %v3756 = vadd.f32 0.0, %v3755
        %v3757 = vpop.f32.mrf.mxu0
        %v3758 = vadd.f32 0.0, %v3757
        %3759 = vdwg.mxu0
        %3762 = vrot.lane.b32.xlu0 %v3700, 32
        %v3763 = vpop.permute.xlu0 %3762
        %3764 = vrot.lane.b32.xlu0 %v3702, 32
        %v3765 = vpop.permute.xlu0 %3764
        %3770 = vrot.lane.b32.xlu0 %v3728, 64
        %v3771 = vpop.permute.xlu0 %3770
        %3772 = vrot.lane.b32.xlu0 %v3730, 64
        %v3773 = vpop.permute.xlu0 %3772
        %3778 = vrot.lane.b32.xlu0 %v3756, 96
        %v3779 = vpop.permute.xlu0 %3778
        %3780 = vrot.lane.b32.xlu0 %v3758, 96
        %v3781 = vpop.permute.xlu0 %3780
        %v3784 = vsel %vm814, %v3672, %v3763
        %v3785 = vsel %vm814, %v3674, %v3765
        %v3786 = vsel %vm862, %v3784, %v3771
        %v3787 = vsel %vm862, %v3785, %v3773
        %v3788 = vsel %vm1532, %v3786, %v3779
        %v3789 = vsel %vm1532, %v3787, %v3781
        %v3790 = vpack.c.bf16 %v3789, %v3788
        %s3791 = scalar_lea.vmem %s9, 128
        %v3792 = vld [vmem:[%s3791] sm:$0xf]
        %v3793 = vld [vmem:[%s3791 + $0x4] sm:$0xf]
        %v3794 = vld [vmem:[%s3791 + $0x8] sm:$0xf]
        %v3795 = vld [vmem:[%s3791 + $0xc] sm:$0xf]
        %v3796 = vld [vmem:[%s3791 + $0x10] sm:$0xf]
        %v3797 = vld [vmem:[%s3791 + $0x14] sm:$0xf]
        %v3798 = vld [vmem:[%s3791 + $0x18] sm:$0xf]
        %v3799 = vld [vmem:[%s3791 + $0x1c] sm:$0xf]
        %v3800 = vld [vmem:[%s3791 + $0x20] sm:$0xf]
        %v3801 = vld [vmem:[%s3791 + $0x24] sm:$0xf]
        %v3802 = vld [vmem:[%s3791 + $0x28] sm:$0xf]
        %v3803 = vld [vmem:[%s3791 + $0x2c] sm:$0xf]
        %v3804 = vld [vmem:[%s3791 + $0x30] sm:$0xf]
        %v3805 = vld [vmem:[%s3791 + $0x34] sm:$0xf]
        %v3806 = vld [vmem:[%s3791 + $0x38] sm:$0xf]
        %v3807 = vld [vmem:[%s3791 + $0x3c] sm:$0xf]
        %s3808 = scalar_lea.vmem %s10, 2
        %v3809 = vld [vmem:[%s3808] sm:$0x1]
        %v3811 = vperm.slane %v3809, 0
        %v3829 = vunpack.c.l.b16 %v3792
        %v3830 = vunpack.c.l.b16 %v3793
        %v3831 = vunpack.c.l.b16 %v3794
        %v3832 = vunpack.c.l.b16 %v3795
        %v3833 = vunpack.c.l.b16 %v3796
        %v3834 = vunpack.c.l.b16 %v3797
        %v3835 = vunpack.c.l.b16 %v3798
        %v3836 = vunpack.c.l.b16 %v3799
        %v3837 = vunpack.c.l.b16 %v3800
        %v3838 = vunpack.c.l.b16 %v3801
        %v3839 = vunpack.c.l.b16 %v3802
        %v3840 = vunpack.c.l.b16 %v3803
        %v3841 = vunpack.c.l.b16 %v3804
        %v3842 = vunpack.c.l.b16 %v3805
        %v3843 = vunpack.c.l.b16 %v3806
        %v3844 = vunpack.c.l.b16 %v3807
        %v3845 = vpack.c.b16 %v3830, %v3829
        %v3846 = vpack.c.b16 %v3832, %v3831
        %v3847 = vpack.c.b16 %v3834, %v3833
        %v3848 = vpack.c.b16 %v3836, %v3835
        %v3849 = vpack.c.b16 %v3838, %v3837
        %v3850 = vpack.c.b16 %v3840, %v3839
        %v3851 = vpack.c.b16 %v3842, %v3841
        %v3852 = vpack.c.b16 %v3844, %v3843
        %3861 = vmatpush.bf16.msra.mxu0 %v3852
        %3862 = vmatpush.bf16.msra.mxu0 %v3851
        %3863 = vmatpush.bf16.msra.mxu0 %v3850
        %3864 = vmatpush.bf16.msra.mxu0 %v3849
        %3865 = vmatpush.bf16.msra.mxu0 %v3848
        %3866 = vmatpush.bf16.msra.mxu0 %v3847
        %3867 = vmatpush.bf16.msra.mxu0 %v3846
        %3868 = vmatpush.bf16.msra.mxu0 %v3845
        %3869 = vmatmul.bf16.gmra.mxu0 %v3790
        %v3870 = vpop.f32.mrf.mxu0
        %v3871 = vadd.f32 %v3811, %v3870
        %v3872 = vpop.f32.mrf.mxu0
        %v3873 = vadd.f32 %v3811, %v3872
        %3874 = vdwg.mxu0
        %v3875 = vadd.f32 %v3157, %v3871
        %v3876 = vadd.f32 %v3158, %v3873
        %s3877 = scalar_lea.vmem %s11, 2
        %v3878 = vld [vmem:[%s3877] sm:$0x1]
        %s3879 = scalar_lea.vmem %s12, 2
        %v3880 = vld [vmem:[%s3879] sm:$0x1]
        %3881 = vadd.xlane.f32.xlu0 %v3875
        %v3882 = vpop.xlane.xlu0 %3881
        %3883 = vadd.xlane.f32.xlu0 %v3876
        %v3884 = vpop.xlane.xlu0 %3883
        %v3885 = vmul.f32 %v3882, %v1632
        %v3886 = vmul.f32 %v3884, %v1632
        %v3887 = vsub.f32 %v3875, %v3885
        %v3888 = vsub.f32 %v3876, %v3886
        %v3889 = vmul.f32 %v3887, %v3887
        %v3890 = vmul.f32 %v3888, %v3888
        %3891 = vadd.xlane.f32.xlu0 %v3889
        %v3892 = vpop.xlane.xlu0 %3891
        %3893 = vadd.xlane.f32.xlu0 %v3890
        %v3894 = vpop.xlane.xlu0 %3893
        %v3895 = vmul.f32 %v3892, %v1632
        %v3896 = vmul.f32 %v3894, %v1632
        %v3897 = vadd.f32 %v3895, 1e-05
        %v3898 = vadd.f32 %v3896, 1e-05
        %v3899 = vrsqrt.pop %v3897
        %v3900 = vmul.f32 %v3899, %v3897
        %v3901 = vmul.f32 %v3900, %v3899
        %v3902 = vmul.f32 0.5, %v3901
        %v3903 = vsub.f32 1.5, %v3902
        %v3904 = vmul.f32 %v3899, %v3903
        %vm3905 = vweird.f32 %v3897
        %vm3906 = vweird.f32 %v3899
        %vm3907 = vmor %vm3905, %vm3906
        %v3908 = vsel %vm3907, %v3899, %v3904
        %v3909 = vrsqrt.pop %v3898
        %v3910 = vmul.f32 %v3909, %v3898
        %v3911 = vmul.f32 %v3910, %v3909
        %v3912 = vmul.f32 0.5, %v3911
        %v3913 = vsub.f32 1.5, %v3912
        %v3914 = vmul.f32 %v3909, %v3913
        %vm3915 = vweird.f32 %v3898
        %vm3916 = vweird.f32 %v3909
        %vm3917 = vmor %vm3915, %vm3916
        %v3918 = vsel %vm3917, %v3909, %v3914
        %v3919 = vmul.f32 %v3887, %v3908
        %v3920 = vmul.f32 %v3888, %v3918
        %v3922 = vperm.slane %v3878, 0
        %v3924 = vmul.f32 %v3919, %v3922
        %v3925 = vmul.f32 %v3920, %v3922
        %v3927 = vperm.slane %v3880, 0
        %v3929 = vadd.f32 %v3924, %v3927
        %v3930 = vadd.f32 %v3925, %v3927
        %v3931 = vpack.c.bf16 %v3930, %v3929
        %s3932 = scalar_lea.vmem [#allocation5], 256
        %v3933 = vld [vmem:[%s3932] sm:$0xff]
        %v3934 = vld [vmem:[%s3932 + $0x8] sm:$0xff]
        %v3935 = vld [vmem:[%s3932 + $0x10] sm:$0xff]
        %v3936 = vld [vmem:[%s3932 + $0x18] sm:$0xff]
        %v3937 = vld [vmem:[%s3932 + $0x20] sm:$0xff]
        %v3938 = vld [vmem:[%s3932 + $0x28] sm:$0xff]
        %v3939 = vld [vmem:[%s3932 + $0x30] sm:$0xff]
        %v3940 = vld [vmem:[%s3932 + $0x38] sm:$0xff]
        %v3941 = vld [vmem:[%s3932 + $0x40] sm:$0xff]
        %v3942 = vld [vmem:[%s3932 + $0x48] sm:$0xff]
        %v3943 = vld [vmem:[%s3932 + $0x50] sm:$0xff]
        %v3944 = vld [vmem:[%s3932 + $0x58] sm:$0xff]
        %v3945 = vld [vmem:[%s3932 + $0x60] sm:$0xff]
        %v3946 = vld [vmem:[%s3932 + $0x68] sm:$0xff]
        %v3947 = vld [vmem:[%s3932 + $0x70] sm:$0xff]
        %v3948 = vld [vmem:[%s3932 + $0x78] sm:$0xff]
        %s3949 = scalar_lea.vmem %s14, 4
        %v3950 = vld [vmem:[%s3949] sm:$0x3]
        %v3952 = vperm.slane %v3950, 0
        %v3953 = vperm.slane %v3950, 1
        %v3972 = vunpack.c.l.b16 %v3933
        %v3973 = vunpack.c.h.b16 %v3933
        %v3974 = vunpack.c.l.b16 %v3934
        %v3975 = vunpack.c.h.b16 %v3934
        %v3976 = vunpack.c.l.b16 %v3935
        %v3977 = vunpack.c.h.b16 %v3935
        %v3978 = vunpack.c.l.b16 %v3936
        %v3979 = vunpack.c.h.b16 %v3936
        %v3980 = vunpack.c.l.b16 %v3937
        %v3981 = vunpack.c.h.b16 %v3937
        %v3982 = vunpack.c.l.b16 %v3938
        %v3983 = vunpack.c.h.b16 %v3938
        %v3984 = vunpack.c.l.b16 %v3939
        %v3985 = vunpack.c.h.b16 %v3939
        %v3986 = vunpack.c.l.b16 %v3940
        %v3987 = vunpack.c.h.b16 %v3940
        %v3988 = vunpack.c.l.b16 %v3941
        %v3989 = vunpack.c.h.b16 %v3941
        %v3990 = vunpack.c.l.b16 %v3942
        %v3991 = vunpack.c.h.b16 %v3942
        %v3992 = vunpack.c.l.b16 %v3943
        %v3993 = vunpack.c.h.b16 %v3943
        %v3994 = vunpack.c.l.b16 %v3944
        %v3995 = vunpack.c.h.b16 %v3944
        %v3996 = vunpack.c.l.b16 %v3945
        %v3997 = vunpack.c.h.b16 %v3945
        %v3998 = vunpack.c.l.b16 %v3946
        %v3999 = vunpack.c.h.b16 %v3946
        %v4000 = vunpack.c.l.b16 %v3947
        %v4001 = vunpack.c.h.b16 %v3947
        %v4002 = vunpack.c.l.b16 %v3948
        %v4003 = vunpack.c.h.b16 %v3948
        %v4004 = vpack.c.b16 %v3974, %v3972
        %v4005 = vpack.c.b16 %v3975, %v3973
        %v4006 = vpack.c.b16 %v3978, %v3976
        %v4007 = vpack.c.b16 %v3979, %v3977
        %v4008 = vpack.c.b16 %v3982, %v3980
        %v4009 = vpack.c.b16 %v3983, %v3981
        %v4010 = vpack.c.b16 %v3986, %v3984
        %v4011 = vpack.c.b16 %v3987, %v3985
        %v4012 = vpack.c.b16 %v3990, %v3988
        %v4013 = vpack.c.b16 %v3991, %v3989
        %v4014 = vpack.c.b16 %v3994, %v3992
        %v4015 = vpack.c.b16 %v3995, %v3993
        %v4016 = vpack.c.b16 %v3998, %v3996
        %v4017 = vpack.c.b16 %v3999, %v3997
        %v4018 = vpack.c.b16 %v4002, %v4000
        %v4019 = vpack.c.b16 %v4003, %v4001
        %4036 = vmatpush.bf16.msra.mxu0 %v4018
        %4037 = vmatpush.bf16.msra.mxu0 %v4016
        %4038 = vmatpush.bf16.msra.mxu0 %v4014
        %4039 = vmatpush.bf16.msra.mxu0 %v4012
        %4040 = vmatpush.bf16.msra.mxu0 %v4010
        %4041 = vmatpush.bf16.msra.mxu0 %v4008
        %4042 = vmatpush.bf16.msra.mxu0 %v4006
        %4043 = vmatpush.bf16.msra.mxu0 %v4004
        %4044 = vmatmul.bf16.gmra.mxu0 %v3931
        %v4045 = vpop.f32.mrf.mxu0
        %v4046 = vadd.f32 %v3952, %v4045
        %v4047 = vpop.f32.mrf.mxu0
        %v4048 = vadd.f32 %v3952, %v4047
        %4049 = vdwg.mxu0
        %4050 = vmatpush.bf16.msra.mxu0 %v4019
        %4051 = vmatpush.bf16.msra.mxu0 %v4017
        %4052 = vmatpush.bf16.msra.mxu0 %v4015
        %4053 = vmatpush.bf16.msra.mxu0 %v4013
        %4054 = vmatpush.bf16.msra.mxu0 %v4011
        %4055 = vmatpush.bf16.msra.mxu0 %v4009
        %4056 = vmatpush.bf16.msra.mxu0 %v4007
        %4057 = vmatpush.bf16.msra.mxu0 %v4005
        %4058 = vmatmul.bf16.gmra.mxu0 %v3931
        %v4059 = vpop.f32.mrf.mxu0
        %v4060 = vadd.f32 %v3953, %v4059
        %v4061 = vpop.f32.mrf.mxu0
        %v4062 = vadd.f32 %v3953, %v4061
        %4063 = vdwg.mxu0
        %v4064 = vmax.f32 %v4046, 0.0
        %v4065 = vmax.f32 %v4060, 0.0
        %v4066 = vmax.f32 %v4048, 0.0
        %v4067 = vmax.f32 %v4062, 0.0
        %v4068 = vpack.c.bf16 %v4066, %v4064
        %v4069 = vpack.c.bf16 %v4067, %v4065
        %s4070 = scalar_lea.vmem [#allocation7], 256
        %v4071 = vld [vmem:[%s4070] sm:$0xf]
        %v4072 = vld [vmem:[%s4070 + $0x4] sm:$0xf]
        %v4073 = vld [vmem:[%s4070 + $0x8] sm:$0xf]
        %v4074 = vld [vmem:[%s4070 + $0xc] sm:$0xf]
        %v4075 = vld [vmem:[%s4070 + $0x10] sm:$0xf]
        %v4076 = vld [vmem:[%s4070 + $0x14] sm:$0xf]
        %v4077 = vld [vmem:[%s4070 + $0x18] sm:$0xf]
        %v4078 = vld [vmem:[%s4070 + $0x1c] sm:$0xf]
        %v4079 = vld [vmem:[%s4070 + $0x20] sm:$0xf]
        %v4080 = vld [vmem:[%s4070 + $0x24] sm:$0xf]
        %v4081 = vld [vmem:[%s4070 + $0x28] sm:$0xf]
        %v4082 = vld [vmem:[%s4070 + $0x2c] sm:$0xf]
        %v4083 = vld [vmem:[%s4070 + $0x30] sm:$0xf]
        %v4084 = vld [vmem:[%s4070 + $0x34] sm:$0xf]
        %v4085 = vld [vmem:[%s4070 + $0x38] sm:$0xf]
        %v4086 = vld [vmem:[%s4070 + $0x3c] sm:$0xf]
        %v4087 = vld [vmem:[%s4070 + $0x40] sm:$0xf]
        %v4088 = vld [vmem:[%s4070 + $0x44] sm:$0xf]
        %v4089 = vld [vmem:[%s4070 + $0x48] sm:$0xf]
        %v4090 = vld [vmem:[%s4070 + $0x4c] sm:$0xf]
        %v4091 = vld [vmem:[%s4070 + $0x50] sm:$0xf]
        %v4092 = vld [vmem:[%s4070 + $0x54] sm:$0xf]
        %v4093 = vld [vmem:[%s4070 + $0x58] sm:$0xf]
        %v4094 = vld [vmem:[%s4070 + $0x5c] sm:$0xf]
        %v4095 = vld [vmem:[%s4070 + $0x60] sm:$0xf]
        %v4096 = vld [vmem:[%s4070 + $0x64] sm:$0xf]
        %v4097 = vld [vmem:[%s4070 + $0x68] sm:$0xf]
        %v4098 = vld [vmem:[%s4070 + $0x6c] sm:$0xf]
        %v4099 = vld [vmem:[%s4070 + $0x70] sm:$0xf]
        %v4100 = vld [vmem:[%s4070 + $0x74] sm:$0xf]
        %v4101 = vld [vmem:[%s4070 + $0x78] sm:$0xf]
        %v4102 = vld [vmem:[%s4070 + $0x7c] sm:$0xf]
        %s4103 = scalar_lea.vmem %s16, 2
        %v4104 = vld [vmem:[%s4103] sm:$0x1]
        %v4106 = vperm.slane %v4104, 0
        %v4140 = vunpack.c.l.b16 %v4071
        %v4141 = vunpack.c.l.b16 %v4072
        %v4142 = vunpack.c.l.b16 %v4073
        %v4143 = vunpack.c.l.b16 %v4074
        %v4144 = vunpack.c.l.b16 %v4075
        %v4145 = vunpack.c.l.b16 %v4076
        %v4146 = vunpack.c.l.b16 %v4077
        %v4147 = vunpack.c.l.b16 %v4078
        %v4148 = vunpack.c.l.b16 %v4079
        %v4149 = vunpack.c.l.b16 %v4080
        %v4150 = vunpack.c.l.b16 %v4081
        %v4151 = vunpack.c.l.b16 %v4082
        %v4152 = vunpack.c.l.b16 %v4083
        %v4153 = vunpack.c.l.b16 %v4084
        %v4154 = vunpack.c.l.b16 %v4085
        %v4155 = vunpack.c.l.b16 %v4086
        %v4156 = vunpack.c.l.b16 %v4087
        %v4157 = vunpack.c.l.b16 %v4088
        %v4158 = vunpack.c.l.b16 %v4089
        %v4159 = vunpack.c.l.b16 %v4090
        %v4160 = vunpack.c.l.b16 %v4091
        %v4161 = vunpack.c.l.b16 %v4092
        %v4162 = vunpack.c.l.b16 %v4093
        %v4163 = vunpack.c.l.b16 %v4094
        %v4164 = vunpack.c.l.b16 %v4095
        %v4165 = vunpack.c.l.b16 %v4096
        %v4166 = vunpack.c.l.b16 %v4097
        %v4167 = vunpack.c.l.b16 %v4098
        %v4168 = vunpack.c.l.b16 %v4099
        %v4169 = vunpack.c.l.b16 %v4100
        %v4170 = vunpack.c.l.b16 %v4101
        %v4171 = vunpack.c.l.b16 %v4102
        %v4172 = vpack.c.b16 %v4141, %v4140
        %v4173 = vpack.c.b16 %v4143, %v4142
        %v4174 = vpack.c.b16 %v4145, %v4144
        %v4175 = vpack.c.b16 %v4147, %v4146
        %v4176 = vpack.c.b16 %v4149, %v4148
        %v4177 = vpack.c.b16 %v4151, %v4150
        %v4178 = vpack.c.b16 %v4153, %v4152
        %v4179 = vpack.c.b16 %v4155, %v4154
        %v4180 = vpack.c.b16 %v4157, %v4156
        %v4181 = vpack.c.b16 %v4159, %v4158
        %v4182 = vpack.c.b16 %v4161, %v4160
        %v4183 = vpack.c.b16 %v4163, %v4162
        %v4184 = vpack.c.b16 %v4165, %v4164
        %v4185 = vpack.c.b16 %v4167, %v4166
        %v4186 = vpack.c.b16 %v4169, %v4168
        %v4187 = vpack.c.b16 %v4171, %v4170
        %4204 = vmatpush.bf16.msra.mxu0 %v4179
        %4205 = vmatpush.bf16.msra.mxu0 %v4178
        %4206 = vmatpush.bf16.msra.mxu0 %v4177
        %4207 = vmatpush.bf16.msra.mxu0 %v4176
        %4208 = vmatpush.bf16.msra.mxu0 %v4175
        %4209 = vmatpush.bf16.msra.mxu0 %v4174
        %4210 = vmatpush.bf16.msra.mxu0 %v4173
        %4211 = vmatpush.bf16.msra.mxu0 %v4172
        %4212 = vmatmul.bf16.gmra.mxu0 %v4068
        %v4213 = vpop.f32.mrf.mxu0
        %v4214 = vadd.f32 %v4106, %v4213
        %v4215 = vpop.f32.mrf.mxu0
        %v4216 = vadd.f32 %v4106, %v4215
        %4217 = vdwg.mxu0
        %4218 = vmatpush.bf16.msra.mxu0 %v4187
        %4219 = vmatpush.bf16.msra.mxu0 %v4186
        %4220 = vmatpush.bf16.msra.mxu0 %v4185
        %4221 = vmatpush.bf16.msra.mxu0 %v4184
        %4222 = vmatpush.bf16.msra.mxu0 %v4183
        %4223 = vmatpush.bf16.msra.mxu0 %v4182
        %4224 = vmatpush.bf16.msra.mxu0 %v4181
        %4225 = vmatpush.bf16.msra.mxu0 %v4180
        %4226 = vmatmul.bf16.gmra.mxu0 %v4069
        %v4227 = vpop.f32.mrf.mxu0
        %v4228 = vadd.f32 %v4214, %v4227
        %v4229 = vpop.f32.mrf.mxu0
        %v4230 = vadd.f32 %v4216, %v4229
        %4231 = vdwg.mxu0
        %v4232 = vadd.f32 %v3929, %v4228
        %v4233 = vadd.f32 %v3930, %v4230
        %s4234 = scalar_lea.vmem %s17, 2
        %v4235 = vld [vmem:[%s4234] sm:$0x1]
        %s4236 = scalar_lea.vmem %s18, 2
        %v4237 = vld [vmem:[%s4236] sm:$0x1]
        %4238 = vadd.xlane.f32.xlu0 %v4232
        %v4239 = vpop.xlane.xlu0 %4238
        %4240 = vadd.xlane.f32.xlu0 %v4233
        %v4241 = vpop.xlane.xlu0 %4240
        %v4242 = vmul.f32 %v4239, %v1632
        %v4243 = vmul.f32 %v4241, %v1632
        %v4244 = vsub.f32 %v4232, %v4242
        %v4245 = vsub.f32 %v4233, %v4243
        %v4246 = vmul.f32 %v4244, %v4244
        %v4247 = vmul.f32 %v4245, %v4245
        %4248 = vadd.xlane.f32.xlu0 %v4246
        %v4249 = vpop.xlane.xlu0 %4248
        %4250 = vadd.xlane.f32.xlu0 %v4247
        %v4251 = vpop.xlane.xlu0 %4250
        %v4252 = vmul.f32 %v4249, %v1632
        %v4253 = vmul.f32 %v4251, %v1632
        %v4254 = vadd.f32 %v4252, 1e-05
        %v4255 = vadd.f32 %v4253, 1e-05
        %v4256 = vrsqrt.pop %v4254
        %v4257 = vmul.f32 %v4256, %v4254
        %v4258 = vmul.f32 %v4257, %v4256
        %v4259 = vmul.f32 0.5, %v4258
        %v4260 = vsub.f32 1.5, %v4259
        %v4261 = vmul.f32 %v4256, %v4260
        %vm4262 = vweird.f32 %v4254
        %vm4263 = vweird.f32 %v4256
        %vm4264 = vmor %vm4262, %vm4263
        %v4265 = vsel %vm4264, %v4256, %v4261
        %v4266 = vrsqrt.pop %v4255
        %v4267 = vmul.f32 %v4266, %v4255
        %v4268 = vmul.f32 %v4267, %v4266
        %v4269 = vmul.f32 0.5, %v4268
        %v4270 = vsub.f32 1.5, %v4269
        %v4271 = vmul.f32 %v4266, %v4270
        %vm4272 = vweird.f32 %v4255
        %vm4273 = vweird.f32 %v4266
        %vm4274 = vmor %vm4272, %vm4273
        %v4275 = vsel %vm4274, %v4266, %v4271
        %v4276 = vmul.f32 %v4244, %v4265
        %v4277 = vmul.f32 %v4245, %v4275
        %v4279 = vperm.slane %v4235, 0
        %v4281 = vmul.f32 %v4276, %v4279
        %v4282 = vmul.f32 %v4277, %v4279
        %v4284 = vperm.slane %v4237, 0
        %v4286 = vadd.f32 %v4281, %v4284
        %v4287 = vadd.f32 %v4282, %v4284
        %v4288 = vpack.c.bf16 %v4287, %v4286
        %s4289 = scalar_lea.vmem [#allocation3], 576
        %v4290 = vld [vmem:[%s4289] sm:$0xff]
        %v4291 = vld [vmem:[%s4289 + $0x8] sm:$0xf]
        %v4292 = vld [vmem:[%s4289 + $0xc] sm:$0xff]
        %v4293 = vld [vmem:[%s4289 + $0x14] sm:$0xf]
        %v4294 = vld [vmem:[%s4289 + $0x18] sm:$0xff]
        %v4295 = vld [vmem:[%s4289 + $0x20] sm:$0xf]
        %v4296 = vld [vmem:[%s4289 + $0x24] sm:$0xff]
        %v4297 = vld [vmem:[%s4289 + $0x2c] sm:$0xf]
        %v4298 = vld [vmem:[%s4289 + $0x30] sm:$0xff]
        %v4299 = vld [vmem:[%s4289 + $0x38] sm:$0xf]
        %v4300 = vld [vmem:[%s4289 + $0x3c] sm:$0xff]
        %v4301 = vld [vmem:[%s4289 + $0x44] sm:$0xf]
        %v4302 = vld [vmem:[%s4289 + $0x48] sm:$0xff]
        %v4303 = vld [vmem:[%s4289 + $0x50] sm:$0xf]
        %v4304 = vld [vmem:[%s4289 + $0x54] sm:$0xff]
        %v4305 = vld [vmem:[%s4289 + $0x5c] sm:$0xf]
        %v4306 = vld [vmem:[%s4289 + $0x60] sm:$0xff]
        %v4307 = vld [vmem:[%s4289 + $0x68] sm:$0xf]
        %v4308 = vld [vmem:[%s4289 + $0x6c] sm:$0xff]
        %v4309 = vld [vmem:[%s4289 + $0x74] sm:$0xf]
        %v4310 = vld [vmem:[%s4289 + $0x78] sm:$0xff]
        %v4311 = vld [vmem:[%s4289 + $0x80] sm:$0xf]
        %v4312 = vld [vmem:[%s4289 + $0x84] sm:$0xff]
        %v4313 = vld [vmem:[%s4289 + $0x8c] sm:$0xf]
        %v4314 = vld [vmem:[%s4289 + $0x90] sm:$0xff]
        %v4315 = vld [vmem:[%s4289 + $0x98] sm:$0xf]
        %v4316 = vld [vmem:[%s4289 + $0x9c] sm:$0xff]
        %v4317 = vld [vmem:[%s4289 + $0xa4] sm:$0xf]
        %v4318 = vld [vmem:[%s4289 + $0xa8] sm:$0xff]
        %v4319 = vld [vmem:[%s4289 + $0xb0] sm:$0xf]
        %v4320 = vld [vmem:[%s4289 + $0xb4] sm:$0xff]
        %v4321 = vld [vmem:[%s4289 + $0xbc] sm:$0xf]
        %s4322 = scalar_lea.vmem %s8, 9
        %v4323 = vld [vmem:[%s4322] sm:$0x7]
        %v4325 = vperm.slane %v4323, 0
        %v4326 = vperm.slane %v4323, 1
        %v4327 = vperm.slane %v4323, 2
        %v4363 = vunpack.c.l.b16 %v4290
        %v4364 = vunpack.c.h.b16 %v4290
        %v4365 = vunpack.c.l.b16 %v4291
        %v4366 = vunpack.c.l.b16 %v4292
        %v4367 = vunpack.c.h.b16 %v4292
        %v4368 = vunpack.c.l.b16 %v4293
        %v4369 = vunpack.c.l.b16 %v4294
        %v4370 = vunpack.c.h.b16 %v4294
        %v4371 = vunpack.c.l.b16 %v4295
        %v4372 = vunpack.c.l.b16 %v4296
        %v4373 = vunpack.c.h.b16 %v4296
        %v4374 = vunpack.c.l.b16 %v4297
        %v4375 = vunpack.c.l.b16 %v4298
        %v4376 = vunpack.c.h.b16 %v4298
        %v4377 = vunpack.c.l.b16 %v4299
        %v4378 = vunpack.c.l.b16 %v4300
        %v4379 = vunpack.c.h.b16 %v4300
        %v4380 = vunpack.c.l.b16 %v4301
        %v4381 = vunpack.c.l.b16 %v4302
        %v4382 = vunpack.c.h.b16 %v4302
        %v4383 = vunpack.c.l.b16 %v4303
        %v4384 = vunpack.c.l.b16 %v4304
        %v4385 = vunpack.c.h.b16 %v4304
        %v4386 = vunpack.c.l.b16 %v4305
        %v4387 = vunpack.c.l.b16 %v4306
        %v4388 = vunpack.c.h.b16 %v4306
        %v4389 = vunpack.c.l.b16 %v4307
        %v4390 = vunpack.c.l.b16 %v4308
        %v4391 = vunpack.c.h.b16 %v4308
        %v4392 = vunpack.c.l.b16 %v4309
        %v4393 = vunpack.c.l.b16 %v4310
        %v4394 = vunpack.c.h.b16 %v4310
        %v4395 = vunpack.c.l.b16 %v4311
        %v4396 = vunpack.c.l.b16 %v4312
        %v4397 = vunpack.c.h.b16 %v4312
        %v4398 = vunpack.c.l.b16 %v4313
        %v4399 = vunpack.c.l.b16 %v4314
        %v4400 = vunpack.c.h.b16 %v4314
        %v4401 = vunpack.c.l.b16 %v4315
        %v4402 = vunpack.c.l.b16 %v4316
        %v4403 = vunpack.c.h.b16 %v4316
        %v4404 = vunpack.c.l.b16 %v4317
        %v4405 = vunpack.c.l.b16 %v4318
        %v4406 = vunpack.c.h.b16 %v4318
        %v4407 = vunpack.c.l.b16 %v4319
        %v4408 = vunpack.c.l.b16 %v4320
        %v4409 = vunpack.c.h.b16 %v4320
        %v4410 = vunpack.c.l.b16 %v4321
        %v4411 = vpack.c.b16 %v4366, %v4363
        %v4412 = vpack.c.b16 %v4367, %v4364
        %v4413 = vpack.c.b16 %v4368, %v4365
        %v4414 = vpack.c.b16 %v4372, %v4369
        %v4415 = vpack.c.b16 %v4373, %v4370
        %v4416 = vpack.c.b16 %v4374, %v4371
        %v4417 = vpack.c.b16 %v4378, %v4375
        %v4418 = vpack.c.b16 %v4379, %v4376
        %v4419 = vpack.c.b16 %v4380, %v4377
        %v4420 = vpack.c.b16 %v4384, %v4381
        %v4421 = vpack.c.b16 %v4385, %v4382
        %v4422 = vpack.c.b16 %v4386, %v4383
        %v4423 = vpack.c.b16 %v4390, %v4387
        %v4424 = vpack.c.b16 %v4391, %v4388
        %v4425 = vpack.c.b16 %v4392, %v4389
        %v4426 = vpack.c.b16 %v4396, %v4393
        %v4427 = vpack.c.b16 %v4397, %v4394
        %v4428 = vpack.c.b16 %v4398, %v4395
        %v4429 = vpack.c.b16 %v4402, %v4399
        %v4430 = vpack.c.b16 %v4403, %v4400
        %v4431 = vpack.c.b16 %v4404, %v4401
        %v4432 = vpack.c.b16 %v4408, %v4405
        %v4433 = vpack.c.b16 %v4409, %v4406
        %v4434 = vpack.c.b16 %v4410, %v4407
        %4459 = vmatpush.bf16.msra.mxu0 %v4432
        %4460 = vmatpush.bf16.msra.mxu0 %v4429
        %4461 = vmatpush.bf16.msra.mxu0 %v4426
        %4462 = vmatpush.bf16.msra.mxu0 %v4423
        %4463 = vmatpush.bf16.msra.mxu0 %v4420
        %4464 = vmatpush.bf16.msra.mxu0 %v4417
        %4465 = vmatpush.bf16.msra.mxu0 %v4414
        %4466 = vmatpush.bf16.msra.mxu0 %v4411
        %4467 = vmatmul.bf16.gmra.mxu0 %v4288
        %v4468 = vpop.f32.mrf.mxu0
        %v4469 = vadd.f32 %v4325, %v4468
        %v4470 = vpop.f32.mrf.mxu0
        %v4471 = vadd.f32 %v4325, %v4470
        %4472 = vdwg.mxu0
        %4473 = vmatpush.bf16.msra.mxu0 %v4433
        %4474 = vmatpush.bf16.msra.mxu0 %v4430
        %4475 = vmatpush.bf16.msra.mxu0 %v4427
        %4476 = vmatpush.bf16.msra.mxu0 %v4424
        %4477 = vmatpush.bf16.msra.mxu0 %v4421
        %4478 = vmatpush.bf16.msra.mxu0 %v4418
        %4479 = vmatpush.bf16.msra.mxu0 %v4415
        %4480 = vmatpush.bf16.msra.mxu0 %v4412
        %4481 = vmatmul.bf16.gmra.mxu0 %v4288
        %v4482 = vpop.f32.mrf.mxu0
        %v4483 = vadd.f32 %v4326, %v4482
        %v4484 = vpop.f32.mrf.mxu0
        %v4485 = vadd.f32 %v4326, %v4484
        %4486 = vdwg.mxu0
        %4487 = vmatpush.bf16.msra.mxu0 %v4434
        %4488 = vmatpush.bf16.msra.mxu0 %v4431
        %4489 = vmatpush.bf16.msra.mxu0 %v4428
        %4490 = vmatpush.bf16.msra.mxu0 %v4425
        %4491 = vmatpush.bf16.msra.mxu0 %v4422
        %4492 = vmatpush.bf16.msra.mxu0 %v4419
        %4493 = vmatpush.bf16.msra.mxu0 %v4416
        %4494 = vmatpush.bf16.msra.mxu0 %v4413
        %4495 = vmatmul.bf16.gmra.mxu0 %v4288
        %v4496 = vpop.f32.mrf.mxu0
        %v4497 = vadd.f32 %v4327, %v4496
        %v4498 = vpop.f32.mrf.mxu0
        %v4499 = vadd.f32 %v4327, %v4498
        %4500 = vdwg.mxu0
        %4503 = vrot.lane.b32.xlu0 %v4469, 96
        %v4504 = vpop.permute.xlu0 %4503
        %4505 = vrot.lane.b32.xlu0 %v4471, 96
        %v4506 = vpop.permute.xlu0 %4505
        %4507 = vrot.lane.b32.xlu0 %v4469, 64
        %v4508 = vpop.permute.xlu0 %4507
        %4509 = vrot.lane.b32.xlu0 %v4471, 64
        %v4510 = vpop.permute.xlu0 %4509
        %4511 = vrot.lane.b32.xlu0 %v4469, 32
        %v4512 = vpop.permute.xlu0 %4511
        %4513 = vrot.lane.b32.xlu0 %v4471, 32
        %v4514 = vpop.permute.xlu0 %4513
        %4517 = vrot.lane.b32.xlu0 %v4483, 96
        %v4518 = vpop.permute.xlu0 %4517
        %4519 = vrot.lane.b32.xlu0 %v4485, 96
        %v4520 = vpop.permute.xlu0 %4519
        %4521 = vrot.lane.b32.xlu0 %v4483, 64
        %v4522 = vpop.permute.xlu0 %4521
        %4523 = vrot.lane.b32.xlu0 %v4485, 64
        %v4524 = vpop.permute.xlu0 %4523
        %4525 = vrot.lane.b32.xlu0 %v4483, 32
        %v4526 = vpop.permute.xlu0 %4525
        %4527 = vrot.lane.b32.xlu0 %v4485, 32
        %v4528 = vpop.permute.xlu0 %4527
        %4531 = vrot.lane.b32.xlu0 %v4497, 96
        %v4532 = vpop.permute.xlu0 %4531
        %4533 = vrot.lane.b32.xlu0 %v4499, 96
        %v4534 = vpop.permute.xlu0 %4533
        %4537 = vrot.lane.b32.xlu0 %v4497, 64
        %v4538 = vpop.permute.xlu0 %4537
        %4539 = vrot.lane.b32.xlu0 %v4499, 64
        %v4540 = vpop.permute.xlu0 %4539
        %4543 = vrot.lane.b32.xlu0 %v4497, 32
        %v4544 = vpop.permute.xlu0 %4543
        %4545 = vrot.lane.b32.xlu0 %v4499, 32
        %v4546 = vpop.permute.xlu0 %4545
        %v4549 = vsel %vm814, %v4469, 0
        %v4551 = vsel %vm814, %v4471, 0
        %v4553 = vsel %vm814, %v4483, 0
        %v4555 = vsel %vm814, %v4485, 0
        %4557 = vmatpush.xpose.msra.mxu0 0.0
        %4558 = vmatpush.xpose.msra.mxu0 0.0
        %4559 = vmatpush.xpose.msra.mxu0 0.0
        %4560 = vmatpush.xpose.msra.mxu0 0.0
        %4561 = vmatpush.xpose.msra.mxu0 0.0
        %4562 = vmatpush.xpose.msra.mxu0 0.0
        %4563 = vmatpush.xpose.msra.mxu0 0.0
        %4564 = vmatpush.xpose.msra.mxu0 0.0
        %4565 = vmatpush.xpose.msra.mxu0 0.0
        %4566 = vmatpush.xpose.msra.mxu0 0.0
        %4567 = vmatpush.xpose.msra.mxu0 0.0
        %4568 = vmatpush.xpose.msra.mxu0 0.0
        %4569 = vmatpush.xpose.msra.mxu0 0.0
        %4570 = vmatpush.xpose.msra.mxu0 0.0
        %4571 = vmatpush.xpose.msra.mxu0 %v4555
        %4572 = vmatpush.xpose.msra.mxu0 %v4553
        %4573 = vmatmul.f32.gmra.mxu0 %v4549
        %v4574 = vpop.f32.mrf.mxu0
        %v4575 = vadd.f32 %v896, %v4574
        %4576 = vmatmul.f32.gmra.mxu0 %v4551
        %v4577 = vpop.f32.mrf.mxu0
        %v4578 = vadd.f32 %v897, %v4577
        %4579 = vdwg.mxu0
        %v4580 = vsel %vm814, %v4504, 0
        %v4582 = vsel %vm814, %v4506, 0
        %v4584 = vsel %vm814, %v4518, 0
        %v4586 = vsel %vm814, %v4520, 0
        %4588 = vmatpush.xpose.msra.mxu0 0.0
        %4589 = vmatpush.xpose.msra.mxu0 0.0
        %4590 = vmatpush.xpose.msra.mxu0 0.0
        %4591 = vmatpush.xpose.msra.mxu0 0.0
        %4592 = vmatpush.xpose.msra.mxu0 0.0
        %4593 = vmatpush.xpose.msra.mxu0 0.0
        %4594 = vmatpush.xpose.msra.mxu0 0.0
        %4595 = vmatpush.xpose.msra.mxu0 0.0
        %4596 = vmatpush.xpose.msra.mxu0 0.0
        %4597 = vmatpush.xpose.msra.mxu0 0.0
        %4598 = vmatpush.xpose.msra.mxu0 0.0
        %4599 = vmatpush.xpose.msra.mxu0 0.0
        %4600 = vmatpush.xpose.msra.mxu0 0.0
        %4601 = vmatpush.xpose.msra.mxu0 0.0
        %4602 = vmatpush.xpose.msra.mxu0 %v4586
        %4603 = vmatpush.xpose.msra.mxu0 %v4584
        %4604 = vmatmul.f32.gmra.mxu0 %v4580
        %v4605 = vpop.f32.mrf.mxu0
        %v4606 = vadd.f32 %v898, %v4605
        %4607 = vmatmul.f32.gmra.mxu0 %v4582
        %v4608 = vpop.f32.mrf.mxu0
        %v4609 = vadd.f32 %v899, %v4608
        %4610 = vdwg.mxu0
        %v4611 = vsel %vm814, %v4508, 0
        %v4613 = vsel %vm814, %v4510, 0
        %v4615 = vsel %vm814, %v4522, 0
        %v4617 = vsel %vm814, %v4524, 0
        %4619 = vmatpush.xpose.msra.mxu0 0.0
        %4620 = vmatpush.xpose.msra.mxu0 0.0
        %4621 = vmatpush.xpose.msra.mxu0 0.0
        %4622 = vmatpush.xpose.msra.mxu0 0.0
        %4623 = vmatpush.xpose.msra.mxu0 0.0
        %4624 = vmatpush.xpose.msra.mxu0 0.0
        %4625 = vmatpush.xpose.msra.mxu0 0.0
        %4626 = vmatpush.xpose.msra.mxu0 0.0
        %4627 = vmatpush.xpose.msra.mxu0 0.0
        %4628 = vmatpush.xpose.msra.mxu0 0.0
        %4629 = vmatpush.xpose.msra.mxu0 0.0
        %4630 = vmatpush.xpose.msra.mxu0 0.0
        %4631 = vmatpush.xpose.msra.mxu0 0.0
        %4632 = vmatpush.xpose.msra.mxu0 0.0
        %4633 = vmatpush.xpose.msra.mxu0 %v4617
        %4634 = vmatpush.xpose.msra.mxu0 %v4615
        %4635 = vmatmul.f32.gmra.mxu0 %v4611
        %v4636 = vpop.f32.mrf.mxu0
        %v4637 = vadd.f32 %v900, %v4636
        %4638 = vmatmul.f32.gmra.mxu0 %v4613
        %v4639 = vpop.f32.mrf.mxu0
        %v4640 = vadd.f32 %v901, %v4639
        %4641 = vdwg.mxu0
        %v4642 = vsel %vm814, %v4512, 0
        %v4644 = vsel %vm814, %v4514, 0
        %v4646 = vsel %vm814, %v4526, 0
        %v4648 = vsel %vm814, %v4528, 0
        %4650 = vmatpush.xpose.msra.mxu0 0.0
        %4651 = vmatpush.xpose.msra.mxu0 0.0
        %4652 = vmatpush.xpose.msra.mxu0 0.0
        %4653 = vmatpush.xpose.msra.mxu0 0.0
        %4654 = vmatpush.xpose.msra.mxu0 0.0
        %4655 = vmatpush.xpose.msra.mxu0 0.0
        %4656 = vmatpush.xpose.msra.mxu0 0.0
        %4657 = vmatpush.xpose.msra.mxu0 0.0
        %4658 = vmatpush.xpose.msra.mxu0 0.0
        %4659 = vmatpush.xpose.msra.mxu0 0.0
        %4660 = vmatpush.xpose.msra.mxu0 0.0
        %4661 = vmatpush.xpose.msra.mxu0 0.0
        %4662 = vmatpush.xpose.msra.mxu0 0.0
        %4663 = vmatpush.xpose.msra.mxu0 0.0
        %4664 = vmatpush.xpose.msra.mxu0 %v4648
        %4665 = vmatpush.xpose.msra.mxu0 %v4646
        %4666 = vmatmul.f32.gmra.mxu0 %v4642
        %v4667 = vpop.f32.mrf.mxu0
        %v4668 = vadd.f32 %v902, %v4667
        %4669 = vmatmul.f32.gmra.mxu0 %v4644
        %v4670 = vpop.f32.mrf.mxu0
        %v4671 = vadd.f32 %v903, %v4670
        %4672 = vdwg.mxu0
        %v4673 = vsel %vm1287, %v4575, -inf
        %4674 = vmax.xlane.f32.xlu0 %v4673
        %v4675 = vpop.xlane.xlu0 %4674
        %v4676 = vsel %vm1287, %v4578, -inf
        %4677 = vmax.xlane.f32.xlu0 %v4676
        %v4678 = vpop.xlane.xlu0 %4677
        %v4679 = vsel %vm1287, %v4606, -inf
        %4680 = vmax.xlane.f32.xlu0 %v4679
        %v4681 = vpop.xlane.xlu0 %4680
        %v4682 = vsel %vm1287, %v4609, -inf
        %4683 = vmax.xlane.f32.xlu0 %v4682
        %v4684 = vpop.xlane.xlu0 %4683
        %v4685 = vsel %vm1287, %v4637, -inf
        %4686 = vmax.xlane.f32.xlu0 %v4685
        %v4687 = vpop.xlane.xlu0 %4686
        %v4688 = vsel %vm1287, %v4640, -inf
        %4689 = vmax.xlane.f32.xlu0 %v4688
        %v4690 = vpop.xlane.xlu0 %4689
        %v4691 = vsel %vm1287, %v4668, -inf
        %4692 = vmax.xlane.f32.xlu0 %v4691
        %v4693 = vpop.xlane.xlu0 %4692
        %v4694 = vsel %vm1287, %v4671, -inf
        %4695 = vmax.xlane.f32.xlu0 %v4694
        %v4696 = vpop.xlane.xlu0 %4695
        %v4697 = vsub.f32 %v4575, %v4675
        %v4698 = vsub.f32 %v4578, %v4678
        %v4699 = vsub.f32 %v4606, %v4681
        %v4700 = vsub.f32 %v4609, %v4684
        %v4701 = vsub.f32 %v4637, %v4687
        %v4702 = vsub.f32 %v4640, %v4690
        %v4703 = vsub.f32 %v4668, %v4693
        %v4704 = vsub.f32 %v4671, %v4696
        %v4705 = vmul.f32 %v4697, 1.442695
        %v4706 = vpow.pop %v4705
        %v4707 = vmul.f32 %v4698, 1.442695
        %v4708 = vpow.pop %v4707
        %v4709 = vmul.f32 %v4699, 1.442695
        %v4710 = vpow.pop %v4709
        %v4711 = vmul.f32 %v4700, 1.442695
        %v4712 = vpow.pop %v4711
        %v4713 = vmul.f32 %v4701, 1.442695
        %v4714 = vpow.pop %v4713
        %v4715 = vmul.f32 %v4702, 1.442695
        %v4716 = vpow.pop %v4715
        %v4717 = vmul.f32 %v4703, 1.442695
        %v4718 = vpow.pop %v4717
        %v4719 = vmul.f32 %v4704, 1.442695
        %v4720 = vpow.pop %v4719
        %v4721 = vsel %vm1287, %v4706, 0.0
        %4722 = vadd.xlane.f32.xlu0 %v4721
        %v4723 = vpop.xlane.xlu0 %4722
        %v4724 = vsel %vm1287, %v4708, 0.0
        %4725 = vadd.xlane.f32.xlu0 %v4724
        %v4726 = vpop.xlane.xlu0 %4725
        %v4727 = vsel %vm1287, %v4710, 0.0
        %4728 = vadd.xlane.f32.xlu0 %v4727
        %v4729 = vpop.xlane.xlu0 %4728
        %v4730 = vsel %vm1287, %v4712, 0.0
        %4731 = vadd.xlane.f32.xlu0 %v4730
        %v4732 = vpop.xlane.xlu0 %4731
        %v4733 = vsel %vm1287, %v4714, 0.0
        %4734 = vadd.xlane.f32.xlu0 %v4733
        %v4735 = vpop.xlane.xlu0 %4734
        %v4736 = vsel %vm1287, %v4716, 0.0
        %4737 = vadd.xlane.f32.xlu0 %v4736
        %v4738 = vpop.xlane.xlu0 %4737
        %v4739 = vsel %vm1287, %v4718, 0.0
        %4740 = vadd.xlane.f32.xlu0 %v4739
        %v4741 = vpop.xlane.xlu0 %4740
        %v4742 = vsel %vm1287, %v4720, 0.0
        %4743 = vadd.xlane.f32.xlu0 %v4742
        %v4744 = vpop.xlane.xlu0 %4743
        %v4745 = vrcp.pop %v4723
        %v4746 = vrcp.pop %v4726
        %v4747 = vrcp.pop %v4729
        %v4748 = vrcp.pop %v4732
        %v4749 = vrcp.pop %v4735
        %v4750 = vrcp.pop %v4738
        %v4751 = vrcp.pop %v4741
        %v4752 = vrcp.pop %v4744
        %v4753 = vmul.f32 %v4706, %v4745
        %v4754 = vmul.f32 %v4708, %v4746
        %v4755 = vmul.f32 %v4710, %v4747
        %v4756 = vmul.f32 %v4712, %v4748
        %v4757 = vmul.f32 %v4714, %v4749
        %v4758 = vmul.f32 %v4716, %v4750
        %v4759 = vmul.f32 %v4718, %v4751
        %v4760 = vmul.f32 %v4720, %v4752
        %v4761 = vpack.c.bf16 %v4753, %v4753
        %v4762 = vpack.c.bf16 %v4754, %v4754
        %v4763 = vpack.c.bf16 %v4755, %v4755
        %v4764 = vpack.c.bf16 %v4756, %v4756
        %v4765 = vpack.c.bf16 %v4757, %v4757
        %v4766 = vpack.c.bf16 %v4758, %v4758
        %v4767 = vpack.c.bf16 %v4759, %v4759
        %v4768 = vpack.c.bf16 %v4760, %v4760
        %v4769 = vpack.c.bf16 %v4497, %v4497
        %v4770 = vpack.c.bf16 %v4499, %v4499
        %v4771 = vpack.c.bf16 %v4532, %v4532
        %v4772 = vpack.c.bf16 %v4534, %v4534
        %v4773 = vpack.c.bf16 %v4538, %v4538
        %v4774 = vpack.c.bf16 %v4540, %v4540
        %v4775 = vpack.c.bf16 %v4544, %v4544
        %v4776 = vpack.c.bf16 %v4546, %v4546
        %v4779 = vunpack.c.l.b16 %v4761
        %v4780 = vunpack.c.l.b16 %v4762
        %v4781 = vpack.c.b16 %v4780, %v4779
        %v4784 = vunpack.c.l.b16 %v4769
        %v4785 = vunpack.c.l.b16 %v4770
        %v4786 = vpack.c.b16 %v4785, %v4784
        %v4789 = vsel %vm1287, %v4781, 0
        %4791 = vmatpush.bf16.msra.mxu0 0
        %4792 = vmatpush.bf16.msra.mxu0 0
        %4793 = vmatpush.bf16.msra.mxu0 0
        %4794 = vmatpush.bf16.msra.mxu0 0
        %4795 = vmatpush.bf16.msra.mxu0 0
        %4796 = vmatpush.bf16.msra.mxu0 0
        %4797 = vmatpush.bf16.msra.mxu0 0
        %4798 = vmatpush.bf16.msra.mxu0 %v4786
        %4799 = vmatmul.bf16.gmra.mxu0 %v4789
        %v4800 = vpop.f32.mrf.mxu0
        %v4801 = vadd.f32 0.0, %v4800
        %v4802 = vpop.f32.mrf.mxu0
        %v4803 = vadd.f32 0.0, %v4802
        %4804 = vdwg.mxu0
        %v4807 = vunpack.c.l.b16 %v4763
        %v4808 = vunpack.c.l.b16 %v4764
        %v4809 = vpack.c.b16 %v4808, %v4807
        %v4812 = vunpack.c.l.b16 %v4771
        %v4813 = vunpack.c.l.b16 %v4772
        %v4814 = vpack.c.b16 %v4813, %v4812
        %v4817 = vsel %vm1287, %v4809, 0
        %4819 = vmatpush.bf16.msra.mxu0 0
        %4820 = vmatpush.bf16.msra.mxu0 0
        %4821 = vmatpush.bf16.msra.mxu0 0
        %4822 = vmatpush.bf16.msra.mxu0 0
        %4823 = vmatpush.bf16.msra.mxu0 0
        %4824 = vmatpush.bf16.msra.mxu0 0
        %4825 = vmatpush.bf16.msra.mxu0 0
        %4826 = vmatpush.bf16.msra.mxu0 %v4814
        %4827 = vmatmul.bf16.gmra.mxu0 %v4817
        %v4828 = vpop.f32.mrf.mxu0
        %v4829 = vadd.f32 0.0, %v4828
        %v4830 = vpop.f32.mrf.mxu0
        %v4831 = vadd.f32 0.0, %v4830
        %4832 = vdwg.mxu0
        %v4835 = vunpack.c.l.b16 %v4765
        %v4836 = vunpack.c.l.b16 %v4766
        %v4837 = vpack.c.b16 %v4836, %v4835
        %v4840 = vunpack.c.l.b16 %v4773
        %v4841 = vunpack.c.l.b16 %v4774
        %v4842 = vpack.c.b16 %v4841, %v4840
        %v4845 = vsel %vm1287, %v4837, 0
        %4847 = vmatpush.bf16.msra.mxu0 0
        %4848 = vmatpush.bf16.msra.mxu0 0
        %4849 = vmatpush.bf16.msra.mxu0 0
        %4850 = vmatpush.bf16.msra.mxu0 0
        %4851 = vmatpush.bf16.msra.mxu0 0
        %4852 = vmatpush.bf16.msra.mxu0 0
        %4853 = vmatpush.bf16.msra.mxu0 0
        %4854 = vmatpush.bf16.msra.mxu0 %v4842
        %4855 = vmatmul.bf16.gmra.mxu0 %v4845
        %v4856 = vpop.f32.mrf.mxu0
        %v4857 = vadd.f32 0.0, %v4856
        %v4858 = vpop.f32.mrf.mxu0
        %v4859 = vadd.f32 0.0, %v4858
        %4860 = vdwg.mxu0
        %v4863 = vunpack.c.l.b16 %v4767
        %v4864 = vunpack.c.l.b16 %v4768
        %v4865 = vpack.c.b16 %v4864, %v4863
        %v4868 = vunpack.c.l.b16 %v4775
        %v4869 = vunpack.c.l.b16 %v4776
        %v4870 = vpack.c.b16 %v4869, %v4868
        %v4873 = vsel %vm1287, %v4865, 0
        %4875 = vmatpush.bf16.msra.mxu0 0
        %4876 = vmatpush.bf16.msra.mxu0 0
        %4877 = vmatpush.bf16.msra.mxu0 0
        %4878 = vmatpush.bf16.msra.mxu0 0
        %4879 = vmatpush.bf16.msra.mxu0 0
        %4880 = vmatpush.bf16.msra.mxu0 0
        %4881 = vmatpush.bf16.msra.mxu0 0
        %4882 = vmatpush.bf16.msra.mxu0 %v4870
        %4883 = vmatmul.bf16.gmra.mxu0 %v4873
        %v4884 = vpop.f32.mrf.mxu0
        %v4885 = vadd.f32 0.0, %v4884
        %v4886 = vpop.f32.mrf.mxu0
        %v4887 = vadd.f32 0.0, %v4886
        %4888 = vdwg.mxu0
        %4891 = vrot.lane.b32.xlu0 %v4829, 32
        %v4892 = vpop.permute.xlu0 %4891
        %4893 = vrot.lane.b32.xlu0 %v4831, 32
        %v4894 = vpop.permute.xlu0 %4893
        %4899 = vrot.lane.b32.xlu0 %v4857, 64
        %v4900 = vpop.permute.xlu0 %4899
        %4901 = vrot.lane.b32.xlu0 %v4859, 64
        %v4902 = vpop.permute.xlu0 %4901
        %4907 = vrot.lane.b32.xlu0 %v4885, 96
        %v4908 = vpop.permute.xlu0 %4907
        %4909 = vrot.lane.b32.xlu0 %v4887, 96
        %v4910 = vpop.permute.xlu0 %4909
        %v4913 = vsel %vm814, %v4801, %v4892
        %v4914 = vsel %vm814, %v4803, %v4894
        %v4915 = vsel %vm862, %v4913, %v4900
        %v4916 = vsel %vm862, %v4914, %v4902
        %v4917 = vsel %vm1532, %v4915, %v4908
        %v4918 = vsel %vm1532, %v4916, %v4910
        %v4919 = vpack.c.bf16 %v4918, %v4917
        %s4920 = scalar_lea.vmem %s9, 192
        %v4921 = vld [vmem:[%s4920] sm:$0xf]
        %v4922 = vld [vmem:[%s4920 + $0x4] sm:$0xf]
        %v4923 = vld [vmem:[%s4920 + $0x8] sm:$0xf]
        %v4924 = vld [vmem:[%s4920 + $0xc] sm:$0xf]
        %v4925 = vld [vmem:[%s4920 + $0x10] sm:$0xf]
        %v4926 = vld [vmem:[%s4920 + $0x14] sm:$0xf]
        %v4927 = vld [vmem:[%s4920 + $0x18] sm:$0xf]
        %v4928 = vld [vmem:[%s4920 + $0x1c] sm:$0xf]
        %v4929 = vld [vmem:[%s4920 + $0x20] sm:$0xf]
        %v4930 = vld [vmem:[%s4920 + $0x24] sm:$0xf]
        %v4931 = vld [vmem:[%s4920 + $0x28] sm:$0xf]
        %v4932 = vld [vmem:[%s4920 + $0x2c] sm:$0xf]
        %v4933 = vld [vmem:[%s4920 + $0x30] sm:$0xf]
        %v4934 = vld [vmem:[%s4920 + $0x34] sm:$0xf]
        %v4935 = vld [vmem:[%s4920 + $0x38] sm:$0xf]
        %v4936 = vld [vmem:[%s4920 + $0x3c] sm:$0xf]
        %s4937 = scalar_lea.vmem %s10, 3
        %v4938 = vld [vmem:[%s4937] sm:$0x1]
        %v4940 = vperm.slane %v4938, 0
        %v4958 = vunpack.c.l.b16 %v4921
        %v4959 = vunpack.c.l.b16 %v4922
        %v4960 = vunpack.c.l.b16 %v4923
        %v4961 = vunpack.c.l.b16 %v4924
        %v4962 = vunpack.c.l.b16 %v4925
        %v4963 = vunpack.c.l.b16 %v4926
        %v4964 = vunpack.c.l.b16 %v4927
        %v4965 = vunpack.c.l.b16 %v4928
        %v4966 = vunpack.c.l.b16 %v4929
        %v4967 = vunpack.c.l.b16 %v4930
        %v4968 = vunpack.c.l.b16 %v4931
        %v4969 = vunpack.c.l.b16 %v4932
        %v4970 = vunpack.c.l.b16 %v4933
        %v4971 = vunpack.c.l.b16 %v4934
        %v4972 = vunpack.c.l.b16 %v4935
        %v4973 = vunpack.c.l.b16 %v4936
        %v4974 = vpack.c.b16 %v4959, %v4958
        %v4975 = vpack.c.b16 %v4961, %v4960
        %v4976 = vpack.c.b16 %v4963, %v4962
        %v4977 = vpack.c.b16 %v4965, %v4964
        %v4978 = vpack.c.b16 %v4967, %v4966
        %v4979 = vpack.c.b16 %v4969, %v4968
        %v4980 = vpack.c.b16 %v4971, %v4970
        %v4981 = vpack.c.b16 %v4973, %v4972
        %4990 = vmatpush.bf16.msra.mxu0 %v4981
        %4991 = vmatpush.bf16.msra.mxu0 %v4980
        %4992 = vmatpush.bf16.msra.mxu0 %v4979
        %4993 = vmatpush.bf16.msra.mxu0 %v4978
        %4994 = vmatpush.bf16.msra.mxu0 %v4977
        %4995 = vmatpush.bf16.msra.mxu0 %v4976
        %4996 = vmatpush.bf16.msra.mxu0 %v4975
        %4997 = vmatpush.bf16.msra.mxu0 %v4974
        %4998 = vmatmul.bf16.gmra.mxu0 %v4919
        %v4999 = vpop.f32.mrf.mxu0
        %v5000 = vadd.f32 %v4940, %v4999
        %v5001 = vpop.f32.mrf.mxu0
        %v5002 = vadd.f32 %v4940, %v5001
        %5003 = vdwg.mxu0
        %v5004 = vadd.f32 %v4286, %v5000
        %v5005 = vadd.f32 %v4287, %v5002
        %s5006 = scalar_lea.vmem %s11, 3
        %v5007 = vld [vmem:[%s5006] sm:$0x1]
        %s5008 = scalar_lea.vmem %s12, 3
        %v5009 = vld [vmem:[%s5008] sm:$0x1]
        %5010 = vadd.xlane.f32.xlu0 %v5004
        %v5011 = vpop.xlane.xlu0 %5010
        %5012 = vadd.xlane.f32.xlu0 %v5005
        %v5013 = vpop.xlane.xlu0 %5012
        %v5014 = vmul.f32 %v5011, %v1632
        %v5015 = vmul.f32 %v5013, %v1632
        %v5016 = vsub.f32 %v5004, %v5014
        %v5017 = vsub.f32 %v5005, %v5015
        %v5018 = vmul.f32 %v5016, %v5016
        %v5019 = vmul.f32 %v5017, %v5017
        %5020 = vadd.xlane.f32.xlu0 %v5018
        %v5021 = vpop.xlane.xlu0 %5020
        %5022 = vadd.xlane.f32.xlu0 %v5019
        %v5023 = vpop.xlane.xlu0 %5022
        %v5024 = vmul.f32 %v5021, %v1632
        %v5025 = vmul.f32 %v5023, %v1632
        %v5026 = vadd.f32 %v5024, 1e-05
        %v5027 = vadd.f32 %v5025, 1e-05
        %v5028 = vrsqrt.pop %v5026
        %v5029 = vmul.f32 %v5028, %v5026
        %v5030 = vmul.f32 %v5029, %v5028
        %v5031 = vmul.f32 0.5, %v5030
        %v5032 = vsub.f32 1.5, %v5031
        %v5033 = vmul.f32 %v5028, %v5032
        %vm5034 = vweird.f32 %v5026
        %vm5035 = vweird.f32 %v5028
        %vm5036 = vmor %vm5034, %vm5035
        %v5037 = vsel %vm5036, %v5028, %v5033
        %v5038 = vrsqrt.pop %v5027
        %v5039 = vmul.f32 %v5038, %v5027
        %v5040 = vmul.f32 %v5039, %v5038
        %v5041 = vmul.f32 0.5, %v5040
        %v5042 = vsub.f32 1.5, %v5041
        %v5043 = vmul.f32 %v5038, %v5042
        %vm5044 = vweird.f32 %v5027
        %vm5045 = vweird.f32 %v5038
        %vm5046 = vmor %vm5044, %vm5045
        %v5047 = vsel %vm5046, %v5038, %v5043
        %v5048 = vmul.f32 %v5016, %v5037
        %v5049 = vmul.f32 %v5017, %v5047
        %v5051 = vperm.slane %v5007, 0
        %v5053 = vmul.f32 %v5048, %v5051
        %v5054 = vmul.f32 %v5049, %v5051
        %v5056 = vperm.slane %v5009, 0
        %v5058 = vadd.f32 %v5053, %v5056
        %v5059 = vadd.f32 %v5054, %v5056
        %v5060 = vpack.c.bf16 %v5059, %v5058
        %s5061 = scalar_lea.vmem [#allocation5], 384
        %v5062 = vld [vmem:[%s5061] sm:$0xff]
        %v5063 = vld [vmem:[%s5061 + $0x8] sm:$0xff]
        %v5064 = vld [vmem:[%s5061 + $0x10] sm:$0xff]
        %v5065 = vld [vmem:[%s5061 + $0x18] sm:$0xff]
        %v5066 = vld [vmem:[%s5061 + $0x20] sm:$0xff]
        %v5067 = vld [vmem:[%s5061 + $0x28] sm:$0xff]
        %v5068 = vld [vmem:[%s5061 + $0x30] sm:$0xff]
        %v5069 = vld [vmem:[%s5061 + $0x38] sm:$0xff]
        %v5070 = vld [vmem:[%s5061 + $0x40] sm:$0xff]
        %v5071 = vld [vmem:[%s5061 + $0x48] sm:$0xff]
        %v5072 = vld [vmem:[%s5061 + $0x50] sm:$0xff]
        %v5073 = vld [vmem:[%s5061 + $0x58] sm:$0xff]
        %v5074 = vld [vmem:[%s5061 + $0x60] sm:$0xff]
        %v5075 = vld [vmem:[%s5061 + $0x68] sm:$0xff]
        %v5076 = vld [vmem:[%s5061 + $0x70] sm:$0xff]
        %v5077 = vld [vmem:[%s5061 + $0x78] sm:$0xff]
        %s5078 = scalar_lea.vmem %s14, 6
        %v5079 = vld [vmem:[%s5078] sm:$0x3]
        %v5081 = vperm.slane %v5079, 0
        %v5082 = vperm.slane %v5079, 1
        %v5101 = vunpack.c.l.b16 %v5062
        %v5102 = vunpack.c.h.b16 %v5062
        %v5103 = vunpack.c.l.b16 %v5063
        %v5104 = vunpack.c.h.b16 %v5063
        %v5105 = vunpack.c.l.b16 %v5064
        %v5106 = vunpack.c.h.b16 %v5064
        %v5107 = vunpack.c.l.b16 %v5065
        %v5108 = vunpack.c.h.b16 %v5065
        %v5109 = vunpack.c.l.b16 %v5066
        %v5110 = vunpack.c.h.b16 %v5066
        %v5111 = vunpack.c.l.b16 %v5067
        %v5112 = vunpack.c.h.b16 %v5067
        %v5113 = vunpack.c.l.b16 %v5068
        %v5114 = vunpack.c.h.b16 %v5068
        %v5115 = vunpack.c.l.b16 %v5069
        %v5116 = vunpack.c.h.b16 %v5069
        %v5117 = vunpack.c.l.b16 %v5070
        %v5118 = vunpack.c.h.b16 %v5070
        %v5119 = vunpack.c.l.b16 %v5071
        %v5120 = vunpack.c.h.b16 %v5071
        %v5121 = vunpack.c.l.b16 %v5072
        %v5122 = vunpack.c.h.b16 %v5072
        %v5123 = vunpack.c.l.b16 %v5073
        %v5124 = vunpack.c.h.b16 %v5073
        %v5125 = vunpack.c.l.b16 %v5074
        %v5126 = vunpack.c.h.b16 %v5074
        %v5127 = vunpack.c.l.b16 %v5075
        %v5128 = vunpack.c.h.b16 %v5075
        %v5129 = vunpack.c.l.b16 %v5076
        %v5130 = vunpack.c.h.b16 %v5076
        %v5131 = vunpack.c.l.b16 %v5077
        %v5132 = vunpack.c.h.b16 %v5077
        %v5133 = vpack.c.b16 %v5103, %v5101
        %v5134 = vpack.c.b16 %v5104, %v5102
        %v5135 = vpack.c.b16 %v5107, %v5105
        %v5136 = vpack.c.b16 %v5108, %v5106
        %v5137 = vpack.c.b16 %v5111, %v5109
        %v5138 = vpack.c.b16 %v5112, %v5110
        %v5139 = vpack.c.b16 %v5115, %v5113
        %v5140 = vpack.c.b16 %v5116, %v5114
        %v5141 = vpack.c.b16 %v5119, %v5117
        %v5142 = vpack.c.b16 %v5120, %v5118
        %v5143 = vpack.c.b16 %v5123, %v5121
        %v5144 = vpack.c.b16 %v5124, %v5122
        %v5145 = vpack.c.b16 %v5127, %v5125
        %v5146 = vpack.c.b16 %v5128, %v5126
        %v5147 = vpack.c.b16 %v5131, %v5129
        %v5148 = vpack.c.b16 %v5132, %v5130
        %5165 = vmatpush.bf16.msra.mxu0 %v5147
        %5166 = vmatpush.bf16.msra.mxu0 %v5145
        %5167 = vmatpush.bf16.msra.mxu0 %v5143
        %5168 = vmatpush.bf16.msra.mxu0 %v5141
        %5169 = vmatpush.bf16.msra.mxu0 %v5139
        %5170 = vmatpush.bf16.msra.mxu0 %v5137
        %5171 = vmatpush.bf16.msra.mxu0 %v5135
        %5172 = vmatpush.bf16.msra.mxu0 %v5133
        %5173 = vmatmul.bf16.gmra.mxu0 %v5060
        %v5174 = vpop.f32.mrf.mxu0
        %v5175 = vadd.f32 %v5081, %v5174
        %v5176 = vpop.f32.mrf.mxu0
        %v5177 = vadd.f32 %v5081, %v5176
        %5178 = vdwg.mxu0
        %5179 = vmatpush.bf16.msra.mxu0 %v5148
        %5180 = vmatpush.bf16.msra.mxu0 %v5146
        %5181 = vmatpush.bf16.msra.mxu0 %v5144
        %5182 = vmatpush.bf16.msra.mxu0 %v5142
        %5183 = vmatpush.bf16.msra.mxu0 %v5140
        %5184 = vmatpush.bf16.msra.mxu0 %v5138
        %5185 = vmatpush.bf16.msra.mxu0 %v5136
        %5186 = vmatpush.bf16.msra.mxu0 %v5134
        %5187 = vmatmul.bf16.gmra.mxu0 %v5060
        %v5188 = vpop.f32.mrf.mxu0
        %v5189 = vadd.f32 %v5082, %v5188
        %v5190 = vpop.f32.mrf.mxu0
        %v5191 = vadd.f32 %v5082, %v5190
        %5192 = vdwg.mxu0
        %v5193 = vmax.f32 %v5175, 0.0
        %v5194 = vmax.f32 %v5189, 0.0
        %v5195 = vmax.f32 %v5177, 0.0
        %v5196 = vmax.f32 %v5191, 0.0
        %v5197 = vpack.c.bf16 %v5195, %v5193
        %v5198 = vpack.c.bf16 %v5196, %v5194
        %s5199 = scalar_lea.vmem [#allocation7], 384
        %v5200 = vld [vmem:[%s5199] sm:$0xf]
        %v5201 = vld [vmem:[%s5199 + $0x4] sm:$0xf]
        %v5202 = vld [vmem:[%s5199 + $0x8] sm:$0xf]
        %v5203 = vld [vmem:[%s5199 + $0xc] sm:$0xf]
        %v5204 = vld [vmem:[%s5199 + $0x10] sm:$0xf]
        %v5205 = vld [vmem:[%s5199 + $0x14] sm:$0xf]
        %v5206 = vld [vmem:[%s5199 + $0x18] sm:$0xf]
        %v5207 = vld [vmem:[%s5199 + $0x1c] sm:$0xf]
        %v5208 = vld [vmem:[%s5199 + $0x20] sm:$0xf]
        %v5209 = vld [vmem:[%s5199 + $0x24] sm:$0xf]
        %v5210 = vld [vmem:[%s5199 + $0x28] sm:$0xf]
        %v5211 = vld [vmem:[%s5199 + $0x2c] sm:$0xf]
        %v5212 = vld [vmem:[%s5199 + $0x30] sm:$0xf]
        %v5213 = vld [vmem:[%s5199 + $0x34] sm:$0xf]
        %v5214 = vld [vmem:[%s5199 + $0x38] sm:$0xf]
        %v5215 = vld [vmem:[%s5199 + $0x3c] sm:$0xf]
        %v5216 = vld [vmem:[%s5199 + $0x40] sm:$0xf]
        %v5217 = vld [vmem:[%s5199 + $0x44] sm:$0xf]
        %v5218 = vld [vmem:[%s5199 + $0x48] sm:$0xf]
        %v5219 = vld [vmem:[%s5199 + $0x4c] sm:$0xf]
        %v5220 = vld [vmem:[%s5199 + $0x50] sm:$0xf]
        %v5221 = vld [vmem:[%s5199 + $0x54] sm:$0xf]
        %v5222 = vld [vmem:[%s5199 + $0x58] sm:$0xf]
        %v5223 = vld [vmem:[%s5199 + $0x5c] sm:$0xf]
        %v5224 = vld [vmem:[%s5199 + $0x60] sm:$0xf]
        %v5225 = vld [vmem:[%s5199 + $0x64] sm:$0xf]
        %v5226 = vld [vmem:[%s5199 + $0x68] sm:$0xf]
        %v5227 = vld [vmem:[%s5199 + $0x6c] sm:$0xf]
        %v5228 = vld [vmem:[%s5199 + $0x70] sm:$0xf]
        %v5229 = vld [vmem:[%s5199 + $0x74] sm:$0xf]
        %v5230 = vld [vmem:[%s5199 + $0x78] sm:$0xf]
        %v5231 = vld [vmem:[%s5199 + $0x7c] sm:$0xf]
        %s5232 = scalar_lea.vmem %s16, 3
        %v5233 = vld [vmem:[%s5232] sm:$0x1]
        %v5235 = vperm.slane %v5233, 0
        %v5269 = vunpack.c.l.b16 %v5200
        %v5270 = vunpack.c.l.b16 %v5201
        %v5271 = vunpack.c.l.b16 %v5202
        %v5272 = vunpack.c.l.b16 %v5203
        %v5273 = vunpack.c.l.b16 %v5204
        %v5274 = vunpack.c.l.b16 %v5205
        %v5275 = vunpack.c.l.b16 %v5206
        %v5276 = vunpack.c.l.b16 %v5207
        %v5277 = vunpack.c.l.b16 %v5208
        %v5278 = vunpack.c.l.b16 %v5209
        %v5279 = vunpack.c.l.b16 %v5210
        %v5280 = vunpack.c.l.b16 %v5211
        %v5281 = vunpack.c.l.b16 %v5212
        %v5282 = vunpack.c.l.b16 %v5213
        %v5283 = vunpack.c.l.b16 %v5214
        %v5284 = vunpack.c.l.b16 %v5215
        %v5285 = vunpack.c.l.b16 %v5216
        %v5286 = vunpack.c.l.b16 %v5217
        %v5287 = vunpack.c.l.b16 %v5218
        %v5288 = vunpack.c.l.b16 %v5219
        %v5289 = vunpack.c.l.b16 %v5220
        %v5290 = vunpack.c.l.b16 %v5221
        %v5291 = vunpack.c.l.b16 %v5222
        %v5292 = vunpack.c.l.b16 %v5223
        %v5293 = vunpack.c.l.b16 %v5224
        %v5294 = vunpack.c.l.b16 %v5225
        %v5295 = vunpack.c.l.b16 %v5226
        %v5296 = vunpack.c.l.b16 %v5227
        %v5297 = vunpack.c.l.b16 %v5228
        %v5298 = vunpack.c.l.b16 %v5229
        %v5299 = vunpack.c.l.b16 %v5230
        %v5300 = vunpack.c.l.b16 %v5231
        %v5301 = vpack.c.b16 %v5270, %v5269
        %v5302 = vpack.c.b16 %v5272, %v5271
        %v5303 = vpack.c.b16 %v5274, %v5273
        %v5304 = vpack.c.b16 %v5276, %v5275
        %v5305 = vpack.c.b16 %v5278, %v5277
        %v5306 = vpack.c.b16 %v5280, %v5279
        %v5307 = vpack.c.b16 %v5282, %v5281
        %v5308 = vpack.c.b16 %v5284, %v5283
        %v5309 = vpack.c.b16 %v5286, %v5285
        %v5310 = vpack.c.b16 %v5288, %v5287
        %v5311 = vpack.c.b16 %v5290, %v5289
        %v5312 = vpack.c.b16 %v5292, %v5291
        %v5313 = vpack.c.b16 %v5294, %v5293
        %v5314 = vpack.c.b16 %v5296, %v5295
        %v5315 = vpack.c.b16 %v5298, %v5297
        %v5316 = vpack.c.b16 %v5300, %v5299
        %5333 = vmatpush.bf16.msra.mxu0 %v5308
        %5334 = vmatpush.bf16.msra.mxu0 %v5307
        %5335 = vmatpush.bf16.msra.mxu0 %v5306
        %5336 = vmatpush.bf16.msra.mxu0 %v5305
        %5337 = vmatpush.bf16.msra.mxu0 %v5304
        %5338 = vmatpush.bf16.msra.mxu0 %v5303
        %5339 = vmatpush.bf16.msra.mxu0 %v5302
        %5340 = vmatpush.bf16.msra.mxu0 %v5301
        %5341 = vmatmul.bf16.gmra.mxu0 %v5197
        %v5342 = vpop.f32.mrf.mxu0
        %v5343 = vadd.f32 %v5235, %v5342
        %v5344 = vpop.f32.mrf.mxu0
        %v5345 = vadd.f32 %v5235, %v5344
        %5346 = vdwg.mxu0
        %5347 = vmatpush.bf16.msra.mxu0 %v5316
        %5348 = vmatpush.bf16.msra.mxu0 %v5315
        %5349 = vmatpush.bf16.msra.mxu0 %v5314
        %5350 = vmatpush.bf16.msra.mxu0 %v5313
        %5351 = vmatpush.bf16.msra.mxu0 %v5312
        %5352 = vmatpush.bf16.msra.mxu0 %v5311
        %5353 = vmatpush.bf16.msra.mxu0 %v5310
        %5354 = vmatpush.bf16.msra.mxu0 %v5309
        %5355 = vmatmul.bf16.gmra.mxu0 %v5198
        %v5356 = vpop.f32.mrf.mxu0
        %v5357 = vadd.f32 %v5343, %v5356
        %v5358 = vpop.f32.mrf.mxu0
        %v5359 = vadd.f32 %v5345, %v5358
        %5360 = vdwg.mxu0
        %v5361 = vadd.f32 %v5058, %v5357
        %v5362 = vadd.f32 %v5059, %v5359
        %s5363 = scalar_lea.vmem %s17, 3
        %v5364 = vld [vmem:[%s5363] sm:$0x1]
        %s5365 = scalar_lea.vmem %s18, 3
        %v5366 = vld [vmem:[%s5365] sm:$0x1]
        %5367 = vadd.xlane.f32.xlu0 %v5361
        %v5368 = vpop.xlane.xlu0 %5367
        %5369 = vadd.xlane.f32.xlu0 %v5362
        %v5370 = vpop.xlane.xlu0 %5369
        %v5371 = vmul.f32 %v5368, %v1632
        %v5372 = vmul.f32 %v5370, %v1632
        %v5373 = vsub.f32 %v5361, %v5371
        %v5374 = vsub.f32 %v5362, %v5372
        %v5375 = vmul.f32 %v5373, %v5373
        %v5376 = vmul.f32 %v5374, %v5374
        %5377 = vadd.xlane.f32.xlu0 %v5375
        %v5378 = vpop.xlane.xlu0 %5377
        %5379 = vadd.xlane.f32.xlu0 %v5376
        %v5380 = vpop.xlane.xlu0 %5379
        %v5381 = vmul.f32 %v5378, %v1632
        %v5382 = vmul.f32 %v5380, %v1632
        %v5383 = vadd.f32 %v5381, 1e-05
        %v5384 = vadd.f32 %v5382, 1e-05
        %v5385 = vrsqrt.pop %v5383
        %v5386 = vmul.f32 %v5385, %v5383
        %v5387 = vmul.f32 %v5386, %v5385
        %v5388 = vmul.f32 0.5, %v5387
        %v5389 = vsub.f32 1.5, %v5388
        %v5390 = vmul.f32 %v5385, %v5389
        %vm5391 = vweird.f32 %v5383
        %vm5392 = vweird.f32 %v5385
        %vm5393 = vmor %vm5391, %vm5392
        %v5394 = vsel %vm5393, %v5385, %v5390
        %v5395 = vrsqrt.pop %v5384
        %v5396 = vmul.f32 %v5395, %v5384
        %v5397 = vmul.f32 %v5396, %v5395
        %v5398 = vmul.f32 0.5, %v5397
        %v5399 = vsub.f32 1.5, %v5398
        %v5400 = vmul.f32 %v5395, %v5399
        %vm5401 = vweird.f32 %v5384
        %vm5402 = vweird.f32 %v5395
        %vm5403 = vmor %vm5401, %vm5402
        %v5404 = vsel %vm5403, %v5395, %v5400
        %v5405 = vmul.f32 %v5373, %v5394
        %v5406 = vmul.f32 %v5374, %v5404
        %v5408 = vperm.slane %v5364, 0
        %v5410 = vmul.f32 %v5405, %v5408
        %v5411 = vmul.f32 %v5406, %v5408
        %v5413 = vperm.slane %v5366, 0
        %v5415 = vadd.f32 %v5410, %v5413
        %v5416 = vadd.f32 %v5411, %v5413
        %v5417 = vpack.c.bf16 %v5416, %v5415
        %s5418 = scalar_lea.vmem [#allocation3], 768
        %v5419 = vld [vmem:[%s5418] sm:$0xff]
        %v5420 = vld [vmem:[%s5418 + $0x8] sm:$0xf]
        %v5421 = vld [vmem:[%s5418 + $0xc] sm:$0xff]
        %v5422 = vld [vmem:[%s5418 + $0x14] sm:$0xf]
        %v5423 = vld [vmem:[%s5418 + $0x18] sm:$0xff]
        %v5424 = vld [vmem:[%s5418 + $0x20] sm:$0xf]
        %v5425 = vld [vmem:[%s5418 + $0x24] sm:$0xff]
        %v5426 = vld [vmem:[%s5418 + $0x2c] sm:$0xf]
        %v5427 = vld [vmem:[%s5418 + $0x30] sm:$0xff]
        %v5428 = vld [vmem:[%s5418 + $0x38] sm:$0xf]
        %v5429 = vld [vmem:[%s5418 + $0x3c] sm:$0xff]
        %v5430 = vld [vmem:[%s5418 + $0x44] sm:$0xf]
        %v5431 = vld [vmem:[%s5418 + $0x48] sm:$0xff]
        %v5432 = vld [vmem:[%s5418 + $0x50] sm:$0xf]
        %v5433 = vld [vmem:[%s5418 + $0x54] sm:$0xff]
        %v5434 = vld [vmem:[%s5418 + $0x5c] sm:$0xf]
        %v5435 = vld [vmem:[%s5418 + $0x60] sm:$0xff]
        %v5436 = vld [vmem:[%s5418 + $0x68] sm:$0xf]
        %v5437 = vld [vmem:[%s5418 + $0x6c] sm:$0xff]
        %v5438 = vld [vmem:[%s5418 + $0x74] sm:$0xf]
        %v5439 = vld [vmem:[%s5418 + $0x78] sm:$0xff]
        %v5440 = vld [vmem:[%s5418 + $0x80] sm:$0xf]
        %v5441 = vld [vmem:[%s5418 + $0x84] sm:$0xff]
        %v5442 = vld [vmem:[%s5418 + $0x8c] sm:$0xf]
        %v5443 = vld [vmem:[%s5418 + $0x90] sm:$0xff]
        %v5444 = vld [vmem:[%s5418 + $0x98] sm:$0xf]
        %v5445 = vld [vmem:[%s5418 + $0x9c] sm:$0xff]
        %v5446 = vld [vmem:[%s5418 + $0xa4] sm:$0xf]
        %v5447 = vld [vmem:[%s5418 + $0xa8] sm:$0xff]
        %v5448 = vld [vmem:[%s5418 + $0xb0] sm:$0xf]
        %v5449 = vld [vmem:[%s5418 + $0xb4] sm:$0xff]
        %v5450 = vld [vmem:[%s5418 + $0xbc] sm:$0xf]
        %s5451 = scalar_lea.vmem %s8, 12
        %v5452 = vld [vmem:[%s5451] sm:$0x7]
        %v5454 = vperm.slane %v5452, 0
        %v5455 = vperm.slane %v5452, 1
        %v5456 = vperm.slane %v5452, 2
        %v5492 = vunpack.c.l.b16 %v5419
        %v5493 = vunpack.c.h.b16 %v5419
        %v5494 = vunpack.c.l.b16 %v5420
        %v5495 = vunpack.c.l.b16 %v5421
        %v5496 = vunpack.c.h.b16 %v5421
        %v5497 = vunpack.c.l.b16 %v5422
        %v5498 = vunpack.c.l.b16 %v5423
        %v5499 = vunpack.c.h.b16 %v5423
        %v5500 = vunpack.c.l.b16 %v5424
        %v5501 = vunpack.c.l.b16 %v5425
        %v5502 = vunpack.c.h.b16 %v5425
        %v5503 = vunpack.c.l.b16 %v5426
        %v5504 = vunpack.c.l.b16 %v5427
        %v5505 = vunpack.c.h.b16 %v5427
        %v5506 = vunpack.c.l.b16 %v5428
        %v5507 = vunpack.c.l.b16 %v5429
        %v5508 = vunpack.c.h.b16 %v5429
        %v5509 = vunpack.c.l.b16 %v5430
        %v5510 = vunpack.c.l.b16 %v5431
        %v5511 = vunpack.c.h.b16 %v5431
        %v5512 = vunpack.c.l.b16 %v5432
        %v5513 = vunpack.c.l.b16 %v5433
        %v5514 = vunpack.c.h.b16 %v5433
        %v5515 = vunpack.c.l.b16 %v5434
        %v5516 = vunpack.c.l.b16 %v5435
        %v5517 = vunpack.c.h.b16 %v5435
        %v5518 = vunpack.c.l.b16 %v5436
        %v5519 = vunpack.c.l.b16 %v5437
        %v5520 = vunpack.c.h.b16 %v5437
        %v5521 = vunpack.c.l.b16 %v5438
        %v5522 = vunpack.c.l.b16 %v5439
        %v5523 = vunpack.c.h.b16 %v5439
        %v5524 = vunpack.c.l.b16 %v5440
        %v5525 = vunpack.c.l.b16 %v5441
        %v5526 = vunpack.c.h.b16 %v5441
        %v5527 = vunpack.c.l.b16 %v5442
        %v5528 = vunpack.c.l.b16 %v5443
        %v5529 = vunpack.c.h.b16 %v5443
        %v5530 = vunpack.c.l.b16 %v5444
        %v5531 = vunpack.c.l.b16 %v5445
        %v5532 = vunpack.c.h.b16 %v5445
        %v5533 = vunpack.c.l.b16 %v5446
        %v5534 = vunpack.c.l.b16 %v5447
        %v5535 = vunpack.c.h.b16 %v5447
        %v5536 = vunpack.c.l.b16 %v5448
        %v5537 = vunpack.c.l.b16 %v5449
        %v5538 = vunpack.c.h.b16 %v5449
        %v5539 = vunpack.c.l.b16 %v5450
        %v5540 = vpack.c.b16 %v5495, %v5492
        %v5541 = vpack.c.b16 %v5496, %v5493
        %v5542 = vpack.c.b16 %v5497, %v5494
        %v5543 = vpack.c.b16 %v5501, %v5498
        %v5544 = vpack.c.b16 %v5502, %v5499
        %v5545 = vpack.c.b16 %v5503, %v5500
        %v5546 = vpack.c.b16 %v5507, %v5504
        %v5547 = vpack.c.b16 %v5508, %v5505
        %v5548 = vpack.c.b16 %v5509, %v5506
        %v5549 = vpack.c.b16 %v5513, %v5510
        %v5550 = vpack.c.b16 %v5514, %v5511
        %v5551 = vpack.c.b16 %v5515, %v5512
        %v5552 = vpack.c.b16 %v5519, %v5516
        %v5553 = vpack.c.b16 %v5520, %v5517
        %v5554 = vpack.c.b16 %v5521, %v5518
        %v5555 = vpack.c.b16 %v5525, %v5522
        %v5556 = vpack.c.b16 %v5526, %v5523
        %v5557 = vpack.c.b16 %v5527, %v5524
        %v5558 = vpack.c.b16 %v5531, %v5528
        %v5559 = vpack.c.b16 %v5532, %v5529
        %v5560 = vpack.c.b16 %v5533, %v5530
        %v5561 = vpack.c.b16 %v5537, %v5534
        %v5562 = vpack.c.b16 %v5538, %v5535
        %v5563 = vpack.c.b16 %v5539, %v5536
        %5588 = vmatpush.bf16.msra.mxu0 %v5561
        %5589 = vmatpush.bf16.msra.mxu0 %v5558
        %5590 = vmatpush.bf16.msra.mxu0 %v5555
        %5591 = vmatpush.bf16.msra.mxu0 %v5552
        %5592 = vmatpush.bf16.msra.mxu0 %v5549
        %5593 = vmatpush.bf16.msra.mxu0 %v5546
        %5594 = vmatpush.bf16.msra.mxu0 %v5543
        %5595 = vmatpush.bf16.msra.mxu0 %v5540
        %5596 = vmatmul.bf16.gmra.mxu0 %v5417
        %v5597 = vpop.f32.mrf.mxu0
        %v5598 = vadd.f32 %v5454, %v5597
        %v5599 = vpop.f32.mrf.mxu0
        %v5600 = vadd.f32 %v5454, %v5599
        %5601 = vdwg.mxu0
        %5602 = vmatpush.bf16.msra.mxu0 %v5562
        %5603 = vmatpush.bf16.msra.mxu0 %v5559
        %5604 = vmatpush.bf16.msra.mxu0 %v5556
        %5605 = vmatpush.bf16.msra.mxu0 %v5553
        %5606 = vmatpush.bf16.msra.mxu0 %v5550
        %5607 = vmatpush.bf16.msra.mxu0 %v5547
        %5608 = vmatpush.bf16.msra.mxu0 %v5544
        %5609 = vmatpush.bf16.msra.mxu0 %v5541
        %5610 = vmatmul.bf16.gmra.mxu0 %v5417
        %v5611 = vpop.f32.mrf.mxu0
        %v5612 = vadd.f32 %v5455, %v5611
        %v5613 = vpop.f32.mrf.mxu0
        %v5614 = vadd.f32 %v5455, %v5613
        %5615 = vdwg.mxu0
        %5616 = vmatpush.bf16.msra.mxu0 %v5563
        %5617 = vmatpush.bf16.msra.mxu0 %v5560
        %5618 = vmatpush.bf16.msra.mxu0 %v5557
        %5619 = vmatpush.bf16.msra.mxu0 %v5554
        %5620 = vmatpush.bf16.msra.mxu0 %v5551
        %5621 = vmatpush.bf16.msra.mxu0 %v5548
        %5622 = vmatpush.bf16.msra.mxu0 %v5545
        %5623 = vmatpush.bf16.msra.mxu0 %v5542
        %5624 = vmatmul.bf16.gmra.mxu0 %v5417
        %v5625 = vpop.f32.mrf.mxu0
        %v5626 = vadd.f32 %v5456, %v5625
        %v5627 = vpop.f32.mrf.mxu0
        %v5628 = vadd.f32 %v5456, %v5627
        %5629 = vdwg.mxu0
        %5632 = vrot.lane.b32.xlu0 %v5598, 96
        %v5633 = vpop.permute.xlu0 %5632
        %5634 = vrot.lane.b32.xlu0 %v5600, 96
        %v5635 = vpop.permute.xlu0 %5634
        %5636 = vrot.lane.b32.xlu0 %v5598, 64
        %v5637 = vpop.permute.xlu0 %5636
        %5638 = vrot.lane.b32.xlu0 %v5600, 64
        %v5639 = vpop.permute.xlu0 %5638
        %5640 = vrot.lane.b32.xlu0 %v5598, 32
        %v5641 = vpop.permute.xlu0 %5640
        %5642 = vrot.lane.b32.xlu0 %v5600, 32
        %v5643 = vpop.permute.xlu0 %5642
        %5646 = vrot.lane.b32.xlu0 %v5612, 96
        %v5647 = vpop.permute.xlu0 %5646
        %5648 = vrot.lane.b32.xlu0 %v5614, 96
        %v5649 = vpop.permute.xlu0 %5648
        %5650 = vrot.lane.b32.xlu0 %v5612, 64
        %v5651 = vpop.permute.xlu0 %5650
        %5652 = vrot.lane.b32.xlu0 %v5614, 64
        %v5653 = vpop.permute.xlu0 %5652
        %5654 = vrot.lane.b32.xlu0 %v5612, 32
        %v5655 = vpop.permute.xlu0 %5654
        %5656 = vrot.lane.b32.xlu0 %v5614, 32
        %v5657 = vpop.permute.xlu0 %5656
        %5660 = vrot.lane.b32.xlu0 %v5626, 96
        %v5661 = vpop.permute.xlu0 %5660
        %5662 = vrot.lane.b32.xlu0 %v5628, 96
        %v5663 = vpop.permute.xlu0 %5662
        %5666 = vrot.lane.b32.xlu0 %v5626, 64
        %v5667 = vpop.permute.xlu0 %5666
        %5668 = vrot.lane.b32.xlu0 %v5628, 64
        %v5669 = vpop.permute.xlu0 %5668
        %5672 = vrot.lane.b32.xlu0 %v5626, 32
        %v5673 = vpop.permute.xlu0 %5672
        %5674 = vrot.lane.b32.xlu0 %v5628, 32
        %v5675 = vpop.permute.xlu0 %5674
        %v5678 = vsel %vm814, %v5598, 0
        %v5680 = vsel %vm814, %v5600, 0
        %v5682 = vsel %vm814, %v5612, 0
        %v5684 = vsel %vm814, %v5614, 0
        %5686 = vmatpush.xpose.msra.mxu0 0.0
        %5687 = vmatpush.xpose.msra.mxu0 0.0
        %5688 = vmatpush.xpose.msra.mxu0 0.0
        %5689 = vmatpush.xpose.msra.mxu0 0.0
        %5690 = vmatpush.xpose.msra.mxu0 0.0
        %5691 = vmatpush.xpose.msra.mxu0 0.0
        %5692 = vmatpush.xpose.msra.mxu0 0.0
        %5693 = vmatpush.xpose.msra.mxu0 0.0
        %5694 = vmatpush.xpose.msra.mxu0 0.0
        %5695 = vmatpush.xpose.msra.mxu0 0.0
        %5696 = vmatpush.xpose.msra.mxu0 0.0
        %5697 = vmatpush.xpose.msra.mxu0 0.0
        %5698 = vmatpush.xpose.msra.mxu0 0.0
        %5699 = vmatpush.xpose.msra.mxu0 0.0
        %5700 = vmatpush.xpose.msra.mxu0 %v5684
        %5701 = vmatpush.xpose.msra.mxu0 %v5682
        %5702 = vmatmul.f32.gmra.mxu0 %v5678
        %v5703 = vpop.f32.mrf.mxu0
        %v5704 = vadd.f32 %v896, %v5703
        %5705 = vmatmul.f32.gmra.mxu0 %v5680
        %v5706 = vpop.f32.mrf.mxu0
        %v5707 = vadd.f32 %v897, %v5706
        %5708 = vdwg.mxu0
        %v5709 = vsel %vm814, %v5633, 0
        %v5711 = vsel %vm814, %v5635, 0
        %v5713 = vsel %vm814, %v5647, 0
        %v5715 = vsel %vm814, %v5649, 0
        %5717 = vmatpush.xpose.msra.mxu0 0.0
        %5718 = vmatpush.xpose.msra.mxu0 0.0
        %5719 = vmatpush.xpose.msra.mxu0 0.0
        %5720 = vmatpush.xpose.msra.mxu0 0.0
        %5721 = vmatpush.xpose.msra.mxu0 0.0
        %5722 = vmatpush.xpose.msra.mxu0 0.0
        %5723 = vmatpush.xpose.msra.mxu0 0.0
        %5724 = vmatpush.xpose.msra.mxu0 0.0
        %5725 = vmatpush.xpose.msra.mxu0 0.0
        %5726 = vmatpush.xpose.msra.mxu0 0.0
        %5727 = vmatpush.xpose.msra.mxu0 0.0
        %5728 = vmatpush.xpose.msra.mxu0 0.0
        %5729 = vmatpush.xpose.msra.mxu0 0.0
        %5730 = vmatpush.xpose.msra.mxu0 0.0
        %5731 = vmatpush.xpose.msra.mxu0 %v5715
        %5732 = vmatpush.xpose.msra.mxu0 %v5713
        %5733 = vmatmul.f32.gmra.mxu0 %v5709
        %v5734 = vpop.f32.mrf.mxu0
        %v5735 = vadd.f32 %v898, %v5734
        %5736 = vmatmul.f32.gmra.mxu0 %v5711
        %v5737 = vpop.f32.mrf.mxu0
        %v5738 = vadd.f32 %v899, %v5737
        %5739 = vdwg.mxu0
        %v5740 = vsel %vm814, %v5637, 0
        %v5742 = vsel %vm814, %v5639, 0
        %v5744 = vsel %vm814, %v5651, 0
        %v5746 = vsel %vm814, %v5653, 0
        %5748 = vmatpush.xpose.msra.mxu0 0.0
        %5749 = vmatpush.xpose.msra.mxu0 0.0
        %5750 = vmatpush.xpose.msra.mxu0 0.0
        %5751 = vmatpush.xpose.msra.mxu0 0.0
        %5752 = vmatpush.xpose.msra.mxu0 0.0
        %5753 = vmatpush.xpose.msra.mxu0 0.0
        %5754 = vmatpush.xpose.msra.mxu0 0.0
        %5755 = vmatpush.xpose.msra.mxu0 0.0
        %5756 = vmatpush.xpose.msra.mxu0 0.0
        %5757 = vmatpush.xpose.msra.mxu0 0.0
        %5758 = vmatpush.xpose.msra.mxu0 0.0
        %5759 = vmatpush.xpose.msra.mxu0 0.0
        %5760 = vmatpush.xpose.msra.mxu0 0.0
        %5761 = vmatpush.xpose.msra.mxu0 0.0
        %5762 = vmatpush.xpose.msra.mxu0 %v5746
        %5763 = vmatpush.xpose.msra.mxu0 %v5744
        %5764 = vmatmul.f32.gmra.mxu0 %v5740
        %v5765 = vpop.f32.mrf.mxu0
        %v5766 = vadd.f32 %v900, %v5765
        %5767 = vmatmul.f32.gmra.mxu0 %v5742
        %v5768 = vpop.f32.mrf.mxu0
        %v5769 = vadd.f32 %v901, %v5768
        %5770 = vdwg.mxu0
        %v5771 = vsel %vm814, %v5641, 0
        %v5773 = vsel %vm814, %v5643, 0
        %v5775 = vsel %vm814, %v5655, 0
        %v5777 = vsel %vm814, %v5657, 0
        %5779 = vmatpush.xpose.msra.mxu0 0.0
        %5780 = vmatpush.xpose.msra.mxu0 0.0
        %5781 = vmatpush.xpose.msra.mxu0 0.0
        %5782 = vmatpush.xpose.msra.mxu0 0.0
        %5783 = vmatpush.xpose.msra.mxu0 0.0
        %5784 = vmatpush.xpose.msra.mxu0 0.0
        %5785 = vmatpush.xpose.msra.mxu0 0.0
        %5786 = vmatpush.xpose.msra.mxu0 0.0
        %5787 = vmatpush.xpose.msra.mxu0 0.0
        %5788 = vmatpush.xpose.msra.mxu0 0.0
        %5789 = vmatpush.xpose.msra.mxu0 0.0
        %5790 = vmatpush.xpose.msra.mxu0 0.0
        %5791 = vmatpush.xpose.msra.mxu0 0.0
        %5792 = vmatpush.xpose.msra.mxu0 0.0
        %5793 = vmatpush.xpose.msra.mxu0 %v5777
        %5794 = vmatpush.xpose.msra.mxu0 %v5775
        %5795 = vmatmul.f32.gmra.mxu0 %v5771
        %v5796 = vpop.f32.mrf.mxu0
        %v5797 = vadd.f32 %v902, %v5796
        %5798 = vmatmul.f32.gmra.mxu0 %v5773
        %v5799 = vpop.f32.mrf.mxu0
        %v5800 = vadd.f32 %v903, %v5799
        %5801 = vdwg.mxu0
        %v5802 = vsel %vm1287, %v5704, -inf
        %5803 = vmax.xlane.f32.xlu0 %v5802
        %v5804 = vpop.xlane.xlu0 %5803
        %v5805 = vsel %vm1287, %v5707, -inf
        %5806 = vmax.xlane.f32.xlu0 %v5805
        %v5807 = vpop.xlane.xlu0 %5806
        %v5808 = vsel %vm1287, %v5735, -inf
        %5809 = vmax.xlane.f32.xlu0 %v5808
        %v5810 = vpop.xlane.xlu0 %5809
        %v5811 = vsel %vm1287, %v5738, -inf
        %5812 = vmax.xlane.f32.xlu0 %v5811
        %v5813 = vpop.xlane.xlu0 %5812
        %v5814 = vsel %vm1287, %v5766, -inf
        %5815 = vmax.xlane.f32.xlu0 %v5814
        %v5816 = vpop.xlane.xlu0 %5815
        %v5817 = vsel %vm1287, %v5769, -inf
        %5818 = vmax.xlane.f32.xlu0 %v5817
        %v5819 = vpop.xlane.xlu0 %5818
        %v5820 = vsel %vm1287, %v5797, -inf
        %5821 = vmax.xlane.f32.xlu0 %v5820
        %v5822 = vpop.xlane.xlu0 %5821
        %v5823 = vsel %vm1287, %v5800, -inf
        %5824 = vmax.xlane.f32.xlu0 %v5823
        %v5825 = vpop.xlane.xlu0 %5824
        %v5826 = vsub.f32 %v5704, %v5804
        %v5827 = vsub.f32 %v5707, %v5807
        %v5828 = vsub.f32 %v5735, %v5810
        %v5829 = vsub.f32 %v5738, %v5813
        %v5830 = vsub.f32 %v5766, %v5816
        %v5831 = vsub.f32 %v5769, %v5819
        %v5832 = vsub.f32 %v5797, %v5822
        %v5833 = vsub.f32 %v5800, %v5825
        %v5834 = vmul.f32 %v5826, 1.442695
        %v5835 = vpow.pop %v5834
        %v5836 = vmul.f32 %v5827, 1.442695
        %v5837 = vpow.pop %v5836
        %v5838 = vmul.f32 %v5828, 1.442695
        %v5839 = vpow.pop %v5838
        %v5840 = vmul.f32 %v5829, 1.442695
        %v5841 = vpow.pop %v5840
        %v5842 = vmul.f32 %v5830, 1.442695
        %v5843 = vpow.pop %v5842
        %v5844 = vmul.f32 %v5831, 1.442695
        %v5845 = vpow.pop %v5844
        %v5846 = vmul.f32 %v5832, 1.442695
        %v5847 = vpow.pop %v5846
        %v5848 = vmul.f32 %v5833, 1.442695
        %v5849 = vpow.pop %v5848
        %v5850 = vsel %vm1287, %v5835, 0.0
        %5851 = vadd.xlane.f32.xlu0 %v5850
        %v5852 = vpop.xlane.xlu0 %5851
        %v5853 = vsel %vm1287, %v5837, 0.0
        %5854 = vadd.xlane.f32.xlu0 %v5853
        %v5855 = vpop.xlane.xlu0 %5854
        %v5856 = vsel %vm1287, %v5839, 0.0
        %5857 = vadd.xlane.f32.xlu0 %v5856
        %v5858 = vpop.xlane.xlu0 %5857
        %v5859 = vsel %vm1287, %v5841, 0.0
        %5860 = vadd.xlane.f32.xlu0 %v5859
        %v5861 = vpop.xlane.xlu0 %5860
        %v5862 = vsel %vm1287, %v5843, 0.0
        %5863 = vadd.xlane.f32.xlu0 %v5862
        %v5864 = vpop.xlane.xlu0 %5863
        %v5865 = vsel %vm1287, %v5845, 0.0
        %5866 = vadd.xlane.f32.xlu0 %v5865
        %v5867 = vpop.xlane.xlu0 %5866
        %v5868 = vsel %vm1287, %v5847, 0.0
        %5869 = vadd.xlane.f32.xlu0 %v5868
        %v5870 = vpop.xlane.xlu0 %5869
        %v5871 = vsel %vm1287, %v5849, 0.0
        %5872 = vadd.xlane.f32.xlu0 %v5871
        %v5873 = vpop.xlane.xlu0 %5872
        %v5874 = vrcp.pop %v5852
        %v5875 = vrcp.pop %v5855
        %v5876 = vrcp.pop %v5858
        %v5877 = vrcp.pop %v5861
        %v5878 = vrcp.pop %v5864
        %v5879 = vrcp.pop %v5867
        %v5880 = vrcp.pop %v5870
        %v5881 = vrcp.pop %v5873
        %v5882 = vmul.f32 %v5835, %v5874
        %v5883 = vmul.f32 %v5837, %v5875
        %v5884 = vmul.f32 %v5839, %v5876
        %v5885 = vmul.f32 %v5841, %v5877
        %v5886 = vmul.f32 %v5843, %v5878
        %v5887 = vmul.f32 %v5845, %v5879
        %v5888 = vmul.f32 %v5847, %v5880
        %v5889 = vmul.f32 %v5849, %v5881
        %v5890 = vpack.c.bf16 %v5882, %v5882
        %v5891 = vpack.c.bf16 %v5883, %v5883
        %v5892 = vpack.c.bf16 %v5884, %v5884
        %v5893 = vpack.c.bf16 %v5885, %v5885
        %v5894 = vpack.c.bf16 %v5886, %v5886
        %v5895 = vpack.c.bf16 %v5887, %v5887
        %v5896 = vpack.c.bf16 %v5888, %v5888
        %v5897 = vpack.c.bf16 %v5889, %v5889
        %v5898 = vpack.c.bf16 %v5626, %v5626
        %v5899 = vpack.c.bf16 %v5628, %v5628
        %v5900 = vpack.c.bf16 %v5661, %v5661
        %v5901 = vpack.c.bf16 %v5663, %v5663
        %v5902 = vpack.c.bf16 %v5667, %v5667
        %v5903 = vpack.c.bf16 %v5669, %v5669
        %v5904 = vpack.c.bf16 %v5673, %v5673
        %v5905 = vpack.c.bf16 %v5675, %v5675
        %v5908 = vunpack.c.l.b16 %v5890
        %v5909 = vunpack.c.l.b16 %v5891
        %v5910 = vpack.c.b16 %v5909, %v5908
        %v5913 = vunpack.c.l.b16 %v5898
        %v5914 = vunpack.c.l.b16 %v5899
        %v5915 = vpack.c.b16 %v5914, %v5913
        %v5918 = vsel %vm1287, %v5910, 0
        %5920 = vmatpush.bf16.msra.mxu0 0
        %5921 = vmatpush.bf16.msra.mxu0 0
        %5922 = vmatpush.bf16.msra.mxu0 0
        %5923 = vmatpush.bf16.msra.mxu0 0
        %5924 = vmatpush.bf16.msra.mxu0 0
        %5925 = vmatpush.bf16.msra.mxu0 0
        %5926 = vmatpush.bf16.msra.mxu0 0
        %5927 = vmatpush.bf16.msra.mxu0 %v5915
        %5928 = vmatmul.bf16.gmra.mxu0 %v5918
        %v5929 = vpop.f32.mrf.mxu0
        %v5930 = vadd.f32 0.0, %v5929
        %v5931 = vpop.f32.mrf.mxu0
        %v5932 = vadd.f32 0.0, %v5931
        %5933 = vdwg.mxu0
        %v5936 = vunpack.c.l.b16 %v5892
        %v5937 = vunpack.c.l.b16 %v5893
        %v5938 = vpack.c.b16 %v5937, %v5936
        %v5941 = vunpack.c.l.b16 %v5900
        %v5942 = vunpack.c.l.b16 %v5901
        %v5943 = vpack.c.b16 %v5942, %v5941
        %v5946 = vsel %vm1287, %v5938, 0
        %5948 = vmatpush.bf16.msra.mxu0 0
        %5949 = vmatpush.bf16.msra.mxu0 0
        %5950 = vmatpush.bf16.msra.mxu0 0
        %5951 = vmatpush.bf16.msra.mxu0 0
        %5952 = vmatpush.bf16.msra.mxu0 0
        %5953 = vmatpush.bf16.msra.mxu0 0
        %5954 = vmatpush.bf16.msra.mxu0 0
        %5955 = vmatpush.bf16.msra.mxu0 %v5943
        %5956 = vmatmul.bf16.gmra.mxu0 %v5946
        %v5957 = vpop.f32.mrf.mxu0
        %v5958 = vadd.f32 0.0, %v5957
        %v5959 = vpop.f32.mrf.mxu0
        %v5960 = vadd.f32 0.0, %v5959
        %5961 = vdwg.mxu0
        %v5964 = vunpack.c.l.b16 %v5894
        %v5965 = vunpack.c.l.b16 %v5895
        %v5966 = vpack.c.b16 %v5965, %v5964
        %v5969 = vunpack.c.l.b16 %v5902
        %v5970 = vunpack.c.l.b16 %v5903
        %v5971 = vpack.c.b16 %v5970, %v5969
        %v5974 = vsel %vm1287, %v5966, 0
        %5976 = vmatpush.bf16.msra.mxu0 0
        %5977 = vmatpush.bf16.msra.mxu0 0
        %5978 = vmatpush.bf16.msra.mxu0 0
        %5979 = vmatpush.bf16.msra.mxu0 0
        %5980 = vmatpush.bf16.msra.mxu0 0
        %5981 = vmatpush.bf16.msra.mxu0 0
        %5982 = vmatpush.bf16.msra.mxu0 0
        %5983 = vmatpush.bf16.msra.mxu0 %v5971
        %5984 = vmatmul.bf16.gmra.mxu0 %v5974
        %v5985 = vpop.f32.mrf.mxu0
        %v5986 = vadd.f32 0.0, %v5985
        %v5987 = vpop.f32.mrf.mxu0
        %v5988 = vadd.f32 0.0, %v5987
        %5989 = vdwg.mxu0
        %v5992 = vunpack.c.l.b16 %v5896
        %v5993 = vunpack.c.l.b16 %v5897
        %v5994 = vpack.c.b16 %v5993, %v5992
        %v5997 = vunpack.c.l.b16 %v5904
        %v5998 = vunpack.c.l.b16 %v5905
        %v5999 = vpack.c.b16 %v5998, %v5997
        %v6002 = vsel %vm1287, %v5994, 0
        %6004 = vmatpush.bf16.msra.mxu0 0
        %6005 = vmatpush.bf16.msra.mxu0 0
        %6006 = vmatpush.bf16.msra.mxu0 0
        %6007 = vmatpush.bf16.msra.mxu0 0
        %6008 = vmatpush.bf16.msra.mxu0 0
        %6009 = vmatpush.bf16.msra.mxu0 0
        %6010 = vmatpush.bf16.msra.mxu0 0
        %6011 = vmatpush.bf16.msra.mxu0 %v5999
        %6012 = vmatmul.bf16.gmra.mxu0 %v6002
        %v6013 = vpop.f32.mrf.mxu0
        %v6014 = vadd.f32 0.0, %v6013
        %v6015 = vpop.f32.mrf.mxu0
        %v6016 = vadd.f32 0.0, %v6015
        %6017 = vdwg.mxu0
        %6020 = vrot.lane.b32.xlu0 %v5958, 32
        %v6021 = vpop.permute.xlu0 %6020
        %6022 = vrot.lane.b32.xlu0 %v5960, 32
        %v6023 = vpop.permute.xlu0 %6022
        %6028 = vrot.lane.b32.xlu0 %v5986, 64
        %v6029 = vpop.permute.xlu0 %6028
        %6030 = vrot.lane.b32.xlu0 %v5988, 64
        %v6031 = vpop.permute.xlu0 %6030
        %6036 = vrot.lane.b32.xlu0 %v6014, 96
        %v6037 = vpop.permute.xlu0 %6036
        %6038 = vrot.lane.b32.xlu0 %v6016, 96
        %v6039 = vpop.permute.xlu0 %6038
        %v6042 = vsel %vm814, %v5930, %v6021
        %v6043 = vsel %vm814, %v5932, %v6023
        %v6044 = vsel %vm862, %v6042, %v6029
        %v6045 = vsel %vm862, %v6043, %v6031
        %v6046 = vsel %vm1532, %v6044, %v6037
        %v6047 = vsel %vm1532, %v6045, %v6039
        %v6048 = vpack.c.bf16 %v6047, %v6046
        %s6049 = scalar_lea.vmem %s9, 256
        %v6050 = vld [vmem:[%s6049] sm:$0xf]
        %v6051 = vld [vmem:[%s6049 + $0x4] sm:$0xf]
        %v6052 = vld [vmem:[%s6049 + $0x8] sm:$0xf]
        %v6053 = vld [vmem:[%s6049 + $0xc] sm:$0xf]
        %v6054 = vld [vmem:[%s6049 + $0x10] sm:$0xf]
        %v6055 = vld [vmem:[%s6049 + $0x14] sm:$0xf]
        %v6056 = vld [vmem:[%s6049 + $0x18] sm:$0xf]
        %v6057 = vld [vmem:[%s6049 + $0x1c] sm:$0xf]
        %v6058 = vld [vmem:[%s6049 + $0x20] sm:$0xf]
        %v6059 = vld [vmem:[%s6049 + $0x24] sm:$0xf]
        %v6060 = vld [vmem:[%s6049 + $0x28] sm:$0xf]
        %v6061 = vld [vmem:[%s6049 + $0x2c] sm:$0xf]
        %v6062 = vld [vmem:[%s6049 + $0x30] sm:$0xf]
        %v6063 = vld [vmem:[%s6049 + $0x34] sm:$0xf]
        %v6064 = vld [vmem:[%s6049 + $0x38] sm:$0xf]
        %v6065 = vld [vmem:[%s6049 + $0x3c] sm:$0xf]
        %s6066 = scalar_lea.vmem %s10, 4
        %v6067 = vld [vmem:[%s6066] sm:$0x1]
        %v6069 = vperm.slane %v6067, 0
        %v6087 = vunpack.c.l.b16 %v6050
        %v6088 = vunpack.c.l.b16 %v6051
        %v6089 = vunpack.c.l.b16 %v6052
        %v6090 = vunpack.c.l.b16 %v6053
        %v6091 = vunpack.c.l.b16 %v6054
        %v6092 = vunpack.c.l.b16 %v6055
        %v6093 = vunpack.c.l.b16 %v6056
        %v6094 = vunpack.c.l.b16 %v6057
        %v6095 = vunpack.c.l.b16 %v6058
        %v6096 = vunpack.c.l.b16 %v6059
        %v6097 = vunpack.c.l.b16 %v6060
        %v6098 = vunpack.c.l.b16 %v6061
        %v6099 = vunpack.c.l.b16 %v6062
        %v6100 = vunpack.c.l.b16 %v6063
        %v6101 = vunpack.c.l.b16 %v6064
        %v6102 = vunpack.c.l.b16 %v6065
        %v6103 = vpack.c.b16 %v6088, %v6087
        %v6104 = vpack.c.b16 %v6090, %v6089
        %v6105 = vpack.c.b16 %v6092, %v6091
        %v6106 = vpack.c.b16 %v6094, %v6093
        %v6107 = vpack.c.b16 %v6096, %v6095
        %v6108 = vpack.c.b16 %v6098, %v6097
        %v6109 = vpack.c.b16 %v6100, %v6099
        %v6110 = vpack.c.b16 %v6102, %v6101
        %6119 = vmatpush.bf16.msra.mxu0 %v6110
        %6120 = vmatpush.bf16.msra.mxu0 %v6109
        %6121 = vmatpush.bf16.msra.mxu0 %v6108
        %6122 = vmatpush.bf16.msra.mxu0 %v6107
        %6123 = vmatpush.bf16.msra.mxu0 %v6106
        %6124 = vmatpush.bf16.msra.mxu0 %v6105
        %6125 = vmatpush.bf16.msra.mxu0 %v6104
        %6126 = vmatpush.bf16.msra.mxu0 %v6103
        %6127 = vmatmul.bf16.gmra.mxu0 %v6048
        %v6128 = vpop.f32.mrf.mxu0
        %v6129 = vadd.f32 %v6069, %v6128
        %v6130 = vpop.f32.mrf.mxu0
        %v6131 = vadd.f32 %v6069, %v6130
        %6132 = vdwg.mxu0
        %v6133 = vadd.f32 %v5415, %v6129
        %v6134 = vadd.f32 %v5416, %v6131
        %s6135 = scalar_lea.vmem %s11, 4
        %v6136 = vld [vmem:[%s6135] sm:$0x1]
        %s6137 = scalar_lea.vmem %s12, 4
        %v6138 = vld [vmem:[%s6137] sm:$0x1]
        %6139 = vadd.xlane.f32.xlu0 %v6133
        %v6140 = vpop.xlane.xlu0 %6139
        %6141 = vadd.xlane.f32.xlu0 %v6134
        %v6142 = vpop.xlane.xlu0 %6141
        %v6143 = vmul.f32 %v6140, %v1632
        %v6144 = vmul.f32 %v6142, %v1632
        %v6145 = vsub.f32 %v6133, %v6143
        %v6146 = vsub.f32 %v6134, %v6144
        %v6147 = vmul.f32 %v6145, %v6145
        %v6148 = vmul.f32 %v6146, %v6146
        %6149 = vadd.xlane.f32.xlu0 %v6147
        %v6150 = vpop.xlane.xlu0 %6149
        %6151 = vadd.xlane.f32.xlu0 %v6148
        %v6152 = vpop.xlane.xlu0 %6151
        %v6153 = vmul.f32 %v6150, %v1632
        %v6154 = vmul.f32 %v6152, %v1632
        %v6155 = vadd.f32 %v6153, 1e-05
        %v6156 = vadd.f32 %v6154, 1e-05
        %v6157 = vrsqrt.pop %v6155
        %v6158 = vmul.f32 %v6157, %v6155
        %v6159 = vmul.f32 %v6158, %v6157
        %v6160 = vmul.f32 0.5, %v6159
        %v6161 = vsub.f32 1.5, %v6160
        %v6162 = vmul.f32 %v6157, %v6161
        %vm6163 = vweird.f32 %v6155
        %vm6164 = vweird.f32 %v6157
        %vm6165 = vmor %vm6163, %vm6164
        %v6166 = vsel %vm6165, %v6157, %v6162
        %v6167 = vrsqrt.pop %v6156
        %v6168 = vmul.f32 %v6167, %v6156
        %v6169 = vmul.f32 %v6168, %v6167
        %v6170 = vmul.f32 0.5, %v6169
        %v6171 = vsub.f32 1.5, %v6170
        %v6172 = vmul.f32 %v6167, %v6171
        %vm6173 = vweird.f32 %v6156
        %vm6174 = vweird.f32 %v6167
        %vm6175 = vmor %vm6173, %vm6174
        %v6176 = vsel %vm6175, %v6167, %v6172
        %v6177 = vmul.f32 %v6145, %v6166
        %v6178 = vmul.f32 %v6146, %v6176
        %v6180 = vperm.slane %v6136, 0
        %v6182 = vmul.f32 %v6177, %v6180
        %v6183 = vmul.f32 %v6178, %v6180
        %v6185 = vperm.slane %v6138, 0
        %v6187 = vadd.f32 %v6182, %v6185
        %v6188 = vadd.f32 %v6183, %v6185
        %v6189 = vpack.c.bf16 %v6188, %v6187
        %s6190 = scalar_lea.vmem [#allocation5], 512
        %v6191 = vld [vmem:[%s6190] sm:$0xff]
        %v6192 = vld [vmem:[%s6190 + $0x8] sm:$0xff]
        %v6193 = vld [vmem:[%s6190 + $0x10] sm:$0xff]
        %v6194 = vld [vmem:[%s6190 + $0x18] sm:$0xff]
        %v6195 = vld [vmem:[%s6190 + $0x20] sm:$0xff]
        %v6196 = vld [vmem:[%s6190 + $0x28] sm:$0xff]
        %v6197 = vld [vmem:[%s6190 + $0x30] sm:$0xff]
        %v6198 = vld [vmem:[%s6190 + $0x38] sm:$0xff]
        %v6199 = vld [vmem:[%s6190 + $0x40] sm:$0xff]
        %v6200 = vld [vmem:[%s6190 + $0x48] sm:$0xff]
        %v6201 = vld [vmem:[%s6190 + $0x50] sm:$0xff]
        %v6202 = vld [vmem:[%s6190 + $0x58] sm:$0xff]
        %v6203 = vld [vmem:[%s6190 + $0x60] sm:$0xff]
        %v6204 = vld [vmem:[%s6190 + $0x68] sm:$0xff]
        %v6205 = vld [vmem:[%s6190 + $0x70] sm:$0xff]
        %v6206 = vld [vmem:[%s6190 + $0x78] sm:$0xff]
        %s6207 = scalar_lea.vmem %s14, 8
        %v6208 = vld [vmem:[%s6207] sm:$0x3]
        %v6210 = vperm.slane %v6208, 0
        %v6211 = vperm.slane %v6208, 1
        %v6230 = vunpack.c.l.b16 %v6191
        %v6231 = vunpack.c.h.b16 %v6191
        %v6232 = vunpack.c.l.b16 %v6192
        %v6233 = vunpack.c.h.b16 %v6192
        %v6234 = vunpack.c.l.b16 %v6193
        %v6235 = vunpack.c.h.b16 %v6193
        %v6236 = vunpack.c.l.b16 %v6194
        %v6237 = vunpack.c.h.b16 %v6194
        %v6238 = vunpack.c.l.b16 %v6195
        %v6239 = vunpack.c.h.b16 %v6195
        %v6240 = vunpack.c.l.b16 %v6196
        %v6241 = vunpack.c.h.b16 %v6196
        %v6242 = vunpack.c.l.b16 %v6197
        %v6243 = vunpack.c.h.b16 %v6197
        %v6244 = vunpack.c.l.b16 %v6198
        %v6245 = vunpack.c.h.b16 %v6198
        %v6246 = vunpack.c.l.b16 %v6199
        %v6247 = vunpack.c.h.b16 %v6199
        %v6248 = vunpack.c.l.b16 %v6200
        %v6249 = vunpack.c.h.b16 %v6200
        %v6250 = vunpack.c.l.b16 %v6201
        %v6251 = vunpack.c.h.b16 %v6201
        %v6252 = vunpack.c.l.b16 %v6202
        %v6253 = vunpack.c.h.b16 %v6202
        %v6254 = vunpack.c.l.b16 %v6203
        %v6255 = vunpack.c.h.b16 %v6203
        %v6256 = vunpack.c.l.b16 %v6204
        %v6257 = vunpack.c.h.b16 %v6204
        %v6258 = vunpack.c.l.b16 %v6205
        %v6259 = vunpack.c.h.b16 %v6205
        %v6260 = vunpack.c.l.b16 %v6206
        %v6261 = vunpack.c.h.b16 %v6206
        %v6262 = vpack.c.b16 %v6232, %v6230
        %v6263 = vpack.c.b16 %v6233, %v6231
        %v6264 = vpack.c.b16 %v6236, %v6234
        %v6265 = vpack.c.b16 %v6237, %v6235
        %v6266 = vpack.c.b16 %v6240, %v6238
        %v6267 = vpack.c.b16 %v6241, %v6239
        %v6268 = vpack.c.b16 %v6244, %v6242
        %v6269 = vpack.c.b16 %v6245, %v6243
        %v6270 = vpack.c.b16 %v6248, %v6246
        %v6271 = vpack.c.b16 %v6249, %v6247
        %v6272 = vpack.c.b16 %v6252, %v6250
        %v6273 = vpack.c.b16 %v6253, %v6251
        %v6274 = vpack.c.b16 %v6256, %v6254
        %v6275 = vpack.c.b16 %v6257, %v6255
        %v6276 = vpack.c.b16 %v6260, %v6258
        %v6277 = vpack.c.b16 %v6261, %v6259
        %6294 = vmatpush.bf16.msra.mxu0 %v6276
        %6295 = vmatpush.bf16.msra.mxu0 %v6274
        %6296 = vmatpush.bf16.msra.mxu0 %v6272
        %6297 = vmatpush.bf16.msra.mxu0 %v6270
        %6298 = vmatpush.bf16.msra.mxu0 %v6268
        %6299 = vmatpush.bf16.msra.mxu0 %v6266
        %6300 = vmatpush.bf16.msra.mxu0 %v6264
        %6301 = vmatpush.bf16.msra.mxu0 %v6262
        %6302 = vmatmul.bf16.gmra.mxu0 %v6189
        %v6303 = vpop.f32.mrf.mxu0
        %v6304 = vadd.f32 %v6210, %v6303
        %v6305 = vpop.f32.mrf.mxu0
        %v6306 = vadd.f32 %v6210, %v6305
        %6307 = vdwg.mxu0
        %6308 = vmatpush.bf16.msra.mxu0 %v6277
        %6309 = vmatpush.bf16.msra.mxu0 %v6275
        %6310 = vmatpush.bf16.msra.mxu0 %v6273
        %6311 = vmatpush.bf16.msra.mxu0 %v6271
        %6312 = vmatpush.bf16.msra.mxu0 %v6269
        %6313 = vmatpush.bf16.msra.mxu0 %v6267
        %6314 = vmatpush.bf16.msra.mxu0 %v6265
        %6315 = vmatpush.bf16.msra.mxu0 %v6263
        %6316 = vmatmul.bf16.gmra.mxu0 %v6189
        %v6317 = vpop.f32.mrf.mxu0
        %v6318 = vadd.f32 %v6211, %v6317
        %v6319 = vpop.f32.mrf.mxu0
        %v6320 = vadd.f32 %v6211, %v6319
        %6321 = vdwg.mxu0
        %v6322 = vmax.f32 %v6304, 0.0
        %v6323 = vmax.f32 %v6318, 0.0
        %v6324 = vmax.f32 %v6306, 0.0
        %v6325 = vmax.f32 %v6320, 0.0
        %v6326 = vpack.c.bf16 %v6324, %v6322
        %v6327 = vpack.c.bf16 %v6325, %v6323
        %s6328 = scalar_lea.vmem [#allocation7], 512
        %v6329 = vld [vmem:[%s6328] sm:$0xf]
        %v6330 = vld [vmem:[%s6328 + $0x4] sm:$0xf]
        %v6331 = vld [vmem:[%s6328 + $0x8] sm:$0xf]
        %v6332 = vld [vmem:[%s6328 + $0xc] sm:$0xf]
        %v6333 = vld [vmem:[%s6328 + $0x10] sm:$0xf]
        %v6334 = vld [vmem:[%s6328 + $0x14] sm:$0xf]
        %v6335 = vld [vmem:[%s6328 + $0x18] sm:$0xf]
        %v6336 = vld [vmem:[%s6328 + $0x1c] sm:$0xf]
        %v6337 = vld [vmem:[%s6328 + $0x20] sm:$0xf]
        %v6338 = vld [vmem:[%s6328 + $0x24] sm:$0xf]
        %v6339 = vld [vmem:[%s6328 + $0x28] sm:$0xf]
        %v6340 = vld [vmem:[%s6328 + $0x2c] sm:$0xf]
        %v6341 = vld [vmem:[%s6328 + $0x30] sm:$0xf]
        %v6342 = vld [vmem:[%s6328 + $0x34] sm:$0xf]
        %v6343 = vld [vmem:[%s6328 + $0x38] sm:$0xf]
        %v6344 = vld [vmem:[%s6328 + $0x3c] sm:$0xf]
        %v6345 = vld [vmem:[%s6328 + $0x40] sm:$0xf]
        %v6346 = vld [vmem:[%s6328 + $0x44] sm:$0xf]
        %v6347 = vld [vmem:[%s6328 + $0x48] sm:$0xf]
        %v6348 = vld [vmem:[%s6328 + $0x4c] sm:$0xf]
        %v6349 = vld [vmem:[%s6328 + $0x50] sm:$0xf]
        %v6350 = vld [vmem:[%s6328 + $0x54] sm:$0xf]
        %v6351 = vld [vmem:[%s6328 + $0x58] sm:$0xf]
        %v6352 = vld [vmem:[%s6328 + $0x5c] sm:$0xf]
        %v6353 = vld [vmem:[%s6328 + $0x60] sm:$0xf]
        %v6354 = vld [vmem:[%s6328 + $0x64] sm:$0xf]
        %v6355 = vld [vmem:[%s6328 + $0x68] sm:$0xf]
        %v6356 = vld [vmem:[%s6328 + $0x6c] sm:$0xf]
        %v6357 = vld [vmem:[%s6328 + $0x70] sm:$0xf]
        %v6358 = vld [vmem:[%s6328 + $0x74] sm:$0xf]
        %v6359 = vld [vmem:[%s6328 + $0x78] sm:$0xf]
        %v6360 = vld [vmem:[%s6328 + $0x7c] sm:$0xf]
        %s6361 = scalar_lea.vmem %s16, 4
        %v6362 = vld [vmem:[%s6361] sm:$0x1]
        %v6364 = vperm.slane %v6362, 0
        %v6398 = vunpack.c.l.b16 %v6329
        %v6399 = vunpack.c.l.b16 %v6330
        %v6400 = vunpack.c.l.b16 %v6331
        %v6401 = vunpack.c.l.b16 %v6332
        %v6402 = vunpack.c.l.b16 %v6333
        %v6403 = vunpack.c.l.b16 %v6334
        %v6404 = vunpack.c.l.b16 %v6335
        %v6405 = vunpack.c.l.b16 %v6336
        %v6406 = vunpack.c.l.b16 %v6337
        %v6407 = vunpack.c.l.b16 %v6338
        %v6408 = vunpack.c.l.b16 %v6339
        %v6409 = vunpack.c.l.b16 %v6340
        %v6410 = vunpack.c.l.b16 %v6341
        %v6411 = vunpack.c.l.b16 %v6342
        %v6412 = vunpack.c.l.b16 %v6343
        %v6413 = vunpack.c.l.b16 %v6344
        %v6414 = vunpack.c.l.b16 %v6345
        %v6415 = vunpack.c.l.b16 %v6346
        %v6416 = vunpack.c.l.b16 %v6347
        %v6417 = vunpack.c.l.b16 %v6348
        %v6418 = vunpack.c.l.b16 %v6349
        %v6419 = vunpack.c.l.b16 %v6350
        %v6420 = vunpack.c.l.b16 %v6351
        %v6421 = vunpack.c.l.b16 %v6352
        %v6422 = vunpack.c.l.b16 %v6353
        %v6423 = vunpack.c.l.b16 %v6354
        %v6424 = vunpack.c.l.b16 %v6355
        %v6425 = vunpack.c.l.b16 %v6356
        %v6426 = vunpack.c.l.b16 %v6357
        %v6427 = vunpack.c.l.b16 %v6358
        %v6428 = vunpack.c.l.b16 %v6359
        %v6429 = vunpack.c.l.b16 %v6360
        %v6430 = vpack.c.b16 %v6399, %v6398
        %v6431 = vpack.c.b16 %v6401, %v6400
        %v6432 = vpack.c.b16 %v6403, %v6402
        %v6433 = vpack.c.b16 %v6405, %v6404
        %v6434 = vpack.c.b16 %v6407, %v6406
        %v6435 = vpack.c.b16 %v6409, %v6408
        %v6436 = vpack.c.b16 %v6411, %v6410
        %v6437 = vpack.c.b16 %v6413, %v6412
        %v6438 = vpack.c.b16 %v6415, %v6414
        %v6439 = vpack.c.b16 %v6417, %v6416
        %v6440 = vpack.c.b16 %v6419, %v6418
        %v6441 = vpack.c.b16 %v6421, %v6420
        %v6442 = vpack.c.b16 %v6423, %v6422
        %v6443 = vpack.c.b16 %v6425, %v6424
        %v6444 = vpack.c.b16 %v6427, %v6426
        %v6445 = vpack.c.b16 %v6429, %v6428
        %6462 = vmatpush.bf16.msra.mxu0 %v6437
        %6463 = vmatpush.bf16.msra.mxu0 %v6436
        %6464 = vmatpush.bf16.msra.mxu0 %v6435
        %6465 = vmatpush.bf16.msra.mxu0 %v6434
        %6466 = vmatpush.bf16.msra.mxu0 %v6433
        %6467 = vmatpush.bf16.msra.mxu0 %v6432
        %6468 = vmatpush.bf16.msra.mxu0 %v6431
        %6469 = vmatpush.bf16.msra.mxu0 %v6430
        %6470 = vmatmul.bf16.gmra.mxu0 %v6326
        %v6471 = vpop.f32.mrf.mxu0
        %v6472 = vadd.f32 %v6364, %v6471
        %v6473 = vpop.f32.mrf.mxu0
        %v6474 = vadd.f32 %v6364, %v6473
        %6475 = vdwg.mxu0
        %6476 = vmatpush.bf16.msra.mxu0 %v6445
        %6477 = vmatpush.bf16.msra.mxu0 %v6444
        %6478 = vmatpush.bf16.msra.mxu0 %v6443
        %6479 = vmatpush.bf16.msra.mxu0 %v6442
        %6480 = vmatpush.bf16.msra.mxu0 %v6441
        %6481 = vmatpush.bf16.msra.mxu0 %v6440
        %6482 = vmatpush.bf16.msra.mxu0 %v6439
        %6483 = vmatpush.bf16.msra.mxu0 %v6438
        %6484 = vmatmul.bf16.gmra.mxu0 %v6327
        %v6485 = vpop.f32.mrf.mxu0
        %v6486 = vadd.f32 %v6472, %v6485
        %v6487 = vpop.f32.mrf.mxu0
        %v6488 = vadd.f32 %v6474, %v6487
        %6489 = vdwg.mxu0
        %v6490 = vadd.f32 %v6187, %v6486
        %v6491 = vadd.f32 %v6188, %v6488
        %s6492 = scalar_lea.vmem %s17, 4
        %v6493 = vld [vmem:[%s6492] sm:$0x1]
        %s6494 = scalar_lea.vmem %s18, 4
        %v6495 = vld [vmem:[%s6494] sm:$0x1]
        %6496 = vadd.xlane.f32.xlu0 %v6490
        %v6497 = vpop.xlane.xlu0 %6496
        %6498 = vadd.xlane.f32.xlu0 %v6491
        %v6499 = vpop.xlane.xlu0 %6498
        %v6500 = vmul.f32 %v6497, %v1632
        %v6501 = vmul.f32 %v6499, %v1632
        %v6502 = vsub.f32 %v6490, %v6500
        %v6503 = vsub.f32 %v6491, %v6501
        %v6504 = vmul.f32 %v6502, %v6502
        %v6505 = vmul.f32 %v6503, %v6503
        %6506 = vadd.xlane.f32.xlu0 %v6504
        %v6507 = vpop.xlane.xlu0 %6506
        %6508 = vadd.xlane.f32.xlu0 %v6505
        %v6509 = vpop.xlane.xlu0 %6508
        %v6510 = vmul.f32 %v6507, %v1632
        %v6511 = vmul.f32 %v6509, %v1632
        %v6512 = vadd.f32 %v6510, 1e-05
        %v6513 = vadd.f32 %v6511, 1e-05
        %v6514 = vrsqrt.pop %v6512
        %v6515 = vmul.f32 %v6514, %v6512
        %v6516 = vmul.f32 %v6515, %v6514
        %v6517 = vmul.f32 0.5, %v6516
        %v6518 = vsub.f32 1.5, %v6517
        %v6519 = vmul.f32 %v6514, %v6518
        %vm6520 = vweird.f32 %v6512
        %vm6521 = vweird.f32 %v6514
        %vm6522 = vmor %vm6520, %vm6521
        %v6523 = vsel %vm6522, %v6514, %v6519
        %v6524 = vrsqrt.pop %v6513
        %v6525 = vmul.f32 %v6524, %v6513
        %v6526 = vmul.f32 %v6525, %v6524
        %v6527 = vmul.f32 0.5, %v6526
        %v6528 = vsub.f32 1.5, %v6527
        %v6529 = vmul.f32 %v6524, %v6528
        %vm6530 = vweird.f32 %v6513
        %vm6531 = vweird.f32 %v6524
        %vm6532 = vmor %vm6530, %vm6531
        %v6533 = vsel %vm6532, %v6524, %v6529
        %v6534 = vmul.f32 %v6502, %v6523
        %v6535 = vmul.f32 %v6503, %v6533
        %v6537 = vperm.slane %v6493, 0
        %v6539 = vmul.f32 %v6534, %v6537
        %v6540 = vmul.f32 %v6535, %v6537
        %v6542 = vperm.slane %v6495, 0
        %v6544 = vadd.f32 %v6539, %v6542
        %v6545 = vadd.f32 %v6540, %v6542
        %v6546 = vpack.c.bf16 %v6545, %v6544
        %s6547 = scalar_lea.vmem [#allocation3], 960
        %v6548 = vld [vmem:[%s6547] sm:$0xff]
        %v6549 = vld [vmem:[%s6547 + $0x8] sm:$0xf]
        %v6550 = vld [vmem:[%s6547 + $0xc] sm:$0xff]
        %v6551 = vld [vmem:[%s6547 + $0x14] sm:$0xf]
        %v6552 = vld [vmem:[%s6547 + $0x18] sm:$0xff]
        %v6553 = vld [vmem:[%s6547 + $0x20] sm:$0xf]
        %v6554 = vld [vmem:[%s6547 + $0x24] sm:$0xff]
        %v6555 = vld [vmem:[%s6547 + $0x2c] sm:$0xf]
        %v6556 = vld [vmem:[%s6547 + $0x30] sm:$0xff]
        %v6557 = vld [vmem:[%s6547 + $0x38] sm:$0xf]
        %v6558 = vld [vmem:[%s6547 + $0x3c] sm:$0xff]
        %v6559 = vld [vmem:[%s6547 + $0x44] sm:$0xf]
        %v6560 = vld [vmem:[%s6547 + $0x48] sm:$0xff]
        %v6561 = vld [vmem:[%s6547 + $0x50] sm:$0xf]
        %v6562 = vld [vmem:[%s6547 + $0x54] sm:$0xff]
        %v6563 = vld [vmem:[%s6547 + $0x5c] sm:$0xf]
        %v6564 = vld [vmem:[%s6547 + $0x60] sm:$0xff]
        %v6565 = vld [vmem:[%s6547 + $0x68] sm:$0xf]
        %v6566 = vld [vmem:[%s6547 + $0x6c] sm:$0xff]
        %v6567 = vld [vmem:[%s6547 + $0x74] sm:$0xf]
        %v6568 = vld [vmem:[%s6547 + $0x78] sm:$0xff]
        %v6569 = vld [vmem:[%s6547 + $0x80] sm:$0xf]
        %v6570 = vld [vmem:[%s6547 + $0x84] sm:$0xff]
        %v6571 = vld [vmem:[%s6547 + $0x8c] sm:$0xf]
        %v6572 = vld [vmem:[%s6547 + $0x90] sm:$0xff]
        %v6573 = vld [vmem:[%s6547 + $0x98] sm:$0xf]
        %v6574 = vld [vmem:[%s6547 + $0x9c] sm:$0xff]
        %v6575 = vld [vmem:[%s6547 + $0xa4] sm:$0xf]
        %v6576 = vld [vmem:[%s6547 + $0xa8] sm:$0xff]
        %v6577 = vld [vmem:[%s6547 + $0xb0] sm:$0xf]
        %v6578 = vld [vmem:[%s6547 + $0xb4] sm:$0xff]
        %v6579 = vld [vmem:[%s6547 + $0xbc] sm:$0xf]
        %s6580 = scalar_lea.vmem %s8, 15
        %v6581 = vld [vmem:[%s6580] sm:$0x7]
        %v6583 = vperm.slane %v6581, 0
        %v6584 = vperm.slane %v6581, 1
        %v6585 = vperm.slane %v6581, 2
        %v6621 = vunpack.c.l.b16 %v6548
        %v6622 = vunpack.c.h.b16 %v6548
        %v6623 = vunpack.c.l.b16 %v6549
        %v6624 = vunpack.c.l.b16 %v6550
        %v6625 = vunpack.c.h.b16 %v6550
        %v6626 = vunpack.c.l.b16 %v6551
        %v6627 = vunpack.c.l.b16 %v6552
        %v6628 = vunpack.c.h.b16 %v6552
        %v6629 = vunpack.c.l.b16 %v6553
        %v6630 = vunpack.c.l.b16 %v6554
        %v6631 = vunpack.c.h.b16 %v6554
        %v6632 = vunpack.c.l.b16 %v6555
        %v6633 = vunpack.c.l.b16 %v6556
        %v6634 = vunpack.c.h.b16 %v6556
        %v6635 = vunpack.c.l.b16 %v6557
        %v6636 = vunpack.c.l.b16 %v6558
        %v6637 = vunpack.c.h.b16 %v6558
        %v6638 = vunpack.c.l.b16 %v6559
        %v6639 = vunpack.c.l.b16 %v6560
        %v6640 = vunpack.c.h.b16 %v6560
        %v6641 = vunpack.c.l.b16 %v6561
        %v6642 = vunpack.c.l.b16 %v6562
        %v6643 = vunpack.c.h.b16 %v6562
        %v6644 = vunpack.c.l.b16 %v6563
        %v6645 = vunpack.c.l.b16 %v6564
        %v6646 = vunpack.c.h.b16 %v6564
        %v6647 = vunpack.c.l.b16 %v6565
        %v6648 = vunpack.c.l.b16 %v6566
        %v6649 = vunpack.c.h.b16 %v6566
        %v6650 = vunpack.c.l.b16 %v6567
        %v6651 = vunpack.c.l.b16 %v6568
        %v6652 = vunpack.c.h.b16 %v6568
        %v6653 = vunpack.c.l.b16 %v6569
        %v6654 = vunpack.c.l.b16 %v6570
        %v6655 = vunpack.c.h.b16 %v6570
        %v6656 = vunpack.c.l.b16 %v6571
        %v6657 = vunpack.c.l.b16 %v6572
        %v6658 = vunpack.c.h.b16 %v6572
        %v6659 = vunpack.c.l.b16 %v6573
        %v6660 = vunpack.c.l.b16 %v6574
        %v6661 = vunpack.c.h.b16 %v6574
        %v6662 = vunpack.c.l.b16 %v6575
        %v6663 = vunpack.c.l.b16 %v6576
        %v6664 = vunpack.c.h.b16 %v6576
        %v6665 = vunpack.c.l.b16 %v6577
        %v6666 = vunpack.c.l.b16 %v6578
        %v6667 = vunpack.c.h.b16 %v6578
        %v6668 = vunpack.c.l.b16 %v6579
        %v6669 = vpack.c.b16 %v6624, %v6621
        %v6670 = vpack.c.b16 %v6625, %v6622
        %v6671 = vpack.c.b16 %v6626, %v6623
        %v6672 = vpack.c.b16 %v6630, %v6627
        %v6673 = vpack.c.b16 %v6631, %v6628
        %v6674 = vpack.c.b16 %v6632, %v6629
        %v6675 = vpack.c.b16 %v6636, %v6633
        %v6676 = vpack.c.b16 %v6637, %v6634
        %v6677 = vpack.c.b16 %v6638, %v6635
        %v6678 = vpack.c.b16 %v6642, %v6639
        %v6679 = vpack.c.b16 %v6643, %v6640
        %v6680 = vpack.c.b16 %v6644, %v6641
        %v6681 = vpack.c.b16 %v6648, %v6645
        %v6682 = vpack.c.b16 %v6649, %v6646
        %v6683 = vpack.c.b16 %v6650, %v6647
        %v6684 = vpack.c.b16 %v6654, %v6651
        %v6685 = vpack.c.b16 %v6655, %v6652
        %v6686 = vpack.c.b16 %v6656, %v6653
        %v6687 = vpack.c.b16 %v6660, %v6657
        %v6688 = vpack.c.b16 %v6661, %v6658
        %v6689 = vpack.c.b16 %v6662, %v6659
        %v6690 = vpack.c.b16 %v6666, %v6663
        %v6691 = vpack.c.b16 %v6667, %v6664
        %v6692 = vpack.c.b16 %v6668, %v6665
        %6717 = vmatpush.bf16.msra.mxu0 %v6690
        %6718 = vmatpush.bf16.msra.mxu0 %v6687
        %6719 = vmatpush.bf16.msra.mxu0 %v6684
        %6720 = vmatpush.bf16.msra.mxu0 %v6681
        %6721 = vmatpush.bf16.msra.mxu0 %v6678
        %6722 = vmatpush.bf16.msra.mxu0 %v6675
        %6723 = vmatpush.bf16.msra.mxu0 %v6672
        %6724 = vmatpush.bf16.msra.mxu0 %v6669
        %6725 = vmatmul.bf16.gmra.mxu0 %v6546
        %v6726 = vpop.f32.mrf.mxu0
        %v6727 = vadd.f32 %v6583, %v6726
        %v6728 = vpop.f32.mrf.mxu0
        %v6729 = vadd.f32 %v6583, %v6728
        %6730 = vdwg.mxu0
        %6731 = vmatpush.bf16.msra.mxu0 %v6691
        %6732 = vmatpush.bf16.msra.mxu0 %v6688
        %6733 = vmatpush.bf16.msra.mxu0 %v6685
        %6734 = vmatpush.bf16.msra.mxu0 %v6682
        %6735 = vmatpush.bf16.msra.mxu0 %v6679
        %6736 = vmatpush.bf16.msra.mxu0 %v6676
        %6737 = vmatpush.bf16.msra.mxu0 %v6673
        %6738 = vmatpush.bf16.msra.mxu0 %v6670
        %6739 = vmatmul.bf16.gmra.mxu0 %v6546
        %v6740 = vpop.f32.mrf.mxu0
        %v6741 = vadd.f32 %v6584, %v6740
        %v6742 = vpop.f32.mrf.mxu0
        %v6743 = vadd.f32 %v6584, %v6742
        %6744 = vdwg.mxu0
        %6745 = vmatpush.bf16.msra.mxu0 %v6692
        %6746 = vmatpush.bf16.msra.mxu0 %v6689
        %6747 = vmatpush.bf16.msra.mxu0 %v6686
        %6748 = vmatpush.bf16.msra.mxu0 %v6683
        %6749 = vmatpush.bf16.msra.mxu0 %v6680
        %6750 = vmatpush.bf16.msra.mxu0 %v6677
        %6751 = vmatpush.bf16.msra.mxu0 %v6674
        %6752 = vmatpush.bf16.msra.mxu0 %v6671
        %6753 = vmatmul.bf16.gmra.mxu0 %v6546
        %v6754 = vpop.f32.mrf.mxu0
        %v6755 = vadd.f32 %v6585, %v6754
        %v6756 = vpop.f32.mrf.mxu0
        %v6757 = vadd.f32 %v6585, %v6756
        %6758 = vdwg.mxu0
        %6761 = vrot.lane.b32.xlu0 %v6727, 96
        %v6762 = vpop.permute.xlu0 %6761
        %6763 = vrot.lane.b32.xlu0 %v6729, 96
        %v6764 = vpop.permute.xlu0 %6763
        %6765 = vrot.lane.b32.xlu0 %v6727, 64
        %v6766 = vpop.permute.xlu0 %6765
        %6767 = vrot.lane.b32.xlu0 %v6729, 64
        %v6768 = vpop.permute.xlu0 %6767
        %6769 = vrot.lane.b32.xlu0 %v6727, 32
        %v6770 = vpop.permute.xlu0 %6769
        %6771 = vrot.lane.b32.xlu0 %v6729, 32
        %v6772 = vpop.permute.xlu0 %6771
        %6775 = vrot.lane.b32.xlu0 %v6741, 96
        %v6776 = vpop.permute.xlu0 %6775
        %6777 = vrot.lane.b32.xlu0 %v6743, 96
        %v6778 = vpop.permute.xlu0 %6777
        %6779 = vrot.lane.b32.xlu0 %v6741, 64
        %v6780 = vpop.permute.xlu0 %6779
        %6781 = vrot.lane.b32.xlu0 %v6743, 64
        %v6782 = vpop.permute.xlu0 %6781
        %6783 = vrot.lane.b32.xlu0 %v6741, 32
        %v6784 = vpop.permute.xlu0 %6783
        %6785 = vrot.lane.b32.xlu0 %v6743, 32
        %v6786 = vpop.permute.xlu0 %6785
        %6789 = vrot.lane.b32.xlu0 %v6755, 96
        %v6790 = vpop.permute.xlu0 %6789
        %6791 = vrot.lane.b32.xlu0 %v6757, 96
        %v6792 = vpop.permute.xlu0 %6791
        %6795 = vrot.lane.b32.xlu0 %v6755, 64
        %v6796 = vpop.permute.xlu0 %6795
        %6797 = vrot.lane.b32.xlu0 %v6757, 64
        %v6798 = vpop.permute.xlu0 %6797
        %6801 = vrot.lane.b32.xlu0 %v6755, 32
        %v6802 = vpop.permute.xlu0 %6801
        %6803 = vrot.lane.b32.xlu0 %v6757, 32
        %v6804 = vpop.permute.xlu0 %6803
        %v6807 = vsel %vm814, %v6727, 0
        %v6809 = vsel %vm814, %v6729, 0
        %v6811 = vsel %vm814, %v6741, 0
        %v6813 = vsel %vm814, %v6743, 0
        %6815 = vmatpush.xpose.msra.mxu0 0.0
        %6816 = vmatpush.xpose.msra.mxu0 0.0
        %6817 = vmatpush.xpose.msra.mxu0 0.0
        %6818 = vmatpush.xpose.msra.mxu0 0.0
        %6819 = vmatpush.xpose.msra.mxu0 0.0
        %6820 = vmatpush.xpose.msra.mxu0 0.0
        %6821 = vmatpush.xpose.msra.mxu0 0.0
        %6822 = vmatpush.xpose.msra.mxu0 0.0
        %6823 = vmatpush.xpose.msra.mxu0 0.0
        %6824 = vmatpush.xpose.msra.mxu0 0.0
        %6825 = vmatpush.xpose.msra.mxu0 0.0
        %6826 = vmatpush.xpose.msra.mxu0 0.0
        %6827 = vmatpush.xpose.msra.mxu0 0.0
        %6828 = vmatpush.xpose.msra.mxu0 0.0
        %6829 = vmatpush.xpose.msra.mxu0 %v6813
        %6830 = vmatpush.xpose.msra.mxu0 %v6811
        %6831 = vmatmul.f32.gmra.mxu0 %v6807
        %v6832 = vpop.f32.mrf.mxu0
        %v6833 = vadd.f32 %v896, %v6832
        %6834 = vmatmul.f32.gmra.mxu0 %v6809
        %v6835 = vpop.f32.mrf.mxu0
        %v6836 = vadd.f32 %v897, %v6835
        %6837 = vdwg.mxu0
        %v6838 = vsel %vm814, %v6762, 0
        %v6840 = vsel %vm814, %v6764, 0
        %v6842 = vsel %vm814, %v6776, 0
        %v6844 = vsel %vm814, %v6778, 0
        %6846 = vmatpush.xpose.msra.mxu0 0.0
        %6847 = vmatpush.xpose.msra.mxu0 0.0
        %6848 = vmatpush.xpose.msra.mxu0 0.0
        %6849 = vmatpush.xpose.msra.mxu0 0.0
        %6850 = vmatpush.xpose.msra.mxu0 0.0
        %6851 = vmatpush.xpose.msra.mxu0 0.0
        %6852 = vmatpush.xpose.msra.mxu0 0.0
        %6853 = vmatpush.xpose.msra.mxu0 0.0
        %6854 = vmatpush.xpose.msra.mxu0 0.0
        %6855 = vmatpush.xpose.msra.mxu0 0.0
        %6856 = vmatpush.xpose.msra.mxu0 0.0
        %6857 = vmatpush.xpose.msra.mxu0 0.0
        %6858 = vmatpush.xpose.msra.mxu0 0.0
        %6859 = vmatpush.xpose.msra.mxu0 0.0
        %6860 = vmatpush.xpose.msra.mxu0 %v6844
        %6861 = vmatpush.xpose.msra.mxu0 %v6842
        %6862 = vmatmul.f32.gmra.mxu0 %v6838
        %v6863 = vpop.f32.mrf.mxu0
        %v6864 = vadd.f32 %v898, %v6863
        %6865 = vmatmul.f32.gmra.mxu0 %v6840
        %v6866 = vpop.f32.mrf.mxu0
        %v6867 = vadd.f32 %v899, %v6866
        %6868 = vdwg.mxu0
        %v6869 = vsel %vm814, %v6766, 0
        %v6871 = vsel %vm814, %v6768, 0
        %v6873 = vsel %vm814, %v6780, 0
        %v6875 = vsel %vm814, %v6782, 0
        %6877 = vmatpush.xpose.msra.mxu0 0.0
        %6878 = vmatpush.xpose.msra.mxu0 0.0
        %6879 = vmatpush.xpose.msra.mxu0 0.0
        %6880 = vmatpush.xpose.msra.mxu0 0.0
        %6881 = vmatpush.xpose.msra.mxu0 0.0
        %6882 = vmatpush.xpose.msra.mxu0 0.0
        %6883 = vmatpush.xpose.msra.mxu0 0.0
        %6884 = vmatpush.xpose.msra.mxu0 0.0
        %6885 = vmatpush.xpose.msra.mxu0 0.0
        %6886 = vmatpush.xpose.msra.mxu0 0.0
        %6887 = vmatpush.xpose.msra.mxu0 0.0
        %6888 = vmatpush.xpose.msra.mxu0 0.0
        %6889 = vmatpush.xpose.msra.mxu0 0.0
        %6890 = vmatpush.xpose.msra.mxu0 0.0
        %6891 = vmatpush.xpose.msra.mxu0 %v6875
        %6892 = vmatpush.xpose.msra.mxu0 %v6873
        %6893 = vmatmul.f32.gmra.mxu0 %v6869
        %v6894 = vpop.f32.mrf.mxu0
        %v6895 = vadd.f32 %v900, %v6894
        %6896 = vmatmul.f32.gmra.mxu0 %v6871
        %v6897 = vpop.f32.mrf.mxu0
        %v6898 = vadd.f32 %v901, %v6897
        %6899 = vdwg.mxu0
        %v6900 = vsel %vm814, %v6770, 0
        %v6902 = vsel %vm814, %v6772, 0
        %v6904 = vsel %vm814, %v6784, 0
        %v6906 = vsel %vm814, %v6786, 0
        %6908 = vmatpush.xpose.msra.mxu0 0.0
        %6909 = vmatpush.xpose.msra.mxu0 0.0
        %6910 = vmatpush.xpose.msra.mxu0 0.0
        %6911 = vmatpush.xpose.msra.mxu0 0.0
        %6912 = vmatpush.xpose.msra.mxu0 0.0
        %6913 = vmatpush.xpose.msra.mxu0 0.0
        %6914 = vmatpush.xpose.msra.mxu0 0.0
        %6915 = vmatpush.xpose.msra.mxu0 0.0
        %6916 = vmatpush.xpose.msra.mxu0 0.0
        %6917 = vmatpush.xpose.msra.mxu0 0.0
        %6918 = vmatpush.xpose.msra.mxu0 0.0
        %6919 = vmatpush.xpose.msra.mxu0 0.0
        %6920 = vmatpush.xpose.msra.mxu0 0.0
        %6921 = vmatpush.xpose.msra.mxu0 0.0
        %6922 = vmatpush.xpose.msra.mxu0 %v6906
        %6923 = vmatpush.xpose.msra.mxu0 %v6904
        %6924 = vmatmul.f32.gmra.mxu0 %v6900
        %v6925 = vpop.f32.mrf.mxu0
        %v6926 = vadd.f32 %v902, %v6925
        %6927 = vmatmul.f32.gmra.mxu0 %v6902
        %v6928 = vpop.f32.mrf.mxu0
        %v6929 = vadd.f32 %v903, %v6928
        %6930 = vdwg.mxu0
        %v6931 = vsel %vm1287, %v6833, -inf
        %6932 = vmax.xlane.f32.xlu0 %v6931
        %v6933 = vpop.xlane.xlu0 %6932
        %v6934 = vsel %vm1287, %v6836, -inf
        %6935 = vmax.xlane.f32.xlu0 %v6934
        %v6936 = vpop.xlane.xlu0 %6935
        %v6937 = vsel %vm1287, %v6864, -inf
        %6938 = vmax.xlane.f32.xlu0 %v6937
        %v6939 = vpop.xlane.xlu0 %6938
        %v6940 = vsel %vm1287, %v6867, -inf
        %6941 = vmax.xlane.f32.xlu0 %v6940
        %v6942 = vpop.xlane.xlu0 %6941
        %v6943 = vsel %vm1287, %v6895, -inf
        %6944 = vmax.xlane.f32.xlu0 %v6943
        %v6945 = vpop.xlane.xlu0 %6944
        %v6946 = vsel %vm1287, %v6898, -inf
        %6947 = vmax.xlane.f32.xlu0 %v6946
        %v6948 = vpop.xlane.xlu0 %6947
        %v6949 = vsel %vm1287, %v6926, -inf
        %6950 = vmax.xlane.f32.xlu0 %v6949
        %v6951 = vpop.xlane.xlu0 %6950
        %v6952 = vsel %vm1287, %v6929, -inf
        %6953 = vmax.xlane.f32.xlu0 %v6952
        %v6954 = vpop.xlane.xlu0 %6953
        %v6955 = vsub.f32 %v6833, %v6933
        %v6956 = vsub.f32 %v6836, %v6936
        %v6957 = vsub.f32 %v6864, %v6939
        %v6958 = vsub.f32 %v6867, %v6942
        %v6959 = vsub.f32 %v6895, %v6945
        %v6960 = vsub.f32 %v6898, %v6948
        %v6961 = vsub.f32 %v6926, %v6951
        %v6962 = vsub.f32 %v6929, %v6954
        %v6963 = vmul.f32 %v6955, 1.442695
        %v6964 = vpow.pop %v6963
        %v6965 = vmul.f32 %v6956, 1.442695
        %v6966 = vpow.pop %v6965
        %v6967 = vmul.f32 %v6957, 1.442695
        %v6968 = vpow.pop %v6967
        %v6969 = vmul.f32 %v6958, 1.442695
        %v6970 = vpow.pop %v6969
        %v6971 = vmul.f32 %v6959, 1.442695
        %v6972 = vpow.pop %v6971
        %v6973 = vmul.f32 %v6960, 1.442695
        %v6974 = vpow.pop %v6973
        %v6975 = vmul.f32 %v6961, 1.442695
        %v6976 = vpow.pop %v6975
        %v6977 = vmul.f32 %v6962, 1.442695
        %v6978 = vpow.pop %v6977
        %v6979 = vsel %vm1287, %v6964, 0.0
        %6980 = vadd.xlane.f32.xlu0 %v6979
        %v6981 = vpop.xlane.xlu0 %6980
        %v6982 = vsel %vm1287, %v6966, 0.0
        %6983 = vadd.xlane.f32.xlu0 %v6982
        %v6984 = vpop.xlane.xlu0 %6983
        %v6985 = vsel %vm1287, %v6968, 0.0
        %6986 = vadd.xlane.f32.xlu0 %v6985
        %v6987 = vpop.xlane.xlu0 %6986
        %v6988 = vsel %vm1287, %v6970, 0.0
        %6989 = vadd.xlane.f32.xlu0 %v6988
        %v6990 = vpop.xlane.xlu0 %6989
        %v6991 = vsel %vm1287, %v6972, 0.0
        %6992 = vadd.xlane.f32.xlu0 %v6991
        %v6993 = vpop.xlane.xlu0 %6992
        %v6994 = vsel %vm1287, %v6974, 0.0
        %6995 = vadd.xlane.f32.xlu0 %v6994
        %v6996 = vpop.xlane.xlu0 %6995
        %v6997 = vsel %vm1287, %v6976, 0.0
        %6998 = vadd.xlane.f32.xlu0 %v6997
        %v6999 = vpop.xlane.xlu0 %6998
        %v7000 = vsel %vm1287, %v6978, 0.0
        %7001 = vadd.xlane.f32.xlu0 %v7000
        %v7002 = vpop.xlane.xlu0 %7001
        %v7003 = vrcp.pop %v6981
        %v7004 = vrcp.pop %v6984
        %v7005 = vrcp.pop %v6987
        %v7006 = vrcp.pop %v6990
        %v7007 = vrcp.pop %v6993
        %v7008 = vrcp.pop %v6996
        %v7009 = vrcp.pop %v6999
        %v7010 = vrcp.pop %v7002
        %v7011 = vmul.f32 %v6964, %v7003
        %v7012 = vmul.f32 %v6966, %v7004
        %v7013 = vmul.f32 %v6968, %v7005
        %v7014 = vmul.f32 %v6970, %v7006
        %v7015 = vmul.f32 %v6972, %v7007
        %v7016 = vmul.f32 %v6974, %v7008
        %v7017 = vmul.f32 %v6976, %v7009
        %v7018 = vmul.f32 %v6978, %v7010
        %v7019 = vpack.c.bf16 %v7011, %v7011
        %v7020 = vpack.c.bf16 %v7012, %v7012
        %v7021 = vpack.c.bf16 %v7013, %v7013
        %v7022 = vpack.c.bf16 %v7014, %v7014
        %v7023 = vpack.c.bf16 %v7015, %v7015
        %v7024 = vpack.c.bf16 %v7016, %v7016
        %v7025 = vpack.c.bf16 %v7017, %v7017
        %v7026 = vpack.c.bf16 %v7018, %v7018
        %v7027 = vpack.c.bf16 %v6755, %v6755
        %v7028 = vpack.c.bf16 %v6757, %v6757
        %v7029 = vpack.c.bf16 %v6790, %v6790
        %v7030 = vpack.c.bf16 %v6792, %v6792
        %v7031 = vpack.c.bf16 %v6796, %v6796
        %v7032 = vpack.c.bf16 %v6798, %v6798
        %v7033 = vpack.c.bf16 %v6802, %v6802
        %v7034 = vpack.c.bf16 %v6804, %v6804
        %v7037 = vunpack.c.l.b16 %v7019
        %v7038 = vunpack.c.l.b16 %v7020
        %v7039 = vpack.c.b16 %v7038, %v7037
        %v7042 = vunpack.c.l.b16 %v7027
        %v7043 = vunpack.c.l.b16 %v7028
        %v7044 = vpack.c.b16 %v7043, %v7042
        %v7047 = vsel %vm1287, %v7039, 0
        %7049 = vmatpush.bf16.msra.mxu0 0
        %7050 = vmatpush.bf16.msra.mxu0 0
        %7051 = vmatpush.bf16.msra.mxu0 0
        %7052 = vmatpush.bf16.msra.mxu0 0
        %7053 = vmatpush.bf16.msra.mxu0 0
        %7054 = vmatpush.bf16.msra.mxu0 0
        %7055 = vmatpush.bf16.msra.mxu0 0
        %7056 = vmatpush.bf16.msra.mxu0 %v7044
        %7057 = vmatmul.bf16.gmra.mxu0 %v7047
        %v7058 = vpop.f32.mrf.mxu0
        %v7059 = vadd.f32 0.0, %v7058
        %v7060 = vpop.f32.mrf.mxu0
        %v7061 = vadd.f32 0.0, %v7060
        %7062 = vdwg.mxu0
        %v7065 = vunpack.c.l.b16 %v7021
        %v7066 = vunpack.c.l.b16 %v7022
        %v7067 = vpack.c.b16 %v7066, %v7065
        %v7070 = vunpack.c.l.b16 %v7029
        %v7071 = vunpack.c.l.b16 %v7030
        %v7072 = vpack.c.b16 %v7071, %v7070
        %v7075 = vsel %vm1287, %v7067, 0
        %7077 = vmatpush.bf16.msra.mxu0 0
        %7078 = vmatpush.bf16.msra.mxu0 0
        %7079 = vmatpush.bf16.msra.mxu0 0
        %7080 = vmatpush.bf16.msra.mxu0 0
        %7081 = vmatpush.bf16.msra.mxu0 0
        %7082 = vmatpush.bf16.msra.mxu0 0
        %7083 = vmatpush.bf16.msra.mxu0 0
        %7084 = vmatpush.bf16.msra.mxu0 %v7072
        %7085 = vmatmul.bf16.gmra.mxu0 %v7075
        %v7086 = vpop.f32.mrf.mxu0
        %v7087 = vadd.f32 0.0, %v7086
        %v7088 = vpop.f32.mrf.mxu0
        %v7089 = vadd.f32 0.0, %v7088
        %7090 = vdwg.mxu0
        %v7093 = vunpack.c.l.b16 %v7023
        %v7094 = vunpack.c.l.b16 %v7024
        %v7095 = vpack.c.b16 %v7094, %v7093
        %v7098 = vunpack.c.l.b16 %v7031
        %v7099 = vunpack.c.l.b16 %v7032
        %v7100 = vpack.c.b16 %v7099, %v7098
        %v7103 = vsel %vm1287, %v7095, 0
        %7105 = vmatpush.bf16.msra.mxu0 0
        %7106 = vmatpush.bf16.msra.mxu0 0
        %7107 = vmatpush.bf16.msra.mxu0 0
        %7108 = vmatpush.bf16.msra.mxu0 0
        %7109 = vmatpush.bf16.msra.mxu0 0
        %7110 = vmatpush.bf16.msra.mxu0 0
        %7111 = vmatpush.bf16.msra.mxu0 0
        %7112 = vmatpush.bf16.msra.mxu0 %v7100
        %7113 = vmatmul.bf16.gmra.mxu0 %v7103
        %v7114 = vpop.f32.mrf.mxu0
        %v7115 = vadd.f32 0.0, %v7114
        %v7116 = vpop.f32.mrf.mxu0
        %v7117 = vadd.f32 0.0, %v7116
        %7118 = vdwg.mxu0
        %v7121 = vunpack.c.l.b16 %v7025
        %v7122 = vunpack.c.l.b16 %v7026
        %v7123 = vpack.c.b16 %v7122, %v7121
        %v7126 = vunpack.c.l.b16 %v7033
        %v7127 = vunpack.c.l.b16 %v7034
        %v7128 = vpack.c.b16 %v7127, %v7126
        %v7131 = vsel %vm1287, %v7123, 0
        %7133 = vmatpush.bf16.msra.mxu0 0
        %7134 = vmatpush.bf16.msra.mxu0 0
        %7135 = vmatpush.bf16.msra.mxu0 0
        %7136 = vmatpush.bf16.msra.mxu0 0
        %7137 = vmatpush.bf16.msra.mxu0 0
        %7138 = vmatpush.bf16.msra.mxu0 0
        %7139 = vmatpush.bf16.msra.mxu0 0
        %7140 = vmatpush.bf16.msra.mxu0 %v7128
        %7141 = vmatmul.bf16.gmra.mxu0 %v7131
        %v7142 = vpop.f32.mrf.mxu0
        %v7143 = vadd.f32 0.0, %v7142
        %v7144 = vpop.f32.mrf.mxu0
        %v7145 = vadd.f32 0.0, %v7144
        %7146 = vdwg.mxu0
        %7149 = vrot.lane.b32.xlu0 %v7087, 32
        %v7150 = vpop.permute.xlu0 %7149
        %7151 = vrot.lane.b32.xlu0 %v7089, 32
        %v7152 = vpop.permute.xlu0 %7151
        %7157 = vrot.lane.b32.xlu0 %v7115, 64
        %v7158 = vpop.permute.xlu0 %7157
        %7159 = vrot.lane.b32.xlu0 %v7117, 64
        %v7160 = vpop.permute.xlu0 %7159
        %7165 = vrot.lane.b32.xlu0 %v7143, 96
        %v7166 = vpop.permute.xlu0 %7165
        %7167 = vrot.lane.b32.xlu0 %v7145, 96
        %v7168 = vpop.permute.xlu0 %7167
        %v7171 = vsel %vm814, %v7059, %v7150
        %v7172 = vsel %vm814, %v7061, %v7152
        %v7173 = vsel %vm862, %v7171, %v7158
        %v7174 = vsel %vm862, %v7172, %v7160
        %v7175 = vsel %vm1532, %v7173, %v7166
        %v7176 = vsel %vm1532, %v7174, %v7168
        %v7177 = vpack.c.bf16 %v7176, %v7175
        %s7178 = scalar_lea.vmem %s9, 320
        %v7179 = vld [vmem:[%s7178] sm:$0xf]
        %v7180 = vld [vmem:[%s7178 + $0x4] sm:$0xf]
        %v7181 = vld [vmem:[%s7178 + $0x8] sm:$0xf]
        %v7182 = vld [vmem:[%s7178 + $0xc] sm:$0xf]
        %v7183 = vld [vmem:[%s7178 + $0x10] sm:$0xf]
        %v7184 = vld [vmem:[%s7178 + $0x14] sm:$0xf]
        %v7185 = vld [vmem:[%s7178 + $0x18] sm:$0xf]
        %v7186 = vld [vmem:[%s7178 + $0x1c] sm:$0xf]
        %v7187 = vld [vmem:[%s7178 + $0x20] sm:$0xf]
        %v7188 = vld [vmem:[%s7178 + $0x24] sm:$0xf]
        %v7189 = vld [vmem:[%s7178 + $0x28] sm:$0xf]
        %v7190 = vld [vmem:[%s7178 + $0x2c] sm:$0xf]
        %v7191 = vld [vmem:[%s7178 + $0x30] sm:$0xf]
        %v7192 = vld [vmem:[%s7178 + $0x34] sm:$0xf]
        %v7193 = vld [vmem:[%s7178 + $0x38] sm:$0xf]
        %v7194 = vld [vmem:[%s7178 + $0x3c] sm:$0xf]
        %s7195 = scalar_lea.vmem %s10, 5
        %v7196 = vld [vmem:[%s7195] sm:$0x1]
        %v7198 = vperm.slane %v7196, 0
        %v7216 = vunpack.c.l.b16 %v7179
        %v7217 = vunpack.c.l.b16 %v7180
        %v7218 = vunpack.c.l.b16 %v7181
        %v7219 = vunpack.c.l.b16 %v7182
        %v7220 = vunpack.c.l.b16 %v7183
        %v7221 = vunpack.c.l.b16 %v7184
        %v7222 = vunpack.c.l.b16 %v7185
        %v7223 = vunpack.c.l.b16 %v7186
        %v7224 = vunpack.c.l.b16 %v7187
        %v7225 = vunpack.c.l.b16 %v7188
        %v7226 = vunpack.c.l.b16 %v7189
        %v7227 = vunpack.c.l.b16 %v7190
        %v7228 = vunpack.c.l.b16 %v7191
        %v7229 = vunpack.c.l.b16 %v7192
        %v7230 = vunpack.c.l.b16 %v7193
        %v7231 = vunpack.c.l.b16 %v7194
        %v7232 = vpack.c.b16 %v7217, %v7216
        %v7233 = vpack.c.b16 %v7219, %v7218
        %v7234 = vpack.c.b16 %v7221, %v7220
        %v7235 = vpack.c.b16 %v7223, %v7222
        %v7236 = vpack.c.b16 %v7225, %v7224
        %v7237 = vpack.c.b16 %v7227, %v7226
        %v7238 = vpack.c.b16 %v7229, %v7228
        %v7239 = vpack.c.b16 %v7231, %v7230
        %7248 = vmatpush.bf16.msra.mxu0 %v7239
        %7249 = vmatpush.bf16.msra.mxu0 %v7238
        %7250 = vmatpush.bf16.msra.mxu0 %v7237
        %7251 = vmatpush.bf16.msra.mxu0 %v7236
        %7252 = vmatpush.bf16.msra.mxu0 %v7235
        %7253 = vmatpush.bf16.msra.mxu0 %v7234
        %7254 = vmatpush.bf16.msra.mxu0 %v7233
        %7255 = vmatpush.bf16.msra.mxu0 %v7232
        %7256 = vmatmul.bf16.gmra.mxu0 %v7177
        %v7257 = vpop.f32.mrf.mxu0
        %v7258 = vadd.f32 %v7198, %v7257
        %v7259 = vpop.f32.mrf.mxu0
        %v7260 = vadd.f32 %v7198, %v7259
        %7261 = vdwg.mxu0
        %v7262 = vadd.f32 %v6544, %v7258
        %v7263 = vadd.f32 %v6545, %v7260
        %s7264 = scalar_lea.vmem %s11, 5
        %v7265 = vld [vmem:[%s7264] sm:$0x1]
        %s7266 = scalar_lea.vmem %s12, 5
        %v7267 = vld [vmem:[%s7266] sm:$0x1]
        %7268 = vadd.xlane.f32.xlu0 %v7262
        %v7269 = vpop.xlane.xlu0 %7268
        %7270 = vadd.xlane.f32.xlu0 %v7263
        %v7271 = vpop.xlane.xlu0 %7270
        %v7272 = vmul.f32 %v7269, %v1632
        %v7273 = vmul.f32 %v7271, %v1632
        %v7274 = vsub.f32 %v7262, %v7272
        %v7275 = vsub.f32 %v7263, %v7273
        %v7276 = vmul.f32 %v7274, %v7274
        %v7277 = vmul.f32 %v7275, %v7275
        %7278 = vadd.xlane.f32.xlu0 %v7276
        %v7279 = vpop.xlane.xlu0 %7278
        %7280 = vadd.xlane.f32.xlu0 %v7277
        %v7281 = vpop.xlane.xlu0 %7280
        %v7282 = vmul.f32 %v7279, %v1632
        %v7283 = vmul.f32 %v7281, %v1632
        %v7284 = vadd.f32 %v7282, 1e-05
        %v7285 = vadd.f32 %v7283, 1e-05
        %v7286 = vrsqrt.pop %v7284
        %v7287 = vmul.f32 %v7286, %v7284
        %v7288 = vmul.f32 %v7287, %v7286
        %v7289 = vmul.f32 0.5, %v7288
        %v7290 = vsub.f32 1.5, %v7289
        %v7291 = vmul.f32 %v7286, %v7290
        %vm7292 = vweird.f32 %v7284
        %vm7293 = vweird.f32 %v7286
        %vm7294 = vmor %vm7292, %vm7293
        %v7295 = vsel %vm7294, %v7286, %v7291
        %v7296 = vrsqrt.pop %v7285
        %v7297 = vmul.f32 %v7296, %v7285
        %v7298 = vmul.f32 %v7297, %v7296
        %v7299 = vmul.f32 0.5, %v7298
        %v7300 = vsub.f32 1.5, %v7299
        %v7301 = vmul.f32 %v7296, %v7300
        %vm7302 = vweird.f32 %v7285
        %vm7303 = vweird.f32 %v7296
        %vm7304 = vmor %vm7302, %vm7303
        %v7305 = vsel %vm7304, %v7296, %v7301
        %v7306 = vmul.f32 %v7274, %v7295
        %v7307 = vmul.f32 %v7275, %v7305
        %v7309 = vperm.slane %v7265, 0
        %v7311 = vmul.f32 %v7306, %v7309
        %v7312 = vmul.f32 %v7307, %v7309
        %v7314 = vperm.slane %v7267, 0
        %v7316 = vadd.f32 %v7311, %v7314
        %v7317 = vadd.f32 %v7312, %v7314
        %v7318 = vpack.c.bf16 %v7317, %v7316
        %s7319 = scalar_lea.vmem [#allocation5], 640
        %v7320 = vld [vmem:[%s7319] sm:$0xff]
        %v7321 = vld [vmem:[%s7319 + $0x8] sm:$0xff]
        %v7322 = vld [vmem:[%s7319 + $0x10] sm:$0xff]
        %v7323 = vld [vmem:[%s7319 + $0x18] sm:$0xff]
        %v7324 = vld [vmem:[%s7319 + $0x20] sm:$0xff]
        %v7325 = vld [vmem:[%s7319 + $0x28] sm:$0xff]
        %v7326 = vld [vmem:[%s7319 + $0x30] sm:$0xff]
        %v7327 = vld [vmem:[%s7319 + $0x38] sm:$0xff]
        %v7328 = vld [vmem:[%s7319 + $0x40] sm:$0xff]
        %v7329 = vld [vmem:[%s7319 + $0x48] sm:$0xff]
        %v7330 = vld [vmem:[%s7319 + $0x50] sm:$0xff]
        %v7331 = vld [vmem:[%s7319 + $0x58] sm:$0xff]
        %v7332 = vld [vmem:[%s7319 + $0x60] sm:$0xff]
        %v7333 = vld [vmem:[%s7319 + $0x68] sm:$0xff]
        %v7334 = vld [vmem:[%s7319 + $0x70] sm:$0xff]
        %v7335 = vld [vmem:[%s7319 + $0x78] sm:$0xff]
        %s7336 = scalar_lea.vmem %s14, 10
        %v7337 = vld [vmem:[%s7336] sm:$0x3]
        %v7339 = vperm.slane %v7337, 0
        %v7340 = vperm.slane %v7337, 1
        %v7359 = vunpack.c.l.b16 %v7320
        %v7360 = vunpack.c.h.b16 %v7320
        %v7361 = vunpack.c.l.b16 %v7321
        %v7362 = vunpack.c.h.b16 %v7321
        %v7363 = vunpack.c.l.b16 %v7322
        %v7364 = vunpack.c.h.b16 %v7322
        %v7365 = vunpack.c.l.b16 %v7323
        %v7366 = vunpack.c.h.b16 %v7323
        %v7367 = vunpack.c.l.b16 %v7324
        %v7368 = vunpack.c.h.b16 %v7324
        %v7369 = vunpack.c.l.b16 %v7325
        %v7370 = vunpack.c.h.b16 %v7325
        %v7371 = vunpack.c.l.b16 %v7326
        %v7372 = vunpack.c.h.b16 %v7326
        %v7373 = vunpack.c.l.b16 %v7327
        %v7374 = vunpack.c.h.b16 %v7327
        %v7375 = vunpack.c.l.b16 %v7328
        %v7376 = vunpack.c.h.b16 %v7328
        %v7377 = vunpack.c.l.b16 %v7329
        %v7378 = vunpack.c.h.b16 %v7329
        %v7379 = vunpack.c.l.b16 %v7330
        %v7380 = vunpack.c.h.b16 %v7330
        %v7381 = vunpack.c.l.b16 %v7331
        %v7382 = vunpack.c.h.b16 %v7331
        %v7383 = vunpack.c.l.b16 %v7332
        %v7384 = vunpack.c.h.b16 %v7332
        %v7385 = vunpack.c.l.b16 %v7333
        %v7386 = vunpack.c.h.b16 %v7333
        %v7387 = vunpack.c.l.b16 %v7334
        %v7388 = vunpack.c.h.b16 %v7334
        %v7389 = vunpack.c.l.b16 %v7335
        %v7390 = vunpack.c.h.b16 %v7335
        %v7391 = vpack.c.b16 %v7361, %v7359
        %v7392 = vpack.c.b16 %v7362, %v7360
        %v7393 = vpack.c.b16 %v7365, %v7363
        %v7394 = vpack.c.b16 %v7366, %v7364
        %v7395 = vpack.c.b16 %v7369, %v7367
        %v7396 = vpack.c.b16 %v7370, %v7368
        %v7397 = vpack.c.b16 %v7373, %v7371
        %v7398 = vpack.c.b16 %v7374, %v7372
        %v7399 = vpack.c.b16 %v7377, %v7375
        %v7400 = vpack.c.b16 %v7378, %v7376
        %v7401 = vpack.c.b16 %v7381, %v7379
        %v7402 = vpack.c.b16 %v7382, %v7380
        %v7403 = vpack.c.b16 %v7385, %v7383
        %v7404 = vpack.c.b16 %v7386, %v7384
        %v7405 = vpack.c.b16 %v7389, %v7387
        %v7406 = vpack.c.b16 %v7390, %v7388
        %7423 = vmatpush.bf16.msra.mxu0 %v7405
        %7424 = vmatpush.bf16.msra.mxu0 %v7403
        %7425 = vmatpush.bf16.msra.mxu0 %v7401
        %7426 = vmatpush.bf16.msra.mxu0 %v7399
        %7427 = vmatpush.bf16.msra.mxu0 %v7397
        %7428 = vmatpush.bf16.msra.mxu0 %v7395
        %7429 = vmatpush.bf16.msra.mxu0 %v7393
        %7430 = vmatpush.bf16.msra.mxu0 %v7391
        %7431 = vmatmul.bf16.gmra.mxu0 %v7318
        %v7432 = vpop.f32.mrf.mxu0
        %v7433 = vadd.f32 %v7339, %v7432
        %v7434 = vpop.f32.mrf.mxu0
        %v7435 = vadd.f32 %v7339, %v7434
        %7436 = vdwg.mxu0
        %7437 = vmatpush.bf16.msra.mxu0 %v7406
        %7438 = vmatpush.bf16.msra.mxu0 %v7404
        %7439 = vmatpush.bf16.msra.mxu0 %v7402
        %7440 = vmatpush.bf16.msra.mxu0 %v7400
        %7441 = vmatpush.bf16.msra.mxu0 %v7398
        %7442 = vmatpush.bf16.msra.mxu0 %v7396
        %7443 = vmatpush.bf16.msra.mxu0 %v7394
        %7444 = vmatpush.bf16.msra.mxu0 %v7392
        %7445 = vmatmul.bf16.gmra.mxu0 %v7318
        %v7446 = vpop.f32.mrf.mxu0
        %v7447 = vadd.f32 %v7340, %v7446
        %v7448 = vpop.f32.mrf.mxu0
        %v7449 = vadd.f32 %v7340, %v7448
        %7450 = vdwg.mxu0
        %v7451 = vmax.f32 %v7433, 0.0
        %v7452 = vmax.f32 %v7447, 0.0
        %v7453 = vmax.f32 %v7435, 0.0
        %v7454 = vmax.f32 %v7449, 0.0
        %v7455 = vpack.c.bf16 %v7453, %v7451
        %v7456 = vpack.c.bf16 %v7454, %v7452
        %s7457 = scalar_lea.vmem [#allocation7], 640
        %v7458 = vld [vmem:[%s7457] sm:$0xf]
        %v7459 = vld [vmem:[%s7457 + $0x4] sm:$0xf]
        %v7460 = vld [vmem:[%s7457 + $0x8] sm:$0xf]
        %v7461 = vld [vmem:[%s7457 + $0xc] sm:$0xf]
        %v7462 = vld [vmem:[%s7457 + $0x10] sm:$0xf]
        %v7463 = vld [vmem:[%s7457 + $0x14] sm:$0xf]
        %v7464 = vld [vmem:[%s7457 + $0x18] sm:$0xf]
        %v7465 = vld [vmem:[%s7457 + $0x1c] sm:$0xf]
        %v7466 = vld [vmem:[%s7457 + $0x20] sm:$0xf]
        %v7467 = vld [vmem:[%s7457 + $0x24] sm:$0xf]
        %v7468 = vld [vmem:[%s7457 + $0x28] sm:$0xf]
        %v7469 = vld [vmem:[%s7457 + $0x2c] sm:$0xf]
        %v7470 = vld [vmem:[%s7457 + $0x30] sm:$0xf]
        %v7471 = vld [vmem:[%s7457 + $0x34] sm:$0xf]
        %v7472 = vld [vmem:[%s7457 + $0x38] sm:$0xf]
        %v7473 = vld [vmem:[%s7457 + $0x3c] sm:$0xf]
        %v7474 = vld [vmem:[%s7457 + $0x40] sm:$0xf]
        %v7475 = vld [vmem:[%s7457 + $0x44] sm:$0xf]
        %v7476 = vld [vmem:[%s7457 + $0x48] sm:$0xf]
        %v7477 = vld [vmem:[%s7457 + $0x4c] sm:$0xf]
        %v7478 = vld [vmem:[%s7457 + $0x50] sm:$0xf]
        %v7479 = vld [vmem:[%s7457 + $0x54] sm:$0xf]
        %v7480 = vld [vmem:[%s7457 + $0x58] sm:$0xf]
        %v7481 = vld [vmem:[%s7457 + $0x5c] sm:$0xf]
        %v7482 = vld [vmem:[%s7457 + $0x60] sm:$0xf]
        %v7483 = vld [vmem:[%s7457 + $0x64] sm:$0xf]
        %v7484 = vld [vmem:[%s7457 + $0x68] sm:$0xf]
        %v7485 = vld [vmem:[%s7457 + $0x6c] sm:$0xf]
        %v7486 = vld [vmem:[%s7457 + $0x70] sm:$0xf]
        %v7487 = vld [vmem:[%s7457 + $0x74] sm:$0xf]
        %v7488 = vld [vmem:[%s7457 + $0x78] sm:$0xf]
        %v7489 = vld [vmem:[%s7457 + $0x7c] sm:$0xf]
        %s7490 = scalar_lea.vmem %s16, 5
        %v7491 = vld [vmem:[%s7490] sm:$0x1]
        %v7493 = vperm.slane %v7491, 0
        %v7527 = vunpack.c.l.b16 %v7458
        %v7528 = vunpack.c.l.b16 %v7459
        %v7529 = vunpack.c.l.b16 %v7460
        %v7530 = vunpack.c.l.b16 %v7461
        %v7531 = vunpack.c.l.b16 %v7462
        %v7532 = vunpack.c.l.b16 %v7463
        %v7533 = vunpack.c.l.b16 %v7464
        %v7534 = vunpack.c.l.b16 %v7465
        %v7535 = vunpack.c.l.b16 %v7466
        %v7536 = vunpack.c.l.b16 %v7467
        %v7537 = vunpack.c.l.b16 %v7468
        %v7538 = vunpack.c.l.b16 %v7469
        %v7539 = vunpack.c.l.b16 %v7470
        %v7540 = vunpack.c.l.b16 %v7471
        %v7541 = vunpack.c.l.b16 %v7472
        %v7542 = vunpack.c.l.b16 %v7473
        %v7543 = vunpack.c.l.b16 %v7474
        %v7544 = vunpack.c.l.b16 %v7475
        %v7545 = vunpack.c.l.b16 %v7476
        %v7546 = vunpack.c.l.b16 %v7477
        %v7547 = vunpack.c.l.b16 %v7478
        %v7548 = vunpack.c.l.b16 %v7479
        %v7549 = vunpack.c.l.b16 %v7480
        %v7550 = vunpack.c.l.b16 %v7481
        %v7551 = vunpack.c.l.b16 %v7482
        %v7552 = vunpack.c.l.b16 %v7483
        %v7553 = vunpack.c.l.b16 %v7484
        %v7554 = vunpack.c.l.b16 %v7485
        %v7555 = vunpack.c.l.b16 %v7486
        %v7556 = vunpack.c.l.b16 %v7487
        %v7557 = vunpack.c.l.b16 %v7488
        %v7558 = vunpack.c.l.b16 %v7489
        %v7559 = vpack.c.b16 %v7528, %v7527
        %v7560 = vpack.c.b16 %v7530, %v7529
        %v7561 = vpack.c.b16 %v7532, %v7531
        %v7562 = vpack.c.b16 %v7534, %v7533
        %v7563 = vpack.c.b16 %v7536, %v7535
        %v7564 = vpack.c.b16 %v7538, %v7537
        %v7565 = vpack.c.b16 %v7540, %v7539
        %v7566 = vpack.c.b16 %v7542, %v7541
        %v7567 = vpack.c.b16 %v7544, %v7543
        %v7568 = vpack.c.b16 %v7546, %v7545
        %v7569 = vpack.c.b16 %v7548, %v7547
        %v7570 = vpack.c.b16 %v7550, %v7549
        %v7571 = vpack.c.b16 %v7552, %v7551
        %v7572 = vpack.c.b16 %v7554, %v7553
        %v7573 = vpack.c.b16 %v7556, %v7555
        %v7574 = vpack.c.b16 %v7558, %v7557
        %7591 = vmatpush.bf16.msra.mxu0 %v7566
        %7592 = vmatpush.bf16.msra.mxu0 %v7565
        %7593 = vmatpush.bf16.msra.mxu0 %v7564
        %7594 = vmatpush.bf16.msra.mxu0 %v7563
        %7595 = vmatpush.bf16.msra.mxu0 %v7562
        %7596 = vmatpush.bf16.msra.mxu0 %v7561
        %7597 = vmatpush.bf16.msra.mxu0 %v7560
        %7598 = vmatpush.bf16.msra.mxu0 %v7559
        %7599 = vmatmul.bf16.gmra.mxu0 %v7455
        %v7600 = vpop.f32.mrf.mxu0
        %v7601 = vadd.f32 %v7493, %v7600
        %v7602 = vpop.f32.mrf.mxu0
        %v7603 = vadd.f32 %v7493, %v7602
        %7604 = vdwg.mxu0
        %7605 = vmatpush.bf16.msra.mxu0 %v7574
        %7606 = vmatpush.bf16.msra.mxu0 %v7573
        %7607 = vmatpush.bf16.msra.mxu0 %v7572
        %7608 = vmatpush.bf16.msra.mxu0 %v7571
        %7609 = vmatpush.bf16.msra.mxu0 %v7570
        %7610 = vmatpush.bf16.msra.mxu0 %v7569
        %7611 = vmatpush.bf16.msra.mxu0 %v7568
        %7612 = vmatpush.bf16.msra.mxu0 %v7567
        %7613 = vmatmul.bf16.gmra.mxu0 %v7456
        %v7614 = vpop.f32.mrf.mxu0
        %v7615 = vadd.f32 %v7601, %v7614
        %v7616 = vpop.f32.mrf.mxu0
        %v7617 = vadd.f32 %v7603, %v7616
        %7618 = vdwg.mxu0
        %v7619 = vadd.f32 %v7316, %v7615
        %v7620 = vadd.f32 %v7317, %v7617
        %s7621 = scalar_lea.vmem %s17, 5
        %v7622 = vld [vmem:[%s7621] sm:$0x1]
        %s7623 = scalar_lea.vmem %s18, 5
        %v7624 = vld [vmem:[%s7623] sm:$0x1]
        %7625 = vadd.xlane.f32.xlu0 %v7619
        %v7626 = vpop.xlane.xlu0 %7625
        %7627 = vadd.xlane.f32.xlu0 %v7620
        %v7628 = vpop.xlane.xlu0 %7627
        %v7629 = vmul.f32 %v7626, %v1632
        %v7630 = vmul.f32 %v7628, %v1632
        %v7631 = vsub.f32 %v7619, %v7629
        %v7632 = vsub.f32 %v7620, %v7630
        %v7633 = vmul.f32 %v7631, %v7631
        %v7634 = vmul.f32 %v7632, %v7632
        %7635 = vadd.xlane.f32.xlu0 %v7633
        %v7636 = vpop.xlane.xlu0 %7635
        %7637 = vadd.xlane.f32.xlu0 %v7634
        %v7638 = vpop.xlane.xlu0 %7637
        %v7639 = vmul.f32 %v7636, %v1632
        %v7640 = vmul.f32 %v7638, %v1632
        %v7641 = vadd.f32 %v7639, 1e-05
        %v7642 = vadd.f32 %v7640, 1e-05
        %v7643 = vrsqrt.pop %v7641
        %v7644 = vmul.f32 %v7643, %v7641
        %v7645 = vmul.f32 %v7644, %v7643
        %v7646 = vmul.f32 0.5, %v7645
        %v7647 = vsub.f32 1.5, %v7646
        %v7648 = vmul.f32 %v7643, %v7647
        %vm7649 = vweird.f32 %v7641
        %vm7650 = vweird.f32 %v7643
        %vm7651 = vmor %vm7649, %vm7650
        %v7652 = vsel %vm7651, %v7643, %v7648
        %v7653 = vrsqrt.pop %v7642
        %v7654 = vmul.f32 %v7653, %v7642
        %v7655 = vmul.f32 %v7654, %v7653
        %v7656 = vmul.f32 0.5, %v7655
        %v7657 = vsub.f32 1.5, %v7656
        %v7658 = vmul.f32 %v7653, %v7657
        %vm7659 = vweird.f32 %v7642
        %vm7660 = vweird.f32 %v7653
        %vm7661 = vmor %vm7659, %vm7660
        %v7662 = vsel %vm7661, %v7653, %v7658
        %v7663 = vmul.f32 %v7631, %v7652
        %v7664 = vmul.f32 %v7632, %v7662
        %v7666 = vperm.slane %v7622, 0
        %v7668 = vmul.f32 %v7663, %v7666
        %v7669 = vmul.f32 %v7664, %v7666
        %v7671 = vperm.slane %v7624, 0
        %v7673 = vadd.f32 %v7668, %v7671
        %v7674 = vadd.f32 %v7669, %v7671
        %v7675 = vld [vmem:[%s19] sm:$0xff]
        %v7676 = vld [vmem:[%s19 + $0x8] sm:$0xff]
        %v7677 = vld [vmem:[%s19 + $0x10] sm:$0xff]
        %v7678 = vld [vmem:[%s19 + $0x18] sm:$0xff]
        %v7679 = vld [vmem:[%s19 + $0x20] sm:$0xff]
        %v7680 = vld [vmem:[%s19 + $0x28] sm:$0xff]
        %v7681 = vld [vmem:[%s19 + $0x30] sm:$0xff]
        %v7682 = vld [vmem:[%s19 + $0x38] sm:$0xff]
        %v7683 = vld [vmem:[%s19 + $0x40] sm:$0xff]
        %v7684 = vld [vmem:[%s19 + $0x48] sm:$0xff]
        %v7685 = vld [vmem:[%s19 + $0x50] sm:$0xff]
        %v7686 = vld [vmem:[%s19 + $0x58] sm:$0xff]
        %v7687 = vld [vmem:[%s19 + $0x60] sm:$0xff]
        %v7688 = vld [vmem:[%s19 + $0x68] sm:$0xff]
        %v7689 = vld [vmem:[%s19 + $0x70] sm:$0xff]
        %v7690 = vld [vmem:[%s19 + $0x78] sm:$0xff]
        %v7691 = vld [vmem:[%s20] sm:$0x1]
        %v7693 = vperm.slane %v7691, 0
        %7695 = vmatpush.msra.mxu0 %v7690
        %7696 = vmatpush.msra.mxu0 %v7689
        %7697 = vmatpush.msra.mxu0 %v7688
        %7698 = vmatpush.msra.mxu0 %v7687
        %7699 = vmatpush.msra.mxu0 %v7686
        %7700 = vmatpush.msra.mxu0 %v7685
        %7701 = vmatpush.msra.mxu0 %v7684
        %7702 = vmatpush.msra.mxu0 %v7683
        %7703 = vmatpush.msra.mxu0 %v7682
        %7704 = vmatpush.msra.mxu0 %v7681
        %7705 = vmatpush.msra.mxu0 %v7680
        %7706 = vmatpush.msra.mxu0 %v7679
        %7707 = vmatpush.msra.mxu0 %v7678
        %7708 = vmatpush.msra.mxu0 %v7677
        %7709 = vmatpush.msra.mxu0 %v7676
        %7710 = vmatpush.msra.mxu0 %v7675
        %7711 = vmatmul.f32.gmra.mxu0 %v7673
        %v7712 = vpop.f32.mrf.mxu0
        %v7713 = vadd.f32 %v7693, %v7712
        %7714 = vmatmul.f32.gmra.mxu0 %v7674
        %v7715 = vpop.f32.mrf.mxu0
        %v7716 = vadd.f32 %v7693, %v7715
        %7717 = vdwg.mxu0
        %vm7718 = vcmp.ge.f32.partialorder %v7713, 0.0
        %vm7719 = vcmp.ge.f32.partialorder %v7716, 0.0
        %v7720 = vmul.f32 %v7713, 0.1
        %v7721 = vmul.f32 %v7716, 0.1
        %v7722 = vsel %vm7718, %v7713, %v7720
        %v7723 = vsel %vm7719, %v7716, %v7721
        %v7724 = vld [vmem:[%s21] sm:$0x1]
        %v7726 = vperm.slane %v7724, 0
        %v7728 = vmul.f32 %v7722, %v7726
        %v7729 = vmul.f32 %v7723, %v7726
        %v7730 = vsel %vm862, %v7728, 0.0
        %7731 = vadd.xlane.f32.xlu0 %v7730
        %v7732 = vpop.xlane.xlu0 %7731
        %v7733 = vsel %vm862, %v7729, 0.0
        %7734 = vadd.xlane.f32.xlu0 %v7733
        %v7735 = vpop.xlane.xlu0 %7734
        %v7736 = vld [vmem:[#allocation2] sm:$0x1]
        %v7738 = vperm.slane %v7736, 0
        %v7740 = vadd.f32 %v7732, %v7738
        %v7741 = vadd.f32 %v7735, %v7738
        %vm7742 = vcmask 7168
        %7743 = vst.msk [vmem:[%s802] sm:$0xff] %vm7742, %v7740
        %7744 = vst.msk [vmem:[%s802 + $0x8] sm:$0xff] %vm7742, %v7741
        %p7745 = scmp.lt.s32.totalorder %s38, 1
        %s7746 = scalar_select %p7745, %s38, 1
        %s7747 = smul.addr %s7746, 2
        %s7748 = smul.addr %s7747, 8
        %s7749 = scalar_lea.vmem %s23, %s7748
        // Predicated region
        $region125: #{graphormer_forward.1} parent=111 // pred_check
          %p7750 = pneg %p554
        $region126: #{graphormer_forward.1} parent=111 // pred_check_branch
          %7752 = sbr.rel (%p7750) target = $region128
        $region127: #{graphormer_forward.1} parent=111 // pred_region
          _
        $region128: #{graphormer_forward.1} parent=111 // pred_fallthru
          _
      $region112: #{graphormer_forward.1} parent=5 // pred_fallthru
        _
      %p7753 = scmp.le.s32.totalorder 2, %s33
      // Predicated region
      $region129: #{graphormer_forward.1} parent=5 // pred_check
        %p7754 = pneg %p7753
      $region130: #{graphormer_forward.1} parent=5 // pred_check_branch
        %7756 = sbr.rel (%p7754) target = $region132
      $region131: #{graphormer_forward.1} parent=5 // pred_region
        %s7757 = ssub.s32 %s33, 2
        // Predicated region
        $region133: #{graphormer_forward.1} parent=131 // pred_check
          %p7758 = pneg %p560
        $region134: #{graphormer_forward.1} parent=131 // pred_check_branch
          %7760 = sbr.rel (%p7758) target = $region136
        $region135: #{graphormer_forward.1} parent=131 // pred_region
          %p7761 = scmp.lt.s32.totalorder %s39, 1
          %s7762 = scalar_select %p7761, %s39, 1
          %s7763 = smul.addr %s7762, 2
          %s7764 = smul.addr %s7763, 8
          %s7765 = scalar_lea.vmem %s23, %s7764
        $region136: #{graphormer_forward.1} parent=131 // pred_fallthru
          _
      $region132: #{graphormer_forward.1} parent=5 // pred_fallthru
        _
    $region6: #{graphormer_forward.1} parent=1 // loop_footer
      %s37 = sadd.s32 1, %s33
    $region7: #{graphormer_forward.1} parent=1 // loop_footer_branch
      %32 = sbr.rel target = $region3
    $region8: #{graphormer_forward.1} parent=1 // loop_exit
      _
    %7766 = vsyncpa [#allocation4], 1
    %s7767 = scalar_lea.sflag [#allocation4], 1
    %7768 = vsyncpa %s7767, 1
    %7769 = vsyncpa [#allocation6], 1

</llo_original>
